<compile_context>
chip_gen: v7x
topology: tpu7x:2x2x1
jax: 0.10.0
libtpu: 0.0.40
codegen_flags: <defaults>
</compile_context>

<pallas_src>
import functools

import jax
import jax.numpy as jnp
from jax.experimental import pallas as pl
from jax.experimental.pallas import tpu as pltpu

IMAGE_H = 128
IMAGE_W = 128
IN_FEATURES = 3 * IMAGE_H * IMAGE_W  # 49152
NUM_CLASSES = 10


def _layer1_kernel(x_ref, w1_ref, s1_ref, b1_ref, h1_ref, acc_ref):
    """h1[:, h_blk] = relu(x @ (int8 W1 * scale)[:, h_blk] + b1[:, h_blk]).

    Grid: (H // block_h, K // block_k).  Axis 0 ("parallel") splits the output
    features so v7x's two TensorCores each stream half of W1; axis 1
    ("arbitrary") is the K reduction, accumulated in an f32 VMEM scratch.
    """
    k = pl.program_id(1)

    @pl.when(k == 0)
    def _():
        acc_ref[...] = jnp.zeros_like(acc_ref)

    # int8 -> bf16 dequant on the VPU (|q| <= 127 is exact in bf16); x is
    # already bf16, so the MXU runs the native bf16 path with f32 accumulation.
    acc_ref[...] += jnp.dot(x_ref[...], w1_ref[...].astype(jnp.bfloat16),
                            preferred_element_type=jnp.float32)

    @pl.when(k == pl.num_programs(1) - 1)
    def _():
        # Per-output-channel scale factors out of the K-sum; apply once here.
        h1_ref[...] = jnp.maximum(acc_ref[...] * s1_ref[...] + b1_ref[...], 0.0)
        # TODO(synk): Dropout(p=0.25) is identity in eval mode; training-mode
        # dropout (pltpu.prng_random_bits mask + 1/(1-p) scale) not emitted.


def _epilogue_kernel(h_ref, w2_ref, b2_ref, w3_ref, b3_ref, w4_ref, b4_ref,
                     o_ref):
    """Tiny tail: two residual blocks + classification head, all in VMEM."""
    h = h_ref[...]
    # Block 1: relu(linear(h) + h)
    h = jnp.maximum(
        jnp.dot(h, w2_ref[...], preferred_element_type=jnp.float32)
        + b2_ref[...] + h, 0.0)
    # Block 2: relu(linear(h) + h)
    h = jnp.maximum(
        jnp.dot(h, w3_ref[...], preferred_element_type=jnp.float32)
        + b3_ref[...] + h, 0.0)
    # Head -> (B, 10)
    o_ref[...] = (jnp.dot(h, w4_ref[...], preferred_element_type=jnp.float32)
                  + b4_ref[...]).astype(o_ref.dtype)


@functools.partial(jax.jit, static_argnames=("block_k", "block_h"))
def mlp_forward(x_nchw, params, *, block_k=24576, block_h=128):
    """x_nchw: (B, 3, 128, 128) float32 -> logits (B, 10) float32."""
    w1q, s1, b1, w2, b2, w3, b3, w4, b4 = params
    B = x_nchw.shape[0]
    K, H = w1q.shape
    x = x_nchw.reshape(B, -1).astype(jnp.bfloat16)   # nn.Flatten() + bf16 stream
    assert x.shape[1] == K
    assert K % block_k == 0, f"K={K} must be divisible by block_k={block_k}"
    assert H % block_h == 0, f"H={H} must be divisible by block_h={block_h}"
    n_k = K // block_k
    n_h = H // block_h

    # Advisory cost: dominated by the int8 W1 stream (HBM-BW bound).
    flops = 2 * B * K * H
    bytes_accessed = (K * H * 1          # W1 (int8)
                      + B * K * 2        # x (bf16)
                      + 2 * H * 4        # scale + bias
                      + B * H * 4)       # h1 out

    h1 = pl.pallas_call(
        _layer1_kernel,
        out_shape=jax.ShapeDtypeStruct((B, H), jnp.float32),
        grid_spec=pltpu.PrefetchScalarGridSpec(
            num_scalar_prefetch=0,
            grid=(n_h, n_k),
            in_specs=[
                pl.BlockSpec((B, block_k), lambda h, k: (0, k)),        # x
                pl.BlockSpec((block_k, block_h), lambda h, k: (k, h)),  # W1 int8
                pl.BlockSpec((1, block_h), lambda h, k: (0, h)),        # scale
                pl.BlockSpec((1, block_h), lambda h, k: (0, h)),        # b1
            ],
            out_specs=pl.BlockSpec((B, block_h), lambda h, k: (0, h)),
            scratch_shapes=[pltpu.VMEM((B, block_h), jnp.float32)],
        ),
        compiler_params=pltpu.CompilerParams(
            dimension_semantics=("parallel", "arbitrary"),
            # Double-buffered tiles: W1 2*24576*128 int8 ~= 6 MiB plus
            # x 2*B*24576*2B ~= 0.2 MiB at B=2 -- well inside every gen's
            # scoped VMEM.  NOTE: the x buffers scale with B; at large batch
            # drop block_k (v7x only has 64 MiB physical VMEM).
            vmem_limit_bytes=32 * 1024 * 1024),
        cost_estimate=pl.CostEstimate(flops=flops, transcendentals=0,
                                      bytes_accessed=bytes_accessed),
    )(x, w1q, s1, b1)

    # Pure-tail epilogue: needs the full H-wide h1, so it runs as its own
    # micro pallas_call with all operands resident in VMEM (whole-array blocks).
    logits = pl.pallas_call(
        _epilogue_kernel,
        out_shape=jax.ShapeDtypeStruct((B, NUM_CLASSES), jnp.float32),
    )(h1, w2, b2, w3, b3, w4, b4)
    return logits


def init_params(key, hidden_dim=256):
    """Mirrors nn.Linear's U(-1/sqrt(fan_in), 1/sqrt(fan_in)) init.

    Weights stored (in_features, out_features).  W1 -- the only weight whose
    HBM bytes matter -- is quantized to int8 with per-output-channel scales;
    everything else stays float32.
    """
    def linear(key, fan_in, fan_out):
        kw, kb = jax.random.split(key)
        bound = 1.0 / jnp.sqrt(fan_in)
        w = jax.random.uniform(kw, (fan_in, fan_out), jnp.float32,
                               minval=-bound, maxval=bound)
        b = jax.random.uniform(kb, (1, fan_out), jnp.float32,
                               minval=-bound, maxval=bound)
        return w, b

    k1, k2, k3, k4 = jax.random.split(key, 4)
    w1, b1 = linear(k1, IN_FEATURES, hidden_dim)
    # Symmetric per-output-channel int8 quantization of W1.
    amax = jnp.maximum(jnp.max(jnp.abs(w1), axis=0, keepdims=True), 1e-30)
    s1 = (amax / 127.0).astype(jnp.float32)
    w1q = jnp.clip(jnp.round(w1 / s1), -127, 127).astype(jnp.int8)
    w2, b2 = linear(k2, hidden_dim, hidden_dim)
    w3, b3 = linear(k3, hidden_dim, hidden_dim)
    w4, b4 = linear(k4, hidden_dim, NUM_CLASSES)
    return (w1q, s1, b1, w2, b2, w3, b3, w4, b4)


def mlp_reference(x_nchw, params):
    """Pure-JAX reference using the same int8-dequantized W1 / bf16-rounded x.

    Validates self-consistency with the quantized weights; fidelity of int8 W1
    vs the original f32 PyTorch model is a separate (model-level) question.
    """
    w1q, s1, b1, w2, b2, w3, b3, w4, b4 = params
    x = x_nchw.reshape(x_nchw.shape[0], -1)
    xb = x.astype(jnp.bfloat16).astype(jnp.float32)
    w1 = w1q.astype(jnp.float32) * s1
    h = jnp.maximum(xb @ w1 + b1, 0.0)
    h = jnp.maximum(h @ w2 + b2 + h, 0.0)
    h = jnp.maximum(h @ w3 + b3 + h, 0.0)
    return h @ w4 + b4


if __name__ == "__main__":
    key = jax.random.PRNGKey(0)
    k_params, k_x = jax.random.split(key)

    hidden_dim = 256
    batch = 2
    params = init_params(k_params, hidden_dim)
    x = jax.random.normal(k_x, (batch, 3, IMAGE_H, IMAGE_W), jnp.float32)

    out = mlp_forward(x, params)
    out = jax.block_until_ready(out)

    ref = mlp_reference(x, params)
    assert out.shape == (batch, NUM_CLASSES)
    max_err = jnp.max(jnp.abs(out - ref))
    assert jnp.allclose(out, ref, atol=3e-3, rtol=3e-3), (
        f"max abs err {max_err}")

    print("KERNEL_OK")
</pallas_src>

<mosaic_0001>
module attributes {stable_mosaic.version = 11 : i64} {
  func.func @_layer1_kernel(%arg0: i32, %arg1: i32, %arg2: memref<2x24576xbf16, #tpu.memory_space<vmem>>, %arg3: memref<24576x128xi8, #tpu.memory_space<vmem>>, %arg4: memref<1x128xf32, #tpu.memory_space<vmem>>, %arg5: memref<1x128xf32, #tpu.memory_space<vmem>>, %arg6: memref<2x128xf32, #tpu.memory_space<vmem>>, %arg7: memref<2x128xf32, #tpu.memory_space<vmem>>) attributes {dimension_semantics = [#tpu.dimension_semantics<parallel>, #tpu.dimension_semantics<arbitrary>], iteration_bounds = array<i64: 2, 2>, scalar_prefetch = 0 : i64, scratch_operands = 1 : i64, tpu.core_type = #tpu.core_type<tc>, window_params = [{transform_indices = @transform_0, window_bounds = array<i64: 2, 24576>}, {transform_indices = @transform_1, window_bounds = array<i64: 24576, 128>}, {transform_indices = @transform_2, window_bounds = array<i64: 1, 128>}, {transform_indices = @transform_3, window_bounds = array<i64: 1, 128>}, {transform_indices = @transform_4, window_bounds = array<i64: 2, 128>}]} {
    %c0_i32 = arith.constant 0 : i32
    %0 = arith.cmpi eq, %arg1, %c0_i32 : i32
    %1 = arith.extui %0 : i1 to i32
    %c0_i32_0 = arith.constant 0 : i32
    %2 = arith.cmpi ne, %1, %c0_i32_0 : i32
    scf.if %2 {
      %cst_9 = arith.constant 0.000000e+00 : f32
      %13 = vector.broadcast %cst_9 : f32 to vector<2x128xf32>
      %c0_10 = arith.constant 0 : index
      %c0_11 = arith.constant 0 : index
      %14 = vector.load %arg7[%c0_10, %c0_11] : memref<2x128xf32, #tpu.memory_space<vmem>>, vector<2x128xf32>
      tpu.vector_store %arg7[%c0_10, %c0_11], %13 {strides = array<i32>} : memref<2x128xf32, #tpu.memory_space<vmem>>, vector<2x128xf32>,
    } else {
    }
    %c0 = arith.constant 0 : index
    %c0_1 = arith.constant 0 : index
    %3 = vector.load %arg7[%c0, %c0_1] : memref<2x128xf32, #tpu.memory_space<vmem>>, vector<2x128xf32>
    %c0_2 = arith.constant 0 : index
    %c0_3 = arith.constant 0 : index
    %4 = vector.load %arg2[%c0_2, %c0_3] : memref<2x24576xbf16, #tpu.memory_space<vmem>>, vector<2x24576xbf16>
    %c0_4 = arith.constant 0 : index
    %c0_5 = arith.constant 0 : index
    %5 = vector.load %arg3[%c0_4, %c0_5] : memref<24576x128xi8, #tpu.memory_space<vmem>>, vector<24576x128xi8>
    %6 = arith.sitofp %5 : vector<24576x128xi8> to vector<24576x128xbf16>
    %cst = arith.constant dense<0.000000e+00> : vector<2x128xf32>
    %7 = tpu.matmul %4, %6, %cst {dimension_numbers = #tpu.dot_dimension_numbers<[1], [0], [0], [1], [0, 0, 1, 1], [], []>} : vector<2x24576xbf16>, vector<24576x128xbf16>, vector<2x128xf32> -> vector<2x128xf32>
    %8 = arith.addf %3, %7 : vector<2x128xf32>
    %c0_6 = arith.constant 0 : index
    %c0_7 = arith.constant 0 : index
    %9 = vector.load %arg7[%c0_6, %c0_7] : memref<2x128xf32, #tpu.memory_space<vmem>>, vector<2x128xf32>
    tpu.vector_store %arg7[%c0_6, %c0_7], %8 {strides = array<i32>} : memref<2x128xf32, #tpu.memory_space<vmem>>, vector<2x128xf32>,
    %c1_i32 = arith.constant 1 : i32
    %10 = arith.cmpi eq, %arg1, %c1_i32 : i32
    %11 = arith.extui %10 : i1 to i32
    %c0_i32_8 = arith.constant 0 : i32
    %12 = arith.cmpi ne, %11, %c0_i32_8 : i32
    scf.if %12 {
      %c0_9 = arith.constant 0 : index
      %c0_10 = arith.constant 0 : index
      %13 = vector.load %arg7[%c0_9, %c0_10] : memref<2x128xf32, #tpu.memory_space<vmem>>, vector<2x128xf32>
      %c0_11 = arith.constant 0 : index
      %c0_12 = arith.constant 0 : index
      %14 = vector.load %arg4[%c0_11, %c0_12] : memref<1x128xf32, #tpu.memory_space<vmem>>, vector<1x128xf32>
      %15 = vector.broadcast %14 : vector<1x128xf32> to vector<2x128xf32>
      %16 = arith.mulf %13, %15 : vector<2x128xf32>
      %c0_13 = arith.constant 0 : index
      %c0_14 = arith.constant 0 : index
      %17 = vector.load %arg5[%c0_13, %c0_14] : memref<1x128xf32, #tpu.memory_space<vmem>>, vector<1x128xf32>
      %18 = vector.broadcast %17 : vector<1x128xf32> to vector<2x128xf32>
      %19 = arith.addf %16, %18 : vector<2x128xf32>
      %cst_15 = arith.constant 0.000000e+00 : f32
      %20 = vector.broadcast %cst_15 : f32 to vector<2x128xf32>
      %21 = arith.maximumf %19, %20 : vector<2x128xf32>
      %c0_16 = arith.constant 0 : index
      %c0_17 = arith.constant 0 : index
      %22 = vector.load %arg6[%c0_16, %c0_17] : memref<2x128xf32, #tpu.memory_space<vmem>>, vector<2x128xf32>
      tpu.vector_store %arg6[%c0_16, %c0_17], %21 {strides = array<i32>} : memref<2x128xf32, #tpu.memory_space<vmem>>, vector<2x128xf32>,
    } else {
    }
    return
  }
  func.func @transform_0(%arg0: i32, %arg1: i32) -> (i32, i32) {
    %c0_i32 = arith.constant 0 : i32
    %c0_i32_0 = arith.constant 0 : i32
    return %c0_i32, %arg1 : i32, i32
  }
  func.func @transform_1(%arg0: i32, %arg1: i32) -> (i32, i32) {
    %c0_i32 = arith.constant 0 : i32
    return %arg1, %arg0 : i32, i32
  }
  func.func @transform_2(%arg0: i32, %arg1: i32) -> (i32, i32) {
    %c0_i32 = arith.constant 0 : i32
    %c0_i32_0 = arith.constant 0 : i32
    return %c0_i32, %arg0 : i32, i32
  }
  func.func @transform_3(%arg0: i32, %arg1: i32) -> (i32, i32) {
    %c0_i32 = arith.constant 0 : i32
    %c0_i32_0 = arith.constant 0 : i32
    return %c0_i32, %arg0 : i32, i32
  }
  func.func @transform_4(%arg0: i32, %arg1: i32) -> (i32, i32) {
    %c0_i32 = arith.constant 0 : i32
    %c0_i32_0 = arith.constant 0 : i32
    return %c0_i32, %arg0 : i32, i32
  }
}

module attributes {stable_mosaic.version = 11 : i64} {
  func.func @_epilogue_kernel(%arg0: memref<2x256xf32, #tpu.memory_space<vmem>>, %arg1: memref<256x256xf32, #tpu.memory_space<vmem>>, %arg2: memref<1x256xf32, #tpu.memory_space<vmem>>, %arg3: memref<256x256xf32, #tpu.memory_space<vmem>>, %arg4: memref<1x256xf32, #tpu.memory_space<vmem>>, %arg5: memref<256x10xf32, #tpu.memory_space<vmem>>, %arg6: memref<1x10xf32, #tpu.memory_space<vmem>>, %arg7: memref<2x10xf32, #tpu.memory_space<vmem>>) attributes {dimension_semantics = [], scalar_prefetch = 0 : i64, scratch_operands = 0 : i64, tpu.core_type = #tpu.core_type<tc>} {
    %c0 = arith.constant 0 : index
    %c0_0 = arith.constant 0 : index
    %0 = vector.load %arg0[%c0, %c0_0] : memref<2x256xf32, #tpu.memory_space<vmem>>, vector<2x256xf32>
    %c0_1 = arith.constant 0 : index
    %c0_2 = arith.constant 0 : index
    %1 = vector.load %arg1[%c0_1, %c0_2] : memref<256x256xf32, #tpu.memory_space<vmem>>, vector<256x256xf32>
    %cst = arith.constant dense<0.000000e+00> : vector<2x256xf32>
    %2 = tpu.matmul %0, %1, %cst {dimension_numbers = #tpu.dot_dimension_numbers<[1], [0], [0], [1], [0, 0, 1, 1], [], []>} : vector<2x256xf32>, vector<256x256xf32>, vector<2x256xf32> -> vector<2x256xf32>
    %c0_3 = arith.constant 0 : index
    %c0_4 = arith.constant 0 : index
    %3 = vector.load %arg2[%c0_3, %c0_4] : memref<1x256xf32, #tpu.memory_space<vmem>>, vector<1x256xf32>
    %4 = vector.broadcast %3 : vector<1x256xf32> to vector<2x256xf32>
    %5 = arith.addf %2, %4 : vector<2x256xf32>
    %6 = arith.addf %5, %0 : vector<2x256xf32>
    %cst_5 = arith.constant 0.000000e+00 : f32
    %7 = vector.broadcast %cst_5 : f32 to vector<2x256xf32>
    %8 = arith.maximumf %6, %7 : vector<2x256xf32>
    %c0_6 = arith.constant 0 : index
    %c0_7 = arith.constant 0 : index
    %9 = vector.load %arg3[%c0_6, %c0_7] : memref<256x256xf32, #tpu.memory_space<vmem>>, vector<256x256xf32>
    %cst_8 = arith.constant dense<0.000000e+00> : vector<2x256xf32>
    %10 = tpu.matmul %8, %9, %cst_8 {dimension_numbers = #tpu.dot_dimension_numbers<[1], [0], [0], [1], [0, 0, 1, 1], [], []>} : vector<2x256xf32>, vector<256x256xf32>, vector<2x256xf32> -> vector<2x256xf32>
    %c0_9 = arith.constant 0 : index
    %c0_10 = arith.constant 0 : index
    %11 = vector.load %arg4[%c0_9, %c0_10] : memref<1x256xf32, #tpu.memory_space<vmem>>, vector<1x256xf32>
    %12 = vector.broadcast %11 : vector<1x256xf32> to vector<2x256xf32>
    %13 = arith.addf %10, %12 : vector<2x256xf32>
    %14 = arith.addf %13, %8 : vector<2x256xf32>
    %cst_11 = arith.constant 0.000000e+00 : f32
    %15 = vector.broadcast %cst_11 : f32 to vector<2x256xf32>
    %16 = arith.maximumf %14, %15 : vector<2x256xf32>
    %c0_12 = arith.constant 0 : index
    %c0_13 = arith.constant 0 : index
    %17 = vector.load %arg5[%c0_12, %c0_13] : memref<256x10xf32, #tpu.memory_space<vmem>>, vector<256x10xf32>
    %cst_14 = arith.constant dense<0.000000e+00> : vector<2x10xf32>
    %18 = tpu.matmul %16, %17, %cst_14 {dimension_numbers = #tpu.dot_dimension_numbers<[1], [0], [0], [1], [0, 0, 1, 1], [], []>} : vector<2x256xf32>, vector<256x10xf32>, vector<2x10xf32> -> vector<2x10xf32>
    %c0_15 = arith.constant 0 : index
    %c0_16 = arith.constant 0 : index
    %19 = vector.load %arg6[%c0_15, %c0_16] : memref<1x10xf32, #tpu.memory_space<vmem>>, vector<1x10xf32>
    %20 = vector.broadcast %19 : vector<1x10xf32> to vector<2x10xf32>
    %21 = arith.addf %18, %20 : vector<2x10xf32>
    %c0_17 = arith.constant 0 : index
    %c0_18 = arith.constant 0 : index
    %22 = vector.load %arg7[%c0_17, %c0_18] : memref<2x10xf32, #tpu.memory_space<vmem>>, vector<2x10xf32>
    tpu.vector_store %arg7[%c0_17, %c0_18], %21 {strides = array<i32>} : memref<2x10xf32, #tpu.memory_space<vmem>>, vector<2x10xf32>,
    return
  }
}

</mosaic_0001>

<llo_original>
// kernel: mlp_forward.3
$region0: #{mlp_forward.3}
  #allocation0 [shape = 'u32[]', space=smem, size = 0x4, offset = 0x4, fixed_abs, tag = 'smem constant byte address 0x4 - core index']
  #allocation1 [shape = 'u32[144,128]{1,0:T(1,128)}', space=vmem, size = 0x12000, scoped, tag = 'internal scratch']
  %s0 = inlined_call_operand.vmem [shape: f32[2,256], index: 0, kind: input, shape index: {}]
  %s1 = inlined_call_operand.vmem [shape: f32[256,256], index: 1, kind: input, shape index: {}]
  %s2 = inlined_call_operand.vmem [shape: f32[1,256], index: 2, kind: input, shape index: {}]
  %s3 = inlined_call_operand.vmem [shape: f32[256,256], index: 3, kind: input, shape index: {}]
  %s4 = inlined_call_operand.vmem [shape: f32[1,256], index: 4, kind: input, shape index: {}]
  %s5 = inlined_call_operand.vmem [shape: f32[256,10], index: 5, kind: input, shape index: {}]
  %s6 = inlined_call_operand.vmem [shape: f32[1,10], index: 6, kind: input, shape index: {}]
  %s7 = inlined_call_operand.hbm [shape: f32[2,10], index: 7, kind: output, shape index: {}]
  %s8 = sld [smem:[#allocation0]]
  $region38: #{mlp_forward.3} parent=0
    _
  %s10 = ssub.s32 1, %s8
  %s11 = scalar_select 0, %s10, %s8
  $region1: #{mlp_forward.3} parent=0
    #allocation2 [shape = 'u8[1024]{0}', space=vmem, size = 0x400, scoped, tag = 'output window, operand 0, single buffered']
    #allocation3 [shape = 's32[1]{0}', space=sflag, size = 0x4, scoped, tag = 'scoped memory for mlp_forward.3']
    %12 = vsyncpa [#allocation3], 0
    // Predicated region
    $region2: #{mlp_forward.3} parent=1 // pred_check
      _
    $region3: #{mlp_forward.3} parent=1 // pred_check_branch
      %14 = sbr.rel (0) target = $region5
    $region4: #{mlp_forward.3} parent=1 // pred_region
      _
    $region5: #{mlp_forward.3} parent=1 // pred_fallthru
      _
    // Predicated region
    $region6: #{mlp_forward.3} parent=1 // pred_check
      _
    $region7: #{mlp_forward.3} parent=1 // pred_check_branch
      %16 = sbr.rel (0) target = $region9
    $region8: #{mlp_forward.3} parent=1 // pred_region
      _
    $region9: #{mlp_forward.3} parent=1 // pred_fallthru
      _
    // Predicated region
    $region10: #{mlp_forward.3} parent=1 // pred_check
      _
    $region11: #{mlp_forward.3} parent=1 // pred_check_branch
      %18 = sbr.rel (0) target = $region13
    $region12: #{mlp_forward.3} parent=1 // pred_region
      _
    $region13: #{mlp_forward.3} parent=1 // pred_fallthru
      _
    // Predicated region
    $region14: #{mlp_forward.3} parent=1 // pred_check
      _
    $region15: #{mlp_forward.3} parent=1 // pred_check_branch
      %20 = sbr.rel (0) target = $region17
    $region16: #{mlp_forward.3} parent=1 // pred_region
      _
    $region17: #{mlp_forward.3} parent=1 // pred_fallthru
      _
    // Predicated region
    $region18: #{mlp_forward.3} parent=1 // pred_check
      _
    $region19: #{mlp_forward.3} parent=1 // pred_check_branch
      %22 = sbr.rel (0) target = $region21
    $region20: #{mlp_forward.3} parent=1 // pred_region
      _
    $region21: #{mlp_forward.3} parent=1 // pred_fallthru
      _
    // Predicated region
    $region22: #{mlp_forward.3} parent=1 // pred_check
      _
    $region23: #{mlp_forward.3} parent=1 // pred_check_branch
      %24 = sbr.rel (0) target = $region25
    $region24: #{mlp_forward.3} parent=1 // pred_region
      _
    $region25: #{mlp_forward.3} parent=1 // pred_fallthru
      _
    // Predicated region
    $region26: #{mlp_forward.3} parent=1 // pred_check
      _
    $region27: #{mlp_forward.3} parent=1 // pred_check_branch
      %26 = sbr.rel (0) target = $region29
    $region28: #{mlp_forward.3} parent=1 // pred_region
      _
    $region29: #{mlp_forward.3} parent=1 // pred_fallthru
      _
    %v27 = vld [vmem:[%s0] sm:$0xf]
    %v28 = vld [vmem:[%s1] sm:$0xff]
    %v29 = vld [vmem:[%s1 + $0x8] sm:$0xff]
    %v30 = vld [vmem:[%s1 + $0x10] sm:$0xff]
    %v31 = vld [vmem:[%s1 + $0x18] sm:$0xff]
    %v32 = vld [vmem:[%s1 + $0x20] sm:$0xff]
    %v33 = vld [vmem:[%s1 + $0x28] sm:$0xff]
    %v34 = vld [vmem:[%s1 + $0x30] sm:$0xff]
    %v35 = vld [vmem:[%s1 + $0x38] sm:$0xff]
    %v36 = vld [vmem:[%s1 + $0x40] sm:$0xff]
    %v37 = vld [vmem:[%s1 + $0x48] sm:$0xff]
    %v38 = vld [vmem:[%s1 + $0x50] sm:$0xff]
    %v39 = vld [vmem:[%s1 + $0x58] sm:$0xff]
    %v40 = vld [vmem:[%s1 + $0x60] sm:$0xff]
    %v41 = vld [vmem:[%s1 + $0x68] sm:$0xff]
    %v42 = vld [vmem:[%s1 + $0x70] sm:$0xff]
    %v43 = vld [vmem:[%s1 + $0x78] sm:$0xff]
    %v44 = vld [vmem:[%s1 + $0x80] sm:$0xff]
    %v45 = vld [vmem:[%s1 + $0x88] sm:$0xff]
    %v46 = vld [vmem:[%s1 + $0x90] sm:$0xff]
    %v47 = vld [vmem:[%s1 + $0x98] sm:$0xff]
    %v48 = vld [vmem:[%s1 + $0xa0] sm:$0xff]
    %v49 = vld [vmem:[%s1 + $0xa8] sm:$0xff]
    %v50 = vld [vmem:[%s1 + $0xb0] sm:$0xff]
    %v51 = vld [vmem:[%s1 + $0xb8] sm:$0xff]
    %v52 = vld [vmem:[%s1 + $0xc0] sm:$0xff]
    %v53 = vld [vmem:[%s1 + $0xc8] sm:$0xff]
    %v54 = vld [vmem:[%s1 + $0xd0] sm:$0xff]
    %v55 = vld [vmem:[%s1 + $0xd8] sm:$0xff]
    %v56 = vld [vmem:[%s1 + $0xe0] sm:$0xff]
    %v57 = vld [vmem:[%s1 + $0xe8] sm:$0xff]
    %v58 = vld [vmem:[%s1 + $0xf0] sm:$0xff]
    %v59 = vld [vmem:[%s1 + $0xf8] sm:$0xff]
    %v60 = vld [vmem:[%s1 + $0x100] sm:$0xff]
    %v61 = vld [vmem:[%s1 + $0x108] sm:$0xff]
    %v62 = vld [vmem:[%s1 + $0x110] sm:$0xff]
    %v63 = vld [vmem:[%s1 + $0x118] sm:$0xff]
    %v64 = vld [vmem:[%s1 + $0x120] sm:$0xff]
    %v65 = vld [vmem:[%s1 + $0x128] sm:$0xff]
    %v66 = vld [vmem:[%s1 + $0x130] sm:$0xff]
    %v67 = vld [vmem:[%s1 + $0x138] sm:$0xff]
    %v68 = vld [vmem:[%s1 + $0x140] sm:$0xff]
    %v69 = vld [vmem:[%s1 + $0x148] sm:$0xff]
    %v70 = vld [vmem:[%s1 + $0x150] sm:$0xff]
    %v71 = vld [vmem:[%s1 + $0x158] sm:$0xff]
    %v72 = vld [vmem:[%s1 + $0x160] sm:$0xff]
    %v73 = vld [vmem:[%s1 + $0x168] sm:$0xff]
    %v74 = vld [vmem:[%s1 + $0x170] sm:$0xff]
    %v75 = vld [vmem:[%s1 + $0x178] sm:$0xff]
    %v76 = vld [vmem:[%s1 + $0x180] sm:$0xff]
    %v77 = vld [vmem:[%s1 + $0x188] sm:$0xff]
    %v78 = vld [vmem:[%s1 + $0x190] sm:$0xff]
    %v79 = vld [vmem:[%s1 + $0x198] sm:$0xff]
    %v80 = vld [vmem:[%s1 + $0x1a0] sm:$0xff]
    %v81 = vld [vmem:[%s1 + $0x1a8] sm:$0xff]
    %v82 = vld [vmem:[%s1 + $0x1b0] sm:$0xff]
    %v83 = vld [vmem:[%s1 + $0x1b8] sm:$0xff]
    %v84 = vld [vmem:[%s1 + $0x1c0] sm:$0xff]
    %v85 = vld [vmem:[%s1 + $0x1c8] sm:$0xff]
    %v86 = vld [vmem:[%s1 + $0x1d0] sm:$0xff]
    %v87 = vld [vmem:[%s1 + $0x1d8] sm:$0xff]
    %v88 = vld [vmem:[%s1 + $0x1e0] sm:$0xff]
    %v89 = vld [vmem:[%s1 + $0x1e8] sm:$0xff]
    %v90 = vld [vmem:[%s1 + $0x1f0] sm:$0xff]
    %v91 = vld [vmem:[%s1 + $0x1f8] sm:$0xff]
    %v92 = vld [vmem:[%s2] sm:$0x3]
    %v94 = vlaneseq
    %v95 = vshrl.u32 %v94, 7
    %v96 = vsub.s32 0, %v95
    %v97 = vrot.slane %v92, %v96
    %v98 = vlaneseq
    %v99 = vshrl.u32 %v98, 7
    %v100 = vsub.s32 1, %v99
    %v101 = vrot.slane %v92, %v100
    %v106 = vunpack.c.l.s4 1983009808
    %v107 = vunpack.c.0.s8 %v106
    %v108 = vlaneseq
    %v109 = vshrl.u32 %v108, 7
    %v110 = vsub.s32 %v107, %v109
    %v111 = vrot.slane %v27, %v110
    %v112 = vcombine.high %v111, %v111
    %115 = vmatprep.subr.mxu0 %v29
    %116 = vmatpush1.msra.mxu0 %v28
    %117 = vmatprep.subr.mxu0 %v31
    %118 = vmatpush1.msra.mxu0 %v30
    %119 = vmatprep.subr.mxu0 %v33
    %120 = vmatpush1.msra.mxu0 %v32
    %121 = vmatprep.subr.mxu0 %v35
    %122 = vmatpush1.msra.mxu0 %v34
    %123 = vmatprep.subr.mxu0 %v37
    %124 = vmatpush1.msra.mxu0 %v36
    %125 = vmatprep.subr.mxu0 %v39
    %126 = vmatpush1.msra.mxu0 %v38
    %127 = vmatprep.subr.mxu0 %v41
    %128 = vmatpush1.msra.mxu0 %v40
    %129 = vmatprep.subr.mxu0 %v43
    %130 = vmatpush1.msra.mxu0 %v42
    %131 = vmatprep.subr.mxu0 %v45
    %132 = vmatpush1.msra.mxu0 %v44
    %133 = vmatprep.subr.mxu0 %v47
    %134 = vmatpush1.msra.mxu0 %v46
    %135 = vmatprep.subr.mxu0 %v49
    %136 = vmatpush1.msra.mxu0 %v48
    %137 = vmatprep.subr.mxu0 %v51
    %138 = vmatpush1.msra.mxu0 %v50
    %139 = vmatprep.subr.mxu0 %v53
    %140 = vmatpush1.msra.mxu0 %v52
    %141 = vmatprep.subr.mxu0 %v55
    %142 = vmatpush1.msra.mxu0 %v54
    %143 = vmatprep.subr.mxu0 %v57
    %144 = vmatpush1.msra.mxu0 %v56
    %145 = vmatprep.subr.mxu0 %v59
    %146 = vmatpush1.msra.mxu0 %v58
    %147 = vmatprep.subr.mxu0 %v61
    %148 = vmatpush1.msra.mxu0 %v60
    %149 = vmatprep.subr.mxu0 %v63
    %150 = vmatpush1.msra.mxu0 %v62
    %151 = vmatprep.subr.mxu0 %v65
    %152 = vmatpush1.msra.mxu0 %v64
    %153 = vmatprep.subr.mxu0 %v67
    %154 = vmatpush1.msra.mxu0 %v66
    %155 = vmatprep.subr.mxu0 %v69
    %156 = vmatpush1.msra.mxu0 %v68
    %157 = vmatprep.subr.mxu0 %v71
    %158 = vmatpush1.msra.mxu0 %v70
    %159 = vmatprep.subr.mxu0 %v73
    %160 = vmatpush1.msra.mxu0 %v72
    %161 = vmatprep.subr.mxu0 %v75
    %162 = vmatpush1.msra.mxu0 %v74
    %163 = vmatprep.subr.mxu0 %v77
    %164 = vmatpush1.msra.mxu0 %v76
    %165 = vmatprep.subr.mxu0 %v79
    %166 = vmatpush1.msra.mxu0 %v78
    %167 = vmatprep.subr.mxu0 %v81
    %168 = vmatpush1.msra.mxu0 %v80
    %169 = vmatprep.subr.mxu0 %v83
    %170 = vmatpush1.msra.mxu0 %v82
    %171 = vmatprep.subr.mxu0 %v85
    %172 = vmatpush1.msra.mxu0 %v84
    %173 = vmatprep.subr.mxu0 %v87
    %174 = vmatpush1.msra.mxu0 %v86
    %175 = vmatprep.subr.mxu0 %v89
    %176 = vmatpush1.msra.mxu0 %v88
    %177 = vmatprep.subr.mxu0 %v91
    %178 = vmatpush1.msra.mxu0 %v90
    %179 = vmatprep.mubr.f32.mxu0 %v112
    %180 = vmatmul.mubr.f32.gmra.mrb[0].mxu0 %v111
    %v181 = vpop.f32.mrb[0].mxu0
    %v182 = vadd.f32 %v97, %v181
    %v183 = vpop.f32.mrb[0].mxu0
    %v184 = vadd.f32 %v101, %v183
    %185 = vdwg.mxu0
    %v186 = vadd.f32 %v182, %v111
    %v187 = vadd.f32 %v184, %v112
    %v188 = vmax.f32 %v186, 0.0
    %v189 = vmax.f32 %v187, 0.0
    %v190 = vld [vmem:[%s3] sm:$0xff]
    %v191 = vld [vmem:[%s3 + $0x8] sm:$0xff]
    %v192 = vld [vmem:[%s3 + $0x10] sm:$0xff]
    %v193 = vld [vmem:[%s3 + $0x18] sm:$0xff]
    %v194 = vld [vmem:[%s3 + $0x20] sm:$0xff]
    %v195 = vld [vmem:[%s3 + $0x28] sm:$0xff]
    %v196 = vld [vmem:[%s3 + $0x30] sm:$0xff]
    %v197 = vld [vmem:[%s3 + $0x38] sm:$0xff]
    %v198 = vld [vmem:[%s3 + $0x40] sm:$0xff]
    %v199 = vld [vmem:[%s3 + $0x48] sm:$0xff]
    %v200 = vld [vmem:[%s3 + $0x50] sm:$0xff]
    %v201 = vld [vmem:[%s3 + $0x58] sm:$0xff]
    %v202 = vld [vmem:[%s3 + $0x60] sm:$0xff]
    %v203 = vld [vmem:[%s3 + $0x68] sm:$0xff]
    %v204 = vld [vmem:[%s3 + $0x70] sm:$0xff]
    %v205 = vld [vmem:[%s3 + $0x78] sm:$0xff]
    %v206 = vld [vmem:[%s3 + $0x80] sm:$0xff]
    %v207 = vld [vmem:[%s3 + $0x88] sm:$0xff]
    %v208 = vld [vmem:[%s3 + $0x90] sm:$0xff]
    %v209 = vld [vmem:[%s3 + $0x98] sm:$0xff]
    %v210 = vld [vmem:[%s3 + $0xa0] sm:$0xff]
    %v211 = vld [vmem:[%s3 + $0xa8] sm:$0xff]
    %v212 = vld [vmem:[%s3 + $0xb0] sm:$0xff]
    %v213 = vld [vmem:[%s3 + $0xb8] sm:$0xff]
    %v214 = vld [vmem:[%s3 + $0xc0] sm:$0xff]
    %v215 = vld [vmem:[%s3 + $0xc8] sm:$0xff]
    %v216 = vld [vmem:[%s3 + $0xd0] sm:$0xff]
    %v217 = vld [vmem:[%s3 + $0xd8] sm:$0xff]
    %v218 = vld [vmem:[%s3 + $0xe0] sm:$0xff]
    %v219 = vld [vmem:[%s3 + $0xe8] sm:$0xff]
    %v220 = vld [vmem:[%s3 + $0xf0] sm:$0xff]
    %v221 = vld [vmem:[%s3 + $0xf8] sm:$0xff]
    %v222 = vld [vmem:[%s3 + $0x100] sm:$0xff]
    %v223 = vld [vmem:[%s3 + $0x108] sm:$0xff]
    %v224 = vld [vmem:[%s3 + $0x110] sm:$0xff]
    %v225 = vld [vmem:[%s3 + $0x118] sm:$0xff]
    %v226 = vld [vmem:[%s3 + $0x120] sm:$0xff]
    %v227 = vld [vmem:[%s3 + $0x128] sm:$0xff]
    %v228 = vld [vmem:[%s3 + $0x130] sm:$0xff]
    %v229 = vld [vmem:[%s3 + $0x138] sm:$0xff]
    %v230 = vld [vmem:[%s3 + $0x140] sm:$0xff]
    %v231 = vld [vmem:[%s3 + $0x148] sm:$0xff]
    %v232 = vld [vmem:[%s3 + $0x150] sm:$0xff]
    %v233 = vld [vmem:[%s3 + $0x158] sm:$0xff]
    %v234 = vld [vmem:[%s3 + $0x160] sm:$0xff]
    %v235 = vld [vmem:[%s3 + $0x168] sm:$0xff]
    %v236 = vld [vmem:[%s3 + $0x170] sm:$0xff]
    %v237 = vld [vmem:[%s3 + $0x178] sm:$0xff]
    %v238 = vld [vmem:[%s3 + $0x180] sm:$0xff]
    %v239 = vld [vmem:[%s3 + $0x188] sm:$0xff]
    %v240 = vld [vmem:[%s3 + $0x190] sm:$0xff]
    %v241 = vld [vmem:[%s3 + $0x198] sm:$0xff]
    %v242 = vld [vmem:[%s3 + $0x1a0] sm:$0xff]
    %v243 = vld [vmem:[%s3 + $0x1a8] sm:$0xff]
    %v244 = vld [vmem:[%s3 + $0x1b0] sm:$0xff]
    %v245 = vld [vmem:[%s3 + $0x1b8] sm:$0xff]
    %v246 = vld [vmem:[%s3 + $0x1c0] sm:$0xff]
    %v247 = vld [vmem:[%s3 + $0x1c8] sm:$0xff]
    %v248 = vld [vmem:[%s3 + $0x1d0] sm:$0xff]
    %v249 = vld [vmem:[%s3 + $0x1d8] sm:$0xff]
    %v250 = vld [vmem:[%s3 + $0x1e0] sm:$0xff]
    %v251 = vld [vmem:[%s3 + $0x1e8] sm:$0xff]
    %v252 = vld [vmem:[%s3 + $0x1f0] sm:$0xff]
    %v253 = vld [vmem:[%s3 + $0x1f8] sm:$0xff]
    %v254 = vld [vmem:[%s4] sm:$0x3]
    %v256 = vlaneseq
    %v257 = vshrl.u32 %v256, 7
    %v258 = vsub.s32 0, %v257
    %v259 = vrot.slane %v254, %v258
    %v260 = vlaneseq
    %v261 = vshrl.u32 %v260, 7
    %v262 = vsub.s32 1, %v261
    %v263 = vrot.slane %v254, %v262
    %266 = vmatprep.subr.mxu0 %v191
    %267 = vmatpush1.msra.mxu0 %v190
    %268 = vmatprep.subr.mxu0 %v193
    %269 = vmatpush1.msra.mxu0 %v192
    %270 = vmatprep.subr.mxu0 %v195
    %271 = vmatpush1.msra.mxu0 %v194
    %272 = vmatprep.subr.mxu0 %v197
    %273 = vmatpush1.msra.mxu0 %v196
    %274 = vmatprep.subr.mxu0 %v199
    %275 = vmatpush1.msra.mxu0 %v198
    %276 = vmatprep.subr.mxu0 %v201
    %277 = vmatpush1.msra.mxu0 %v200
    %278 = vmatprep.subr.mxu0 %v203
    %279 = vmatpush1.msra.mxu0 %v202
    %280 = vmatprep.subr.mxu0 %v205
    %281 = vmatpush1.msra.mxu0 %v204
    %282 = vmatprep.subr.mxu0 %v207
    %283 = vmatpush1.msra.mxu0 %v206
    %284 = vmatprep.subr.mxu0 %v209
    %285 = vmatpush1.msra.mxu0 %v208
    %286 = vmatprep.subr.mxu0 %v211
    %287 = vmatpush1.msra.mxu0 %v210
    %288 = vmatprep.subr.mxu0 %v213
    %289 = vmatpush1.msra.mxu0 %v212
    %290 = vmatprep.subr.mxu0 %v215
    %291 = vmatpush1.msra.mxu0 %v214
    %292 = vmatprep.subr.mxu0 %v217
    %293 = vmatpush1.msra.mxu0 %v216
    %294 = vmatprep.subr.mxu0 %v219
    %295 = vmatpush1.msra.mxu0 %v218
    %296 = vmatprep.subr.mxu0 %v221
    %297 = vmatpush1.msra.mxu0 %v220
    %298 = vmatprep.subr.mxu0 %v223
    %299 = vmatpush1.msra.mxu0 %v222
    %300 = vmatprep.subr.mxu0 %v225
    %301 = vmatpush1.msra.mxu0 %v224
    %302 = vmatprep.subr.mxu0 %v227
    %303 = vmatpush1.msra.mxu0 %v226
    %304 = vmatprep.subr.mxu0 %v229
    %305 = vmatpush1.msra.mxu0 %v228
    %306 = vmatprep.subr.mxu0 %v231
    %307 = vmatpush1.msra.mxu0 %v230
    %308 = vmatprep.subr.mxu0 %v233
    %309 = vmatpush1.msra.mxu0 %v232
    %310 = vmatprep.subr.mxu0 %v235
    %311 = vmatpush1.msra.mxu0 %v234
    %312 = vmatprep.subr.mxu0 %v237
    %313 = vmatpush1.msra.mxu0 %v236
    %314 = vmatprep.subr.mxu0 %v239
    %315 = vmatpush1.msra.mxu0 %v238
    %316 = vmatprep.subr.mxu0 %v241
    %317 = vmatpush1.msra.mxu0 %v240
    %318 = vmatprep.subr.mxu0 %v243
    %319 = vmatpush1.msra.mxu0 %v242
    %320 = vmatprep.subr.mxu0 %v245
    %321 = vmatpush1.msra.mxu0 %v244
    %322 = vmatprep.subr.mxu0 %v247
    %323 = vmatpush1.msra.mxu0 %v246
    %324 = vmatprep.subr.mxu0 %v249
    %325 = vmatpush1.msra.mxu0 %v248
    %326 = vmatprep.subr.mxu0 %v251
    %327 = vmatpush1.msra.mxu0 %v250
    %328 = vmatprep.subr.mxu0 %v253
    %329 = vmatpush1.msra.mxu0 %v252
    %330 = vmatprep.mubr.f32.mxu0 %v189
    %331 = vmatmul.mubr.f32.gmra.mrb[0].mxu0 %v188
    %v332 = vpop.f32.mrb[0].mxu0
    %v333 = vadd.f32 %v259, %v332
    %v334 = vpop.f32.mrb[0].mxu0
    %v335 = vadd.f32 %v263, %v334
    %336 = vdwg.mxu0
    %v337 = vadd.f32 %v333, %v188
    %v338 = vadd.f32 %v335, %v189
    %v339 = vmax.f32 %v337, 0.0
    %v340 = vmax.f32 %v338, 0.0
    %v341 = vld [vmem:[%s5] sm:$0xff]
    %v342 = vld [vmem:[%s5 + $0x8] sm:$0xff]
    %v343 = vld [vmem:[%s5 + $0x10] sm:$0xff]
    %v344 = vld [vmem:[%s5 + $0x18] sm:$0xff]
    %v345 = vld [vmem:[%s5 + $0x20] sm:$0xff]
    %v346 = vld [vmem:[%s5 + $0x28] sm:$0xff]
    %v347 = vld [vmem:[%s5 + $0x30] sm:$0xff]
    %v348 = vld [vmem:[%s5 + $0x38] sm:$0xff]
    %v349 = vld [vmem:[%s5 + $0x40] sm:$0xff]
    %v350 = vld [vmem:[%s5 + $0x48] sm:$0xff]
    %v351 = vld [vmem:[%s5 + $0x50] sm:$0xff]
    %v352 = vld [vmem:[%s5 + $0x58] sm:$0xff]
    %v353 = vld [vmem:[%s5 + $0x60] sm:$0xff]
    %v354 = vld [vmem:[%s5 + $0x68] sm:$0xff]
    %v355 = vld [vmem:[%s5 + $0x70] sm:$0xff]
    %v356 = vld [vmem:[%s5 + $0x78] sm:$0xff]
    %v357 = vld [vmem:[%s5 + $0x80] sm:$0xff]
    %v358 = vld [vmem:[%s5 + $0x88] sm:$0xff]
    %v359 = vld [vmem:[%s5 + $0x90] sm:$0xff]
    %v360 = vld [vmem:[%s5 + $0x98] sm:$0xff]
    %v361 = vld [vmem:[%s5 + $0xa0] sm:$0xff]
    %v362 = vld [vmem:[%s5 + $0xa8] sm:$0xff]
    %v363 = vld [vmem:[%s5 + $0xb0] sm:$0xff]
    %v364 = vld [vmem:[%s5 + $0xb8] sm:$0xff]
    %v365 = vld [vmem:[%s5 + $0xc0] sm:$0xff]
    %v366 = vld [vmem:[%s5 + $0xc8] sm:$0xff]
    %v367 = vld [vmem:[%s5 + $0xd0] sm:$0xff]
    %v368 = vld [vmem:[%s5 + $0xd8] sm:$0xff]
    %v369 = vld [vmem:[%s5 + $0xe0] sm:$0xff]
    %v370 = vld [vmem:[%s5 + $0xe8] sm:$0xff]
    %v371 = vld [vmem:[%s5 + $0xf0] sm:$0xff]
    %v372 = vld [vmem:[%s5 + $0xf8] sm:$0xff]
    %v373 = vld [vmem:[%s6] sm:$0x1]
    %v375 = vlaneseq
    %v376 = vshrl.u32 %v375, 7
    %v377 = vsub.s32 0, %v376
    %v378 = vrot.slane %v373, %v377
    %380 = vmatprep.subr.mxu0 0.0
    %381 = vmatpush1.msra.mxu0 %v341
    %382 = vmatprep.subr.mxu0 0.0
    %383 = vmatpush1.msra.mxu0 %v342
    %384 = vmatprep.subr.mxu0 0.0
    %385 = vmatpush1.msra.mxu0 %v343
    %386 = vmatprep.subr.mxu0 0.0
    %387 = vmatpush1.msra.mxu0 %v344
    %388 = vmatprep.subr.mxu0 0.0
    %389 = vmatpush1.msra.mxu0 %v345
    %390 = vmatprep.subr.mxu0 0.0
    %391 = vmatpush1.msra.mxu0 %v346
    %392 = vmatprep.subr.mxu0 0.0
    %393 = vmatpush1.msra.mxu0 %v347
    %394 = vmatprep.subr.mxu0 0.0
    %395 = vmatpush1.msra.mxu0 %v348
    %396 = vmatprep.subr.mxu0 0.0
    %397 = vmatpush1.msra.mxu0 %v349
    %398 = vmatprep.subr.mxu0 0.0
    %399 = vmatpush1.msra.mxu0 %v350
    %400 = vmatprep.subr.mxu0 0.0
    %401 = vmatpush1.msra.mxu0 %v351
    %402 = vmatprep.subr.mxu0 0.0
    %403 = vmatpush1.msra.mxu0 %v352
    %404 = vmatprep.subr.mxu0 0.0
    %405 = vmatpush1.msra.mxu0 %v353
    %406 = vmatprep.subr.mxu0 0.0
    %407 = vmatpush1.msra.mxu0 %v354
    %408 = vmatprep.subr.mxu0 0.0
    %409 = vmatpush1.msra.mxu0 %v355
    %410 = vmatprep.subr.mxu0 0.0
    %411 = vmatpush1.msra.mxu0 %v356
    %412 = vmatprep.subr.mxu0 0.0
    %413 = vmatpush1.msra.mxu0 %v357
    %414 = vmatprep.subr.mxu0 0.0
    %415 = vmatpush1.msra.mxu0 %v358
    %416 = vmatprep.subr.mxu0 0.0
    %417 = vmatpush1.msra.mxu0 %v359
    %418 = vmatprep.subr.mxu0 0.0
    %419 = vmatpush1.msra.mxu0 %v360
    %420 = vmatprep.subr.mxu0 0.0
    %421 = vmatpush1.msra.mxu0 %v361
    %422 = vmatprep.subr.mxu0 0.0
    %423 = vmatpush1.msra.mxu0 %v362
    %424 = vmatprep.subr.mxu0 0.0
    %425 = vmatpush1.msra.mxu0 %v363
    %426 = vmatprep.subr.mxu0 0.0
    %427 = vmatpush1.msra.mxu0 %v364
    %428 = vmatprep.subr.mxu0 0.0
    %429 = vmatpush1.msra.mxu0 %v365
    %430 = vmatprep.subr.mxu0 0.0
    %431 = vmatpush1.msra.mxu0 %v366
    %432 = vmatprep.subr.mxu0 0.0
    %433 = vmatpush1.msra.mxu0 %v367
    %434 = vmatprep.subr.mxu0 0.0
    %435 = vmatpush1.msra.mxu0 %v368
    %436 = vmatprep.subr.mxu0 0.0
    %437 = vmatpush1.msra.mxu0 %v369
    %438 = vmatprep.subr.mxu0 0.0
    %439 = vmatpush1.msra.mxu0 %v370
    %440 = vmatprep.subr.mxu0 0.0
    %441 = vmatpush1.msra.mxu0 %v371
    %442 = vmatprep.subr.mxu0 0.0
    %443 = vmatpush1.msra.mxu0 %v372
    %444 = vmatprep.mubr.f32.mxu0 %v340
    %445 = vmatmul.mubr.f32.gmra.mrb[0].mxu0 %v339
    %v446 = vpop.f32.mrb[0].mxu0
    %v447 = vadd.f32 %v378, %v446
    %v448 = vpop.f32.mrb[0].mxu0
    %449 = vdwg.mxu0
    %vm450 = vcmask 74752
    %451 = vst.msk [vmem:[#allocation2] sm:$0x3] %vm450, %v447
    // Predicated region
    $region30: #{mlp_forward.3} parent=1 // pred_check
      _
    $region31: #{mlp_forward.3} parent=1 // pred_check_branch
      %453 = sbr.rel (0) target = $region33
    $region32: #{mlp_forward.3} parent=1 // pred_region
      %s455 = ssub.s32 32, 32
      %456 = vsyncadd [#allocation3], %s455
      %s458 = sshll.u32 [#allocation2], 4
      %s459 = int_to_ptr.vmem [resolvable:$true] %s458
      %461 = dma.vmem_to_hbm [thread:$0]  %s459, 32, %s7, [#allocation3]
    $region33: #{mlp_forward.3} parent=1 // pred_fallthru
      _
    // Predicated region
    $region34: #{mlp_forward.3} parent=1 // pred_check
      _
    $region35: #{mlp_forward.3} parent=1 // pred_check_branch
      %463 = sbr.rel (0) target = $region37
    $region36: #{mlp_forward.3} parent=1 // pred_region
      %464 = dma.done [#allocation3], 32
    $region37: #{mlp_forward.3} parent=1 // pred_fallthru
      _
    %465 = vsyncpa [#allocation3], 1

// kernel: mlp_forward.2
$region0: #{mlp_forward.2}
  #allocation0 [shape = 'u32[]', space=smem, size = 0x4, offset = 0x4, fixed_abs, tag = 'smem constant byte address 0x4 - core index']
  #allocation1 [shape = 'u32[144,128]{1,0:T(1,128)}', space=vmem, size = 0x12000, scoped, tag = 'internal scratch']
  #allocation2 [shape = 'f32[2,128]{1,0:T(2,128)}', space=vmem, size = 0x400, scoped, tag = 'scratch operand']
  %s0 = inlined_call_operand.vmem [shape: bf16[2,49152], index: 0, kind: input, shape index: {}]
  %s1 = inlined_call_operand.hbm [shape: s8[49152,256], index: 1, kind: input, shape index: {}]
  %s2 = inlined_call_operand.hbm [shape: f32[1,256], index: 2, kind: input, shape index: {}]
  %s3 = inlined_call_operand.hbm [shape: f32[1,256], index: 3, kind: input, shape index: {}]
  %s4 = inlined_call_operand.vmem [shape: f32[2,256], index: 4, kind: output, shape index: {}]
  %s5 = sld [smem:[#allocation0]]
  $region69: #{mlp_forward.2} parent=0
    _
  %s7 = ssub.s32 1, %s5
  %s8 = scalar_select 0, %s7, %s5
  $region1: #{mlp_forward.2} parent=0
    #allocation3 [shape = 'u8[6291456]{0}', space=vmem, size = 0x600000, scoped, tag = 'input window, operand 1']
    #allocation4 [shape = 's32[2]{0}', space=sflag, size = 0x8, scoped, tag = 'scoped memory for mlp_forward.2']
    #allocation5 [shape = 'u8[1024]{0}', space=vmem, size = 0x400, scoped, tag = 'input window, operand 2']
    #allocation6 [shape = 's32[2]{0}', space=sflag, size = 0x8, scoped, tag = 'scoped memory for mlp_forward.2']
    #allocation7 [shape = 'u8[1024]{0}', space=vmem, size = 0x400, scoped, tag = 'input window, operand 3']
    %9 = vsyncpa [#allocation4], 0
    %s10 = scalar_lea.sflag [#allocation4], 1
    %11 = vsyncpa %s10, 0
    %12 = vsyncpa [#allocation6], 0
    %s13 = scalar_lea.sflag [#allocation6], 1
    %14 = vsyncpa %s13, 0
    loop: start=0, step=1, limit=6
    $region2: #{mlp_forward.2} parent=1 // loop_pre_header
      _
    $region3: #{mlp_forward.2} parent=1 // loop_header
      %s16 = sphi 0, %s20
      %p17 = scmp.ge.s32.totalorder %s16, 6
      %s23 = sphi 0, %s35
      %s24 = sphi 0, %s31
      %s25 = sphi 0, %s23
      %s26 = sphi 0, %s24
      %s27 = sphi 0, %s25
      %s28 = sphi 0, %s26
      %s38 = sphi 0, %s40
      %s41 = sphi 0, %s38
      %s42 = sphi 0, %s41
      %s58 = sphi 0, %s42
      %s66 = sphi 0, %s68
      %s69 = sphi 0, %s66
      %s70 = sphi 0, %s69
      %s86 = sphi 0, %s70
      %s92 = sphi 0, %s94
      %s95 = sphi 0, %s92
      %s96 = sphi 0, %s95
      %s112 = sphi 0, %s96
      %s118 = sphi 0, %s120
      %s121 = sphi 0, %s118
      %s122 = sphi 0, %s121
      %s138 = sphi 0, %s122
      %s144 = sphi 0, %s146
      %s147 = sphi 0, %s144
      %s148 = sphi 0, %s147
      %s164 = sphi 0, %s148
    $region4: #{mlp_forward.2} parent=1 // loop_header_branch
      %19 = sbr.rel (%p17) target = $region8
    $region5: #{mlp_forward.2} parent=1 // loop_body
      %s21 = ssub.s32 %s16, 1
      %s22 = ssub.s32 %s16, 2
      %s29 = sadd.s32 1, %s24
      %p30 = scmp.ge.s32.totalorder %s29, 2
      %s31 = scalar_select %p30, 0, %s29
      %s32 = sadd.s32 1, %s23
      %s33 = scalar_select %p30, %s32, %s23
      %p34 = scmp.ge.s32.totalorder %s33, 2
      %s35 = scalar_select %p34, 0, %s33
      %s36 = ssub.s32 %s24, %s31
      %p37 = scmp.eq.s32.totalorder %s36, 0
      %s39 = sadd.s32 %s38, 1
      %s40 = scalar_select %p37, %s38, %s39
      %p43 = pneg %p37
      %p44 = scmp.eq.s32.totalorder %s16, 3
      %p45 = por %p43, %p44
      %p46 = scmp.ne.s32.totalorder %s38, %s41
      %p47 = scmp.eq.s32.totalorder %s16, 0
      %p48 = por %p46, %p47
      %p49 = scmp.ne.s32.totalorder %s38, %s41
      %p50 = scmp.eq.s32.totalorder %s21, 3
      %p51 = por %p49, %p50
      %p52 = scmp.ne.s32.totalorder %s41, %s42
      %p53 = scmp.eq.s32.totalorder %s21, 0
      %p54 = por %p52, %p53
      %p55 = scmp.ne.s32.totalorder %s41, %s42
      %p56 = scmp.eq.s32.totalorder %s22, 3
      %p57 = por %p55, %p56
      %p59 = scmp.ne.s32.totalorder %s42, %s58
      %p60 = scmp.eq.s32.totalorder %s22, 0
      %p61 = por %p59, %p60
      %s62 = ssub.s32 %s24, %s31
      %s63 = ssub.s32 %s23, %s35
      %s64 = sor.u32 %s62, %s63
      %p65 = scmp.eq.s32.totalorder %s64, 0
      %s67 = sadd.s32 %s66, 1
      %s68 = scalar_select %p65, %s66, %s67
      %p71 = pneg %p65
      %p72 = scmp.eq.s32.totalorder %s16, 3
      %p73 = por %p71, %p72
      %p74 = scmp.ne.s32.totalorder %s66, %s69
      %p75 = scmp.eq.s32.totalorder %s16, 0
      %p76 = por %p74, %p75
      %p77 = scmp.ne.s32.totalorder %s66, %s69
      %p78 = scmp.eq.s32.totalorder %s21, 3
      %p79 = por %p77, %p78
      %p80 = scmp.ne.s32.totalorder %s69, %s70
      %p81 = scmp.eq.s32.totalorder %s21, 0
      %p82 = por %p80, %p81
      %p83 = scmp.ne.s32.totalorder %s69, %s70
      %p84 = scmp.eq.s32.totalorder %s22, 3
      %p85 = por %p83, %p84
      %p87 = scmp.ne.s32.totalorder %s70, %s86
      %p88 = scmp.eq.s32.totalorder %s22, 0
      %p89 = por %p87, %p88
      %s90 = ssub.s32 %s23, %s35
      %p91 = scmp.eq.s32.totalorder %s90, 0
      %s93 = sadd.s32 %s92, 1
      %s94 = scalar_select %p91, %s92, %s93
      %p97 = pneg %p91
      %p98 = scmp.eq.s32.totalorder %s16, 3
      %p99 = por %p97, %p98
      %p100 = scmp.ne.s32.totalorder %s92, %s95
      %p101 = scmp.eq.s32.totalorder %s16, 0
      %p102 = por %p100, %p101
      %p103 = scmp.ne.s32.totalorder %s92, %s95
      %p104 = scmp.eq.s32.totalorder %s21, 3
      %p105 = por %p103, %p104
      %p106 = scmp.ne.s32.totalorder %s95, %s96
      %p107 = scmp.eq.s32.totalorder %s21, 0
      %p108 = por %p106, %p107
      %p109 = scmp.ne.s32.totalorder %s95, %s96
      %p110 = scmp.eq.s32.totalorder %s22, 3
      %p111 = por %p109, %p110
      %p113 = scmp.ne.s32.totalorder %s96, %s112
      %p114 = scmp.eq.s32.totalorder %s22, 0
      %p115 = por %p113, %p114
      %s116 = ssub.s32 %s23, %s35
      %p117 = scmp.eq.s32.totalorder %s116, 0
      %s119 = sadd.s32 %s118, 1
      %s120 = scalar_select %p117, %s118, %s119
      %p123 = pneg %p117
      %p124 = scmp.eq.s32.totalorder %s16, 3
      %p125 = por %p123, %p124
      %p126 = scmp.ne.s32.totalorder %s118, %s121
      %p127 = scmp.eq.s32.totalorder %s16, 0
      %p128 = por %p126, %p127
      %p129 = scmp.ne.s32.totalorder %s118, %s121
      %p130 = scmp.eq.s32.totalorder %s21, 3
      %p131 = por %p129, %p130
      %p132 = scmp.ne.s32.totalorder %s121, %s122
      %p133 = scmp.eq.s32.totalorder %s21, 0
      %p134 = por %p132, %p133
      %p135 = scmp.ne.s32.totalorder %s121, %s122
      %p136 = scmp.eq.s32.totalorder %s22, 3
      %p137 = por %p135, %p136
      %p139 = scmp.ne.s32.totalorder %s122, %s138
      %p140 = scmp.eq.s32.totalorder %s22, 0
      %p141 = por %p139, %p140
      %s142 = ssub.s32 %s23, %s35
      %p143 = scmp.eq.s32.totalorder %s142, 0
      %s145 = sadd.s32 %s144, 1
      %s146 = scalar_select %p143, %s144, %s145
      %p149 = pneg %p143
      %p150 = scmp.eq.s32.totalorder %s16, 3
      %p151 = por %p149, %p150
      %p152 = scmp.ne.s32.totalorder %s144, %s147
      %p153 = scmp.eq.s32.totalorder %s16, 0
      %p154 = por %p152, %p153
      %p155 = scmp.ne.s32.totalorder %s144, %s147
      %p156 = scmp.eq.s32.totalorder %s21, 3
      %p157 = por %p155, %p156
      %p158 = scmp.ne.s32.totalorder %s147, %s148
      %p159 = scmp.eq.s32.totalorder %s21, 0
      %p160 = por %p158, %p159
      %p161 = scmp.ne.s32.totalorder %s147, %s148
      %p162 = scmp.eq.s32.totalorder %s22, 3
      %p163 = por %p161, %p162
      %p165 = scmp.ne.s32.totalorder %s148, %s164
      %p166 = scmp.eq.s32.totalorder %s22, 0
      %p167 = por %p165, %p166
      %p168 = scmp.le.s32.totalorder 1, %s16
      %p169 = scmp.lt.s32.totalorder %s16, 5
      %p170 = pnand %p168, %p169
      %p171 = pneg %p170
      // Predicated region
      $region9: #{mlp_forward.2} parent=5 // pred_check
        _
      $region10: #{mlp_forward.2} parent=5 // pred_check_branch
        %173 = sbr.rel (%p170) target = $region12
      $region11: #{mlp_forward.2} parent=5 // pred_region
        %s174 = ssub.s32 %s16, 1
      $region12: #{mlp_forward.2} parent=5 // pred_fallthru
        _
      %p175 = scmp.lt.s32.totalorder %s16, 4
      // Predicated region
      $region13: #{mlp_forward.2} parent=5 // pred_check
        %p176 = pneg %p175
      $region14: #{mlp_forward.2} parent=5 // pred_check_branch
        %178 = sbr.rel (%p176) target = $region16
      $region15: #{mlp_forward.2} parent=5 // pred_region
        // Predicated region
        $region17: #{mlp_forward.2} parent=15 // pred_check
          %p179 = pneg %p48
        $region18: #{mlp_forward.2} parent=15 // pred_check_branch
          %181 = sbr.rel (%p179) target = $region20
        $region19: #{mlp_forward.2} parent=15 // pred_region
          %s182 = smul.u32 192, %s24
          %p183 = scmp.lt.s32.totalorder %s182, 383
          %s184 = scalar_select %p183, %s182, 383
          %s185 = scalar_lea.vmem %s0, %s184
          %s186 = smul.u32 192, %s24
        $region20: #{mlp_forward.2} parent=15 // pred_fallthru
          _
        // Predicated region
        $region21: #{mlp_forward.2} parent=15 // pred_check
          %p187 = pneg %p76
        $region22: #{mlp_forward.2} parent=15 // pred_check_branch
          %189 = sbr.rel (%p187) target = $region24
        $region23: #{mlp_forward.2} parent=15 // pred_region
          %s190 = sand.u32 %s66, 1
          %s191 = scalar_lea.sflag [#allocation4], %s190
          %s192 = sand.u32 %s66, 1
          %s193 = smul.addr %s192, 6144
          %s194 = scalar_lea.vmem [#allocation3], %s193
          %s195 = smul.u32 768, %s24
          %s197 = ssub.s32 98304, 98304
          %198 = vsyncadd %s191, %s197
          %s199 = smul.addr %s195, 2
          %s200 = sadd.s32 %s23, %s199
          %s201 = smul.addr %s200, 128
          %s202 = scalar_lea.hbm %s1, %s201
          %s203 = sshll.u32 %s194, 4
          %s204 = int_to_ptr.vmem [resolvable:$true] %s203
          %209 = dma.hbm_to_vmem [thread:$0]  %s202, 98304, %s204, %s191, 256, 128, 8
        $region24: #{mlp_forward.2} parent=15 // pred_fallthru
          _
        // Predicated region
        $region25: #{mlp_forward.2} parent=15 // pred_check
          %p210 = pneg %p102
        $region26: #{mlp_forward.2} parent=15 // pred_check_branch
          %212 = sbr.rel (%p210) target = $region28
        $region27: #{mlp_forward.2} parent=15 // pred_region
          %s213 = sand.u32 %s16, 1
          %s214 = scalar_lea.sflag [#allocation6], %s213
          %s215 = sand.u32 %s92, 1
          %s216 = scalar_lea.vmem [#allocation5], %s215
          %s218 = ssub.s32 16, 16
          %219 = vsyncadd %s214, %s218
          %s220 = smul.addr %s23, 16
          %s221 = scalar_lea.hbm %s2, %s220
          %s223 = sshll.u32 %s216, 4
          %s224 = int_to_ptr.vmem [resolvable:$true] %s223
          %226 = dma.hbm_to_vmem [thread:$0]  %s221, 16, %s224, %s214
        $region28: #{mlp_forward.2} parent=15 // pred_fallthru
          _
        // Predicated region
        $region29: #{mlp_forward.2} parent=15 // pred_check
          %p227 = pneg %p128
        $region30: #{mlp_forward.2} parent=15 // pred_check_branch
          %229 = sbr.rel (%p227) target = $region32
        $region31: #{mlp_forward.2} parent=15 // pred_region
          %s230 = sand.u32 %s16, 1
          %s231 = scalar_lea.sflag [#allocation6], %s230
          %s232 = sand.u32 %s118, 1
          %s233 = scalar_lea.vmem [#allocation7], %s232
          %s235 = ssub.s32 16, 16
          %236 = vsyncadd %s231, %s235
          %s237 = smul.addr %s23, 16
          %s238 = scalar_lea.hbm %s3, %s237
          %s240 = sshll.u32 %s233, 4
          %s241 = int_to_ptr.vmem [resolvable:$true] %s240
          %243 = dma.hbm_to_vmem [thread:$0]  %s238, 16, %s241, %s231
        $region32: #{mlp_forward.2} parent=15 // pred_fallthru
          _
      $region16: #{mlp_forward.2} parent=5 // pred_fallthru
        _
      %p244 = scmp.le.s32.totalorder 1, %s16
      %p245 = scmp.lt.s32.totalorder %s16, 5
      %p246 = pnand %p244, %p245
      %p247 = pneg %p246
      // Predicated region
      $region33: #{mlp_forward.2} parent=5 // pred_check
        _
      $region34: #{mlp_forward.2} parent=5 // pred_check_branch
        %249 = sbr.rel (%p246) target = $region36
      $region35: #{mlp_forward.2} parent=5 // pred_region
        %s250 = ssub.s32 %s16, 1
        %s251 = sand.u32 %s69, 1
        %s252 = scalar_lea.sflag [#allocation4], %s251
        %s253 = sand.u32 %s69, 1
        %s254 = smul.addr %s253, 6144
        %s255 = scalar_lea.vmem [#allocation3], %s254
        // Predicated region
        $region37: #{mlp_forward.2} parent=35 // pred_check
          %p256 = pneg %p82
        $region38: #{mlp_forward.2} parent=35 // pred_check_branch
          %258 = sbr.rel (%p256) target = $region40
        $region39: #{mlp_forward.2} parent=35 // pred_region
          %259 = dma.done %s252, 98304
        $region40: #{mlp_forward.2} parent=35 // pred_fallthru
          _
        %s260 = sand.u32 %s21, 1
        %s261 = scalar_lea.sflag [#allocation6], %s260
        %s262 = sand.u32 %s95, 1
        %s263 = scalar_lea.vmem [#allocation5], %s262
        // Predicated region
        $region41: #{mlp_forward.2} parent=35 // pred_check
          %p264 = pneg %p108
        $region42: #{mlp_forward.2} parent=35 // pred_check_branch
          %266 = sbr.rel (%p264) target = $region44
        $region43: #{mlp_forward.2} parent=35 // pred_region
          %267 = dma.done %s261, 16
        $region44: #{mlp_forward.2} parent=35 // pred_fallthru
          _
        %s268 = sand.u32 %s21, 1
        %s269 = scalar_lea.sflag [#allocation6], %s268
        %s270 = sand.u32 %s121, 1
        %s271 = scalar_lea.vmem [#allocation7], %s270
        // Predicated region
        $region45: #{mlp_forward.2} parent=35 // pred_check
          %p272 = pneg %p134
        $region46: #{mlp_forward.2} parent=35 // pred_check_branch
          %274 = sbr.rel (%p272) target = $region48
        $region47: #{mlp_forward.2} parent=35 // pred_region
          %275 = dma.done %s269, 16
        $region48: #{mlp_forward.2} parent=35 // pred_fallthru
          _
        %s276 = smul.u32 192, %s26
        %p277 = scmp.lt.s32.totalorder %s276, 383
        %s278 = scalar_select %p277, %s276, 383
        %s279 = scalar_lea.vmem %s0, %s278
        %p280 = pneg %p54
        %p281 = pneg %p51
        %s282 = sand.u32 %s69, 1
        %s283 = scalar_lea.sflag [#allocation4], %s282
        %s284 = sand.u32 %s69, 1
        %s285 = smul.addr %s284, 6144
        %s286 = scalar_lea.vmem [#allocation3], %s285
        %p287 = pneg %p82
        %p288 = pneg %p79
        %s289 = sand.u32 %s21, 1
        %s290 = scalar_lea.sflag [#allocation6], %s289
        %s291 = sand.u32 %s95, 1
        %s292 = scalar_lea.vmem [#allocation5], %s291
        %p293 = pneg %p108
        %p294 = pneg %p105
        %s295 = sand.u32 %s21, 1
        %s296 = scalar_lea.sflag [#allocation6], %s295
        %s297 = sand.u32 %s121, 1
        %s298 = scalar_lea.vmem [#allocation7], %s297
        %p299 = pneg %p134
        %p300 = pneg %p131
        %p301 = pneg %p160
        %p302 = pneg %p157
        %p303 = scmp.lt.s32.totalorder %s25, 1
        %s304 = scalar_select %p303, %s25, 1
        %s305 = smul.addr %s304, 2
        %s306 = scalar_lea.vmem %s4, %s305
        %s307 = smul.u32 192, %s26
        %p308 = scmp.lt.s32.totalorder %s307, 383
        %s309 = scalar_select %p308, %s307, 383
        %s310 = scalar_lea.vmem %s0, %s309
        %s311 = smul.u32 192, %s26
        %s312 = smul.u32 768, %s26
        %p313 = scmp.lt.s32.totalorder %s25, 1
        %s314 = scalar_select %p313, %s25, 1
        %s315 = smul.addr %s314, 2
        %s316 = scalar_lea.vmem %s4, %s315
        %p318 = scmp.eq.s32.totalorder %s26, 0
        // Predicated region
        $region49: #{mlp_forward.2} parent=35 // pred_check
          %p319 = pneg %p318
        $region50: #{mlp_forward.2} parent=35 // pred_check_branch
          %321 = sbr.rel (%p319) target = $region52
        $region51: #{mlp_forward.2} parent=35 // pred_region
          %322 = vst [vmem:[#allocation2] sm:$0x3] 0.0
        $region52: #{mlp_forward.2} parent=35 // pred_fallthru
          _
        %v323 = vld [vmem:[#allocation2] sm:$0x3]
        %v324 = vld [vmem:[%s310] sm:$0xff]
        %v325 = vld [vmem:[%s310 + $0x8] sm:$0xff]
        %v326 = vld [vmem:[%s310 + $0x10] sm:$0xff]
        %v327 = vld [vmem:[%s310 + $0x18] sm:$0xff]
        %v328 = vld [vmem:[%s310 + $0x20] sm:$0xff]
        %v329 = vld [vmem:[%s310 + $0x28] sm:$0xff]
        %v330 = vld [vmem:[%s310 + $0x30] sm:$0xff]
        %v331 = vld [vmem:[%s310 + $0x38] sm:$0xff]
        %v332 = vld [vmem:[%s310 + $0x40] sm:$0xff]
        %v333 = vld [vmem:[%s310 + $0x48] sm:$0xff]
        %v334 = vld [vmem:[%s310 + $0x50] sm:$0xff]
        %v335 = vld [vmem:[%s310 + $0x58] sm:$0xff]
        %v336 = vld [vmem:[%s310 + $0x60] sm:$0xff]
        %v337 = vld [vmem:[%s310 + $0x68] sm:$0xff]
        %v338 = vld [vmem:[%s310 + $0x70] sm:$0xff]
        %v339 = vld [vmem:[%s310 + $0x78] sm:$0xff]
        %v340 = vld [vmem:[%s310 + $0x80] sm:$0xff]
        %v341 = vld [vmem:[%s310 + $0x88] sm:$0xff]
        %v342 = vld [vmem:[%s310 + $0x90] sm:$0xff]
        %v343 = vld [vmem:[%s310 + $0x98] sm:$0xff]
        %v344 = vld [vmem:[%s310 + $0xa0] sm:$0xff]
        %v345 = vld [vmem:[%s310 + $0xa8] sm:$0xff]
        %v346 = vld [vmem:[%s310 + $0xb0] sm:$0xff]
        %v347 = vld [vmem:[%s310 + $0xb8] sm:$0xff]
        %v348 = vld [vmem:[%s255] sm:$0xff]
        %v349 = vld [vmem:[%s255 + $0x8] sm:$0xff]
        %v350 = vld [vmem:[%s255 + $0x10] sm:$0xff]
        %v351 = vld [vmem:[%s255 + $0x18] sm:$0xff]
        %v352 = vld [vmem:[%s255 + $0x20] sm:$0xff]
        %v353 = vld [vmem:[%s255 + $0x28] sm:$0xff]
        %v354 = vld [vmem:[%s255 + $0x30] sm:$0xff]
        %v355 = vld [vmem:[%s255 + $0x38] sm:$0xff]
        %v356 = vld [vmem:[%s255 + $0x40] sm:$0xff]
        %v357 = vld [vmem:[%s255 + $0x48] sm:$0xff]
        %v358 = vld [vmem:[%s255 + $0x50] sm:$0xff]
        %v359 = vld [vmem:[%s255 + $0x58] sm:$0xff]
        %v360 = vld [vmem:[%s255 + $0x60] sm:$0xff]
        %v361 = vld [vmem:[%s255 + $0x68] sm:$0xff]
        %v362 = vld [vmem:[%s255 + $0x70] sm:$0xff]
        %v363 = vld [vmem:[%s255 + $0x78] sm:$0xff]
        %v364 = vld [vmem:[%s255 + $0x80] sm:$0xff]
        %v365 = vld [vmem:[%s255 + $0x88] sm:$0xff]
        %v366 = vld [vmem:[%s255 + $0x90] sm:$0xff]
        %v367 = vld [vmem:[%s255 + $0x98] sm:$0xff]
        %v368 = vld [vmem:[%s255 + $0xa0] sm:$0xff]
        %v369 = vld [vmem:[%s255 + $0xa8] sm:$0xff]
        %v370 = vld [vmem:[%s255 + $0xb0] sm:$0xff]
        %v371 = vld [vmem:[%s255 + $0xb8] sm:$0xff]
        %v372 = vld [vmem:[%s255 + $0xc0] sm:$0xff]
        %v373 = vld [vmem:[%s255 + $0xc8] sm:$0xff]
        %v374 = vld [vmem:[%s255 + $0xd0] sm:$0xff]
        %v375 = vld [vmem:[%s255 + $0xd8] sm:$0xff]
        %v376 = vld [vmem:[%s255 + $0xe0] sm:$0xff]
        %v377 = vld [vmem:[%s255 + $0xe8] sm:$0xff]
        %v378 = vld [vmem:[%s255 + $0xf0] sm:$0xff]
        %v379 = vld [vmem:[%s255 + $0xf8] sm:$0xff]
        %v380 = vld [vmem:[%s255 + $0x100] sm:$0xff]
        %v381 = vld [vmem:[%s255 + $0x108] sm:$0xff]
        %v382 = vld [vmem:[%s255 + $0x110] sm:$0xff]
        %v383 = vld [vmem:[%s255 + $0x118] sm:$0xff]
        %v384 = vld [vmem:[%s255 + $0x120] sm:$0xff]
        %v385 = vld [vmem:[%s255 + $0x128] sm:$0xff]
        %v386 = vld [vmem:[%s255 + $0x130] sm:$0xff]
        %v387 = vld [vmem:[%s255 + $0x138] sm:$0xff]
        %v388 = vld [vmem:[%s255 + $0x140] sm:$0xff]
        %v389 = vld [vmem:[%s255 + $0x148] sm:$0xff]
        %v390 = vld [vmem:[%s255 + $0x150] sm:$0xff]
        %v391 = vld [vmem:[%s255 + $0x158] sm:$0xff]
        %v392 = vld [vmem:[%s255 + $0x160] sm:$0xff]
        %v393 = vld [vmem:[%s255 + $0x168] sm:$0xff]
        %v394 = vld [vmem:[%s255 + $0x170] sm:$0xff]
        %v395 = vld [vmem:[%s255 + $0x178] sm:$0xff]
        %v396 = vld [vmem:[%s255 + $0x180] sm:$0xff]
        %v397 = vld [vmem:[%s255 + $0x188] sm:$0xff]
        %v398 = vld [vmem:[%s255 + $0x190] sm:$0xff]
        %v399 = vld [vmem:[%s255 + $0x198] sm:$0xff]
        %v400 = vld [vmem:[%s255 + $0x1a0] sm:$0xff]
        %v401 = vld [vmem:[%s255 + $0x1a8] sm:$0xff]
        %v402 = vld [vmem:[%s255 + $0x1b0] sm:$0xff]
        %v403 = vld [vmem:[%s255 + $0x1b8] sm:$0xff]
        %v404 = vld [vmem:[%s255 + $0x1c0] sm:$0xff]
        %v405 = vld [vmem:[%s255 + $0x1c8] sm:$0xff]
        %v406 = vld [vmem:[%s255 + $0x1d0] sm:$0xff]
        %v407 = vld [vmem:[%s255 + $0x1d8] sm:$0xff]
        %v408 = vld [vmem:[%s255 + $0x1e0] sm:$0xff]
        %v409 = vld [vmem:[%s255 + $0x1e8] sm:$0xff]
        %v410 = vld [vmem:[%s255 + $0x1f0] sm:$0xff]
        %v411 = vld [vmem:[%s255 + $0x1f8] sm:$0xff]
        %v412 = vld [vmem:[%s255 + $0x200] sm:$0xff]
        %v413 = vld [vmem:[%s255 + $0x208] sm:$0xff]
        %v414 = vld [vmem:[%s255 + $0x210] sm:$0xff]
        %v415 = vld [vmem:[%s255 + $0x218] sm:$0xff]
        %v416 = vld [vmem:[%s255 + $0x220] sm:$0xff]
        %v417 = vld [vmem:[%s255 + $0x228] sm:$0xff]
        %v418 = vld [vmem:[%s255 + $0x230] sm:$0xff]
        %v419 = vld [vmem:[%s255 + $0x238] sm:$0xff]
        %v420 = vld [vmem:[%s255 + $0x240] sm:$0xff]
        %v421 = vld [vmem:[%s255 + $0x248] sm:$0xff]
        %v422 = vld [vmem:[%s255 + $0x250] sm:$0xff]
        %v423 = vld [vmem:[%s255 + $0x258] sm:$0xff]
        %v424 = vld [vmem:[%s255 + $0x260] sm:$0xff]
        %v425 = vld [vmem:[%s255 + $0x268] sm:$0xff]
        %v426 = vld [vmem:[%s255 + $0x270] sm:$0xff]
        %v427 = vld [vmem:[%s255 + $0x278] sm:$0xff]
        %v428 = vld [vmem:[%s255 + $0x280] sm:$0xff]
        %v429 = vld [vmem:[%s255 + $0x288] sm:$0xff]
        %v430 = vld [vmem:[%s255 + $0x290] sm:$0xff]
        %v431 = vld [vmem:[%s255 + $0x298] sm:$0xff]
        %v432 = vld [vmem:[%s255 + $0x2a0] sm:$0xff]
        %v433 = vld [vmem:[%s255 + $0x2a8] sm:$0xff]
        %v434 = vld [vmem:[%s255 + $0x2b0] sm:$0xff]
        %v435 = vld [vmem:[%s255 + $0x2b8] sm:$0xff]
        %v436 = vld [vmem:[%s255 + $0x2c0] sm:$0xff]
        %v437 = vld [vmem:[%s255 + $0x2c8] sm:$0xff]
        %v438 = vld [vmem:[%s255 + $0x2d0] sm:$0xff]
        %v439 = vld [vmem:[%s255 + $0x2d8] sm:$0xff]
        %v440 = vld [vmem:[%s255 + $0x2e0] sm:$0xff]
        %v441 = vld [vmem:[%s255 + $0x2e8] sm:$0xff]
        %v442 = vld [vmem:[%s255 + $0x2f0] sm:$0xff]
        %v443 = vld [vmem:[%s255 + $0x2f8] sm:$0xff]
        %v444 = vld [vmem:[%s255 + $0x300] sm:$0xff]
        %v445 = vld [vmem:[%s255 + $0x308] sm:$0xff]
        %v446 = vld [vmem:[%s255 + $0x310] sm:$0xff]
        %v447 = vld [vmem:[%s255 + $0x318] sm:$0xff]
        %v448 = vld [vmem:[%s255 + $0x320] sm:$0xff]
        %v449 = vld [vmem:[%s255 + $0x328] sm:$0xff]
        %v450 = vld [vmem:[%s255 + $0x330] sm:$0xff]
        %v451 = vld [vmem:[%s255 + $0x338] sm:$0xff]
        %v452 = vld [vmem:[%s255 + $0x340] sm:$0xff]
        %v453 = vld [vmem:[%s255 + $0x348] sm:$0xff]
        %v454 = vld [vmem:[%s255 + $0x350] sm:$0xff]
        %v455 = vld [vmem:[%s255 + $0x358] sm:$0xff]
        %v456 = vld [vmem:[%s255 + $0x360] sm:$0xff]
        %v457 = vld [vmem:[%s255 + $0x368] sm:$0xff]
        %v458 = vld [vmem:[%s255 + $0x370] sm:$0xff]
        %v459 = vld [vmem:[%s255 + $0x378] sm:$0xff]
        %v460 = vld [vmem:[%s255 + $0x380] sm:$0xff]
        %v461 = vld [vmem:[%s255 + $0x388] sm:$0xff]
        %v462 = vld [vmem:[%s255 + $0x390] sm:$0xff]
        %v463 = vld [vmem:[%s255 + $0x398] sm:$0xff]
        %v464 = vld [vmem:[%s255 + $0x3a0] sm:$0xff]
        %v465 = vld [vmem:[%s255 + $0x3a8] sm:$0xff]
        %v466 = vld [vmem:[%s255 + $0x3b0] sm:$0xff]
        %v467 = vld [vmem:[%s255 + $0x3b8] sm:$0xff]
        %v468 = vld [vmem:[%s255 + $0x3c0] sm:$0xff]
        %v469 = vld [vmem:[%s255 + $0x3c8] sm:$0xff]
        %v470 = vld [vmem:[%s255 + $0x3d0] sm:$0xff]
        %v471 = vld [vmem:[%s255 + $0x3d8] sm:$0xff]
        %v472 = vld [vmem:[%s255 + $0x3e0] sm:$0xff]
        %v473 = vld [vmem:[%s255 + $0x3e8] sm:$0xff]
        %v474 = vld [vmem:[%s255 + $0x3f0] sm:$0xff]
        %v475 = vld [vmem:[%s255 + $0x3f8] sm:$0xff]
        %v476 = vld [vmem:[%s255 + $0x400] sm:$0xff]
        %v477 = vld [vmem:[%s255 + $0x408] sm:$0xff]
        %v478 = vld [vmem:[%s255 + $0x410] sm:$0xff]
        %v479 = vld [vmem:[%s255 + $0x418] sm:$0xff]
        %v480 = vld [vmem:[%s255 + $0x420] sm:$0xff]
        %v481 = vld [vmem:[%s255 + $0x428] sm:$0xff]
        %v482 = vld [vmem:[%s255 + $0x430] sm:$0xff]
        %v483 = vld [vmem:[%s255 + $0x438] sm:$0xff]
        %v484 = vld [vmem:[%s255 + $0x440] sm:$0xff]
        %v485 = vld [vmem:[%s255 + $0x448] sm:$0xff]
        %v486 = vld [vmem:[%s255 + $0x450] sm:$0xff]
        %v487 = vld [vmem:[%s255 + $0x458] sm:$0xff]
        %v488 = vld [vmem:[%s255 + $0x460] sm:$0xff]
        %v489 = vld [vmem:[%s255 + $0x468] sm:$0xff]
        %v490 = vld [vmem:[%s255 + $0x470] sm:$0xff]
        %v491 = vld [vmem:[%s255 + $0x478] sm:$0xff]
        %v492 = vld [vmem:[%s255 + $0x480] sm:$0xff]
        %v493 = vld [vmem:[%s255 + $0x488] sm:$0xff]
        %v494 = vld [vmem:[%s255 + $0x490] sm:$0xff]
        %v495 = vld [vmem:[%s255 + $0x498] sm:$0xff]
        %v496 = vld [vmem:[%s255 + $0x4a0] sm:$0xff]
        %v497 = vld [vmem:[%s255 + $0x4a8] sm:$0xff]
        %v498 = vld [vmem:[%s255 + $0x4b0] sm:$0xff]
        %v499 = vld [vmem:[%s255 + $0x4b8] sm:$0xff]
        %v500 = vld [vmem:[%s255 + $0x4c0] sm:$0xff]
        %v501 = vld [vmem:[%s255 + $0x4c8] sm:$0xff]
        %v502 = vld [vmem:[%s255 + $0x4d0] sm:$0xff]
        %v503 = vld [vmem:[%s255 + $0x4d8] sm:$0xff]
        %v504 = vld [vmem:[%s255 + $0x4e0] sm:$0xff]
        %v505 = vld [vmem:[%s255 + $0x4e8] sm:$0xff]
        %v506 = vld [vmem:[%s255 + $0x4f0] sm:$0xff]
        %v507 = vld [vmem:[%s255 + $0x4f8] sm:$0xff]
        %v508 = vld [vmem:[%s255 + $0x500] sm:$0xff]
        %v509 = vld [vmem:[%s255 + $0x508] sm:$0xff]
        %v510 = vld [vmem:[%s255 + $0x510] sm:$0xff]
        %v511 = vld [vmem:[%s255 + $0x518] sm:$0xff]
        %v512 = vld [vmem:[%s255 + $0x520] sm:$0xff]
        %v513 = vld [vmem:[%s255 + $0x528] sm:$0xff]
        %v514 = vld [vmem:[%s255 + $0x530] sm:$0xff]
        %v515 = vld [vmem:[%s255 + $0x538] sm:$0xff]
        %v516 = vld [vmem:[%s255 + $0x540] sm:$0xff]
        %v517 = vld [vmem:[%s255 + $0x548] sm:$0xff]
        %v518 = vld [vmem:[%s255 + $0x550] sm:$0xff]
        %v519 = vld [vmem:[%s255 + $0x558] sm:$0xff]
        %v520 = vld [vmem:[%s255 + $0x560] sm:$0xff]
        %v521 = vld [vmem:[%s255 + $0x568] sm:$0xff]
        %v522 = vld [vmem:[%s255 + $0x570] sm:$0xff]
        %v523 = vld [vmem:[%s255 + $0x578] sm:$0xff]
        %v524 = vld [vmem:[%s255 + $0x580] sm:$0xff]
        %v525 = vld [vmem:[%s255 + $0x588] sm:$0xff]
        %v526 = vld [vmem:[%s255 + $0x590] sm:$0xff]
        %v527 = vld [vmem:[%s255 + $0x598] sm:$0xff]
        %v528 = vld [vmem:[%s255 + $0x5a0] sm:$0xff]
        %v529 = vld [vmem:[%s255 + $0x5a8] sm:$0xff]
        %v530 = vld [vmem:[%s255 + $0x5b0] sm:$0xff]
        %v531 = vld [vmem:[%s255 + $0x5b8] sm:$0xff]
        %v532 = vld [vmem:[%s255 + $0x5c0] sm:$0xff]
        %v533 = vld [vmem:[%s255 + $0x5c8] sm:$0xff]
        %v534 = vld [vmem:[%s255 + $0x5d0] sm:$0xff]
        %v535 = vld [vmem:[%s255 + $0x5d8] sm:$0xff]
        %v536 = vld [vmem:[%s255 + $0x5e0] sm:$0xff]
        %v537 = vld [vmem:[%s255 + $0x5e8] sm:$0xff]
        %v538 = vld [vmem:[%s255 + $0x5f0] sm:$0xff]
        %v539 = vld [vmem:[%s255 + $0x5f8] sm:$0xff]
        %v540 = vld [vmem:[%s255 + $0x600] sm:$0xff]
        %v541 = vld [vmem:[%s255 + $0x608] sm:$0xff]
        %v542 = vld [vmem:[%s255 + $0x610] sm:$0xff]
        %v543 = vld [vmem:[%s255 + $0x618] sm:$0xff]
        %v544 = vld [vmem:[%s255 + $0x620] sm:$0xff]
        %v545 = vld [vmem:[%s255 + $0x628] sm:$0xff]
        %v546 = vld [vmem:[%s255 + $0x630] sm:$0xff]
        %v547 = vld [vmem:[%s255 + $0x638] sm:$0xff]
        %v548 = vld [vmem:[%s255 + $0x640] sm:$0xff]
        %v549 = vld [vmem:[%s255 + $0x648] sm:$0xff]
        %v550 = vld [vmem:[%s255 + $0x650] sm:$0xff]
        %v551 = vld [vmem:[%s255 + $0x658] sm:$0xff]
        %v552 = vld [vmem:[%s255 + $0x660] sm:$0xff]
        %v553 = vld [vmem:[%s255 + $0x668] sm:$0xff]
        %v554 = vld [vmem:[%s255 + $0x670] sm:$0xff]
        %v555 = vld [vmem:[%s255 + $0x678] sm:$0xff]
        %v556 = vld [vmem:[%s255 + $0x680] sm:$0xff]
        %v557 = vld [vmem:[%s255 + $0x688] sm:$0xff]
        %v558 = vld [vmem:[%s255 + $0x690] sm:$0xff]
        %v559 = vld [vmem:[%s255 + $0x698] sm:$0xff]
        %v560 = vld [vmem:[%s255 + $0x6a0] sm:$0xff]
        %v561 = vld [vmem:[%s255 + $0x6a8] sm:$0xff]
        %v562 = vld [vmem:[%s255 + $0x6b0] sm:$0xff]
        %v563 = vld [vmem:[%s255 + $0x6b8] sm:$0xff]
        %v564 = vld [vmem:[%s255 + $0x6c0] sm:$0xff]
        %v565 = vld [vmem:[%s255 + $0x6c8] sm:$0xff]
        %v566 = vld [vmem:[%s255 + $0x6d0] sm:$0xff]
        %v567 = vld [vmem:[%s255 + $0x6d8] sm:$0xff]
        %v568 = vld [vmem:[%s255 + $0x6e0] sm:$0xff]
        %v569 = vld [vmem:[%s255 + $0x6e8] sm:$0xff]
        %v570 = vld [vmem:[%s255 + $0x6f0] sm:$0xff]
        %v571 = vld [vmem:[%s255 + $0x6f8] sm:$0xff]
        %v572 = vld [vmem:[%s255 + $0x700] sm:$0xff]
        %v573 = vld [vmem:[%s255 + $0x708] sm:$0xff]
        %v574 = vld [vmem:[%s255 + $0x710] sm:$0xff]
        %v575 = vld [vmem:[%s255 + $0x718] sm:$0xff]
        %v576 = vld [vmem:[%s255 + $0x720] sm:$0xff]
        %v577 = vld [vmem:[%s255 + $0x728] sm:$0xff]
        %v578 = vld [vmem:[%s255 + $0x730] sm:$0xff]
        %v579 = vld [vmem:[%s255 + $0x738] sm:$0xff]
        %v580 = vld [vmem:[%s255 + $0x740] sm:$0xff]
        %v581 = vld [vmem:[%s255 + $0x748] sm:$0xff]
        %v582 = vld [vmem:[%s255 + $0x750] sm:$0xff]
        %v583 = vld [vmem:[%s255 + $0x758] sm:$0xff]
        %v584 = vld [vmem:[%s255 + $0x760] sm:$0xff]
        %v585 = vld [vmem:[%s255 + $0x768] sm:$0xff]
        %v586 = vld [vmem:[%s255 + $0x770] sm:$0xff]
        %v587 = vld [vmem:[%s255 + $0x778] sm:$0xff]
        %v588 = vld [vmem:[%s255 + $0x780] sm:$0xff]
        %v589 = vld [vmem:[%s255 + $0x788] sm:$0xff]
        %v590 = vld [vmem:[%s255 + $0x790] sm:$0xff]
        %v591 = vld [vmem:[%s255 + $0x798] sm:$0xff]
        %v592 = vld [vmem:[%s255 + $0x7a0] sm:$0xff]
        %v593 = vld [vmem:[%s255 + $0x7a8] sm:$0xff]
        %v594 = vld [vmem:[%s255 + $0x7b0] sm:$0xff]
        %v595 = vld [vmem:[%s255 + $0x7b8] sm:$0xff]
        %v596 = vld [vmem:[%s255 + $0x7c0] sm:$0xff]
        %v597 = vld [vmem:[%s255 + $0x7c8] sm:$0xff]
        %v598 = vld [vmem:[%s255 + $0x7d0] sm:$0xff]
        %v599 = vld [vmem:[%s255 + $0x7d8] sm:$0xff]
        %v600 = vld [vmem:[%s255 + $0x7e0] sm:$0xff]
        %v601 = vld [vmem:[%s255 + $0x7e8] sm:$0xff]
        %v602 = vld [vmem:[%s255 + $0x7f0] sm:$0xff]
        %v603 = vld [vmem:[%s255 + $0x7f8] sm:$0xff]
        %v604 = vld [vmem:[%s255 + $0x800] sm:$0xff]
        %v605 = vld [vmem:[%s255 + $0x808] sm:$0xff]
        %v606 = vld [vmem:[%s255 + $0x810] sm:$0xff]
        %v607 = vld [vmem:[%s255 + $0x818] sm:$0xff]
        %v608 = vld [vmem:[%s255 + $0x820] sm:$0xff]
        %v609 = vld [vmem:[%s255 + $0x828] sm:$0xff]
        %v610 = vld [vmem:[%s255 + $0x830] sm:$0xff]
        %v611 = vld [vmem:[%s255 + $0x838] sm:$0xff]
        %v612 = vld [vmem:[%s255 + $0x840] sm:$0xff]
        %v613 = vld [vmem:[%s255 + $0x848] sm:$0xff]
        %v614 = vld [vmem:[%s255 + $0x850] sm:$0xff]
        %v615 = vld [vmem:[%s255 + $0x858] sm:$0xff]
        %v616 = vld [vmem:[%s255 + $0x860] sm:$0xff]
        %v617 = vld [vmem:[%s255 + $0x868] sm:$0xff]
        %v618 = vld [vmem:[%s255 + $0x870] sm:$0xff]
        %v619 = vld [vmem:[%s255 + $0x878] sm:$0xff]
        %v620 = vld [vmem:[%s255 + $0x880] sm:$0xff]
        %v621 = vld [vmem:[%s255 + $0x888] sm:$0xff]
        %v622 = vld [vmem:[%s255 + $0x890] sm:$0xff]
        %v623 = vld [vmem:[%s255 + $0x898] sm:$0xff]
        %v624 = vld [vmem:[%s255 + $0x8a0] sm:$0xff]
        %v625 = vld [vmem:[%s255 + $0x8a8] sm:$0xff]
        %v626 = vld [vmem:[%s255 + $0x8b0] sm:$0xff]
        %v627 = vld [vmem:[%s255 + $0x8b8] sm:$0xff]
        %v628 = vld [vmem:[%s255 + $0x8c0] sm:$0xff]
        %v629 = vld [vmem:[%s255 + $0x8c8] sm:$0xff]
        %v630 = vld [vmem:[%s255 + $0x8d0] sm:$0xff]
        %v631 = vld [vmem:[%s255 + $0x8d8] sm:$0xff]
        %v632 = vld [vmem:[%s255 + $0x8e0] sm:$0xff]
        %v633 = vld [vmem:[%s255 + $0x8e8] sm:$0xff]
        %v634 = vld [vmem:[%s255 + $0x8f0] sm:$0xff]
        %v635 = vld [vmem:[%s255 + $0x8f8] sm:$0xff]
        %v636 = vld [vmem:[%s255 + $0x900] sm:$0xff]
        %v637 = vld [vmem:[%s255 + $0x908] sm:$0xff]
        %v638 = vld [vmem:[%s255 + $0x910] sm:$0xff]
        %v639 = vld [vmem:[%s255 + $0x918] sm:$0xff]
        %v640 = vld [vmem:[%s255 + $0x920] sm:$0xff]
        %v641 = vld [vmem:[%s255 + $0x928] sm:$0xff]
        %v642 = vld [vmem:[%s255 + $0x930] sm:$0xff]
        %v643 = vld [vmem:[%s255 + $0x938] sm:$0xff]
        %v644 = vld [vmem:[%s255 + $0x940] sm:$0xff]
        %v645 = vld [vmem:[%s255 + $0x948] sm:$0xff]
        %v646 = vld [vmem:[%s255 + $0x950] sm:$0xff]
        %v647 = vld [vmem:[%s255 + $0x958] sm:$0xff]
        %v648 = vld [vmem:[%s255 + $0x960] sm:$0xff]
        %v649 = vld [vmem:[%s255 + $0x968] sm:$0xff]
        %v650 = vld [vmem:[%s255 + $0x970] sm:$0xff]
        %v651 = vld [vmem:[%s255 + $0x978] sm:$0xff]
        %v652 = vld [vmem:[%s255 + $0x980] sm:$0xff]
        %v653 = vld [vmem:[%s255 + $0x988] sm:$0xff]
        %v654 = vld [vmem:[%s255 + $0x990] sm:$0xff]
        %v655 = vld [vmem:[%s255 + $0x998] sm:$0xff]
        %v656 = vld [vmem:[%s255 + $0x9a0] sm:$0xff]
        %v657 = vld [vmem:[%s255 + $0x9a8] sm:$0xff]
        %v658 = vld [vmem:[%s255 + $0x9b0] sm:$0xff]
        %v659 = vld [vmem:[%s255 + $0x9b8] sm:$0xff]
        %v660 = vld [vmem:[%s255 + $0x9c0] sm:$0xff]
        %v661 = vld [vmem:[%s255 + $0x9c8] sm:$0xff]
        %v662 = vld [vmem:[%s255 + $0x9d0] sm:$0xff]
        %v663 = vld [vmem:[%s255 + $0x9d8] sm:$0xff]
        %v664 = vld [vmem:[%s255 + $0x9e0] sm:$0xff]
        %v665 = vld [vmem:[%s255 + $0x9e8] sm:$0xff]
        %v666 = vld [vmem:[%s255 + $0x9f0] sm:$0xff]
        %v667 = vld [vmem:[%s255 + $0x9f8] sm:$0xff]
        %v668 = vld [vmem:[%s255 + $0xa00] sm:$0xff]
        %v669 = vld [vmem:[%s255 + $0xa08] sm:$0xff]
        %v670 = vld [vmem:[%s255 + $0xa10] sm:$0xff]
        %v671 = vld [vmem:[%s255 + $0xa18] sm:$0xff]
        %v672 = vld [vmem:[%s255 + $0xa20] sm:$0xff]
        %v673 = vld [vmem:[%s255 + $0xa28] sm:$0xff]
        %v674 = vld [vmem:[%s255 + $0xa30] sm:$0xff]
        %v675 = vld [vmem:[%s255 + $0xa38] sm:$0xff]
        %v676 = vld [vmem:[%s255 + $0xa40] sm:$0xff]
        %v677 = vld [vmem:[%s255 + $0xa48] sm:$0xff]
        %v678 = vld [vmem:[%s255 + $0xa50] sm:$0xff]
        %v679 = vld [vmem:[%s255 + $0xa58] sm:$0xff]
        %v680 = vld [vmem:[%s255 + $0xa60] sm:$0xff]
        %v681 = vld [vmem:[%s255 + $0xa68] sm:$0xff]
        %v682 = vld [vmem:[%s255 + $0xa70] sm:$0xff]
        %v683 = vld [vmem:[%s255 + $0xa78] sm:$0xff]
        %v684 = vld [vmem:[%s255 + $0xa80] sm:$0xff]
        %v685 = vld [vmem:[%s255 + $0xa88] sm:$0xff]
        %v686 = vld [vmem:[%s255 + $0xa90] sm:$0xff]
        %v687 = vld [vmem:[%s255 + $0xa98] sm:$0xff]
        %v688 = vld [vmem:[%s255 + $0xaa0] sm:$0xff]
        %v689 = vld [vmem:[%s255 + $0xaa8] sm:$0xff]
        %v690 = vld [vmem:[%s255 + $0xab0] sm:$0xff]
        %v691 = vld [vmem:[%s255 + $0xab8] sm:$0xff]
        %v692 = vld [vmem:[%s255 + $0xac0] sm:$0xff]
        %v693 = vld [vmem:[%s255 + $0xac8] sm:$0xff]
        %v694 = vld [vmem:[%s255 + $0xad0] sm:$0xff]
        %v695 = vld [vmem:[%s255 + $0xad8] sm:$0xff]
        %v696 = vld [vmem:[%s255 + $0xae0] sm:$0xff]
        %v697 = vld [vmem:[%s255 + $0xae8] sm:$0xff]
        %v698 = vld [vmem:[%s255 + $0xaf0] sm:$0xff]
        %v699 = vld [vmem:[%s255 + $0xaf8] sm:$0xff]
        %v700 = vld [vmem:[%s255 + $0xb00] sm:$0xff]
        %v701 = vld [vmem:[%s255 + $0xb08] sm:$0xff]
        %v702 = vld [vmem:[%s255 + $0xb10] sm:$0xff]
        %v703 = vld [vmem:[%s255 + $0xb18] sm:$0xff]
        %v704 = vld [vmem:[%s255 + $0xb20] sm:$0xff]
        %v705 = vld [vmem:[%s255 + $0xb28] sm:$0xff]
        %v706 = vld [vmem:[%s255 + $0xb30] sm:$0xff]
        %v707 = vld [vmem:[%s255 + $0xb38] sm:$0xff]
        %v708 = vld [vmem:[%s255 + $0xb40] sm:$0xff]
        %v709 = vld [vmem:[%s255 + $0xb48] sm:$0xff]
        %v710 = vld [vmem:[%s255 + $0xb50] sm:$0xff]
        %v711 = vld [vmem:[%s255 + $0xb58] sm:$0xff]
        %v712 = vld [vmem:[%s255 + $0xb60] sm:$0xff]
        %v713 = vld [vmem:[%s255 + $0xb68] sm:$0xff]
        %v714 = vld [vmem:[%s255 + $0xb70] sm:$0xff]
        %v715 = vld [vmem:[%s255 + $0xb78] sm:$0xff]
        %v716 = vld [vmem:[%s255 + $0xb80] sm:$0xff]
        %v717 = vld [vmem:[%s255 + $0xb88] sm:$0xff]
        %v718 = vld [vmem:[%s255 + $0xb90] sm:$0xff]
        %v719 = vld [vmem:[%s255 + $0xb98] sm:$0xff]
        %v720 = vld [vmem:[%s255 + $0xba0] sm:$0xff]
        %v721 = vld [vmem:[%s255 + $0xba8] sm:$0xff]
        %v722 = vld [vmem:[%s255 + $0xbb0] sm:$0xff]
        %v723 = vld [vmem:[%s255 + $0xbb8] sm:$0xff]
        %v724 = vld [vmem:[%s255 + $0xbc0] sm:$0xff]
        %v725 = vld [vmem:[%s255 + $0xbc8] sm:$0xff]
        %v726 = vld [vmem:[%s255 + $0xbd0] sm:$0xff]
        %v727 = vld [vmem:[%s255 + $0xbd8] sm:$0xff]
        %v728 = vld [vmem:[%s255 + $0xbe0] sm:$0xff]
        %v729 = vld [vmem:[%s255 + $0xbe8] sm:$0xff]
        %v730 = vld [vmem:[%s255 + $0xbf0] sm:$0xff]
        %v731 = vld [vmem:[%s255 + $0xbf8] sm:$0xff]
        %v732 = vld [vmem:[%s255 + $0xc00] sm:$0xff]
        %v733 = vld [vmem:[%s255 + $0xc08] sm:$0xff]
        %v734 = vld [vmem:[%s255 + $0xc10] sm:$0xff]
        %v735 = vld [vmem:[%s255 + $0xc18] sm:$0xff]
        %v736 = vld [vmem:[%s255 + $0xc20] sm:$0xff]
        %v737 = vld [vmem:[%s255 + $0xc28] sm:$0xff]
        %v738 = vld [vmem:[%s255 + $0xc30] sm:$0xff]
        %v739 = vld [vmem:[%s255 + $0xc38] sm:$0xff]
        %v740 = vld [vmem:[%s255 + $0xc40] sm:$0xff]
        %v741 = vld [vmem:[%s255 + $0xc48] sm:$0xff]
        %v742 = vld [vmem:[%s255 + $0xc50] sm:$0xff]
        %v743 = vld [vmem:[%s255 + $0xc58] sm:$0xff]
        %v744 = vld [vmem:[%s255 + $0xc60] sm:$0xff]
        %v745 = vld [vmem:[%s255 + $0xc68] sm:$0xff]
        %v746 = vld [vmem:[%s255 + $0xc70] sm:$0xff]
        %v747 = vld [vmem:[%s255 + $0xc78] sm:$0xff]
        %v748 = vld [vmem:[%s255 + $0xc80] sm:$0xff]
        %v749 = vld [vmem:[%s255 + $0xc88] sm:$0xff]
        %v750 = vld [vmem:[%s255 + $0xc90] sm:$0xff]
        %v751 = vld [vmem:[%s255 + $0xc98] sm:$0xff]
        %v752 = vld [vmem:[%s255 + $0xca0] sm:$0xff]
        %v753 = vld [vmem:[%s255 + $0xca8] sm:$0xff]
        %v754 = vld [vmem:[%s255 + $0xcb0] sm:$0xff]
        %v755 = vld [vmem:[%s255 + $0xcb8] sm:$0xff]
        %v756 = vld [vmem:[%s255 + $0xcc0] sm:$0xff]
        %v757 = vld [vmem:[%s255 + $0xcc8] sm:$0xff]
        %v758 = vld [vmem:[%s255 + $0xcd0] sm:$0xff]
        %v759 = vld [vmem:[%s255 + $0xcd8] sm:$0xff]
        %v760 = vld [vmem:[%s255 + $0xce0] sm:$0xff]
        %v761 = vld [vmem:[%s255 + $0xce8] sm:$0xff]
        %v762 = vld [vmem:[%s255 + $0xcf0] sm:$0xff]
        %v763 = vld [vmem:[%s255 + $0xcf8] sm:$0xff]
        %v764 = vld [vmem:[%s255 + $0xd00] sm:$0xff]
        %v765 = vld [vmem:[%s255 + $0xd08] sm:$0xff]
        %v766 = vld [vmem:[%s255 + $0xd10] sm:$0xff]
        %v767 = vld [vmem:[%s255 + $0xd18] sm:$0xff]
        %v768 = vld [vmem:[%s255 + $0xd20] sm:$0xff]
        %v769 = vld [vmem:[%s255 + $0xd28] sm:$0xff]
        %v770 = vld [vmem:[%s255 + $0xd30] sm:$0xff]
        %v771 = vld [vmem:[%s255 + $0xd38] sm:$0xff]
        %v772 = vld [vmem:[%s255 + $0xd40] sm:$0xff]
        %v773 = vld [vmem:[%s255 + $0xd48] sm:$0xff]
        %v774 = vld [vmem:[%s255 + $0xd50] sm:$0xff]
        %v775 = vld [vmem:[%s255 + $0xd58] sm:$0xff]
        %v776 = vld [vmem:[%s255 + $0xd60] sm:$0xff]
        %v777 = vld [vmem:[%s255 + $0xd68] sm:$0xff]
        %v778 = vld [vmem:[%s255 + $0xd70] sm:$0xff]
        %v779 = vld [vmem:[%s255 + $0xd78] sm:$0xff]
        %v780 = vld [vmem:[%s255 + $0xd80] sm:$0xff]
        %v781 = vld [vmem:[%s255 + $0xd88] sm:$0xff]
        %v782 = vld [vmem:[%s255 + $0xd90] sm:$0xff]
        %v783 = vld [vmem:[%s255 + $0xd98] sm:$0xff]
        %v784 = vld [vmem:[%s255 + $0xda0] sm:$0xff]
        %v785 = vld [vmem:[%s255 + $0xda8] sm:$0xff]
        %v786 = vld [vmem:[%s255 + $0xdb0] sm:$0xff]
        %v787 = vld [vmem:[%s255 + $0xdb8] sm:$0xff]
        %v788 = vld [vmem:[%s255 + $0xdc0] sm:$0xff]
        %v789 = vld [vmem:[%s255 + $0xdc8] sm:$0xff]
        %v790 = vld [vmem:[%s255 + $0xdd0] sm:$0xff]
        %v791 = vld [vmem:[%s255 + $0xdd8] sm:$0xff]
        %v792 = vld [vmem:[%s255 + $0xde0] sm:$0xff]
        %v793 = vld [vmem:[%s255 + $0xde8] sm:$0xff]
        %v794 = vld [vmem:[%s255 + $0xdf0] sm:$0xff]
        %v795 = vld [vmem:[%s255 + $0xdf8] sm:$0xff]
        %v796 = vld [vmem:[%s255 + $0xe00] sm:$0xff]
        %v797 = vld [vmem:[%s255 + $0xe08] sm:$0xff]
        %v798 = vld [vmem:[%s255 + $0xe10] sm:$0xff]
        %v799 = vld [vmem:[%s255 + $0xe18] sm:$0xff]
        %v800 = vld [vmem:[%s255 + $0xe20] sm:$0xff]
        %v801 = vld [vmem:[%s255 + $0xe28] sm:$0xff]
        %v802 = vld [vmem:[%s255 + $0xe30] sm:$0xff]
        %v803 = vld [vmem:[%s255 + $0xe38] sm:$0xff]
        %v804 = vld [vmem:[%s255 + $0xe40] sm:$0xff]
        %v805 = vld [vmem:[%s255 + $0xe48] sm:$0xff]
        %v806 = vld [vmem:[%s255 + $0xe50] sm:$0xff]
        %v807 = vld [vmem:[%s255 + $0xe58] sm:$0xff]
        %v808 = vld [vmem:[%s255 + $0xe60] sm:$0xff]
        %v809 = vld [vmem:[%s255 + $0xe68] sm:$0xff]
        %v810 = vld [vmem:[%s255 + $0xe70] sm:$0xff]
        %v811 = vld [vmem:[%s255 + $0xe78] sm:$0xff]
        %v812 = vld [vmem:[%s255 + $0xe80] sm:$0xff]
        %v813 = vld [vmem:[%s255 + $0xe88] sm:$0xff]
        %v814 = vld [vmem:[%s255 + $0xe90] sm:$0xff]
        %v815 = vld [vmem:[%s255 + $0xe98] sm:$0xff]
        %v816 = vld [vmem:[%s255 + $0xea0] sm:$0xff]
        %v817 = vld [vmem:[%s255 + $0xea8] sm:$0xff]
        %v818 = vld [vmem:[%s255 + $0xeb0] sm:$0xff]
        %v819 = vld [vmem:[%s255 + $0xeb8] sm:$0xff]
        %v820 = vld [vmem:[%s255 + $0xec0] sm:$0xff]
        %v821 = vld [vmem:[%s255 + $0xec8] sm:$0xff]
        %v822 = vld [vmem:[%s255 + $0xed0] sm:$0xff]
        %v823 = vld [vmem:[%s255 + $0xed8] sm:$0xff]
        %v824 = vld [vmem:[%s255 + $0xee0] sm:$0xff]
        %v825 = vld [vmem:[%s255 + $0xee8] sm:$0xff]
        %v826 = vld [vmem:[%s255 + $0xef0] sm:$0xff]
        %v827 = vld [vmem:[%s255 + $0xef8] sm:$0xff]
        %v828 = vld [vmem:[%s255 + $0xf00] sm:$0xff]
        %v829 = vld [vmem:[%s255 + $0xf08] sm:$0xff]
        %v830 = vld [vmem:[%s255 + $0xf10] sm:$0xff]
        %v831 = vld [vmem:[%s255 + $0xf18] sm:$0xff]
        %v832 = vld [vmem:[%s255 + $0xf20] sm:$0xff]
        %v833 = vld [vmem:[%s255 + $0xf28] sm:$0xff]
        %v834 = vld [vmem:[%s255 + $0xf30] sm:$0xff]
        %v835 = vld [vmem:[%s255 + $0xf38] sm:$0xff]
        %v836 = vld [vmem:[%s255 + $0xf40] sm:$0xff]
        %v837 = vld [vmem:[%s255 + $0xf48] sm:$0xff]
        %v838 = vld [vmem:[%s255 + $0xf50] sm:$0xff]
        %v839 = vld [vmem:[%s255 + $0xf58] sm:$0xff]
        %v840 = vld [vmem:[%s255 + $0xf60] sm:$0xff]
        %v841 = vld [vmem:[%s255 + $0xf68] sm:$0xff]
        %v842 = vld [vmem:[%s255 + $0xf70] sm:$0xff]
        %v843 = vld [vmem:[%s255 + $0xf78] sm:$0xff]
        %v844 = vld [vmem:[%s255 + $0xf80] sm:$0xff]
        %v845 = vld [vmem:[%s255 + $0xf88] sm:$0xff]
        %v846 = vld [vmem:[%s255 + $0xf90] sm:$0xff]
        %v847 = vld [vmem:[%s255 + $0xf98] sm:$0xff]
        %v848 = vld [vmem:[%s255 + $0xfa0] sm:$0xff]
        %v849 = vld [vmem:[%s255 + $0xfa8] sm:$0xff]
        %v850 = vld [vmem:[%s255 + $0xfb0] sm:$0xff]
        %v851 = vld [vmem:[%s255 + $0xfb8] sm:$0xff]
        %v852 = vld [vmem:[%s255 + $0xfc0] sm:$0xff]
        %v853 = vld [vmem:[%s255 + $0xfc8] sm:$0xff]
        %v854 = vld [vmem:[%s255 + $0xfd0] sm:$0xff]
        %v855 = vld [vmem:[%s255 + $0xfd8] sm:$0xff]
        %v856 = vld [vmem:[%s255 + $0xfe0] sm:$0xff]
        %v857 = vld [vmem:[%s255 + $0xfe8] sm:$0xff]
        %v858 = vld [vmem:[%s255 + $0xff0] sm:$0xff]
        %v859 = vld [vmem:[%s255 + $0xff8] sm:$0xff]
        %v860 = vld [vmem:[%s255 + $0x1000] sm:$0xff]
        %v861 = vld [vmem:[%s255 + $0x1008] sm:$0xff]
        %v862 = vld [vmem:[%s255 + $0x1010] sm:$0xff]
        %v863 = vld [vmem:[%s255 + $0x1018] sm:$0xff]
        %v864 = vld [vmem:[%s255 + $0x1020] sm:$0xff]
        %v865 = vld [vmem:[%s255 + $0x1028] sm:$0xff]
        %v866 = vld [vmem:[%s255 + $0x1030] sm:$0xff]
        %v867 = vld [vmem:[%s255 + $0x1038] sm:$0xff]
        %v868 = vld [vmem:[%s255 + $0x1040] sm:$0xff]
        %v869 = vld [vmem:[%s255 + $0x1048] sm:$0xff]
        %v870 = vld [vmem:[%s255 + $0x1050] sm:$0xff]
        %v871 = vld [vmem:[%s255 + $0x1058] sm:$0xff]
        %v872 = vld [vmem:[%s255 + $0x1060] sm:$0xff]
        %v873 = vld [vmem:[%s255 + $0x1068] sm:$0xff]
        %v874 = vld [vmem:[%s255 + $0x1070] sm:$0xff]
        %v875 = vld [vmem:[%s255 + $0x1078] sm:$0xff]
        %v876 = vld [vmem:[%s255 + $0x1080] sm:$0xff]
        %v877 = vld [vmem:[%s255 + $0x1088] sm:$0xff]
        %v878 = vld [vmem:[%s255 + $0x1090] sm:$0xff]
        %v879 = vld [vmem:[%s255 + $0x1098] sm:$0xff]
        %v880 = vld [vmem:[%s255 + $0x10a0] sm:$0xff]
        %v881 = vld [vmem:[%s255 + $0x10a8] sm:$0xff]
        %v882 = vld [vmem:[%s255 + $0x10b0] sm:$0xff]
        %v883 = vld [vmem:[%s255 + $0x10b8] sm:$0xff]
        %v884 = vld [vmem:[%s255 + $0x10c0] sm:$0xff]
        %v885 = vld [vmem:[%s255 + $0x10c8] sm:$0xff]
        %v886 = vld [vmem:[%s255 + $0x10d0] sm:$0xff]
        %v887 = vld [vmem:[%s255 + $0x10d8] sm:$0xff]
        %v888 = vld [vmem:[%s255 + $0x10e0] sm:$0xff]
        %v889 = vld [vmem:[%s255 + $0x10e8] sm:$0xff]
        %v890 = vld [vmem:[%s255 + $0x10f0] sm:$0xff]
        %v891 = vld [vmem:[%s255 + $0x10f8] sm:$0xff]
        %v892 = vld [vmem:[%s255 + $0x1100] sm:$0xff]
        %v893 = vld [vmem:[%s255 + $0x1108] sm:$0xff]
        %v894 = vld [vmem:[%s255 + $0x1110] sm:$0xff]
        %v895 = vld [vmem:[%s255 + $0x1118] sm:$0xff]
        %v896 = vld [vmem:[%s255 + $0x1120] sm:$0xff]
        %v897 = vld [vmem:[%s255 + $0x1128] sm:$0xff]
        %v898 = vld [vmem:[%s255 + $0x1130] sm:$0xff]
        %v899 = vld [vmem:[%s255 + $0x1138] sm:$0xff]
        %v900 = vld [vmem:[%s255 + $0x1140] sm:$0xff]
        %v901 = vld [vmem:[%s255 + $0x1148] sm:$0xff]
        %v902 = vld [vmem:[%s255 + $0x1150] sm:$0xff]
        %v903 = vld [vmem:[%s255 + $0x1158] sm:$0xff]
        %v904 = vld [vmem:[%s255 + $0x1160] sm:$0xff]
        %v905 = vld [vmem:[%s255 + $0x1168] sm:$0xff]
        %v906 = vld [vmem:[%s255 + $0x1170] sm:$0xff]
        %v907 = vld [vmem:[%s255 + $0x1178] sm:$0xff]
        %v908 = vld [vmem:[%s255 + $0x1180] sm:$0xff]
        %v909 = vld [vmem:[%s255 + $0x1188] sm:$0xff]
        %v910 = vld [vmem:[%s255 + $0x1190] sm:$0xff]
        %v911 = vld [vmem:[%s255 + $0x1198] sm:$0xff]
        %v912 = vld [vmem:[%s255 + $0x11a0] sm:$0xff]
        %v913 = vld [vmem:[%s255 + $0x11a8] sm:$0xff]
        %v914 = vld [vmem:[%s255 + $0x11b0] sm:$0xff]
        %v915 = vld [vmem:[%s255 + $0x11b8] sm:$0xff]
        %v916 = vld [vmem:[%s255 + $0x11c0] sm:$0xff]
        %v917 = vld [vmem:[%s255 + $0x11c8] sm:$0xff]
        %v918 = vld [vmem:[%s255 + $0x11d0] sm:$0xff]
        %v919 = vld [vmem:[%s255 + $0x11d8] sm:$0xff]
        %v920 = vld [vmem:[%s255 + $0x11e0] sm:$0xff]
        %v921 = vld [vmem:[%s255 + $0x11e8] sm:$0xff]
        %v922 = vld [vmem:[%s255 + $0x11f0] sm:$0xff]
        %v923 = vld [vmem:[%s255 + $0x11f8] sm:$0xff]
        %v924 = vld [vmem:[%s255 + $0x1200] sm:$0xff]
        %v925 = vld [vmem:[%s255 + $0x1208] sm:$0xff]
        %v926 = vld [vmem:[%s255 + $0x1210] sm:$0xff]
        %v927 = vld [vmem:[%s255 + $0x1218] sm:$0xff]
        %v928 = vld [vmem:[%s255 + $0x1220] sm:$0xff]
        %v929 = vld [vmem:[%s255 + $0x1228] sm:$0xff]
        %v930 = vld [vmem:[%s255 + $0x1230] sm:$0xff]
        %v931 = vld [vmem:[%s255 + $0x1238] sm:$0xff]
        %v932 = vld [vmem:[%s255 + $0x1240] sm:$0xff]
        %v933 = vld [vmem:[%s255 + $0x1248] sm:$0xff]
        %v934 = vld [vmem:[%s255 + $0x1250] sm:$0xff]
        %v935 = vld [vmem:[%s255 + $0x1258] sm:$0xff]
        %v936 = vld [vmem:[%s255 + $0x1260] sm:$0xff]
        %v937 = vld [vmem:[%s255 + $0x1268] sm:$0xff]
        %v938 = vld [vmem:[%s255 + $0x1270] sm:$0xff]
        %v939 = vld [vmem:[%s255 + $0x1278] sm:$0xff]
        %v940 = vld [vmem:[%s255 + $0x1280] sm:$0xff]
        %v941 = vld [vmem:[%s255 + $0x1288] sm:$0xff]
        %v942 = vld [vmem:[%s255 + $0x1290] sm:$0xff]
        %v943 = vld [vmem:[%s255 + $0x1298] sm:$0xff]
        %v944 = vld [vmem:[%s255 + $0x12a0] sm:$0xff]
        %v945 = vld [vmem:[%s255 + $0x12a8] sm:$0xff]
        %v946 = vld [vmem:[%s255 + $0x12b0] sm:$0xff]
        %v947 = vld [vmem:[%s255 + $0x12b8] sm:$0xff]
        %v948 = vld [vmem:[%s255 + $0x12c0] sm:$0xff]
        %v949 = vld [vmem:[%s255 + $0x12c8] sm:$0xff]
        %v950 = vld [vmem:[%s255 + $0x12d0] sm:$0xff]
        %v951 = vld [vmem:[%s255 + $0x12d8] sm:$0xff]
        %v952 = vld [vmem:[%s255 + $0x12e0] sm:$0xff]
        %v953 = vld [vmem:[%s255 + $0x12e8] sm:$0xff]
        %v954 = vld [vmem:[%s255 + $0x12f0] sm:$0xff]
        %v955 = vld [vmem:[%s255 + $0x12f8] sm:$0xff]
        %v956 = vld [vmem:[%s255 + $0x1300] sm:$0xff]
        %v957 = vld [vmem:[%s255 + $0x1308] sm:$0xff]
        %v958 = vld [vmem:[%s255 + $0x1310] sm:$0xff]
        %v959 = vld [vmem:[%s255 + $0x1318] sm:$0xff]
        %v960 = vld [vmem:[%s255 + $0x1320] sm:$0xff]
        %v961 = vld [vmem:[%s255 + $0x1328] sm:$0xff]
        %v962 = vld [vmem:[%s255 + $0x1330] sm:$0xff]
        %v963 = vld [vmem:[%s255 + $0x1338] sm:$0xff]
        %v964 = vld [vmem:[%s255 + $0x1340] sm:$0xff]
        %v965 = vld [vmem:[%s255 + $0x1348] sm:$0xff]
        %v966 = vld [vmem:[%s255 + $0x1350] sm:$0xff]
        %v967 = vld [vmem:[%s255 + $0x1358] sm:$0xff]
        %v968 = vld [vmem:[%s255 + $0x1360] sm:$0xff]
        %v969 = vld [vmem:[%s255 + $0x1368] sm:$0xff]
        %v970 = vld [vmem:[%s255 + $0x1370] sm:$0xff]
        %v971 = vld [vmem:[%s255 + $0x1378] sm:$0xff]
        %v972 = vld [vmem:[%s255 + $0x1380] sm:$0xff]
        %v973 = vld [vmem:[%s255 + $0x1388] sm:$0xff]
        %v974 = vld [vmem:[%s255 + $0x1390] sm:$0xff]
        %v975 = vld [vmem:[%s255 + $0x1398] sm:$0xff]
        %v976 = vld [vmem:[%s255 + $0x13a0] sm:$0xff]
        %v977 = vld [vmem:[%s255 + $0x13a8] sm:$0xff]
        %v978 = vld [vmem:[%s255 + $0x13b0] sm:$0xff]
        %v979 = vld [vmem:[%s255 + $0x13b8] sm:$0xff]
        %v980 = vld [vmem:[%s255 + $0x13c0] sm:$0xff]
        %v981 = vld [vmem:[%s255 + $0x13c8] sm:$0xff]
        %v982 = vld [vmem:[%s255 + $0x13d0] sm:$0xff]
        %v983 = vld [vmem:[%s255 + $0x13d8] sm:$0xff]
        %v984 = vld [vmem:[%s255 + $0x13e0] sm:$0xff]
        %v985 = vld [vmem:[%s255 + $0x13e8] sm:$0xff]
        %v986 = vld [vmem:[%s255 + $0x13f0] sm:$0xff]
        %v987 = vld [vmem:[%s255 + $0x13f8] sm:$0xff]
        %v988 = vld [vmem:[%s255 + $0x1400] sm:$0xff]
        %v989 = vld [vmem:[%s255 + $0x1408] sm:$0xff]
        %v990 = vld [vmem:[%s255 + $0x1410] sm:$0xff]
        %v991 = vld [vmem:[%s255 + $0x1418] sm:$0xff]
        %v992 = vld [vmem:[%s255 + $0x1420] sm:$0xff]
        %v993 = vld [vmem:[%s255 + $0x1428] sm:$0xff]
        %v994 = vld [vmem:[%s255 + $0x1430] sm:$0xff]
        %v995 = vld [vmem:[%s255 + $0x1438] sm:$0xff]
        %v996 = vld [vmem:[%s255 + $0x1440] sm:$0xff]
        %v997 = vld [vmem:[%s255 + $0x1448] sm:$0xff]
        %v998 = vld [vmem:[%s255 + $0x1450] sm:$0xff]
        %v999 = vld [vmem:[%s255 + $0x1458] sm:$0xff]
        %v1000 = vld [vmem:[%s255 + $0x1460] sm:$0xff]
        %v1001 = vld [vmem:[%s255 + $0x1468] sm:$0xff]
        %v1002 = vld [vmem:[%s255 + $0x1470] sm:$0xff]
        %v1003 = vld [vmem:[%s255 + $0x1478] sm:$0xff]
        %v1004 = vld [vmem:[%s255 + $0x1480] sm:$0xff]
        %v1005 = vld [vmem:[%s255 + $0x1488] sm:$0xff]
        %v1006 = vld [vmem:[%s255 + $0x1490] sm:$0xff]
        %v1007 = vld [vmem:[%s255 + $0x1498] sm:$0xff]
        %v1008 = vld [vmem:[%s255 + $0x14a0] sm:$0xff]
        %v1009 = vld [vmem:[%s255 + $0x14a8] sm:$0xff]
        %v1010 = vld [vmem:[%s255 + $0x14b0] sm:$0xff]
        %v1011 = vld [vmem:[%s255 + $0x14b8] sm:$0xff]
        %v1012 = vld [vmem:[%s255 + $0x14c0] sm:$0xff]
        %v1013 = vld [vmem:[%s255 + $0x14c8] sm:$0xff]
        %v1014 = vld [vmem:[%s255 + $0x14d0] sm:$0xff]
        %v1015 = vld [vmem:[%s255 + $0x14d8] sm:$0xff]
        %v1016 = vld [vmem:[%s255 + $0x14e0] sm:$0xff]
        %v1017 = vld [vmem:[%s255 + $0x14e8] sm:$0xff]
        %v1018 = vld [vmem:[%s255 + $0x14f0] sm:$0xff]
        %v1019 = vld [vmem:[%s255 + $0x14f8] sm:$0xff]
        %v1020 = vld [vmem:[%s255 + $0x1500] sm:$0xff]
        %v1021 = vld [vmem:[%s255 + $0x1508] sm:$0xff]
        %v1022 = vld [vmem:[%s255 + $0x1510] sm:$0xff]
        %v1023 = vld [vmem:[%s255 + $0x1518] sm:$0xff]
        %v1024 = vld [vmem:[%s255 + $0x1520] sm:$0xff]
        %v1025 = vld [vmem:[%s255 + $0x1528] sm:$0xff]
        %v1026 = vld [vmem:[%s255 + $0x1530] sm:$0xff]
        %v1027 = vld [vmem:[%s255 + $0x1538] sm:$0xff]
        %v1028 = vld [vmem:[%s255 + $0x1540] sm:$0xff]
        %v1029 = vld [vmem:[%s255 + $0x1548] sm:$0xff]
        %v1030 = vld [vmem:[%s255 + $0x1550] sm:$0xff]
        %v1031 = vld [vmem:[%s255 + $0x1558] sm:$0xff]
        %v1032 = vld [vmem:[%s255 + $0x1560] sm:$0xff]
        %v1033 = vld [vmem:[%s255 + $0x1568] sm:$0xff]
        %v1034 = vld [vmem:[%s255 + $0x1570] sm:$0xff]
        %v1035 = vld [vmem:[%s255 + $0x1578] sm:$0xff]
        %v1036 = vld [vmem:[%s255 + $0x1580] sm:$0xff]
        %v1037 = vld [vmem:[%s255 + $0x1588] sm:$0xff]
        %v1038 = vld [vmem:[%s255 + $0x1590] sm:$0xff]
        %v1039 = vld [vmem:[%s255 + $0x1598] sm:$0xff]
        %v1040 = vld [vmem:[%s255 + $0x15a0] sm:$0xff]
        %v1041 = vld [vmem:[%s255 + $0x15a8] sm:$0xff]
        %v1042 = vld [vmem:[%s255 + $0x15b0] sm:$0xff]
        %v1043 = vld [vmem:[%s255 + $0x15b8] sm:$0xff]
        %v1044 = vld [vmem:[%s255 + $0x15c0] sm:$0xff]
        %v1045 = vld [vmem:[%s255 + $0x15c8] sm:$0xff]
        %v1046 = vld [vmem:[%s255 + $0x15d0] sm:$0xff]
        %v1047 = vld [vmem:[%s255 + $0x15d8] sm:$0xff]
        %v1048 = vld [vmem:[%s255 + $0x15e0] sm:$0xff]
        %v1049 = vld [vmem:[%s255 + $0x15e8] sm:$0xff]
        %v1050 = vld [vmem:[%s255 + $0x15f0] sm:$0xff]
        %v1051 = vld [vmem:[%s255 + $0x15f8] sm:$0xff]
        %v1052 = vld [vmem:[%s255 + $0x1600] sm:$0xff]
        %v1053 = vld [vmem:[%s255 + $0x1608] sm:$0xff]
        %v1054 = vld [vmem:[%s255 + $0x1610] sm:$0xff]
        %v1055 = vld [vmem:[%s255 + $0x1618] sm:$0xff]
        %v1056 = vld [vmem:[%s255 + $0x1620] sm:$0xff]
        %v1057 = vld [vmem:[%s255 + $0x1628] sm:$0xff]
        %v1058 = vld [vmem:[%s255 + $0x1630] sm:$0xff]
        %v1059 = vld [vmem:[%s255 + $0x1638] sm:$0xff]
        %v1060 = vld [vmem:[%s255 + $0x1640] sm:$0xff]
        %v1061 = vld [vmem:[%s255 + $0x1648] sm:$0xff]
        %v1062 = vld [vmem:[%s255 + $0x1650] sm:$0xff]
        %v1063 = vld [vmem:[%s255 + $0x1658] sm:$0xff]
        %v1064 = vld [vmem:[%s255 + $0x1660] sm:$0xff]
        %v1065 = vld [vmem:[%s255 + $0x1668] sm:$0xff]
        %v1066 = vld [vmem:[%s255 + $0x1670] sm:$0xff]
        %v1067 = vld [vmem:[%s255 + $0x1678] sm:$0xff]
        %v1068 = vld [vmem:[%s255 + $0x1680] sm:$0xff]
        %v1069 = vld [vmem:[%s255 + $0x1688] sm:$0xff]
        %v1070 = vld [vmem:[%s255 + $0x1690] sm:$0xff]
        %v1071 = vld [vmem:[%s255 + $0x1698] sm:$0xff]
        %v1072 = vld [vmem:[%s255 + $0x16a0] sm:$0xff]
        %v1073 = vld [vmem:[%s255 + $0x16a8] sm:$0xff]
        %v1074 = vld [vmem:[%s255 + $0x16b0] sm:$0xff]
        %v1075 = vld [vmem:[%s255 + $0x16b8] sm:$0xff]
        %v1076 = vld [vmem:[%s255 + $0x16c0] sm:$0xff]
        %v1077 = vld [vmem:[%s255 + $0x16c8] sm:$0xff]
        %v1078 = vld [vmem:[%s255 + $0x16d0] sm:$0xff]
        %v1079 = vld [vmem:[%s255 + $0x16d8] sm:$0xff]
        %v1080 = vld [vmem:[%s255 + $0x16e0] sm:$0xff]
        %v1081 = vld [vmem:[%s255 + $0x16e8] sm:$0xff]
        %v1082 = vld [vmem:[%s255 + $0x16f0] sm:$0xff]
        %v1083 = vld [vmem:[%s255 + $0x16f8] sm:$0xff]
        %v1084 = vld [vmem:[%s255 + $0x1700] sm:$0xff]
        %v1085 = vld [vmem:[%s255 + $0x1708] sm:$0xff]
        %v1086 = vld [vmem:[%s255 + $0x1710] sm:$0xff]
        %v1087 = vld [vmem:[%s255 + $0x1718] sm:$0xff]
        %v1088 = vld [vmem:[%s255 + $0x1720] sm:$0xff]
        %v1089 = vld [vmem:[%s255 + $0x1728] sm:$0xff]
        %v1090 = vld [vmem:[%s255 + $0x1730] sm:$0xff]
        %v1091 = vld [vmem:[%s255 + $0x1738] sm:$0xff]
        %v1092 = vld [vmem:[%s255 + $0x1740] sm:$0xff]
        %v1093 = vld [vmem:[%s255 + $0x1748] sm:$0xff]
        %v1094 = vld [vmem:[%s255 + $0x1750] sm:$0xff]
        %v1095 = vld [vmem:[%s255 + $0x1758] sm:$0xff]
        %v1096 = vld [vmem:[%s255 + $0x1760] sm:$0xff]
        %v1097 = vld [vmem:[%s255 + $0x1768] sm:$0xff]
        %v1098 = vld [vmem:[%s255 + $0x1770] sm:$0xff]
        %v1099 = vld [vmem:[%s255 + $0x1778] sm:$0xff]
        %v1100 = vld [vmem:[%s255 + $0x1780] sm:$0xff]
        %v1101 = vld [vmem:[%s255 + $0x1788] sm:$0xff]
        %v1102 = vld [vmem:[%s255 + $0x1790] sm:$0xff]
        %v1103 = vld [vmem:[%s255 + $0x1798] sm:$0xff]
        %v1104 = vld [vmem:[%s255 + $0x17a0] sm:$0xff]
        %v1105 = vld [vmem:[%s255 + $0x17a8] sm:$0xff]
        %v1106 = vld [vmem:[%s255 + $0x17b0] sm:$0xff]
        %v1107 = vld [vmem:[%s255 + $0x17b8] sm:$0xff]
        %v1108 = vld [vmem:[%s255 + $0x17c0] sm:$0xff]
        %v1109 = vld [vmem:[%s255 + $0x17c8] sm:$0xff]
        %v1110 = vld [vmem:[%s255 + $0x17d0] sm:$0xff]
        %v1111 = vld [vmem:[%s255 + $0x17d8] sm:$0xff]
        %v1112 = vld [vmem:[%s255 + $0x17e0] sm:$0xff]
        %v1113 = vld [vmem:[%s255 + $0x17e8] sm:$0xff]
        %v1114 = vld [vmem:[%s255 + $0x17f0] sm:$0xff]
        %v1115 = vld [vmem:[%s255 + $0x17f8] sm:$0xff]
        %v1116 = vunpack.c.l.s8.bf16 %v348
        %v1117 = vunpack.c.h.s8.bf16 %v348
        %v1118 = vunpack.c.l.s8.bf16 %v349
        %v1119 = vunpack.c.h.s8.bf16 %v349
        %v1120 = vunpack.c.l.s8.bf16 %v350
        %v1121 = vunpack.c.h.s8.bf16 %v350
        %v1122 = vunpack.c.l.s8.bf16 %v351
        %v1123 = vunpack.c.h.s8.bf16 %v351
        %v1124 = vunpack.c.l.s8.bf16 %v352
        %v1125 = vunpack.c.h.s8.bf16 %v352
        %v1126 = vunpack.c.l.s8.bf16 %v353
        %v1127 = vunpack.c.h.s8.bf16 %v353
        %v1128 = vunpack.c.l.s8.bf16 %v354
        %v1129 = vunpack.c.h.s8.bf16 %v354
        %v1130 = vunpack.c.l.s8.bf16 %v355
        %v1131 = vunpack.c.h.s8.bf16 %v355
        %v1132 = vunpack.c.l.s8.bf16 %v356
        %v1133 = vunpack.c.h.s8.bf16 %v356
        %v1134 = vunpack.c.l.s8.bf16 %v357
        %v1135 = vunpack.c.h.s8.bf16 %v357
        %v1136 = vunpack.c.l.s8.bf16 %v358
        %v1137 = vunpack.c.h.s8.bf16 %v358
        %v1138 = vunpack.c.l.s8.bf16 %v359
        %v1139 = vunpack.c.h.s8.bf16 %v359
        %v1140 = vunpack.c.l.s8.bf16 %v360
        %v1141 = vunpack.c.h.s8.bf16 %v360
        %v1142 = vunpack.c.l.s8.bf16 %v361
        %v1143 = vunpack.c.h.s8.bf16 %v361
        %v1144 = vunpack.c.l.s8.bf16 %v362
        %v1145 = vunpack.c.h.s8.bf16 %v362
        %v1146 = vunpack.c.l.s8.bf16 %v363
        %v1147 = vunpack.c.h.s8.bf16 %v363
        %v1148 = vunpack.c.l.s8.bf16 %v364
        %v1149 = vunpack.c.h.s8.bf16 %v364
        %v1150 = vunpack.c.l.s8.bf16 %v365
        %v1151 = vunpack.c.h.s8.bf16 %v365
        %v1152 = vunpack.c.l.s8.bf16 %v366
        %v1153 = vunpack.c.h.s8.bf16 %v366
        %v1154 = vunpack.c.l.s8.bf16 %v367
        %v1155 = vunpack.c.h.s8.bf16 %v367
        %v1156 = vunpack.c.l.s8.bf16 %v368
        %v1157 = vunpack.c.h.s8.bf16 %v368
        %v1158 = vunpack.c.l.s8.bf16 %v369
        %v1159 = vunpack.c.h.s8.bf16 %v369
        %v1160 = vunpack.c.l.s8.bf16 %v370
        %v1161 = vunpack.c.h.s8.bf16 %v370
        %v1162 = vunpack.c.l.s8.bf16 %v371
        %v1163 = vunpack.c.h.s8.bf16 %v371
        %v1164 = vunpack.c.l.s8.bf16 %v372
        %v1165 = vunpack.c.h.s8.bf16 %v372
        %v1166 = vunpack.c.l.s8.bf16 %v373
        %v1167 = vunpack.c.h.s8.bf16 %v373
        %v1168 = vunpack.c.l.s8.bf16 %v374
        %v1169 = vunpack.c.h.s8.bf16 %v374
        %v1170 = vunpack.c.l.s8.bf16 %v375
        %v1171 = vunpack.c.h.s8.bf16 %v375
        %v1172 = vunpack.c.l.s8.bf16 %v376
        %v1173 = vunpack.c.h.s8.bf16 %v376
        %v1174 = vunpack.c.l.s8.bf16 %v377
        %v1175 = vunpack.c.h.s8.bf16 %v377
        %v1176 = vunpack.c.l.s8.bf16 %v378
        %v1177 = vunpack.c.h.s8.bf16 %v378
        %v1178 = vunpack.c.l.s8.bf16 %v379
        %v1179 = vunpack.c.h.s8.bf16 %v379
        %v1180 = vunpack.c.l.s8.bf16 %v380
        %v1181 = vunpack.c.h.s8.bf16 %v380
        %v1182 = vunpack.c.l.s8.bf16 %v381
        %v1183 = vunpack.c.h.s8.bf16 %v381
        %v1184 = vunpack.c.l.s8.bf16 %v382
        %v1185 = vunpack.c.h.s8.bf16 %v382
        %v1186 = vunpack.c.l.s8.bf16 %v383
        %v1187 = vunpack.c.h.s8.bf16 %v383
        %v1188 = vunpack.c.l.s8.bf16 %v384
        %v1189 = vunpack.c.h.s8.bf16 %v384
        %v1190 = vunpack.c.l.s8.bf16 %v385
        %v1191 = vunpack.c.h.s8.bf16 %v385
        %v1192 = vunpack.c.l.s8.bf16 %v386
        %v1193 = vunpack.c.h.s8.bf16 %v386
        %v1194 = vunpack.c.l.s8.bf16 %v387
        %v1195 = vunpack.c.h.s8.bf16 %v387
        %v1196 = vunpack.c.l.s8.bf16 %v388
        %v1197 = vunpack.c.h.s8.bf16 %v388
        %v1198 = vunpack.c.l.s8.bf16 %v389
        %v1199 = vunpack.c.h.s8.bf16 %v389
        %v1200 = vunpack.c.l.s8.bf16 %v390
        %v1201 = vunpack.c.h.s8.bf16 %v390
        %v1202 = vunpack.c.l.s8.bf16 %v391
        %v1203 = vunpack.c.h.s8.bf16 %v391
        %v1204 = vunpack.c.l.s8.bf16 %v392
        %v1205 = vunpack.c.h.s8.bf16 %v392
        %v1206 = vunpack.c.l.s8.bf16 %v393
        %v1207 = vunpack.c.h.s8.bf16 %v393
        %v1208 = vunpack.c.l.s8.bf16 %v394
        %v1209 = vunpack.c.h.s8.bf16 %v394
        %v1210 = vunpack.c.l.s8.bf16 %v395
        %v1211 = vunpack.c.h.s8.bf16 %v395
        %v1212 = vunpack.c.l.s8.bf16 %v396
        %v1213 = vunpack.c.h.s8.bf16 %v396
        %v1214 = vunpack.c.l.s8.bf16 %v397
        %v1215 = vunpack.c.h.s8.bf16 %v397
        %v1216 = vunpack.c.l.s8.bf16 %v398
        %v1217 = vunpack.c.h.s8.bf16 %v398
        %v1218 = vunpack.c.l.s8.bf16 %v399
        %v1219 = vunpack.c.h.s8.bf16 %v399
        %v1220 = vunpack.c.l.s8.bf16 %v400
        %v1221 = vunpack.c.h.s8.bf16 %v400
        %v1222 = vunpack.c.l.s8.bf16 %v401
        %v1223 = vunpack.c.h.s8.bf16 %v401
        %v1224 = vunpack.c.l.s8.bf16 %v402
        %v1225 = vunpack.c.h.s8.bf16 %v402
        %v1226 = vunpack.c.l.s8.bf16 %v403
        %v1227 = vunpack.c.h.s8.bf16 %v403
        %v1228 = vunpack.c.l.s8.bf16 %v404
        %v1229 = vunpack.c.h.s8.bf16 %v404
        %v1230 = vunpack.c.l.s8.bf16 %v405
        %v1231 = vunpack.c.h.s8.bf16 %v405
        %v1232 = vunpack.c.l.s8.bf16 %v406
        %v1233 = vunpack.c.h.s8.bf16 %v406
        %v1234 = vunpack.c.l.s8.bf16 %v407
        %v1235 = vunpack.c.h.s8.bf16 %v407
        %v1236 = vunpack.c.l.s8.bf16 %v408
        %v1237 = vunpack.c.h.s8.bf16 %v408
        %v1238 = vunpack.c.l.s8.bf16 %v409
        %v1239 = vunpack.c.h.s8.bf16 %v409
        %v1240 = vunpack.c.l.s8.bf16 %v410
        %v1241 = vunpack.c.h.s8.bf16 %v410
        %v1242 = vunpack.c.l.s8.bf16 %v411
        %v1243 = vunpack.c.h.s8.bf16 %v411
        %v1244 = vunpack.c.l.s8.bf16 %v412
        %v1245 = vunpack.c.h.s8.bf16 %v412
        %v1246 = vunpack.c.l.s8.bf16 %v413
        %v1247 = vunpack.c.h.s8.bf16 %v413
        %v1248 = vunpack.c.l.s8.bf16 %v414
        %v1249 = vunpack.c.h.s8.bf16 %v414
        %v1250 = vunpack.c.l.s8.bf16 %v415
        %v1251 = vunpack.c.h.s8.bf16 %v415
        %v1252 = vunpack.c.l.s8.bf16 %v416
        %v1253 = vunpack.c.h.s8.bf16 %v416
        %v1254 = vunpack.c.l.s8.bf16 %v417
        %v1255 = vunpack.c.h.s8.bf16 %v417
        %v1256 = vunpack.c.l.s8.bf16 %v418
        %v1257 = vunpack.c.h.s8.bf16 %v418
        %v1258 = vunpack.c.l.s8.bf16 %v419
        %v1259 = vunpack.c.h.s8.bf16 %v419
        %v1260 = vunpack.c.l.s8.bf16 %v420
        %v1261 = vunpack.c.h.s8.bf16 %v420
        %v1262 = vunpack.c.l.s8.bf16 %v421
        %v1263 = vunpack.c.h.s8.bf16 %v421
        %v1264 = vunpack.c.l.s8.bf16 %v422
        %v1265 = vunpack.c.h.s8.bf16 %v422
        %v1266 = vunpack.c.l.s8.bf16 %v423
        %v1267 = vunpack.c.h.s8.bf16 %v423
        %v1268 = vunpack.c.l.s8.bf16 %v424
        %v1269 = vunpack.c.h.s8.bf16 %v424
        %v1270 = vunpack.c.l.s8.bf16 %v425
        %v1271 = vunpack.c.h.s8.bf16 %v425
        %v1272 = vunpack.c.l.s8.bf16 %v426
        %v1273 = vunpack.c.h.s8.bf16 %v426
        %v1274 = vunpack.c.l.s8.bf16 %v427
        %v1275 = vunpack.c.h.s8.bf16 %v427
        %v1276 = vunpack.c.l.s8.bf16 %v428
        %v1277 = vunpack.c.h.s8.bf16 %v428
        %v1278 = vunpack.c.l.s8.bf16 %v429
        %v1279 = vunpack.c.h.s8.bf16 %v429
        %v1280 = vunpack.c.l.s8.bf16 %v430
        %v1281 = vunpack.c.h.s8.bf16 %v430
        %v1282 = vunpack.c.l.s8.bf16 %v431
        %v1283 = vunpack.c.h.s8.bf16 %v431
        %v1284 = vunpack.c.l.s8.bf16 %v432
        %v1285 = vunpack.c.h.s8.bf16 %v432
        %v1286 = vunpack.c.l.s8.bf16 %v433
        %v1287 = vunpack.c.h.s8.bf16 %v433
        %v1288 = vunpack.c.l.s8.bf16 %v434
        %v1289 = vunpack.c.h.s8.bf16 %v434
        %v1290 = vunpack.c.l.s8.bf16 %v435
        %v1291 = vunpack.c.h.s8.bf16 %v435
        %v1292 = vunpack.c.l.s8.bf16 %v436
        %v1293 = vunpack.c.h.s8.bf16 %v436
        %v1294 = vunpack.c.l.s8.bf16 %v437
        %v1295 = vunpack.c.h.s8.bf16 %v437
        %v1296 = vunpack.c.l.s8.bf16 %v438
        %v1297 = vunpack.c.h.s8.bf16 %v438
        %v1298 = vunpack.c.l.s8.bf16 %v439
        %v1299 = vunpack.c.h.s8.bf16 %v439
        %v1300 = vunpack.c.l.s8.bf16 %v440
        %v1301 = vunpack.c.h.s8.bf16 %v440
        %v1302 = vunpack.c.l.s8.bf16 %v441
        %v1303 = vunpack.c.h.s8.bf16 %v441
        %v1304 = vunpack.c.l.s8.bf16 %v442
        %v1305 = vunpack.c.h.s8.bf16 %v442
        %v1306 = vunpack.c.l.s8.bf16 %v443
        %v1307 = vunpack.c.h.s8.bf16 %v443
        %v1308 = vunpack.c.l.s8.bf16 %v444
        %v1309 = vunpack.c.h.s8.bf16 %v444
        %v1310 = vunpack.c.l.s8.bf16 %v445
        %v1311 = vunpack.c.h.s8.bf16 %v445
        %v1312 = vunpack.c.l.s8.bf16 %v446
        %v1313 = vunpack.c.h.s8.bf16 %v446
        %v1314 = vunpack.c.l.s8.bf16 %v447
        %v1315 = vunpack.c.h.s8.bf16 %v447
        %v1316 = vunpack.c.l.s8.bf16 %v448
        %v1317 = vunpack.c.h.s8.bf16 %v448
        %v1318 = vunpack.c.l.s8.bf16 %v449
        %v1319 = vunpack.c.h.s8.bf16 %v449
        %v1320 = vunpack.c.l.s8.bf16 %v450
        %v1321 = vunpack.c.h.s8.bf16 %v450
        %v1322 = vunpack.c.l.s8.bf16 %v451
        %v1323 = vunpack.c.h.s8.bf16 %v451
        %v1324 = vunpack.c.l.s8.bf16 %v452
        %v1325 = vunpack.c.h.s8.bf16 %v452
        %v1326 = vunpack.c.l.s8.bf16 %v453
        %v1327 = vunpack.c.h.s8.bf16 %v453
        %v1328 = vunpack.c.l.s8.bf16 %v454
        %v1329 = vunpack.c.h.s8.bf16 %v454
        %v1330 = vunpack.c.l.s8.bf16 %v455
        %v1331 = vunpack.c.h.s8.bf16 %v455
        %v1332 = vunpack.c.l.s8.bf16 %v456
        %v1333 = vunpack.c.h.s8.bf16 %v456
        %v1334 = vunpack.c.l.s8.bf16 %v457
        %v1335 = vunpack.c.h.s8.bf16 %v457
        %v1336 = vunpack.c.l.s8.bf16 %v458
        %v1337 = vunpack.c.h.s8.bf16 %v458
        %v1338 = vunpack.c.l.s8.bf16 %v459
        %v1339 = vunpack.c.h.s8.bf16 %v459
        %v1340 = vunpack.c.l.s8.bf16 %v460
        %v1341 = vunpack.c.h.s8.bf16 %v460
        %v1342 = vunpack.c.l.s8.bf16 %v461
        %v1343 = vunpack.c.h.s8.bf16 %v461
        %v1344 = vunpack.c.l.s8.bf16 %v462
        %v1345 = vunpack.c.h.s8.bf16 %v462
        %v1346 = vunpack.c.l.s8.bf16 %v463
        %v1347 = vunpack.c.h.s8.bf16 %v463
        %v1348 = vunpack.c.l.s8.bf16 %v464
        %v1349 = vunpack.c.h.s8.bf16 %v464
        %v1350 = vunpack.c.l.s8.bf16 %v465
        %v1351 = vunpack.c.h.s8.bf16 %v465
        %v1352 = vunpack.c.l.s8.bf16 %v466
        %v1353 = vunpack.c.h.s8.bf16 %v466
        %v1354 = vunpack.c.l.s8.bf16 %v467
        %v1355 = vunpack.c.h.s8.bf16 %v467
        %v1356 = vunpack.c.l.s8.bf16 %v468
        %v1357 = vunpack.c.h.s8.bf16 %v468
        %v1358 = vunpack.c.l.s8.bf16 %v469
        %v1359 = vunpack.c.h.s8.bf16 %v469
        %v1360 = vunpack.c.l.s8.bf16 %v470
        %v1361 = vunpack.c.h.s8.bf16 %v470
        %v1362 = vunpack.c.l.s8.bf16 %v471
        %v1363 = vunpack.c.h.s8.bf16 %v471
        %v1364 = vunpack.c.l.s8.bf16 %v472
        %v1365 = vunpack.c.h.s8.bf16 %v472
        %v1366 = vunpack.c.l.s8.bf16 %v473
        %v1367 = vunpack.c.h.s8.bf16 %v473
        %v1368 = vunpack.c.l.s8.bf16 %v474
        %v1369 = vunpack.c.h.s8.bf16 %v474
        %v1370 = vunpack.c.l.s8.bf16 %v475
        %v1371 = vunpack.c.h.s8.bf16 %v475
        %v1372 = vunpack.c.l.s8.bf16 %v476
        %v1373 = vunpack.c.h.s8.bf16 %v476
        %v1374 = vunpack.c.l.s8.bf16 %v477
        %v1375 = vunpack.c.h.s8.bf16 %v477
        %v1376 = vunpack.c.l.s8.bf16 %v478
        %v1377 = vunpack.c.h.s8.bf16 %v478
        %v1378 = vunpack.c.l.s8.bf16 %v479
        %v1379 = vunpack.c.h.s8.bf16 %v479
        %v1380 = vunpack.c.l.s8.bf16 %v480
        %v1381 = vunpack.c.h.s8.bf16 %v480
        %v1382 = vunpack.c.l.s8.bf16 %v481
        %v1383 = vunpack.c.h.s8.bf16 %v481
        %v1384 = vunpack.c.l.s8.bf16 %v482
        %v1385 = vunpack.c.h.s8.bf16 %v482
        %v1386 = vunpack.c.l.s8.bf16 %v483
        %v1387 = vunpack.c.h.s8.bf16 %v483
        %v1388 = vunpack.c.l.s8.bf16 %v484
        %v1389 = vunpack.c.h.s8.bf16 %v484
        %v1390 = vunpack.c.l.s8.bf16 %v485
        %v1391 = vunpack.c.h.s8.bf16 %v485
        %v1392 = vunpack.c.l.s8.bf16 %v486
        %v1393 = vunpack.c.h.s8.bf16 %v486
        %v1394 = vunpack.c.l.s8.bf16 %v487
        %v1395 = vunpack.c.h.s8.bf16 %v487
        %v1396 = vunpack.c.l.s8.bf16 %v488
        %v1397 = vunpack.c.h.s8.bf16 %v488
        %v1398 = vunpack.c.l.s8.bf16 %v489
        %v1399 = vunpack.c.h.s8.bf16 %v489
        %v1400 = vunpack.c.l.s8.bf16 %v490
        %v1401 = vunpack.c.h.s8.bf16 %v490
        %v1402 = vunpack.c.l.s8.bf16 %v491
        %v1403 = vunpack.c.h.s8.bf16 %v491
        %v1404 = vunpack.c.l.s8.bf16 %v492
        %v1405 = vunpack.c.h.s8.bf16 %v492
        %v1406 = vunpack.c.l.s8.bf16 %v493
        %v1407 = vunpack.c.h.s8.bf16 %v493
        %v1408 = vunpack.c.l.s8.bf16 %v494
        %v1409 = vunpack.c.h.s8.bf16 %v494
        %v1410 = vunpack.c.l.s8.bf16 %v495
        %v1411 = vunpack.c.h.s8.bf16 %v495
        %v1412 = vunpack.c.l.s8.bf16 %v496
        %v1413 = vunpack.c.h.s8.bf16 %v496
        %v1414 = vunpack.c.l.s8.bf16 %v497
        %v1415 = vunpack.c.h.s8.bf16 %v497
        %v1416 = vunpack.c.l.s8.bf16 %v498
        %v1417 = vunpack.c.h.s8.bf16 %v498
        %v1418 = vunpack.c.l.s8.bf16 %v499
        %v1419 = vunpack.c.h.s8.bf16 %v499
        %v1420 = vunpack.c.l.s8.bf16 %v500
        %v1421 = vunpack.c.h.s8.bf16 %v500
        %v1422 = vunpack.c.l.s8.bf16 %v501
        %v1423 = vunpack.c.h.s8.bf16 %v501
        %v1424 = vunpack.c.l.s8.bf16 %v502
        %v1425 = vunpack.c.h.s8.bf16 %v502
        %v1426 = vunpack.c.l.s8.bf16 %v503
        %v1427 = vunpack.c.h.s8.bf16 %v503
        %v1428 = vunpack.c.l.s8.bf16 %v504
        %v1429 = vunpack.c.h.s8.bf16 %v504
        %v1430 = vunpack.c.l.s8.bf16 %v505
        %v1431 = vunpack.c.h.s8.bf16 %v505
        %v1432 = vunpack.c.l.s8.bf16 %v506
        %v1433 = vunpack.c.h.s8.bf16 %v506
        %v1434 = vunpack.c.l.s8.bf16 %v507
        %v1435 = vunpack.c.h.s8.bf16 %v507
        %v1436 = vunpack.c.l.s8.bf16 %v508
        %v1437 = vunpack.c.h.s8.bf16 %v508
        %v1438 = vunpack.c.l.s8.bf16 %v509
        %v1439 = vunpack.c.h.s8.bf16 %v509
        %v1440 = vunpack.c.l.s8.bf16 %v510
        %v1441 = vunpack.c.h.s8.bf16 %v510
        %v1442 = vunpack.c.l.s8.bf16 %v511
        %v1443 = vunpack.c.h.s8.bf16 %v511
        %v1444 = vunpack.c.l.s8.bf16 %v512
        %v1445 = vunpack.c.h.s8.bf16 %v512
        %v1446 = vunpack.c.l.s8.bf16 %v513
        %v1447 = vunpack.c.h.s8.bf16 %v513
        %v1448 = vunpack.c.l.s8.bf16 %v514
        %v1449 = vunpack.c.h.s8.bf16 %v514
        %v1450 = vunpack.c.l.s8.bf16 %v515
        %v1451 = vunpack.c.h.s8.bf16 %v515
        %v1452 = vunpack.c.l.s8.bf16 %v516
        %v1453 = vunpack.c.h.s8.bf16 %v516
        %v1454 = vunpack.c.l.s8.bf16 %v517
        %v1455 = vunpack.c.h.s8.bf16 %v517
        %v1456 = vunpack.c.l.s8.bf16 %v518
        %v1457 = vunpack.c.h.s8.bf16 %v518
        %v1458 = vunpack.c.l.s8.bf16 %v519
        %v1459 = vunpack.c.h.s8.bf16 %v519
        %v1460 = vunpack.c.l.s8.bf16 %v520
        %v1461 = vunpack.c.h.s8.bf16 %v520
        %v1462 = vunpack.c.l.s8.bf16 %v521
        %v1463 = vunpack.c.h.s8.bf16 %v521
        %v1464 = vunpack.c.l.s8.bf16 %v522
        %v1465 = vunpack.c.h.s8.bf16 %v522
        %v1466 = vunpack.c.l.s8.bf16 %v523
        %v1467 = vunpack.c.h.s8.bf16 %v523
        %v1468 = vunpack.c.l.s8.bf16 %v524
        %v1469 = vunpack.c.h.s8.bf16 %v524
        %v1470 = vunpack.c.l.s8.bf16 %v525
        %v1471 = vunpack.c.h.s8.bf16 %v525
        %v1472 = vunpack.c.l.s8.bf16 %v526
        %v1473 = vunpack.c.h.s8.bf16 %v526
        %v1474 = vunpack.c.l.s8.bf16 %v527
        %v1475 = vunpack.c.h.s8.bf16 %v527
        %v1476 = vunpack.c.l.s8.bf16 %v528
        %v1477 = vunpack.c.h.s8.bf16 %v528
        %v1478 = vunpack.c.l.s8.bf16 %v529
        %v1479 = vunpack.c.h.s8.bf16 %v529
        %v1480 = vunpack.c.l.s8.bf16 %v530
        %v1481 = vunpack.c.h.s8.bf16 %v530
        %v1482 = vunpack.c.l.s8.bf16 %v531
        %v1483 = vunpack.c.h.s8.bf16 %v531
        %v1484 = vunpack.c.l.s8.bf16 %v532
        %v1485 = vunpack.c.h.s8.bf16 %v532
        %v1486 = vunpack.c.l.s8.bf16 %v533
        %v1487 = vunpack.c.h.s8.bf16 %v533
        %v1488 = vunpack.c.l.s8.bf16 %v534
        %v1489 = vunpack.c.h.s8.bf16 %v534
        %v1490 = vunpack.c.l.s8.bf16 %v535
        %v1491 = vunpack.c.h.s8.bf16 %v535
        %v1492 = vunpack.c.l.s8.bf16 %v536
        %v1493 = vunpack.c.h.s8.bf16 %v536
        %v1494 = vunpack.c.l.s8.bf16 %v537
        %v1495 = vunpack.c.h.s8.bf16 %v537
        %v1496 = vunpack.c.l.s8.bf16 %v538
        %v1497 = vunpack.c.h.s8.bf16 %v538
        %v1498 = vunpack.c.l.s8.bf16 %v539
        %v1499 = vunpack.c.h.s8.bf16 %v539
        %v1500 = vunpack.c.l.s8.bf16 %v540
        %v1501 = vunpack.c.h.s8.bf16 %v540
        %v1502 = vunpack.c.l.s8.bf16 %v541
        %v1503 = vunpack.c.h.s8.bf16 %v541
        %v1504 = vunpack.c.l.s8.bf16 %v542
        %v1505 = vunpack.c.h.s8.bf16 %v542
        %v1506 = vunpack.c.l.s8.bf16 %v543
        %v1507 = vunpack.c.h.s8.bf16 %v543
        %v1508 = vunpack.c.l.s8.bf16 %v544
        %v1509 = vunpack.c.h.s8.bf16 %v544
        %v1510 = vunpack.c.l.s8.bf16 %v545
        %v1511 = vunpack.c.h.s8.bf16 %v545
        %v1512 = vunpack.c.l.s8.bf16 %v546
        %v1513 = vunpack.c.h.s8.bf16 %v546
        %v1514 = vunpack.c.l.s8.bf16 %v547
        %v1515 = vunpack.c.h.s8.bf16 %v547
        %v1516 = vunpack.c.l.s8.bf16 %v548
        %v1517 = vunpack.c.h.s8.bf16 %v548
        %v1518 = vunpack.c.l.s8.bf16 %v549
        %v1519 = vunpack.c.h.s8.bf16 %v549
        %v1520 = vunpack.c.l.s8.bf16 %v550
        %v1521 = vunpack.c.h.s8.bf16 %v550
        %v1522 = vunpack.c.l.s8.bf16 %v551
        %v1523 = vunpack.c.h.s8.bf16 %v551
        %v1524 = vunpack.c.l.s8.bf16 %v552
        %v1525 = vunpack.c.h.s8.bf16 %v552
        %v1526 = vunpack.c.l.s8.bf16 %v553
        %v1527 = vunpack.c.h.s8.bf16 %v553
        %v1528 = vunpack.c.l.s8.bf16 %v554
        %v1529 = vunpack.c.h.s8.bf16 %v554
        %v1530 = vunpack.c.l.s8.bf16 %v555
        %v1531 = vunpack.c.h.s8.bf16 %v555
        %v1532 = vunpack.c.l.s8.bf16 %v556
        %v1533 = vunpack.c.h.s8.bf16 %v556
        %v1534 = vunpack.c.l.s8.bf16 %v557
        %v1535 = vunpack.c.h.s8.bf16 %v557
        %v1536 = vunpack.c.l.s8.bf16 %v558
        %v1537 = vunpack.c.h.s8.bf16 %v558
        %v1538 = vunpack.c.l.s8.bf16 %v559
        %v1539 = vunpack.c.h.s8.bf16 %v559
        %v1540 = vunpack.c.l.s8.bf16 %v560
        %v1541 = vunpack.c.h.s8.bf16 %v560
        %v1542 = vunpack.c.l.s8.bf16 %v561
        %v1543 = vunpack.c.h.s8.bf16 %v561
        %v1544 = vunpack.c.l.s8.bf16 %v562
        %v1545 = vunpack.c.h.s8.bf16 %v562
        %v1546 = vunpack.c.l.s8.bf16 %v563
        %v1547 = vunpack.c.h.s8.bf16 %v563
        %v1548 = vunpack.c.l.s8.bf16 %v564
        %v1549 = vunpack.c.h.s8.bf16 %v564
        %v1550 = vunpack.c.l.s8.bf16 %v565
        %v1551 = vunpack.c.h.s8.bf16 %v565
        %v1552 = vunpack.c.l.s8.bf16 %v566
        %v1553 = vunpack.c.h.s8.bf16 %v566
        %v1554 = vunpack.c.l.s8.bf16 %v567
        %v1555 = vunpack.c.h.s8.bf16 %v567
        %v1556 = vunpack.c.l.s8.bf16 %v568
        %v1557 = vunpack.c.h.s8.bf16 %v568
        %v1558 = vunpack.c.l.s8.bf16 %v569
        %v1559 = vunpack.c.h.s8.bf16 %v569
        %v1560 = vunpack.c.l.s8.bf16 %v570
        %v1561 = vunpack.c.h.s8.bf16 %v570
        %v1562 = vunpack.c.l.s8.bf16 %v571
        %v1563 = vunpack.c.h.s8.bf16 %v571
        %v1564 = vunpack.c.l.s8.bf16 %v572
        %v1565 = vunpack.c.h.s8.bf16 %v572
        %v1566 = vunpack.c.l.s8.bf16 %v573
        %v1567 = vunpack.c.h.s8.bf16 %v573
        %v1568 = vunpack.c.l.s8.bf16 %v574
        %v1569 = vunpack.c.h.s8.bf16 %v574
        %v1570 = vunpack.c.l.s8.bf16 %v575
        %v1571 = vunpack.c.h.s8.bf16 %v575
        %v1572 = vunpack.c.l.s8.bf16 %v576
        %v1573 = vunpack.c.h.s8.bf16 %v576
        %v1574 = vunpack.c.l.s8.bf16 %v577
        %v1575 = vunpack.c.h.s8.bf16 %v577
        %v1576 = vunpack.c.l.s8.bf16 %v578
        %v1577 = vunpack.c.h.s8.bf16 %v578
        %v1578 = vunpack.c.l.s8.bf16 %v579
        %v1579 = vunpack.c.h.s8.bf16 %v579
        %v1580 = vunpack.c.l.s8.bf16 %v580
        %v1581 = vunpack.c.h.s8.bf16 %v580
        %v1582 = vunpack.c.l.s8.bf16 %v581
        %v1583 = vunpack.c.h.s8.bf16 %v581
        %v1584 = vunpack.c.l.s8.bf16 %v582
        %v1585 = vunpack.c.h.s8.bf16 %v582
        %v1586 = vunpack.c.l.s8.bf16 %v583
        %v1587 = vunpack.c.h.s8.bf16 %v583
        %v1588 = vunpack.c.l.s8.bf16 %v584
        %v1589 = vunpack.c.h.s8.bf16 %v584
        %v1590 = vunpack.c.l.s8.bf16 %v585
        %v1591 = vunpack.c.h.s8.bf16 %v585
        %v1592 = vunpack.c.l.s8.bf16 %v586
        %v1593 = vunpack.c.h.s8.bf16 %v586
        %v1594 = vunpack.c.l.s8.bf16 %v587
        %v1595 = vunpack.c.h.s8.bf16 %v587
        %v1596 = vunpack.c.l.s8.bf16 %v588
        %v1597 = vunpack.c.h.s8.bf16 %v588
        %v1598 = vunpack.c.l.s8.bf16 %v589
        %v1599 = vunpack.c.h.s8.bf16 %v589
        %v1600 = vunpack.c.l.s8.bf16 %v590
        %v1601 = vunpack.c.h.s8.bf16 %v590
        %v1602 = vunpack.c.l.s8.bf16 %v591
        %v1603 = vunpack.c.h.s8.bf16 %v591
        %v1604 = vunpack.c.l.s8.bf16 %v592
        %v1605 = vunpack.c.h.s8.bf16 %v592
        %v1606 = vunpack.c.l.s8.bf16 %v593
        %v1607 = vunpack.c.h.s8.bf16 %v593
        %v1608 = vunpack.c.l.s8.bf16 %v594
        %v1609 = vunpack.c.h.s8.bf16 %v594
        %v1610 = vunpack.c.l.s8.bf16 %v595
        %v1611 = vunpack.c.h.s8.bf16 %v595
        %v1612 = vunpack.c.l.s8.bf16 %v596
        %v1613 = vunpack.c.h.s8.bf16 %v596
        %v1614 = vunpack.c.l.s8.bf16 %v597
        %v1615 = vunpack.c.h.s8.bf16 %v597
        %v1616 = vunpack.c.l.s8.bf16 %v598
        %v1617 = vunpack.c.h.s8.bf16 %v598
        %v1618 = vunpack.c.l.s8.bf16 %v599
        %v1619 = vunpack.c.h.s8.bf16 %v599
        %v1620 = vunpack.c.l.s8.bf16 %v600
        %v1621 = vunpack.c.h.s8.bf16 %v600
        %v1622 = vunpack.c.l.s8.bf16 %v601
        %v1623 = vunpack.c.h.s8.bf16 %v601
        %v1624 = vunpack.c.l.s8.bf16 %v602
        %v1625 = vunpack.c.h.s8.bf16 %v602
        %v1626 = vunpack.c.l.s8.bf16 %v603
        %v1627 = vunpack.c.h.s8.bf16 %v603
        %v1628 = vunpack.c.l.s8.bf16 %v604
        %v1629 = vunpack.c.h.s8.bf16 %v604
        %v1630 = vunpack.c.l.s8.bf16 %v605
        %v1631 = vunpack.c.h.s8.bf16 %v605
        %v1632 = vunpack.c.l.s8.bf16 %v606
        %v1633 = vunpack.c.h.s8.bf16 %v606
        %v1634 = vunpack.c.l.s8.bf16 %v607
        %v1635 = vunpack.c.h.s8.bf16 %v607
        %v1636 = vunpack.c.l.s8.bf16 %v608
        %v1637 = vunpack.c.h.s8.bf16 %v608
        %v1638 = vunpack.c.l.s8.bf16 %v609
        %v1639 = vunpack.c.h.s8.bf16 %v609
        %v1640 = vunpack.c.l.s8.bf16 %v610
        %v1641 = vunpack.c.h.s8.bf16 %v610
        %v1642 = vunpack.c.l.s8.bf16 %v611
        %v1643 = vunpack.c.h.s8.bf16 %v611
        %v1644 = vunpack.c.l.s8.bf16 %v612
        %v1645 = vunpack.c.h.s8.bf16 %v612
        %v1646 = vunpack.c.l.s8.bf16 %v613
        %v1647 = vunpack.c.h.s8.bf16 %v613
        %v1648 = vunpack.c.l.s8.bf16 %v614
        %v1649 = vunpack.c.h.s8.bf16 %v614
        %v1650 = vunpack.c.l.s8.bf16 %v615
        %v1651 = vunpack.c.h.s8.bf16 %v615
        %v1652 = vunpack.c.l.s8.bf16 %v616
        %v1653 = vunpack.c.h.s8.bf16 %v616
        %v1654 = vunpack.c.l.s8.bf16 %v617
        %v1655 = vunpack.c.h.s8.bf16 %v617
        %v1656 = vunpack.c.l.s8.bf16 %v618
        %v1657 = vunpack.c.h.s8.bf16 %v618
        %v1658 = vunpack.c.l.s8.bf16 %v619
        %v1659 = vunpack.c.h.s8.bf16 %v619
        %v1660 = vunpack.c.l.s8.bf16 %v620
        %v1661 = vunpack.c.h.s8.bf16 %v620
        %v1662 = vunpack.c.l.s8.bf16 %v621
        %v1663 = vunpack.c.h.s8.bf16 %v621
        %v1664 = vunpack.c.l.s8.bf16 %v622
        %v1665 = vunpack.c.h.s8.bf16 %v622
        %v1666 = vunpack.c.l.s8.bf16 %v623
        %v1667 = vunpack.c.h.s8.bf16 %v623
        %v1668 = vunpack.c.l.s8.bf16 %v624
        %v1669 = vunpack.c.h.s8.bf16 %v624
        %v1670 = vunpack.c.l.s8.bf16 %v625
        %v1671 = vunpack.c.h.s8.bf16 %v625
        %v1672 = vunpack.c.l.s8.bf16 %v626
        %v1673 = vunpack.c.h.s8.bf16 %v626
        %v1674 = vunpack.c.l.s8.bf16 %v627
        %v1675 = vunpack.c.h.s8.bf16 %v627
        %v1676 = vunpack.c.l.s8.bf16 %v628
        %v1677 = vunpack.c.h.s8.bf16 %v628
        %v1678 = vunpack.c.l.s8.bf16 %v629
        %v1679 = vunpack.c.h.s8.bf16 %v629
        %v1680 = vunpack.c.l.s8.bf16 %v630
        %v1681 = vunpack.c.h.s8.bf16 %v630
        %v1682 = vunpack.c.l.s8.bf16 %v631
        %v1683 = vunpack.c.h.s8.bf16 %v631
        %v1684 = vunpack.c.l.s8.bf16 %v632
        %v1685 = vunpack.c.h.s8.bf16 %v632
        %v1686 = vunpack.c.l.s8.bf16 %v633
        %v1687 = vunpack.c.h.s8.bf16 %v633
        %v1688 = vunpack.c.l.s8.bf16 %v634
        %v1689 = vunpack.c.h.s8.bf16 %v634
        %v1690 = vunpack.c.l.s8.bf16 %v635
        %v1691 = vunpack.c.h.s8.bf16 %v635
        %v1692 = vunpack.c.l.s8.bf16 %v636
        %v1693 = vunpack.c.h.s8.bf16 %v636
        %v1694 = vunpack.c.l.s8.bf16 %v637
        %v1695 = vunpack.c.h.s8.bf16 %v637
        %v1696 = vunpack.c.l.s8.bf16 %v638
        %v1697 = vunpack.c.h.s8.bf16 %v638
        %v1698 = vunpack.c.l.s8.bf16 %v639
        %v1699 = vunpack.c.h.s8.bf16 %v639
        %v1700 = vunpack.c.l.s8.bf16 %v640
        %v1701 = vunpack.c.h.s8.bf16 %v640
        %v1702 = vunpack.c.l.s8.bf16 %v641
        %v1703 = vunpack.c.h.s8.bf16 %v641
        %v1704 = vunpack.c.l.s8.bf16 %v642
        %v1705 = vunpack.c.h.s8.bf16 %v642
        %v1706 = vunpack.c.l.s8.bf16 %v643
        %v1707 = vunpack.c.h.s8.bf16 %v643
        %v1708 = vunpack.c.l.s8.bf16 %v644
        %v1709 = vunpack.c.h.s8.bf16 %v644
        %v1710 = vunpack.c.l.s8.bf16 %v645
        %v1711 = vunpack.c.h.s8.bf16 %v645
        %v1712 = vunpack.c.l.s8.bf16 %v646
        %v1713 = vunpack.c.h.s8.bf16 %v646
        %v1714 = vunpack.c.l.s8.bf16 %v647
        %v1715 = vunpack.c.h.s8.bf16 %v647
        %v1716 = vunpack.c.l.s8.bf16 %v648
        %v1717 = vunpack.c.h.s8.bf16 %v648
        %v1718 = vunpack.c.l.s8.bf16 %v649
        %v1719 = vunpack.c.h.s8.bf16 %v649
        %v1720 = vunpack.c.l.s8.bf16 %v650
        %v1721 = vunpack.c.h.s8.bf16 %v650
        %v1722 = vunpack.c.l.s8.bf16 %v651
        %v1723 = vunpack.c.h.s8.bf16 %v651
        %v1724 = vunpack.c.l.s8.bf16 %v652
        %v1725 = vunpack.c.h.s8.bf16 %v652
        %v1726 = vunpack.c.l.s8.bf16 %v653
        %v1727 = vunpack.c.h.s8.bf16 %v653
        %v1728 = vunpack.c.l.s8.bf16 %v654
        %v1729 = vunpack.c.h.s8.bf16 %v654
        %v1730 = vunpack.c.l.s8.bf16 %v655
        %v1731 = vunpack.c.h.s8.bf16 %v655
        %v1732 = vunpack.c.l.s8.bf16 %v656
        %v1733 = vunpack.c.h.s8.bf16 %v656
        %v1734 = vunpack.c.l.s8.bf16 %v657
        %v1735 = vunpack.c.h.s8.bf16 %v657
        %v1736 = vunpack.c.l.s8.bf16 %v658
        %v1737 = vunpack.c.h.s8.bf16 %v658
        %v1738 = vunpack.c.l.s8.bf16 %v659
        %v1739 = vunpack.c.h.s8.bf16 %v659
        %v1740 = vunpack.c.l.s8.bf16 %v660
        %v1741 = vunpack.c.h.s8.bf16 %v660
        %v1742 = vunpack.c.l.s8.bf16 %v661
        %v1743 = vunpack.c.h.s8.bf16 %v661
        %v1744 = vunpack.c.l.s8.bf16 %v662
        %v1745 = vunpack.c.h.s8.bf16 %v662
        %v1746 = vunpack.c.l.s8.bf16 %v663
        %v1747 = vunpack.c.h.s8.bf16 %v663
        %v1748 = vunpack.c.l.s8.bf16 %v664
        %v1749 = vunpack.c.h.s8.bf16 %v664
        %v1750 = vunpack.c.l.s8.bf16 %v665
        %v1751 = vunpack.c.h.s8.bf16 %v665
        %v1752 = vunpack.c.l.s8.bf16 %v666
        %v1753 = vunpack.c.h.s8.bf16 %v666
        %v1754 = vunpack.c.l.s8.bf16 %v667
        %v1755 = vunpack.c.h.s8.bf16 %v667
        %v1756 = vunpack.c.l.s8.bf16 %v668
        %v1757 = vunpack.c.h.s8.bf16 %v668
        %v1758 = vunpack.c.l.s8.bf16 %v669
        %v1759 = vunpack.c.h.s8.bf16 %v669
        %v1760 = vunpack.c.l.s8.bf16 %v670
        %v1761 = vunpack.c.h.s8.bf16 %v670
        %v1762 = vunpack.c.l.s8.bf16 %v671
        %v1763 = vunpack.c.h.s8.bf16 %v671
        %v1764 = vunpack.c.l.s8.bf16 %v672
        %v1765 = vunpack.c.h.s8.bf16 %v672
        %v1766 = vunpack.c.l.s8.bf16 %v673
        %v1767 = vunpack.c.h.s8.bf16 %v673
        %v1768 = vunpack.c.l.s8.bf16 %v674
        %v1769 = vunpack.c.h.s8.bf16 %v674
        %v1770 = vunpack.c.l.s8.bf16 %v675
        %v1771 = vunpack.c.h.s8.bf16 %v675
        %v1772 = vunpack.c.l.s8.bf16 %v676
        %v1773 = vunpack.c.h.s8.bf16 %v676
        %v1774 = vunpack.c.l.s8.bf16 %v677
        %v1775 = vunpack.c.h.s8.bf16 %v677
        %v1776 = vunpack.c.l.s8.bf16 %v678
        %v1777 = vunpack.c.h.s8.bf16 %v678
        %v1778 = vunpack.c.l.s8.bf16 %v679
        %v1779 = vunpack.c.h.s8.bf16 %v679
        %v1780 = vunpack.c.l.s8.bf16 %v680
        %v1781 = vunpack.c.h.s8.bf16 %v680
        %v1782 = vunpack.c.l.s8.bf16 %v681
        %v1783 = vunpack.c.h.s8.bf16 %v681
        %v1784 = vunpack.c.l.s8.bf16 %v682
        %v1785 = vunpack.c.h.s8.bf16 %v682
        %v1786 = vunpack.c.l.s8.bf16 %v683
        %v1787 = vunpack.c.h.s8.bf16 %v683
        %v1788 = vunpack.c.l.s8.bf16 %v684
        %v1789 = vunpack.c.h.s8.bf16 %v684
        %v1790 = vunpack.c.l.s8.bf16 %v685
        %v1791 = vunpack.c.h.s8.bf16 %v685
        %v1792 = vunpack.c.l.s8.bf16 %v686
        %v1793 = vunpack.c.h.s8.bf16 %v686
        %v1794 = vunpack.c.l.s8.bf16 %v687
        %v1795 = vunpack.c.h.s8.bf16 %v687
        %v1796 = vunpack.c.l.s8.bf16 %v688
        %v1797 = vunpack.c.h.s8.bf16 %v688
        %v1798 = vunpack.c.l.s8.bf16 %v689
        %v1799 = vunpack.c.h.s8.bf16 %v689
        %v1800 = vunpack.c.l.s8.bf16 %v690
        %v1801 = vunpack.c.h.s8.bf16 %v690
        %v1802 = vunpack.c.l.s8.bf16 %v691
        %v1803 = vunpack.c.h.s8.bf16 %v691
        %v1804 = vunpack.c.l.s8.bf16 %v692
        %v1805 = vunpack.c.h.s8.bf16 %v692
        %v1806 = vunpack.c.l.s8.bf16 %v693
        %v1807 = vunpack.c.h.s8.bf16 %v693
        %v1808 = vunpack.c.l.s8.bf16 %v694
        %v1809 = vunpack.c.h.s8.bf16 %v694
        %v1810 = vunpack.c.l.s8.bf16 %v695
        %v1811 = vunpack.c.h.s8.bf16 %v695
        %v1812 = vunpack.c.l.s8.bf16 %v696
        %v1813 = vunpack.c.h.s8.bf16 %v696
        %v1814 = vunpack.c.l.s8.bf16 %v697
        %v1815 = vunpack.c.h.s8.bf16 %v697
        %v1816 = vunpack.c.l.s8.bf16 %v698
        %v1817 = vunpack.c.h.s8.bf16 %v698
        %v1818 = vunpack.c.l.s8.bf16 %v699
        %v1819 = vunpack.c.h.s8.bf16 %v699
        %v1820 = vunpack.c.l.s8.bf16 %v700
        %v1821 = vunpack.c.h.s8.bf16 %v700
        %v1822 = vunpack.c.l.s8.bf16 %v701
        %v1823 = vunpack.c.h.s8.bf16 %v701
        %v1824 = vunpack.c.l.s8.bf16 %v702
        %v1825 = vunpack.c.h.s8.bf16 %v702
        %v1826 = vunpack.c.l.s8.bf16 %v703
        %v1827 = vunpack.c.h.s8.bf16 %v703
        %v1828 = vunpack.c.l.s8.bf16 %v704
        %v1829 = vunpack.c.h.s8.bf16 %v704
        %v1830 = vunpack.c.l.s8.bf16 %v705
        %v1831 = vunpack.c.h.s8.bf16 %v705
        %v1832 = vunpack.c.l.s8.bf16 %v706
        %v1833 = vunpack.c.h.s8.bf16 %v706
        %v1834 = vunpack.c.l.s8.bf16 %v707
        %v1835 = vunpack.c.h.s8.bf16 %v707
        %v1836 = vunpack.c.l.s8.bf16 %v708
        %v1837 = vunpack.c.h.s8.bf16 %v708
        %v1838 = vunpack.c.l.s8.bf16 %v709
        %v1839 = vunpack.c.h.s8.bf16 %v709
        %v1840 = vunpack.c.l.s8.bf16 %v710
        %v1841 = vunpack.c.h.s8.bf16 %v710
        %v1842 = vunpack.c.l.s8.bf16 %v711
        %v1843 = vunpack.c.h.s8.bf16 %v711
        %v1844 = vunpack.c.l.s8.bf16 %v712
        %v1845 = vunpack.c.h.s8.bf16 %v712
        %v1846 = vunpack.c.l.s8.bf16 %v713
        %v1847 = vunpack.c.h.s8.bf16 %v713
        %v1848 = vunpack.c.l.s8.bf16 %v714
        %v1849 = vunpack.c.h.s8.bf16 %v714
        %v1850 = vunpack.c.l.s8.bf16 %v715
        %v1851 = vunpack.c.h.s8.bf16 %v715
        %v1852 = vunpack.c.l.s8.bf16 %v716
        %v1853 = vunpack.c.h.s8.bf16 %v716
        %v1854 = vunpack.c.l.s8.bf16 %v717
        %v1855 = vunpack.c.h.s8.bf16 %v717
        %v1856 = vunpack.c.l.s8.bf16 %v718
        %v1857 = vunpack.c.h.s8.bf16 %v718
        %v1858 = vunpack.c.l.s8.bf16 %v719
        %v1859 = vunpack.c.h.s8.bf16 %v719
        %v1860 = vunpack.c.l.s8.bf16 %v720
        %v1861 = vunpack.c.h.s8.bf16 %v720
        %v1862 = vunpack.c.l.s8.bf16 %v721
        %v1863 = vunpack.c.h.s8.bf16 %v721
        %v1864 = vunpack.c.l.s8.bf16 %v722
        %v1865 = vunpack.c.h.s8.bf16 %v722
        %v1866 = vunpack.c.l.s8.bf16 %v723
        %v1867 = vunpack.c.h.s8.bf16 %v723
        %v1868 = vunpack.c.l.s8.bf16 %v724
        %v1869 = vunpack.c.h.s8.bf16 %v724
        %v1870 = vunpack.c.l.s8.bf16 %v725
        %v1871 = vunpack.c.h.s8.bf16 %v725
        %v1872 = vunpack.c.l.s8.bf16 %v726
        %v1873 = vunpack.c.h.s8.bf16 %v726
        %v1874 = vunpack.c.l.s8.bf16 %v727
        %v1875 = vunpack.c.h.s8.bf16 %v727
        %v1876 = vunpack.c.l.s8.bf16 %v728
        %v1877 = vunpack.c.h.s8.bf16 %v728
        %v1878 = vunpack.c.l.s8.bf16 %v729
        %v1879 = vunpack.c.h.s8.bf16 %v729
        %v1880 = vunpack.c.l.s8.bf16 %v730
        %v1881 = vunpack.c.h.s8.bf16 %v730
        %v1882 = vunpack.c.l.s8.bf16 %v731
        %v1883 = vunpack.c.h.s8.bf16 %v731
        %v1884 = vunpack.c.l.s8.bf16 %v732
        %v1885 = vunpack.c.h.s8.bf16 %v732
        %v1886 = vunpack.c.l.s8.bf16 %v733
        %v1887 = vunpack.c.h.s8.bf16 %v733
        %v1888 = vunpack.c.l.s8.bf16 %v734
        %v1889 = vunpack.c.h.s8.bf16 %v734
        %v1890 = vunpack.c.l.s8.bf16 %v735
        %v1891 = vunpack.c.h.s8.bf16 %v735
        %v1892 = vunpack.c.l.s8.bf16 %v736
        %v1893 = vunpack.c.h.s8.bf16 %v736
        %v1894 = vunpack.c.l.s8.bf16 %v737
        %v1895 = vunpack.c.h.s8.bf16 %v737
        %v1896 = vunpack.c.l.s8.bf16 %v738
        %v1897 = vunpack.c.h.s8.bf16 %v738
        %v1898 = vunpack.c.l.s8.bf16 %v739
        %v1899 = vunpack.c.h.s8.bf16 %v739
        %v1900 = vunpack.c.l.s8.bf16 %v740
        %v1901 = vunpack.c.h.s8.bf16 %v740
        %v1902 = vunpack.c.l.s8.bf16 %v741
        %v1903 = vunpack.c.h.s8.bf16 %v741
        %v1904 = vunpack.c.l.s8.bf16 %v742
        %v1905 = vunpack.c.h.s8.bf16 %v742
        %v1906 = vunpack.c.l.s8.bf16 %v743
        %v1907 = vunpack.c.h.s8.bf16 %v743
        %v1908 = vunpack.c.l.s8.bf16 %v744
        %v1909 = vunpack.c.h.s8.bf16 %v744
        %v1910 = vunpack.c.l.s8.bf16 %v745
        %v1911 = vunpack.c.h.s8.bf16 %v745
        %v1912 = vunpack.c.l.s8.bf16 %v746
        %v1913 = vunpack.c.h.s8.bf16 %v746
        %v1914 = vunpack.c.l.s8.bf16 %v747
        %v1915 = vunpack.c.h.s8.bf16 %v747
        %v1916 = vunpack.c.l.s8.bf16 %v748
        %v1917 = vunpack.c.h.s8.bf16 %v748
        %v1918 = vunpack.c.l.s8.bf16 %v749
        %v1919 = vunpack.c.h.s8.bf16 %v749
        %v1920 = vunpack.c.l.s8.bf16 %v750
        %v1921 = vunpack.c.h.s8.bf16 %v750
        %v1922 = vunpack.c.l.s8.bf16 %v751
        %v1923 = vunpack.c.h.s8.bf16 %v751
        %v1924 = vunpack.c.l.s8.bf16 %v752
        %v1925 = vunpack.c.h.s8.bf16 %v752
        %v1926 = vunpack.c.l.s8.bf16 %v753
        %v1927 = vunpack.c.h.s8.bf16 %v753
        %v1928 = vunpack.c.l.s8.bf16 %v754
        %v1929 = vunpack.c.h.s8.bf16 %v754
        %v1930 = vunpack.c.l.s8.bf16 %v755
        %v1931 = vunpack.c.h.s8.bf16 %v755
        %v1932 = vunpack.c.l.s8.bf16 %v756
        %v1933 = vunpack.c.h.s8.bf16 %v756
        %v1934 = vunpack.c.l.s8.bf16 %v757
        %v1935 = vunpack.c.h.s8.bf16 %v757
        %v1936 = vunpack.c.l.s8.bf16 %v758
        %v1937 = vunpack.c.h.s8.bf16 %v758
        %v1938 = vunpack.c.l.s8.bf16 %v759
        %v1939 = vunpack.c.h.s8.bf16 %v759
        %v1940 = vunpack.c.l.s8.bf16 %v760
        %v1941 = vunpack.c.h.s8.bf16 %v760
        %v1942 = vunpack.c.l.s8.bf16 %v761
        %v1943 = vunpack.c.h.s8.bf16 %v761
        %v1944 = vunpack.c.l.s8.bf16 %v762
        %v1945 = vunpack.c.h.s8.bf16 %v762
        %v1946 = vunpack.c.l.s8.bf16 %v763
        %v1947 = vunpack.c.h.s8.bf16 %v763
        %v1948 = vunpack.c.l.s8.bf16 %v764
        %v1949 = vunpack.c.h.s8.bf16 %v764
        %v1950 = vunpack.c.l.s8.bf16 %v765
        %v1951 = vunpack.c.h.s8.bf16 %v765
        %v1952 = vunpack.c.l.s8.bf16 %v766
        %v1953 = vunpack.c.h.s8.bf16 %v766
        %v1954 = vunpack.c.l.s8.bf16 %v767
        %v1955 = vunpack.c.h.s8.bf16 %v767
        %v1956 = vunpack.c.l.s8.bf16 %v768
        %v1957 = vunpack.c.h.s8.bf16 %v768
        %v1958 = vunpack.c.l.s8.bf16 %v769
        %v1959 = vunpack.c.h.s8.bf16 %v769
        %v1960 = vunpack.c.l.s8.bf16 %v770
        %v1961 = vunpack.c.h.s8.bf16 %v770
        %v1962 = vunpack.c.l.s8.bf16 %v771
        %v1963 = vunpack.c.h.s8.bf16 %v771
        %v1964 = vunpack.c.l.s8.bf16 %v772
        %v1965 = vunpack.c.h.s8.bf16 %v772
        %v1966 = vunpack.c.l.s8.bf16 %v773
        %v1967 = vunpack.c.h.s8.bf16 %v773
        %v1968 = vunpack.c.l.s8.bf16 %v774
        %v1969 = vunpack.c.h.s8.bf16 %v774
        %v1970 = vunpack.c.l.s8.bf16 %v775
        %v1971 = vunpack.c.h.s8.bf16 %v775
        %v1972 = vunpack.c.l.s8.bf16 %v776
        %v1973 = vunpack.c.h.s8.bf16 %v776
        %v1974 = vunpack.c.l.s8.bf16 %v777
        %v1975 = vunpack.c.h.s8.bf16 %v777
        %v1976 = vunpack.c.l.s8.bf16 %v778
        %v1977 = vunpack.c.h.s8.bf16 %v778
        %v1978 = vunpack.c.l.s8.bf16 %v779
        %v1979 = vunpack.c.h.s8.bf16 %v779
        %v1980 = vunpack.c.l.s8.bf16 %v780
        %v1981 = vunpack.c.h.s8.bf16 %v780
        %v1982 = vunpack.c.l.s8.bf16 %v781
        %v1983 = vunpack.c.h.s8.bf16 %v781
        %v1984 = vunpack.c.l.s8.bf16 %v782
        %v1985 = vunpack.c.h.s8.bf16 %v782
        %v1986 = vunpack.c.l.s8.bf16 %v783
        %v1987 = vunpack.c.h.s8.bf16 %v783
        %v1988 = vunpack.c.l.s8.bf16 %v784
        %v1989 = vunpack.c.h.s8.bf16 %v784
        %v1990 = vunpack.c.l.s8.bf16 %v785
        %v1991 = vunpack.c.h.s8.bf16 %v785
        %v1992 = vunpack.c.l.s8.bf16 %v786
        %v1993 = vunpack.c.h.s8.bf16 %v786
        %v1994 = vunpack.c.l.s8.bf16 %v787
        %v1995 = vunpack.c.h.s8.bf16 %v787
        %v1996 = vunpack.c.l.s8.bf16 %v788
        %v1997 = vunpack.c.h.s8.bf16 %v788
        %v1998 = vunpack.c.l.s8.bf16 %v789
        %v1999 = vunpack.c.h.s8.bf16 %v789
        %v2000 = vunpack.c.l.s8.bf16 %v790
        %v2001 = vunpack.c.h.s8.bf16 %v790
        %v2002 = vunpack.c.l.s8.bf16 %v791
        %v2003 = vunpack.c.h.s8.bf16 %v791
        %v2004 = vunpack.c.l.s8.bf16 %v792
        %v2005 = vunpack.c.h.s8.bf16 %v792
        %v2006 = vunpack.c.l.s8.bf16 %v793
        %v2007 = vunpack.c.h.s8.bf16 %v793
        %v2008 = vunpack.c.l.s8.bf16 %v794
        %v2009 = vunpack.c.h.s8.bf16 %v794
        %v2010 = vunpack.c.l.s8.bf16 %v795
        %v2011 = vunpack.c.h.s8.bf16 %v795
        %v2012 = vunpack.c.l.s8.bf16 %v796
        %v2013 = vunpack.c.h.s8.bf16 %v796
        %v2014 = vunpack.c.l.s8.bf16 %v797
        %v2015 = vunpack.c.h.s8.bf16 %v797
        %v2016 = vunpack.c.l.s8.bf16 %v798
        %v2017 = vunpack.c.h.s8.bf16 %v798
        %v2018 = vunpack.c.l.s8.bf16 %v799
        %v2019 = vunpack.c.h.s8.bf16 %v799
        %v2020 = vunpack.c.l.s8.bf16 %v800
        %v2021 = vunpack.c.h.s8.bf16 %v800
        %v2022 = vunpack.c.l.s8.bf16 %v801
        %v2023 = vunpack.c.h.s8.bf16 %v801
        %v2024 = vunpack.c.l.s8.bf16 %v802
        %v2025 = vunpack.c.h.s8.bf16 %v802
        %v2026 = vunpack.c.l.s8.bf16 %v803
        %v2027 = vunpack.c.h.s8.bf16 %v803
        %v2028 = vunpack.c.l.s8.bf16 %v804
        %v2029 = vunpack.c.h.s8.bf16 %v804
        %v2030 = vunpack.c.l.s8.bf16 %v805
        %v2031 = vunpack.c.h.s8.bf16 %v805
        %v2032 = vunpack.c.l.s8.bf16 %v806
        %v2033 = vunpack.c.h.s8.bf16 %v806
        %v2034 = vunpack.c.l.s8.bf16 %v807
        %v2035 = vunpack.c.h.s8.bf16 %v807
        %v2036 = vunpack.c.l.s8.bf16 %v808
        %v2037 = vunpack.c.h.s8.bf16 %v808
        %v2038 = vunpack.c.l.s8.bf16 %v809
        %v2039 = vunpack.c.h.s8.bf16 %v809
        %v2040 = vunpack.c.l.s8.bf16 %v810
        %v2041 = vunpack.c.h.s8.bf16 %v810
        %v2042 = vunpack.c.l.s8.bf16 %v811
        %v2043 = vunpack.c.h.s8.bf16 %v811
        %v2044 = vunpack.c.l.s8.bf16 %v812
        %v2045 = vunpack.c.h.s8.bf16 %v812
        %v2046 = vunpack.c.l.s8.bf16 %v813
        %v2047 = vunpack.c.h.s8.bf16 %v813
        %v2048 = vunpack.c.l.s8.bf16 %v814
        %v2049 = vunpack.c.h.s8.bf16 %v814
        %v2050 = vunpack.c.l.s8.bf16 %v815
        %v2051 = vunpack.c.h.s8.bf16 %v815
        %v2052 = vunpack.c.l.s8.bf16 %v816
        %v2053 = vunpack.c.h.s8.bf16 %v816
        %v2054 = vunpack.c.l.s8.bf16 %v817
        %v2055 = vunpack.c.h.s8.bf16 %v817
        %v2056 = vunpack.c.l.s8.bf16 %v818
        %v2057 = vunpack.c.h.s8.bf16 %v818
        %v2058 = vunpack.c.l.s8.bf16 %v819
        %v2059 = vunpack.c.h.s8.bf16 %v819
        %v2060 = vunpack.c.l.s8.bf16 %v820
        %v2061 = vunpack.c.h.s8.bf16 %v820
        %v2062 = vunpack.c.l.s8.bf16 %v821
        %v2063 = vunpack.c.h.s8.bf16 %v821
        %v2064 = vunpack.c.l.s8.bf16 %v822
        %v2065 = vunpack.c.h.s8.bf16 %v822
        %v2066 = vunpack.c.l.s8.bf16 %v823
        %v2067 = vunpack.c.h.s8.bf16 %v823
        %v2068 = vunpack.c.l.s8.bf16 %v824
        %v2069 = vunpack.c.h.s8.bf16 %v824
        %v2070 = vunpack.c.l.s8.bf16 %v825
        %v2071 = vunpack.c.h.s8.bf16 %v825
        %v2072 = vunpack.c.l.s8.bf16 %v826
        %v2073 = vunpack.c.h.s8.bf16 %v826
        %v2074 = vunpack.c.l.s8.bf16 %v827
        %v2075 = vunpack.c.h.s8.bf16 %v827
        %v2076 = vunpack.c.l.s8.bf16 %v828
        %v2077 = vunpack.c.h.s8.bf16 %v828
        %v2078 = vunpack.c.l.s8.bf16 %v829
        %v2079 = vunpack.c.h.s8.bf16 %v829
        %v2080 = vunpack.c.l.s8.bf16 %v830
        %v2081 = vunpack.c.h.s8.bf16 %v830
        %v2082 = vunpack.c.l.s8.bf16 %v831
        %v2083 = vunpack.c.h.s8.bf16 %v831
        %v2084 = vunpack.c.l.s8.bf16 %v832
        %v2085 = vunpack.c.h.s8.bf16 %v832
        %v2086 = vunpack.c.l.s8.bf16 %v833
        %v2087 = vunpack.c.h.s8.bf16 %v833
        %v2088 = vunpack.c.l.s8.bf16 %v834
        %v2089 = vunpack.c.h.s8.bf16 %v834
        %v2090 = vunpack.c.l.s8.bf16 %v835
        %v2091 = vunpack.c.h.s8.bf16 %v835
        %v2092 = vunpack.c.l.s8.bf16 %v836
        %v2093 = vunpack.c.h.s8.bf16 %v836
        %v2094 = vunpack.c.l.s8.bf16 %v837
        %v2095 = vunpack.c.h.s8.bf16 %v837
        %v2096 = vunpack.c.l.s8.bf16 %v838
        %v2097 = vunpack.c.h.s8.bf16 %v838
        %v2098 = vunpack.c.l.s8.bf16 %v839
        %v2099 = vunpack.c.h.s8.bf16 %v839
        %v2100 = vunpack.c.l.s8.bf16 %v840
        %v2101 = vunpack.c.h.s8.bf16 %v840
        %v2102 = vunpack.c.l.s8.bf16 %v841
        %v2103 = vunpack.c.h.s8.bf16 %v841
        %v2104 = vunpack.c.l.s8.bf16 %v842
        %v2105 = vunpack.c.h.s8.bf16 %v842
        %v2106 = vunpack.c.l.s8.bf16 %v843
        %v2107 = vunpack.c.h.s8.bf16 %v843
        %v2108 = vunpack.c.l.s8.bf16 %v844
        %v2109 = vunpack.c.h.s8.bf16 %v844
        %v2110 = vunpack.c.l.s8.bf16 %v845
        %v2111 = vunpack.c.h.s8.bf16 %v845
        %v2112 = vunpack.c.l.s8.bf16 %v846
        %v2113 = vunpack.c.h.s8.bf16 %v846
        %v2114 = vunpack.c.l.s8.bf16 %v847
        %v2115 = vunpack.c.h.s8.bf16 %v847
        %v2116 = vunpack.c.l.s8.bf16 %v848
        %v2117 = vunpack.c.h.s8.bf16 %v848
        %v2118 = vunpack.c.l.s8.bf16 %v849
        %v2119 = vunpack.c.h.s8.bf16 %v849
        %v2120 = vunpack.c.l.s8.bf16 %v850
        %v2121 = vunpack.c.h.s8.bf16 %v850
        %v2122 = vunpack.c.l.s8.bf16 %v851
        %v2123 = vunpack.c.h.s8.bf16 %v851
        %v2124 = vunpack.c.l.s8.bf16 %v852
        %v2125 = vunpack.c.h.s8.bf16 %v852
        %v2126 = vunpack.c.l.s8.bf16 %v853
        %v2127 = vunpack.c.h.s8.bf16 %v853
        %v2128 = vunpack.c.l.s8.bf16 %v854
        %v2129 = vunpack.c.h.s8.bf16 %v854
        %v2130 = vunpack.c.l.s8.bf16 %v855
        %v2131 = vunpack.c.h.s8.bf16 %v855
        %v2132 = vunpack.c.l.s8.bf16 %v856
        %v2133 = vunpack.c.h.s8.bf16 %v856
        %v2134 = vunpack.c.l.s8.bf16 %v857
        %v2135 = vunpack.c.h.s8.bf16 %v857
        %v2136 = vunpack.c.l.s8.bf16 %v858
        %v2137 = vunpack.c.h.s8.bf16 %v858
        %v2138 = vunpack.c.l.s8.bf16 %v859
        %v2139 = vunpack.c.h.s8.bf16 %v859
        %v2140 = vunpack.c.l.s8.bf16 %v860
        %v2141 = vunpack.c.h.s8.bf16 %v860
        %v2142 = vunpack.c.l.s8.bf16 %v861
        %v2143 = vunpack.c.h.s8.bf16 %v861
        %v2144 = vunpack.c.l.s8.bf16 %v862
        %v2145 = vunpack.c.h.s8.bf16 %v862
        %v2146 = vunpack.c.l.s8.bf16 %v863
        %v2147 = vunpack.c.h.s8.bf16 %v863
        %v2148 = vunpack.c.l.s8.bf16 %v864
        %v2149 = vunpack.c.h.s8.bf16 %v864
        %v2150 = vunpack.c.l.s8.bf16 %v865
        %v2151 = vunpack.c.h.s8.bf16 %v865
        %v2152 = vunpack.c.l.s8.bf16 %v866
        %v2153 = vunpack.c.h.s8.bf16 %v866
        %v2154 = vunpack.c.l.s8.bf16 %v867
        %v2155 = vunpack.c.h.s8.bf16 %v867
        %v2156 = vunpack.c.l.s8.bf16 %v868
        %v2157 = vunpack.c.h.s8.bf16 %v868
        %v2158 = vunpack.c.l.s8.bf16 %v869
        %v2159 = vunpack.c.h.s8.bf16 %v869
        %v2160 = vunpack.c.l.s8.bf16 %v870
        %v2161 = vunpack.c.h.s8.bf16 %v870
        %v2162 = vunpack.c.l.s8.bf16 %v871
        %v2163 = vunpack.c.h.s8.bf16 %v871
        %v2164 = vunpack.c.l.s8.bf16 %v872
        %v2165 = vunpack.c.h.s8.bf16 %v872
        %v2166 = vunpack.c.l.s8.bf16 %v873
        %v2167 = vunpack.c.h.s8.bf16 %v873
        %v2168 = vunpack.c.l.s8.bf16 %v874
        %v2169 = vunpack.c.h.s8.bf16 %v874
        %v2170 = vunpack.c.l.s8.bf16 %v875
        %v2171 = vunpack.c.h.s8.bf16 %v875
        %v2172 = vunpack.c.l.s8.bf16 %v876
        %v2173 = vunpack.c.h.s8.bf16 %v876
        %v2174 = vunpack.c.l.s8.bf16 %v877
        %v2175 = vunpack.c.h.s8.bf16 %v877
        %v2176 = vunpack.c.l.s8.bf16 %v878
        %v2177 = vunpack.c.h.s8.bf16 %v878
        %v2178 = vunpack.c.l.s8.bf16 %v879
        %v2179 = vunpack.c.h.s8.bf16 %v879
        %v2180 = vunpack.c.l.s8.bf16 %v880
        %v2181 = vunpack.c.h.s8.bf16 %v880
        %v2182 = vunpack.c.l.s8.bf16 %v881
        %v2183 = vunpack.c.h.s8.bf16 %v881
        %v2184 = vunpack.c.l.s8.bf16 %v882
        %v2185 = vunpack.c.h.s8.bf16 %v882
        %v2186 = vunpack.c.l.s8.bf16 %v883
        %v2187 = vunpack.c.h.s8.bf16 %v883
        %v2188 = vunpack.c.l.s8.bf16 %v884
        %v2189 = vunpack.c.h.s8.bf16 %v884
        %v2190 = vunpack.c.l.s8.bf16 %v885
        %v2191 = vunpack.c.h.s8.bf16 %v885
        %v2192 = vunpack.c.l.s8.bf16 %v886
        %v2193 = vunpack.c.h.s8.bf16 %v886
        %v2194 = vunpack.c.l.s8.bf16 %v887
        %v2195 = vunpack.c.h.s8.bf16 %v887
        %v2196 = vunpack.c.l.s8.bf16 %v888
        %v2197 = vunpack.c.h.s8.bf16 %v888
        %v2198 = vunpack.c.l.s8.bf16 %v889
        %v2199 = vunpack.c.h.s8.bf16 %v889
        %v2200 = vunpack.c.l.s8.bf16 %v890
        %v2201 = vunpack.c.h.s8.bf16 %v890
        %v2202 = vunpack.c.l.s8.bf16 %v891
        %v2203 = vunpack.c.h.s8.bf16 %v891
        %v2204 = vunpack.c.l.s8.bf16 %v892
        %v2205 = vunpack.c.h.s8.bf16 %v892
        %v2206 = vunpack.c.l.s8.bf16 %v893
        %v2207 = vunpack.c.h.s8.bf16 %v893
        %v2208 = vunpack.c.l.s8.bf16 %v894
        %v2209 = vunpack.c.h.s8.bf16 %v894
        %v2210 = vunpack.c.l.s8.bf16 %v895
        %v2211 = vunpack.c.h.s8.bf16 %v895
        %v2212 = vunpack.c.l.s8.bf16 %v896
        %v2213 = vunpack.c.h.s8.bf16 %v896
        %v2214 = vunpack.c.l.s8.bf16 %v897
        %v2215 = vunpack.c.h.s8.bf16 %v897
        %v2216 = vunpack.c.l.s8.bf16 %v898
        %v2217 = vunpack.c.h.s8.bf16 %v898
        %v2218 = vunpack.c.l.s8.bf16 %v899
        %v2219 = vunpack.c.h.s8.bf16 %v899
        %v2220 = vunpack.c.l.s8.bf16 %v900
        %v2221 = vunpack.c.h.s8.bf16 %v900
        %v2222 = vunpack.c.l.s8.bf16 %v901
        %v2223 = vunpack.c.h.s8.bf16 %v901
        %v2224 = vunpack.c.l.s8.bf16 %v902
        %v2225 = vunpack.c.h.s8.bf16 %v902
        %v2226 = vunpack.c.l.s8.bf16 %v903
        %v2227 = vunpack.c.h.s8.bf16 %v903
        %v2228 = vunpack.c.l.s8.bf16 %v904
        %v2229 = vunpack.c.h.s8.bf16 %v904
        %v2230 = vunpack.c.l.s8.bf16 %v905
        %v2231 = vunpack.c.h.s8.bf16 %v905
        %v2232 = vunpack.c.l.s8.bf16 %v906
        %v2233 = vunpack.c.h.s8.bf16 %v906
        %v2234 = vunpack.c.l.s8.bf16 %v907
        %v2235 = vunpack.c.h.s8.bf16 %v907
        %v2236 = vunpack.c.l.s8.bf16 %v908
        %v2237 = vunpack.c.h.s8.bf16 %v908
        %v2238 = vunpack.c.l.s8.bf16 %v909
        %v2239 = vunpack.c.h.s8.bf16 %v909
        %v2240 = vunpack.c.l.s8.bf16 %v910
        %v2241 = vunpack.c.h.s8.bf16 %v910
        %v2242 = vunpack.c.l.s8.bf16 %v911
        %v2243 = vunpack.c.h.s8.bf16 %v911
        %v2244 = vunpack.c.l.s8.bf16 %v912
        %v2245 = vunpack.c.h.s8.bf16 %v912
        %v2246 = vunpack.c.l.s8.bf16 %v913
        %v2247 = vunpack.c.h.s8.bf16 %v913
        %v2248 = vunpack.c.l.s8.bf16 %v914
        %v2249 = vunpack.c.h.s8.bf16 %v914
        %v2250 = vunpack.c.l.s8.bf16 %v915
        %v2251 = vunpack.c.h.s8.bf16 %v915
        %v2252 = vunpack.c.l.s8.bf16 %v916
        %v2253 = vunpack.c.h.s8.bf16 %v916
        %v2254 = vunpack.c.l.s8.bf16 %v917
        %v2255 = vunpack.c.h.s8.bf16 %v917
        %v2256 = vunpack.c.l.s8.bf16 %v918
        %v2257 = vunpack.c.h.s8.bf16 %v918
        %v2258 = vunpack.c.l.s8.bf16 %v919
        %v2259 = vunpack.c.h.s8.bf16 %v919
        %v2260 = vunpack.c.l.s8.bf16 %v920
        %v2261 = vunpack.c.h.s8.bf16 %v920
        %v2262 = vunpack.c.l.s8.bf16 %v921
        %v2263 = vunpack.c.h.s8.bf16 %v921
        %v2264 = vunpack.c.l.s8.bf16 %v922
        %v2265 = vunpack.c.h.s8.bf16 %v922
        %v2266 = vunpack.c.l.s8.bf16 %v923
        %v2267 = vunpack.c.h.s8.bf16 %v923
        %v2268 = vunpack.c.l.s8.bf16 %v924
        %v2269 = vunpack.c.h.s8.bf16 %v924
        %v2270 = vunpack.c.l.s8.bf16 %v925
        %v2271 = vunpack.c.h.s8.bf16 %v925
        %v2272 = vunpack.c.l.s8.bf16 %v926
        %v2273 = vunpack.c.h.s8.bf16 %v926
        %v2274 = vunpack.c.l.s8.bf16 %v927
        %v2275 = vunpack.c.h.s8.bf16 %v927
        %v2276 = vunpack.c.l.s8.bf16 %v928
        %v2277 = vunpack.c.h.s8.bf16 %v928
        %v2278 = vunpack.c.l.s8.bf16 %v929
        %v2279 = vunpack.c.h.s8.bf16 %v929
        %v2280 = vunpack.c.l.s8.bf16 %v930
        %v2281 = vunpack.c.h.s8.bf16 %v930
        %v2282 = vunpack.c.l.s8.bf16 %v931
        %v2283 = vunpack.c.h.s8.bf16 %v931
        %v2284 = vunpack.c.l.s8.bf16 %v932
        %v2285 = vunpack.c.h.s8.bf16 %v932
        %v2286 = vunpack.c.l.s8.bf16 %v933
        %v2287 = vunpack.c.h.s8.bf16 %v933
        %v2288 = vunpack.c.l.s8.bf16 %v934
        %v2289 = vunpack.c.h.s8.bf16 %v934
        %v2290 = vunpack.c.l.s8.bf16 %v935
        %v2291 = vunpack.c.h.s8.bf16 %v935
        %v2292 = vunpack.c.l.s8.bf16 %v936
        %v2293 = vunpack.c.h.s8.bf16 %v936
        %v2294 = vunpack.c.l.s8.bf16 %v937
        %v2295 = vunpack.c.h.s8.bf16 %v937
        %v2296 = vunpack.c.l.s8.bf16 %v938
        %v2297 = vunpack.c.h.s8.bf16 %v938
        %v2298 = vunpack.c.l.s8.bf16 %v939
        %v2299 = vunpack.c.h.s8.bf16 %v939
        %v2300 = vunpack.c.l.s8.bf16 %v940
        %v2301 = vunpack.c.h.s8.bf16 %v940
        %v2302 = vunpack.c.l.s8.bf16 %v941
        %v2303 = vunpack.c.h.s8.bf16 %v941
        %v2304 = vunpack.c.l.s8.bf16 %v942
        %v2305 = vunpack.c.h.s8.bf16 %v942
        %v2306 = vunpack.c.l.s8.bf16 %v943
        %v2307 = vunpack.c.h.s8.bf16 %v943
        %v2308 = vunpack.c.l.s8.bf16 %v944
        %v2309 = vunpack.c.h.s8.bf16 %v944
        %v2310 = vunpack.c.l.s8.bf16 %v945
        %v2311 = vunpack.c.h.s8.bf16 %v945
        %v2312 = vunpack.c.l.s8.bf16 %v946
        %v2313 = vunpack.c.h.s8.bf16 %v946
        %v2314 = vunpack.c.l.s8.bf16 %v947
        %v2315 = vunpack.c.h.s8.bf16 %v947
        %v2316 = vunpack.c.l.s8.bf16 %v948
        %v2317 = vunpack.c.h.s8.bf16 %v948
        %v2318 = vunpack.c.l.s8.bf16 %v949
        %v2319 = vunpack.c.h.s8.bf16 %v949
        %v2320 = vunpack.c.l.s8.bf16 %v950
        %v2321 = vunpack.c.h.s8.bf16 %v950
        %v2322 = vunpack.c.l.s8.bf16 %v951
        %v2323 = vunpack.c.h.s8.bf16 %v951
        %v2324 = vunpack.c.l.s8.bf16 %v952
        %v2325 = vunpack.c.h.s8.bf16 %v952
        %v2326 = vunpack.c.l.s8.bf16 %v953
        %v2327 = vunpack.c.h.s8.bf16 %v953
        %v2328 = vunpack.c.l.s8.bf16 %v954
        %v2329 = vunpack.c.h.s8.bf16 %v954
        %v2330 = vunpack.c.l.s8.bf16 %v955
        %v2331 = vunpack.c.h.s8.bf16 %v955
        %v2332 = vunpack.c.l.s8.bf16 %v956
        %v2333 = vunpack.c.h.s8.bf16 %v956
        %v2334 = vunpack.c.l.s8.bf16 %v957
        %v2335 = vunpack.c.h.s8.bf16 %v957
        %v2336 = vunpack.c.l.s8.bf16 %v958
        %v2337 = vunpack.c.h.s8.bf16 %v958
        %v2338 = vunpack.c.l.s8.bf16 %v959
        %v2339 = vunpack.c.h.s8.bf16 %v959
        %v2340 = vunpack.c.l.s8.bf16 %v960
        %v2341 = vunpack.c.h.s8.bf16 %v960
        %v2342 = vunpack.c.l.s8.bf16 %v961
        %v2343 = vunpack.c.h.s8.bf16 %v961
        %v2344 = vunpack.c.l.s8.bf16 %v962
        %v2345 = vunpack.c.h.s8.bf16 %v962
        %v2346 = vunpack.c.l.s8.bf16 %v963
        %v2347 = vunpack.c.h.s8.bf16 %v963
        %v2348 = vunpack.c.l.s8.bf16 %v964
        %v2349 = vunpack.c.h.s8.bf16 %v964
        %v2350 = vunpack.c.l.s8.bf16 %v965
        %v2351 = vunpack.c.h.s8.bf16 %v965
        %v2352 = vunpack.c.l.s8.bf16 %v966
        %v2353 = vunpack.c.h.s8.bf16 %v966
        %v2354 = vunpack.c.l.s8.bf16 %v967
        %v2355 = vunpack.c.h.s8.bf16 %v967
        %v2356 = vunpack.c.l.s8.bf16 %v968
        %v2357 = vunpack.c.h.s8.bf16 %v968
        %v2358 = vunpack.c.l.s8.bf16 %v969
        %v2359 = vunpack.c.h.s8.bf16 %v969
        %v2360 = vunpack.c.l.s8.bf16 %v970
        %v2361 = vunpack.c.h.s8.bf16 %v970
        %v2362 = vunpack.c.l.s8.bf16 %v971
        %v2363 = vunpack.c.h.s8.bf16 %v971
        %v2364 = vunpack.c.l.s8.bf16 %v972
        %v2365 = vunpack.c.h.s8.bf16 %v972
        %v2366 = vunpack.c.l.s8.bf16 %v973
        %v2367 = vunpack.c.h.s8.bf16 %v973
        %v2368 = vunpack.c.l.s8.bf16 %v974
        %v2369 = vunpack.c.h.s8.bf16 %v974
        %v2370 = vunpack.c.l.s8.bf16 %v975
        %v2371 = vunpack.c.h.s8.bf16 %v975
        %v2372 = vunpack.c.l.s8.bf16 %v976
        %v2373 = vunpack.c.h.s8.bf16 %v976
        %v2374 = vunpack.c.l.s8.bf16 %v977
        %v2375 = vunpack.c.h.s8.bf16 %v977
        %v2376 = vunpack.c.l.s8.bf16 %v978
        %v2377 = vunpack.c.h.s8.bf16 %v978
        %v2378 = vunpack.c.l.s8.bf16 %v979
        %v2379 = vunpack.c.h.s8.bf16 %v979
        %v2380 = vunpack.c.l.s8.bf16 %v980
        %v2381 = vunpack.c.h.s8.bf16 %v980
        %v2382 = vunpack.c.l.s8.bf16 %v981
        %v2383 = vunpack.c.h.s8.bf16 %v981
        %v2384 = vunpack.c.l.s8.bf16 %v982
        %v2385 = vunpack.c.h.s8.bf16 %v982
        %v2386 = vunpack.c.l.s8.bf16 %v983
        %v2387 = vunpack.c.h.s8.bf16 %v983
        %v2388 = vunpack.c.l.s8.bf16 %v984
        %v2389 = vunpack.c.h.s8.bf16 %v984
        %v2390 = vunpack.c.l.s8.bf16 %v985
        %v2391 = vunpack.c.h.s8.bf16 %v985
        %v2392 = vunpack.c.l.s8.bf16 %v986
        %v2393 = vunpack.c.h.s8.bf16 %v986
        %v2394 = vunpack.c.l.s8.bf16 %v987
        %v2395 = vunpack.c.h.s8.bf16 %v987
        %v2396 = vunpack.c.l.s8.bf16 %v988
        %v2397 = vunpack.c.h.s8.bf16 %v988
        %v2398 = vunpack.c.l.s8.bf16 %v989
        %v2399 = vunpack.c.h.s8.bf16 %v989
        %v2400 = vunpack.c.l.s8.bf16 %v990
        %v2401 = vunpack.c.h.s8.bf16 %v990
        %v2402 = vunpack.c.l.s8.bf16 %v991
        %v2403 = vunpack.c.h.s8.bf16 %v991
        %v2404 = vunpack.c.l.s8.bf16 %v992
        %v2405 = vunpack.c.h.s8.bf16 %v992
        %v2406 = vunpack.c.l.s8.bf16 %v993
        %v2407 = vunpack.c.h.s8.bf16 %v993
        %v2408 = vunpack.c.l.s8.bf16 %v994
        %v2409 = vunpack.c.h.s8.bf16 %v994
        %v2410 = vunpack.c.l.s8.bf16 %v995
        %v2411 = vunpack.c.h.s8.bf16 %v995
        %v2412 = vunpack.c.l.s8.bf16 %v996
        %v2413 = vunpack.c.h.s8.bf16 %v996
        %v2414 = vunpack.c.l.s8.bf16 %v997
        %v2415 = vunpack.c.h.s8.bf16 %v997
        %v2416 = vunpack.c.l.s8.bf16 %v998
        %v2417 = vunpack.c.h.s8.bf16 %v998
        %v2418 = vunpack.c.l.s8.bf16 %v999
        %v2419 = vunpack.c.h.s8.bf16 %v999
        %v2420 = vunpack.c.l.s8.bf16 %v1000
        %v2421 = vunpack.c.h.s8.bf16 %v1000
        %v2422 = vunpack.c.l.s8.bf16 %v1001
        %v2423 = vunpack.c.h.s8.bf16 %v1001
        %v2424 = vunpack.c.l.s8.bf16 %v1002
        %v2425 = vunpack.c.h.s8.bf16 %v1002
        %v2426 = vunpack.c.l.s8.bf16 %v1003
        %v2427 = vunpack.c.h.s8.bf16 %v1003
        %v2428 = vunpack.c.l.s8.bf16 %v1004
        %v2429 = vunpack.c.h.s8.bf16 %v1004
        %v2430 = vunpack.c.l.s8.bf16 %v1005
        %v2431 = vunpack.c.h.s8.bf16 %v1005
        %v2432 = vunpack.c.l.s8.bf16 %v1006
        %v2433 = vunpack.c.h.s8.bf16 %v1006
        %v2434 = vunpack.c.l.s8.bf16 %v1007
        %v2435 = vunpack.c.h.s8.bf16 %v1007
        %v2436 = vunpack.c.l.s8.bf16 %v1008
        %v2437 = vunpack.c.h.s8.bf16 %v1008
        %v2438 = vunpack.c.l.s8.bf16 %v1009
        %v2439 = vunpack.c.h.s8.bf16 %v1009
        %v2440 = vunpack.c.l.s8.bf16 %v1010
        %v2441 = vunpack.c.h.s8.bf16 %v1010
        %v2442 = vunpack.c.l.s8.bf16 %v1011
        %v2443 = vunpack.c.h.s8.bf16 %v1011
        %v2444 = vunpack.c.l.s8.bf16 %v1012
        %v2445 = vunpack.c.h.s8.bf16 %v1012
        %v2446 = vunpack.c.l.s8.bf16 %v1013
        %v2447 = vunpack.c.h.s8.bf16 %v1013
        %v2448 = vunpack.c.l.s8.bf16 %v1014
        %v2449 = vunpack.c.h.s8.bf16 %v1014
        %v2450 = vunpack.c.l.s8.bf16 %v1015
        %v2451 = vunpack.c.h.s8.bf16 %v1015
        %v2452 = vunpack.c.l.s8.bf16 %v1016
        %v2453 = vunpack.c.h.s8.bf16 %v1016
        %v2454 = vunpack.c.l.s8.bf16 %v1017
        %v2455 = vunpack.c.h.s8.bf16 %v1017
        %v2456 = vunpack.c.l.s8.bf16 %v1018
        %v2457 = vunpack.c.h.s8.bf16 %v1018
        %v2458 = vunpack.c.l.s8.bf16 %v1019
        %v2459 = vunpack.c.h.s8.bf16 %v1019
        %v2460 = vunpack.c.l.s8.bf16 %v1020
        %v2461 = vunpack.c.h.s8.bf16 %v1020
        %v2462 = vunpack.c.l.s8.bf16 %v1021
        %v2463 = vunpack.c.h.s8.bf16 %v1021
        %v2464 = vunpack.c.l.s8.bf16 %v1022
        %v2465 = vunpack.c.h.s8.bf16 %v1022
        %v2466 = vunpack.c.l.s8.bf16 %v1023
        %v2467 = vunpack.c.h.s8.bf16 %v1023
        %v2468 = vunpack.c.l.s8.bf16 %v1024
        %v2469 = vunpack.c.h.s8.bf16 %v1024
        %v2470 = vunpack.c.l.s8.bf16 %v1025
        %v2471 = vunpack.c.h.s8.bf16 %v1025
        %v2472 = vunpack.c.l.s8.bf16 %v1026
        %v2473 = vunpack.c.h.s8.bf16 %v1026
        %v2474 = vunpack.c.l.s8.bf16 %v1027
        %v2475 = vunpack.c.h.s8.bf16 %v1027
        %v2476 = vunpack.c.l.s8.bf16 %v1028
        %v2477 = vunpack.c.h.s8.bf16 %v1028
        %v2478 = vunpack.c.l.s8.bf16 %v1029
        %v2479 = vunpack.c.h.s8.bf16 %v1029
        %v2480 = vunpack.c.l.s8.bf16 %v1030
        %v2481 = vunpack.c.h.s8.bf16 %v1030
        %v2482 = vunpack.c.l.s8.bf16 %v1031
        %v2483 = vunpack.c.h.s8.bf16 %v1031
        %v2484 = vunpack.c.l.s8.bf16 %v1032
        %v2485 = vunpack.c.h.s8.bf16 %v1032
        %v2486 = vunpack.c.l.s8.bf16 %v1033
        %v2487 = vunpack.c.h.s8.bf16 %v1033
        %v2488 = vunpack.c.l.s8.bf16 %v1034
        %v2489 = vunpack.c.h.s8.bf16 %v1034
        %v2490 = vunpack.c.l.s8.bf16 %v1035
        %v2491 = vunpack.c.h.s8.bf16 %v1035
        %v2492 = vunpack.c.l.s8.bf16 %v1036
        %v2493 = vunpack.c.h.s8.bf16 %v1036
        %v2494 = vunpack.c.l.s8.bf16 %v1037
        %v2495 = vunpack.c.h.s8.bf16 %v1037
        %v2496 = vunpack.c.l.s8.bf16 %v1038
        %v2497 = vunpack.c.h.s8.bf16 %v1038
        %v2498 = vunpack.c.l.s8.bf16 %v1039
        %v2499 = vunpack.c.h.s8.bf16 %v1039
        %v2500 = vunpack.c.l.s8.bf16 %v1040
        %v2501 = vunpack.c.h.s8.bf16 %v1040
        %v2502 = vunpack.c.l.s8.bf16 %v1041
        %v2503 = vunpack.c.h.s8.bf16 %v1041
        %v2504 = vunpack.c.l.s8.bf16 %v1042
        %v2505 = vunpack.c.h.s8.bf16 %v1042
        %v2506 = vunpack.c.l.s8.bf16 %v1043
        %v2507 = vunpack.c.h.s8.bf16 %v1043
        %v2508 = vunpack.c.l.s8.bf16 %v1044
        %v2509 = vunpack.c.h.s8.bf16 %v1044
        %v2510 = vunpack.c.l.s8.bf16 %v1045
        %v2511 = vunpack.c.h.s8.bf16 %v1045
        %v2512 = vunpack.c.l.s8.bf16 %v1046
        %v2513 = vunpack.c.h.s8.bf16 %v1046
        %v2514 = vunpack.c.l.s8.bf16 %v1047
        %v2515 = vunpack.c.h.s8.bf16 %v1047
        %v2516 = vunpack.c.l.s8.bf16 %v1048
        %v2517 = vunpack.c.h.s8.bf16 %v1048
        %v2518 = vunpack.c.l.s8.bf16 %v1049
        %v2519 = vunpack.c.h.s8.bf16 %v1049
        %v2520 = vunpack.c.l.s8.bf16 %v1050
        %v2521 = vunpack.c.h.s8.bf16 %v1050
        %v2522 = vunpack.c.l.s8.bf16 %v1051
        %v2523 = vunpack.c.h.s8.bf16 %v1051
        %v2524 = vunpack.c.l.s8.bf16 %v1052
        %v2525 = vunpack.c.h.s8.bf16 %v1052
        %v2526 = vunpack.c.l.s8.bf16 %v1053
        %v2527 = vunpack.c.h.s8.bf16 %v1053
        %v2528 = vunpack.c.l.s8.bf16 %v1054
        %v2529 = vunpack.c.h.s8.bf16 %v1054
        %v2530 = vunpack.c.l.s8.bf16 %v1055
        %v2531 = vunpack.c.h.s8.bf16 %v1055
        %v2532 = vunpack.c.l.s8.bf16 %v1056
        %v2533 = vunpack.c.h.s8.bf16 %v1056
        %v2534 = vunpack.c.l.s8.bf16 %v1057
        %v2535 = vunpack.c.h.s8.bf16 %v1057
        %v2536 = vunpack.c.l.s8.bf16 %v1058
        %v2537 = vunpack.c.h.s8.bf16 %v1058
        %v2538 = vunpack.c.l.s8.bf16 %v1059
        %v2539 = vunpack.c.h.s8.bf16 %v1059
        %v2540 = vunpack.c.l.s8.bf16 %v1060
        %v2541 = vunpack.c.h.s8.bf16 %v1060
        %v2542 = vunpack.c.l.s8.bf16 %v1061
        %v2543 = vunpack.c.h.s8.bf16 %v1061
        %v2544 = vunpack.c.l.s8.bf16 %v1062
        %v2545 = vunpack.c.h.s8.bf16 %v1062
        %v2546 = vunpack.c.l.s8.bf16 %v1063
        %v2547 = vunpack.c.h.s8.bf16 %v1063
        %v2548 = vunpack.c.l.s8.bf16 %v1064
        %v2549 = vunpack.c.h.s8.bf16 %v1064
        %v2550 = vunpack.c.l.s8.bf16 %v1065
        %v2551 = vunpack.c.h.s8.bf16 %v1065
        %v2552 = vunpack.c.l.s8.bf16 %v1066
        %v2553 = vunpack.c.h.s8.bf16 %v1066
        %v2554 = vunpack.c.l.s8.bf16 %v1067
        %v2555 = vunpack.c.h.s8.bf16 %v1067
        %v2556 = vunpack.c.l.s8.bf16 %v1068
        %v2557 = vunpack.c.h.s8.bf16 %v1068
        %v2558 = vunpack.c.l.s8.bf16 %v1069
        %v2559 = vunpack.c.h.s8.bf16 %v1069
        %v2560 = vunpack.c.l.s8.bf16 %v1070
        %v2561 = vunpack.c.h.s8.bf16 %v1070
        %v2562 = vunpack.c.l.s8.bf16 %v1071
        %v2563 = vunpack.c.h.s8.bf16 %v1071
        %v2564 = vunpack.c.l.s8.bf16 %v1072
        %v2565 = vunpack.c.h.s8.bf16 %v1072
        %v2566 = vunpack.c.l.s8.bf16 %v1073
        %v2567 = vunpack.c.h.s8.bf16 %v1073
        %v2568 = vunpack.c.l.s8.bf16 %v1074
        %v2569 = vunpack.c.h.s8.bf16 %v1074
        %v2570 = vunpack.c.l.s8.bf16 %v1075
        %v2571 = vunpack.c.h.s8.bf16 %v1075
        %v2572 = vunpack.c.l.s8.bf16 %v1076
        %v2573 = vunpack.c.h.s8.bf16 %v1076
        %v2574 = vunpack.c.l.s8.bf16 %v1077
        %v2575 = vunpack.c.h.s8.bf16 %v1077
        %v2576 = vunpack.c.l.s8.bf16 %v1078
        %v2577 = vunpack.c.h.s8.bf16 %v1078
        %v2578 = vunpack.c.l.s8.bf16 %v1079
        %v2579 = vunpack.c.h.s8.bf16 %v1079
        %v2580 = vunpack.c.l.s8.bf16 %v1080
        %v2581 = vunpack.c.h.s8.bf16 %v1080
        %v2582 = vunpack.c.l.s8.bf16 %v1081
        %v2583 = vunpack.c.h.s8.bf16 %v1081
        %v2584 = vunpack.c.l.s8.bf16 %v1082
        %v2585 = vunpack.c.h.s8.bf16 %v1082
        %v2586 = vunpack.c.l.s8.bf16 %v1083
        %v2587 = vunpack.c.h.s8.bf16 %v1083
        %v2588 = vunpack.c.l.s8.bf16 %v1084
        %v2589 = vunpack.c.h.s8.bf16 %v1084
        %v2590 = vunpack.c.l.s8.bf16 %v1085
        %v2591 = vunpack.c.h.s8.bf16 %v1085
        %v2592 = vunpack.c.l.s8.bf16 %v1086
        %v2593 = vunpack.c.h.s8.bf16 %v1086
        %v2594 = vunpack.c.l.s8.bf16 %v1087
        %v2595 = vunpack.c.h.s8.bf16 %v1087
        %v2596 = vunpack.c.l.s8.bf16 %v1088
        %v2597 = vunpack.c.h.s8.bf16 %v1088
        %v2598 = vunpack.c.l.s8.bf16 %v1089
        %v2599 = vunpack.c.h.s8.bf16 %v1089
        %v2600 = vunpack.c.l.s8.bf16 %v1090
        %v2601 = vunpack.c.h.s8.bf16 %v1090
        %v2602 = vunpack.c.l.s8.bf16 %v1091
        %v2603 = vunpack.c.h.s8.bf16 %v1091
        %v2604 = vunpack.c.l.s8.bf16 %v1092
        %v2605 = vunpack.c.h.s8.bf16 %v1092
        %v2606 = vunpack.c.l.s8.bf16 %v1093
        %v2607 = vunpack.c.h.s8.bf16 %v1093
        %v2608 = vunpack.c.l.s8.bf16 %v1094
        %v2609 = vunpack.c.h.s8.bf16 %v1094
        %v2610 = vunpack.c.l.s8.bf16 %v1095
        %v2611 = vunpack.c.h.s8.bf16 %v1095
        %v2612 = vunpack.c.l.s8.bf16 %v1096
        %v2613 = vunpack.c.h.s8.bf16 %v1096
        %v2614 = vunpack.c.l.s8.bf16 %v1097
        %v2615 = vunpack.c.h.s8.bf16 %v1097
        %v2616 = vunpack.c.l.s8.bf16 %v1098
        %v2617 = vunpack.c.h.s8.bf16 %v1098
        %v2618 = vunpack.c.l.s8.bf16 %v1099
        %v2619 = vunpack.c.h.s8.bf16 %v1099
        %v2620 = vunpack.c.l.s8.bf16 %v1100
        %v2621 = vunpack.c.h.s8.bf16 %v1100
        %v2622 = vunpack.c.l.s8.bf16 %v1101
        %v2623 = vunpack.c.h.s8.bf16 %v1101
        %v2624 = vunpack.c.l.s8.bf16 %v1102
        %v2625 = vunpack.c.h.s8.bf16 %v1102
        %v2626 = vunpack.c.l.s8.bf16 %v1103
        %v2627 = vunpack.c.h.s8.bf16 %v1103
        %v2628 = vunpack.c.l.s8.bf16 %v1104
        %v2629 = vunpack.c.h.s8.bf16 %v1104
        %v2630 = vunpack.c.l.s8.bf16 %v1105
        %v2631 = vunpack.c.h.s8.bf16 %v1105
        %v2632 = vunpack.c.l.s8.bf16 %v1106
        %v2633 = vunpack.c.h.s8.bf16 %v1106
        %v2634 = vunpack.c.l.s8.bf16 %v1107
        %v2635 = vunpack.c.h.s8.bf16 %v1107
        %v2636 = vunpack.c.l.s8.bf16 %v1108
        %v2637 = vunpack.c.h.s8.bf16 %v1108
        %v2638 = vunpack.c.l.s8.bf16 %v1109
        %v2639 = vunpack.c.h.s8.bf16 %v1109
        %v2640 = vunpack.c.l.s8.bf16 %v1110
        %v2641 = vunpack.c.h.s8.bf16 %v1110
        %v2642 = vunpack.c.l.s8.bf16 %v1111
        %v2643 = vunpack.c.h.s8.bf16 %v1111
        %v2644 = vunpack.c.l.s8.bf16 %v1112
        %v2645 = vunpack.c.h.s8.bf16 %v1112
        %v2646 = vunpack.c.l.s8.bf16 %v1113
        %v2647 = vunpack.c.h.s8.bf16 %v1113
        %v2648 = vunpack.c.l.s8.bf16 %v1114
        %v2649 = vunpack.c.h.s8.bf16 %v1114
        %v2650 = vunpack.c.l.s8.bf16 %v1115
        %v2651 = vunpack.c.h.s8.bf16 %v1115
        %v2676 = vcombine.high %v324, %v324
        %v2678 = vunpack.c.l.s4 1966171168
        %v2679 = vunpack.c.0.s8 %v2678
        %v2680 = vlaneseq
        %v2681 = vshrl.u32 %v2680, 7
        %v2682 = vsub.s32 %v2679, %v2681
        %v2683 = vrot.slane %v324, %v2682
        %v2685 = vunpack.c.l.s4 1966171168
        %v2686 = vunpack.c.0.s8 %v2685
        %v2687 = vlaneseq
        %v2688 = vshrl.u32 %v2687, 7
        %v2689 = vsub.s32 %v2686, %v2688
        %v2690 = vrot.slane %v2676, %v2689
        %v2691 = vcombine.high %v2683, %v2683
        %v2692 = vcombine.high %v2690, %v2690
        %v2694 = vunpack.c.l.s4 1966171168
        %v2695 = vunpack.c.0.s8 %v2694
        %v2696 = vlaneseq
        %v2697 = vshrl.u32 %v2696, 7
        %v2698 = vsub.s32 %v2695, %v2697
        %v2699 = vrot.slane %v2683, %v2698
        %v2701 = vunpack.c.l.s4 1966171168
        %v2702 = vunpack.c.0.s8 %v2701
        %v2703 = vlaneseq
        %v2704 = vshrl.u32 %v2703, 7
        %v2705 = vsub.s32 %v2702, %v2704
        %v2706 = vrot.slane %v2690, %v2705
        %v2708 = vunpack.c.l.s4 1966171168
        %v2709 = vunpack.c.0.s8 %v2708
        %v2710 = vlaneseq
        %v2711 = vshrl.u32 %v2710, 7
        %v2712 = vsub.s32 %v2709, %v2711
        %v2713 = vrot.slane %v2691, %v2712
        %v2715 = vunpack.c.l.s4 1966171168
        %v2716 = vunpack.c.0.s8 %v2715
        %v2717 = vlaneseq
        %v2718 = vshrl.u32 %v2717, 7
        %v2719 = vsub.s32 %v2716, %v2718
        %v2720 = vrot.slane %v2692, %v2719
        %v2721 = vcombine.high %v2699, %v2699
        %v2722 = vcombine.high %v2706, %v2706
        %v2723 = vcombine.high %v2713, %v2713
        %v2724 = vcombine.high %v2720, %v2720
        %v2725 = vcombine.high %v325, %v325
        %v2727 = vunpack.c.l.s4 1966171168
        %v2728 = vunpack.c.0.s8 %v2727
        %v2729 = vlaneseq
        %v2730 = vshrl.u32 %v2729, 7
        %v2731 = vsub.s32 %v2728, %v2730
        %v2732 = vrot.slane %v325, %v2731
        %v2734 = vunpack.c.l.s4 1966171168
        %v2735 = vunpack.c.0.s8 %v2734
        %v2736 = vlaneseq
        %v2737 = vshrl.u32 %v2736, 7
        %v2738 = vsub.s32 %v2735, %v2737
        %v2739 = vrot.slane %v2725, %v2738
        %v2740 = vcombine.high %v2732, %v2732
        %v2741 = vcombine.high %v2739, %v2739
        %v2743 = vunpack.c.l.s4 1966171168
        %v2744 = vunpack.c.0.s8 %v2743
        %v2745 = vlaneseq
        %v2746 = vshrl.u32 %v2745, 7
        %v2747 = vsub.s32 %v2744, %v2746
        %v2748 = vrot.slane %v2732, %v2747
        %v2750 = vunpack.c.l.s4 1966171168
        %v2751 = vunpack.c.0.s8 %v2750
        %v2752 = vlaneseq
        %v2753 = vshrl.u32 %v2752, 7
        %v2754 = vsub.s32 %v2751, %v2753
        %v2755 = vrot.slane %v2739, %v2754
        %v2757 = vunpack.c.l.s4 1966171168
        %v2758 = vunpack.c.0.s8 %v2757
        %v2759 = vlaneseq
        %v2760 = vshrl.u32 %v2759, 7
        %v2761 = vsub.s32 %v2758, %v2760
        %v2762 = vrot.slane %v2740, %v2761
        %v2764 = vunpack.c.l.s4 1966171168
        %v2765 = vunpack.c.0.s8 %v2764
        %v2766 = vlaneseq
        %v2767 = vshrl.u32 %v2766, 7
        %v2768 = vsub.s32 %v2765, %v2767
        %v2769 = vrot.slane %v2741, %v2768
        %v2770 = vcombine.high %v2748, %v2748
        %v2771 = vcombine.high %v2755, %v2755
        %v2772 = vcombine.high %v2762, %v2762
        %v2773 = vcombine.high %v2769, %v2769
        %v2774 = vcombine.high %v326, %v326
        %v2776 = vunpack.c.l.s4 1966171168
        %v2777 = vunpack.c.0.s8 %v2776
        %v2778 = vlaneseq
        %v2779 = vshrl.u32 %v2778, 7
        %v2780 = vsub.s32 %v2777, %v2779
        %v2781 = vrot.slane %v326, %v2780
        %v2783 = vunpack.c.l.s4 1966171168
        %v2784 = vunpack.c.0.s8 %v2783
        %v2785 = vlaneseq
        %v2786 = vshrl.u32 %v2785, 7
        %v2787 = vsub.s32 %v2784, %v2786
        %v2788 = vrot.slane %v2774, %v2787
        %v2789 = vcombine.high %v2781, %v2781
        %v2790 = vcombine.high %v2788, %v2788
        %v2792 = vunpack.c.l.s4 1966171168
        %v2793 = vunpack.c.0.s8 %v2792
        %v2794 = vlaneseq
        %v2795 = vshrl.u32 %v2794, 7
        %v2796 = vsub.s32 %v2793, %v2795
        %v2797 = vrot.slane %v2781, %v2796
        %v2799 = vunpack.c.l.s4 1966171168
        %v2800 = vunpack.c.0.s8 %v2799
        %v2801 = vlaneseq
        %v2802 = vshrl.u32 %v2801, 7
        %v2803 = vsub.s32 %v2800, %v2802
        %v2804 = vrot.slane %v2788, %v2803
        %v2806 = vunpack.c.l.s4 1966171168
        %v2807 = vunpack.c.0.s8 %v2806
        %v2808 = vlaneseq
        %v2809 = vshrl.u32 %v2808, 7
        %v2810 = vsub.s32 %v2807, %v2809
        %v2811 = vrot.slane %v2789, %v2810
        %v2813 = vunpack.c.l.s4 1966171168
        %v2814 = vunpack.c.0.s8 %v2813
        %v2815 = vlaneseq
        %v2816 = vshrl.u32 %v2815, 7
        %v2817 = vsub.s32 %v2814, %v2816
        %v2818 = vrot.slane %v2790, %v2817
        %v2819 = vcombine.high %v2797, %v2797
        %v2820 = vcombine.high %v2804, %v2804
        %v2821 = vcombine.high %v2811, %v2811
        %v2822 = vcombine.high %v2818, %v2818
        %v2823 = vcombine.high %v327, %v327
        %v2825 = vunpack.c.l.s4 1966171168
        %v2826 = vunpack.c.0.s8 %v2825
        %v2827 = vlaneseq
        %v2828 = vshrl.u32 %v2827, 7
        %v2829 = vsub.s32 %v2826, %v2828
        %v2830 = vrot.slane %v327, %v2829
        %v2832 = vunpack.c.l.s4 1966171168
        %v2833 = vunpack.c.0.s8 %v2832
        %v2834 = vlaneseq
        %v2835 = vshrl.u32 %v2834, 7
        %v2836 = vsub.s32 %v2833, %v2835
        %v2837 = vrot.slane %v2823, %v2836
        %v2838 = vcombine.high %v2830, %v2830
        %v2839 = vcombine.high %v2837, %v2837
        %v2841 = vunpack.c.l.s4 1966171168
        %v2842 = vunpack.c.0.s8 %v2841
        %v2843 = vlaneseq
        %v2844 = vshrl.u32 %v2843, 7
        %v2845 = vsub.s32 %v2842, %v2844
        %v2846 = vrot.slane %v2830, %v2845
        %v2848 = vunpack.c.l.s4 1966171168
        %v2849 = vunpack.c.0.s8 %v2848
        %v2850 = vlaneseq
        %v2851 = vshrl.u32 %v2850, 7
        %v2852 = vsub.s32 %v2849, %v2851
        %v2853 = vrot.slane %v2837, %v2852
        %v2855 = vunpack.c.l.s4 1966171168
        %v2856 = vunpack.c.0.s8 %v2855
        %v2857 = vlaneseq
        %v2858 = vshrl.u32 %v2857, 7
        %v2859 = vsub.s32 %v2856, %v2858
        %v2860 = vrot.slane %v2838, %v2859
        %v2862 = vunpack.c.l.s4 1966171168
        %v2863 = vunpack.c.0.s8 %v2862
        %v2864 = vlaneseq
        %v2865 = vshrl.u32 %v2864, 7
        %v2866 = vsub.s32 %v2863, %v2865
        %v2867 = vrot.slane %v2839, %v2866
        %v2868 = vcombine.high %v2846, %v2846
        %v2869 = vcombine.high %v2853, %v2853
        %v2870 = vcombine.high %v2860, %v2860
        %v2871 = vcombine.high %v2867, %v2867
        %v2872 = vcombine.high %v328, %v328
        %v2874 = vunpack.c.l.s4 1966171168
        %v2875 = vunpack.c.0.s8 %v2874
        %v2876 = vlaneseq
        %v2877 = vshrl.u32 %v2876, 7
        %v2878 = vsub.s32 %v2875, %v2877
        %v2879 = vrot.slane %v328, %v2878
        %v2881 = vunpack.c.l.s4 1966171168
        %v2882 = vunpack.c.0.s8 %v2881
        %v2883 = vlaneseq
        %v2884 = vshrl.u32 %v2883, 7
        %v2885 = vsub.s32 %v2882, %v2884
        %v2886 = vrot.slane %v2872, %v2885
        %v2887 = vcombine.high %v2879, %v2879
        %v2888 = vcombine.high %v2886, %v2886
        %v2890 = vunpack.c.l.s4 1966171168
        %v2891 = vunpack.c.0.s8 %v2890
        %v2892 = vlaneseq
        %v2893 = vshrl.u32 %v2892, 7
        %v2894 = vsub.s32 %v2891, %v2893
        %v2895 = vrot.slane %v2879, %v2894
        %v2897 = vunpack.c.l.s4 1966171168
        %v2898 = vunpack.c.0.s8 %v2897
        %v2899 = vlaneseq
        %v2900 = vshrl.u32 %v2899, 7
        %v2901 = vsub.s32 %v2898, %v2900
        %v2902 = vrot.slane %v2886, %v2901
        %v2904 = vunpack.c.l.s4 1966171168
        %v2905 = vunpack.c.0.s8 %v2904
        %v2906 = vlaneseq
        %v2907 = vshrl.u32 %v2906, 7
        %v2908 = vsub.s32 %v2905, %v2907
        %v2909 = vrot.slane %v2887, %v2908
        %v2911 = vunpack.c.l.s4 1966171168
        %v2912 = vunpack.c.0.s8 %v2911
        %v2913 = vlaneseq
        %v2914 = vshrl.u32 %v2913, 7
        %v2915 = vsub.s32 %v2912, %v2914
        %v2916 = vrot.slane %v2888, %v2915
        %v2917 = vcombine.high %v2895, %v2895
        %v2918 = vcombine.high %v2902, %v2902
        %v2919 = vcombine.high %v2909, %v2909
        %v2920 = vcombine.high %v2916, %v2916
        %v2921 = vcombine.high %v329, %v329
        %v2923 = vunpack.c.l.s4 1966171168
        %v2924 = vunpack.c.0.s8 %v2923
        %v2925 = vlaneseq
        %v2926 = vshrl.u32 %v2925, 7
        %v2927 = vsub.s32 %v2924, %v2926
        %v2928 = vrot.slane %v329, %v2927
        %v2930 = vunpack.c.l.s4 1966171168
        %v2931 = vunpack.c.0.s8 %v2930
        %v2932 = vlaneseq
        %v2933 = vshrl.u32 %v2932, 7
        %v2934 = vsub.s32 %v2931, %v2933
        %v2935 = vrot.slane %v2921, %v2934
        %v2936 = vcombine.high %v2928, %v2928
        %v2937 = vcombine.high %v2935, %v2935
        %v2939 = vunpack.c.l.s4 1966171168
        %v2940 = vunpack.c.0.s8 %v2939
        %v2941 = vlaneseq
        %v2942 = vshrl.u32 %v2941, 7
        %v2943 = vsub.s32 %v2940, %v2942
        %v2944 = vrot.slane %v2928, %v2943
        %v2946 = vunpack.c.l.s4 1966171168
        %v2947 = vunpack.c.0.s8 %v2946
        %v2948 = vlaneseq
        %v2949 = vshrl.u32 %v2948, 7
        %v2950 = vsub.s32 %v2947, %v2949
        %v2951 = vrot.slane %v2935, %v2950
        %v2953 = vunpack.c.l.s4 1966171168
        %v2954 = vunpack.c.0.s8 %v2953
        %v2955 = vlaneseq
        %v2956 = vshrl.u32 %v2955, 7
        %v2957 = vsub.s32 %v2954, %v2956
        %v2958 = vrot.slane %v2936, %v2957
        %v2960 = vunpack.c.l.s4 1966171168
        %v2961 = vunpack.c.0.s8 %v2960
        %v2962 = vlaneseq
        %v2963 = vshrl.u32 %v2962, 7
        %v2964 = vsub.s32 %v2961, %v2963
        %v2965 = vrot.slane %v2937, %v2964
        %v2966 = vcombine.high %v2944, %v2944
        %v2967 = vcombine.high %v2951, %v2951
        %v2968 = vcombine.high %v2958, %v2958
        %v2969 = vcombine.high %v2965, %v2965
        %v2970 = vcombine.high %v330, %v330
        %v2972 = vunpack.c.l.s4 1966171168
        %v2973 = vunpack.c.0.s8 %v2972
        %v2974 = vlaneseq
        %v2975 = vshrl.u32 %v2974, 7
        %v2976 = vsub.s32 %v2973, %v2975
        %v2977 = vrot.slane %v330, %v2976
        %v2979 = vunpack.c.l.s4 1966171168
        %v2980 = vunpack.c.0.s8 %v2979
        %v2981 = vlaneseq
        %v2982 = vshrl.u32 %v2981, 7
        %v2983 = vsub.s32 %v2980, %v2982
        %v2984 = vrot.slane %v2970, %v2983
        %v2985 = vcombine.high %v2977, %v2977
        %v2986 = vcombine.high %v2984, %v2984
        %v2988 = vunpack.c.l.s4 1966171168
        %v2989 = vunpack.c.0.s8 %v2988
        %v2990 = vlaneseq
        %v2991 = vshrl.u32 %v2990, 7
        %v2992 = vsub.s32 %v2989, %v2991
        %v2993 = vrot.slane %v2977, %v2992
        %v2995 = vunpack.c.l.s4 1966171168
        %v2996 = vunpack.c.0.s8 %v2995
        %v2997 = vlaneseq
        %v2998 = vshrl.u32 %v2997, 7
        %v2999 = vsub.s32 %v2996, %v2998
        %v3000 = vrot.slane %v2984, %v2999
        %v3002 = vunpack.c.l.s4 1966171168
        %v3003 = vunpack.c.0.s8 %v3002
        %v3004 = vlaneseq
        %v3005 = vshrl.u32 %v3004, 7
        %v3006 = vsub.s32 %v3003, %v3005
        %v3007 = vrot.slane %v2985, %v3006
        %v3009 = vunpack.c.l.s4 1966171168
        %v3010 = vunpack.c.0.s8 %v3009
        %v3011 = vlaneseq
        %v3012 = vshrl.u32 %v3011, 7
        %v3013 = vsub.s32 %v3010, %v3012
        %v3014 = vrot.slane %v2986, %v3013
        %v3015 = vcombine.high %v2993, %v2993
        %v3016 = vcombine.high %v3000, %v3000
        %v3017 = vcombine.high %v3007, %v3007
        %v3018 = vcombine.high %v3014, %v3014
        %v3019 = vcombine.high %v331, %v331
        %v3021 = vunpack.c.l.s4 1966171168
        %v3022 = vunpack.c.0.s8 %v3021
        %v3023 = vlaneseq
        %v3024 = vshrl.u32 %v3023, 7
        %v3025 = vsub.s32 %v3022, %v3024
        %v3026 = vrot.slane %v331, %v3025
        %v3028 = vunpack.c.l.s4 1966171168
        %v3029 = vunpack.c.0.s8 %v3028
        %v3030 = vlaneseq
        %v3031 = vshrl.u32 %v3030, 7
        %v3032 = vsub.s32 %v3029, %v3031
        %v3033 = vrot.slane %v3019, %v3032
        %v3034 = vcombine.high %v3026, %v3026
        %v3035 = vcombine.high %v3033, %v3033
        %v3037 = vunpack.c.l.s4 1966171168
        %v3038 = vunpack.c.0.s8 %v3037
        %v3039 = vlaneseq
        %v3040 = vshrl.u32 %v3039, 7
        %v3041 = vsub.s32 %v3038, %v3040
        %v3042 = vrot.slane %v3026, %v3041
        %v3044 = vunpack.c.l.s4 1966171168
        %v3045 = vunpack.c.0.s8 %v3044
        %v3046 = vlaneseq
        %v3047 = vshrl.u32 %v3046, 7
        %v3048 = vsub.s32 %v3045, %v3047
        %v3049 = vrot.slane %v3033, %v3048
        %v3051 = vunpack.c.l.s4 1966171168
        %v3052 = vunpack.c.0.s8 %v3051
        %v3053 = vlaneseq
        %v3054 = vshrl.u32 %v3053, 7
        %v3055 = vsub.s32 %v3052, %v3054
        %v3056 = vrot.slane %v3034, %v3055
        %v3058 = vunpack.c.l.s4 1966171168
        %v3059 = vunpack.c.0.s8 %v3058
        %v3060 = vlaneseq
        %v3061 = vshrl.u32 %v3060, 7
        %v3062 = vsub.s32 %v3059, %v3061
        %v3063 = vrot.slane %v3035, %v3062
        %v3064 = vcombine.high %v3042, %v3042
        %v3065 = vcombine.high %v3049, %v3049
        %v3066 = vcombine.high %v3056, %v3056
        %v3067 = vcombine.high %v3063, %v3063
        %v3068 = vcombine.high %v332, %v332
        %v3070 = vunpack.c.l.s4 1966171168
        %v3071 = vunpack.c.0.s8 %v3070
        %v3072 = vlaneseq
        %v3073 = vshrl.u32 %v3072, 7
        %v3074 = vsub.s32 %v3071, %v3073
        %v3075 = vrot.slane %v332, %v3074
        %v3077 = vunpack.c.l.s4 1966171168
        %v3078 = vunpack.c.0.s8 %v3077
        %v3079 = vlaneseq
        %v3080 = vshrl.u32 %v3079, 7
        %v3081 = vsub.s32 %v3078, %v3080
        %v3082 = vrot.slane %v3068, %v3081
        %v3083 = vcombine.high %v3075, %v3075
        %v3084 = vcombine.high %v3082, %v3082
        %v3086 = vunpack.c.l.s4 1966171168
        %v3087 = vunpack.c.0.s8 %v3086
        %v3088 = vlaneseq
        %v3089 = vshrl.u32 %v3088, 7
        %v3090 = vsub.s32 %v3087, %v3089
        %v3091 = vrot.slane %v3075, %v3090
        %v3093 = vunpack.c.l.s4 1966171168
        %v3094 = vunpack.c.0.s8 %v3093
        %v3095 = vlaneseq
        %v3096 = vshrl.u32 %v3095, 7
        %v3097 = vsub.s32 %v3094, %v3096
        %v3098 = vrot.slane %v3082, %v3097
        %v3100 = vunpack.c.l.s4 1966171168
        %v3101 = vunpack.c.0.s8 %v3100
        %v3102 = vlaneseq
        %v3103 = vshrl.u32 %v3102, 7
        %v3104 = vsub.s32 %v3101, %v3103
        %v3105 = vrot.slane %v3083, %v3104
        %v3107 = vunpack.c.l.s4 1966171168
        %v3108 = vunpack.c.0.s8 %v3107
        %v3109 = vlaneseq
        %v3110 = vshrl.u32 %v3109, 7
        %v3111 = vsub.s32 %v3108, %v3110
        %v3112 = vrot.slane %v3084, %v3111
        %v3113 = vcombine.high %v3091, %v3091
        %v3114 = vcombine.high %v3098, %v3098
        %v3115 = vcombine.high %v3105, %v3105
        %v3116 = vcombine.high %v3112, %v3112
        %v3117 = vcombine.high %v333, %v333
        %v3119 = vunpack.c.l.s4 1966171168
        %v3120 = vunpack.c.0.s8 %v3119
        %v3121 = vlaneseq
        %v3122 = vshrl.u32 %v3121, 7
        %v3123 = vsub.s32 %v3120, %v3122
        %v3124 = vrot.slane %v333, %v3123
        %v3126 = vunpack.c.l.s4 1966171168
        %v3127 = vunpack.c.0.s8 %v3126
        %v3128 = vlaneseq
        %v3129 = vshrl.u32 %v3128, 7
        %v3130 = vsub.s32 %v3127, %v3129
        %v3131 = vrot.slane %v3117, %v3130
        %v3132 = vcombine.high %v3124, %v3124
        %v3133 = vcombine.high %v3131, %v3131
        %v3135 = vunpack.c.l.s4 1966171168
        %v3136 = vunpack.c.0.s8 %v3135
        %v3137 = vlaneseq
        %v3138 = vshrl.u32 %v3137, 7
        %v3139 = vsub.s32 %v3136, %v3138
        %v3140 = vrot.slane %v3124, %v3139
        %v3142 = vunpack.c.l.s4 1966171168
        %v3143 = vunpack.c.0.s8 %v3142
        %v3144 = vlaneseq
        %v3145 = vshrl.u32 %v3144, 7
        %v3146 = vsub.s32 %v3143, %v3145
        %v3147 = vrot.slane %v3131, %v3146
        %v3149 = vunpack.c.l.s4 1966171168
        %v3150 = vunpack.c.0.s8 %v3149
        %v3151 = vlaneseq
        %v3152 = vshrl.u32 %v3151, 7
        %v3153 = vsub.s32 %v3150, %v3152
        %v3154 = vrot.slane %v3132, %v3153
        %v3156 = vunpack.c.l.s4 1966171168
        %v3157 = vunpack.c.0.s8 %v3156
        %v3158 = vlaneseq
        %v3159 = vshrl.u32 %v3158, 7
        %v3160 = vsub.s32 %v3157, %v3159
        %v3161 = vrot.slane %v3133, %v3160
        %v3162 = vcombine.high %v3140, %v3140
        %v3163 = vcombine.high %v3147, %v3147
        %v3164 = vcombine.high %v3154, %v3154
        %v3165 = vcombine.high %v3161, %v3161
        %v3166 = vcombine.high %v334, %v334
        %v3168 = vunpack.c.l.s4 1966171168
        %v3169 = vunpack.c.0.s8 %v3168
        %v3170 = vlaneseq
        %v3171 = vshrl.u32 %v3170, 7
        %v3172 = vsub.s32 %v3169, %v3171
        %v3173 = vrot.slane %v334, %v3172
        %v3175 = vunpack.c.l.s4 1966171168
        %v3176 = vunpack.c.0.s8 %v3175
        %v3177 = vlaneseq
        %v3178 = vshrl.u32 %v3177, 7
        %v3179 = vsub.s32 %v3176, %v3178
        %v3180 = vrot.slane %v3166, %v3179
        %v3181 = vcombine.high %v3173, %v3173
        %v3182 = vcombine.high %v3180, %v3180
        %v3184 = vunpack.c.l.s4 1966171168
        %v3185 = vunpack.c.0.s8 %v3184
        %v3186 = vlaneseq
        %v3187 = vshrl.u32 %v3186, 7
        %v3188 = vsub.s32 %v3185, %v3187
        %v3189 = vrot.slane %v3173, %v3188
        %v3191 = vunpack.c.l.s4 1966171168
        %v3192 = vunpack.c.0.s8 %v3191
        %v3193 = vlaneseq
        %v3194 = vshrl.u32 %v3193, 7
        %v3195 = vsub.s32 %v3192, %v3194
        %v3196 = vrot.slane %v3180, %v3195
        %v3198 = vunpack.c.l.s4 1966171168
        %v3199 = vunpack.c.0.s8 %v3198
        %v3200 = vlaneseq
        %v3201 = vshrl.u32 %v3200, 7
        %v3202 = vsub.s32 %v3199, %v3201
        %v3203 = vrot.slane %v3181, %v3202
        %v3205 = vunpack.c.l.s4 1966171168
        %v3206 = vunpack.c.0.s8 %v3205
        %v3207 = vlaneseq
        %v3208 = vshrl.u32 %v3207, 7
        %v3209 = vsub.s32 %v3206, %v3208
        %v3210 = vrot.slane %v3182, %v3209
        %v3211 = vcombine.high %v3189, %v3189
        %v3212 = vcombine.high %v3196, %v3196
        %v3213 = vcombine.high %v3203, %v3203
        %v3214 = vcombine.high %v3210, %v3210
        %v3215 = vcombine.high %v335, %v335
        %v3217 = vunpack.c.l.s4 1966171168
        %v3218 = vunpack.c.0.s8 %v3217
        %v3219 = vlaneseq
        %v3220 = vshrl.u32 %v3219, 7
        %v3221 = vsub.s32 %v3218, %v3220
        %v3222 = vrot.slane %v335, %v3221
        %v3224 = vunpack.c.l.s4 1966171168
        %v3225 = vunpack.c.0.s8 %v3224
        %v3226 = vlaneseq
        %v3227 = vshrl.u32 %v3226, 7
        %v3228 = vsub.s32 %v3225, %v3227
        %v3229 = vrot.slane %v3215, %v3228
        %v3230 = vcombine.high %v3222, %v3222
        %v3231 = vcombine.high %v3229, %v3229
        %v3233 = vunpack.c.l.s4 1966171168
        %v3234 = vunpack.c.0.s8 %v3233
        %v3235 = vlaneseq
        %v3236 = vshrl.u32 %v3235, 7
        %v3237 = vsub.s32 %v3234, %v3236
        %v3238 = vrot.slane %v3222, %v3237
        %v3240 = vunpack.c.l.s4 1966171168
        %v3241 = vunpack.c.0.s8 %v3240
        %v3242 = vlaneseq
        %v3243 = vshrl.u32 %v3242, 7
        %v3244 = vsub.s32 %v3241, %v3243
        %v3245 = vrot.slane %v3229, %v3244
        %v3247 = vunpack.c.l.s4 1966171168
        %v3248 = vunpack.c.0.s8 %v3247
        %v3249 = vlaneseq
        %v3250 = vshrl.u32 %v3249, 7
        %v3251 = vsub.s32 %v3248, %v3250
        %v3252 = vrot.slane %v3230, %v3251
        %v3254 = vunpack.c.l.s4 1966171168
        %v3255 = vunpack.c.0.s8 %v3254
        %v3256 = vlaneseq
        %v3257 = vshrl.u32 %v3256, 7
        %v3258 = vsub.s32 %v3255, %v3257
        %v3259 = vrot.slane %v3231, %v3258
        %v3260 = vcombine.high %v3238, %v3238
        %v3261 = vcombine.high %v3245, %v3245
        %v3262 = vcombine.high %v3252, %v3252
        %v3263 = vcombine.high %v3259, %v3259
        %v3264 = vcombine.high %v336, %v336
        %v3266 = vunpack.c.l.s4 1966171168
        %v3267 = vunpack.c.0.s8 %v3266
        %v3268 = vlaneseq
        %v3269 = vshrl.u32 %v3268, 7
        %v3270 = vsub.s32 %v3267, %v3269
        %v3271 = vrot.slane %v336, %v3270
        %v3273 = vunpack.c.l.s4 1966171168
        %v3274 = vunpack.c.0.s8 %v3273
        %v3275 = vlaneseq
        %v3276 = vshrl.u32 %v3275, 7
        %v3277 = vsub.s32 %v3274, %v3276
        %v3278 = vrot.slane %v3264, %v3277
        %v3279 = vcombine.high %v3271, %v3271
        %v3280 = vcombine.high %v3278, %v3278
        %v3282 = vunpack.c.l.s4 1966171168
        %v3283 = vunpack.c.0.s8 %v3282
        %v3284 = vlaneseq
        %v3285 = vshrl.u32 %v3284, 7
        %v3286 = vsub.s32 %v3283, %v3285
        %v3287 = vrot.slane %v3271, %v3286
        %v3289 = vunpack.c.l.s4 1966171168
        %v3290 = vunpack.c.0.s8 %v3289
        %v3291 = vlaneseq
        %v3292 = vshrl.u32 %v3291, 7
        %v3293 = vsub.s32 %v3290, %v3292
        %v3294 = vrot.slane %v3278, %v3293
        %v3296 = vunpack.c.l.s4 1966171168
        %v3297 = vunpack.c.0.s8 %v3296
        %v3298 = vlaneseq
        %v3299 = vshrl.u32 %v3298, 7
        %v3300 = vsub.s32 %v3297, %v3299
        %v3301 = vrot.slane %v3279, %v3300
        %v3303 = vunpack.c.l.s4 1966171168
        %v3304 = vunpack.c.0.s8 %v3303
        %v3305 = vlaneseq
        %v3306 = vshrl.u32 %v3305, 7
        %v3307 = vsub.s32 %v3304, %v3306
        %v3308 = vrot.slane %v3280, %v3307
        %v3309 = vcombine.high %v3287, %v3287
        %v3310 = vcombine.high %v3294, %v3294
        %v3311 = vcombine.high %v3301, %v3301
        %v3312 = vcombine.high %v3308, %v3308
        %v3313 = vcombine.high %v337, %v337
        %v3315 = vunpack.c.l.s4 1966171168
        %v3316 = vunpack.c.0.s8 %v3315
        %v3317 = vlaneseq
        %v3318 = vshrl.u32 %v3317, 7
        %v3319 = vsub.s32 %v3316, %v3318
        %v3320 = vrot.slane %v337, %v3319
        %v3322 = vunpack.c.l.s4 1966171168
        %v3323 = vunpack.c.0.s8 %v3322
        %v3324 = vlaneseq
        %v3325 = vshrl.u32 %v3324, 7
        %v3326 = vsub.s32 %v3323, %v3325
        %v3327 = vrot.slane %v3313, %v3326
        %v3328 = vcombine.high %v3320, %v3320
        %v3329 = vcombine.high %v3327, %v3327
        %v3331 = vunpack.c.l.s4 1966171168
        %v3332 = vunpack.c.0.s8 %v3331
        %v3333 = vlaneseq
        %v3334 = vshrl.u32 %v3333, 7
        %v3335 = vsub.s32 %v3332, %v3334
        %v3336 = vrot.slane %v3320, %v3335
        %v3338 = vunpack.c.l.s4 1966171168
        %v3339 = vunpack.c.0.s8 %v3338
        %v3340 = vlaneseq
        %v3341 = vshrl.u32 %v3340, 7
        %v3342 = vsub.s32 %v3339, %v3341
        %v3343 = vrot.slane %v3327, %v3342
        %v3345 = vunpack.c.l.s4 1966171168
        %v3346 = vunpack.c.0.s8 %v3345
        %v3347 = vlaneseq
        %v3348 = vshrl.u32 %v3347, 7
        %v3349 = vsub.s32 %v3346, %v3348
        %v3350 = vrot.slane %v3328, %v3349
        %v3352 = vunpack.c.l.s4 1966171168
        %v3353 = vunpack.c.0.s8 %v3352
        %v3354 = vlaneseq
        %v3355 = vshrl.u32 %v3354, 7
        %v3356 = vsub.s32 %v3353, %v3355
        %v3357 = vrot.slane %v3329, %v3356
        %v3358 = vcombine.high %v3336, %v3336
        %v3359 = vcombine.high %v3343, %v3343
        %v3360 = vcombine.high %v3350, %v3350
        %v3361 = vcombine.high %v3357, %v3357
        %v3362 = vcombine.high %v338, %v338
        %v3364 = vunpack.c.l.s4 1966171168
        %v3365 = vunpack.c.0.s8 %v3364
        %v3366 = vlaneseq
        %v3367 = vshrl.u32 %v3366, 7
        %v3368 = vsub.s32 %v3365, %v3367
        %v3369 = vrot.slane %v338, %v3368
        %v3371 = vunpack.c.l.s4 1966171168
        %v3372 = vunpack.c.0.s8 %v3371
        %v3373 = vlaneseq
        %v3374 = vshrl.u32 %v3373, 7
        %v3375 = vsub.s32 %v3372, %v3374
        %v3376 = vrot.slane %v3362, %v3375
        %v3377 = vcombine.high %v3369, %v3369
        %v3378 = vcombine.high %v3376, %v3376
        %v3380 = vunpack.c.l.s4 1966171168
        %v3381 = vunpack.c.0.s8 %v3380
        %v3382 = vlaneseq
        %v3383 = vshrl.u32 %v3382, 7
        %v3384 = vsub.s32 %v3381, %v3383
        %v3385 = vrot.slane %v3369, %v3384
        %v3387 = vunpack.c.l.s4 1966171168
        %v3388 = vunpack.c.0.s8 %v3387
        %v3389 = vlaneseq
        %v3390 = vshrl.u32 %v3389, 7
        %v3391 = vsub.s32 %v3388, %v3390
        %v3392 = vrot.slane %v3376, %v3391
        %v3394 = vunpack.c.l.s4 1966171168
        %v3395 = vunpack.c.0.s8 %v3394
        %v3396 = vlaneseq
        %v3397 = vshrl.u32 %v3396, 7
        %v3398 = vsub.s32 %v3395, %v3397
        %v3399 = vrot.slane %v3377, %v3398
        %v3401 = vunpack.c.l.s4 1966171168
        %v3402 = vunpack.c.0.s8 %v3401
        %v3403 = vlaneseq
        %v3404 = vshrl.u32 %v3403, 7
        %v3405 = vsub.s32 %v3402, %v3404
        %v3406 = vrot.slane %v3378, %v3405
        %v3407 = vcombine.high %v3385, %v3385
        %v3408 = vcombine.high %v3392, %v3392
        %v3409 = vcombine.high %v3399, %v3399
        %v3410 = vcombine.high %v3406, %v3406
        %v3411 = vcombine.high %v339, %v339
        %v3413 = vunpack.c.l.s4 1966171168
        %v3414 = vunpack.c.0.s8 %v3413
        %v3415 = vlaneseq
        %v3416 = vshrl.u32 %v3415, 7
        %v3417 = vsub.s32 %v3414, %v3416
        %v3418 = vrot.slane %v339, %v3417
        %v3420 = vunpack.c.l.s4 1966171168
        %v3421 = vunpack.c.0.s8 %v3420
        %v3422 = vlaneseq
        %v3423 = vshrl.u32 %v3422, 7
        %v3424 = vsub.s32 %v3421, %v3423
        %v3425 = vrot.slane %v3411, %v3424
        %v3426 = vcombine.high %v3418, %v3418
        %v3427 = vcombine.high %v3425, %v3425
        %v3429 = vunpack.c.l.s4 1966171168
        %v3430 = vunpack.c.0.s8 %v3429
        %v3431 = vlaneseq
        %v3432 = vshrl.u32 %v3431, 7
        %v3433 = vsub.s32 %v3430, %v3432
        %v3434 = vrot.slane %v3418, %v3433
        %v3436 = vunpack.c.l.s4 1966171168
        %v3437 = vunpack.c.0.s8 %v3436
        %v3438 = vlaneseq
        %v3439 = vshrl.u32 %v3438, 7
        %v3440 = vsub.s32 %v3437, %v3439
        %v3441 = vrot.slane %v3425, %v3440
        %v3443 = vunpack.c.l.s4 1966171168
        %v3444 = vunpack.c.0.s8 %v3443
        %v3445 = vlaneseq
        %v3446 = vshrl.u32 %v3445, 7
        %v3447 = vsub.s32 %v3444, %v3446
        %v3448 = vrot.slane %v3426, %v3447
        %v3450 = vunpack.c.l.s4 1966171168
        %v3451 = vunpack.c.0.s8 %v3450
        %v3452 = vlaneseq
        %v3453 = vshrl.u32 %v3452, 7
        %v3454 = vsub.s32 %v3451, %v3453
        %v3455 = vrot.slane %v3427, %v3454
        %v3456 = vcombine.high %v3434, %v3434
        %v3457 = vcombine.high %v3441, %v3441
        %v3458 = vcombine.high %v3448, %v3448
        %v3459 = vcombine.high %v3455, %v3455
        %v3460 = vcombine.high %v340, %v340
        %v3462 = vunpack.c.l.s4 1966171168
        %v3463 = vunpack.c.0.s8 %v3462
        %v3464 = vlaneseq
        %v3465 = vshrl.u32 %v3464, 7
        %v3466 = vsub.s32 %v3463, %v3465
        %v3467 = vrot.slane %v340, %v3466
        %v3469 = vunpack.c.l.s4 1966171168
        %v3470 = vunpack.c.0.s8 %v3469
        %v3471 = vlaneseq
        %v3472 = vshrl.u32 %v3471, 7
        %v3473 = vsub.s32 %v3470, %v3472
        %v3474 = vrot.slane %v3460, %v3473
        %v3475 = vcombine.high %v3467, %v3467
        %v3476 = vcombine.high %v3474, %v3474
        %v3478 = vunpack.c.l.s4 1966171168
        %v3479 = vunpack.c.0.s8 %v3478
        %v3480 = vlaneseq
        %v3481 = vshrl.u32 %v3480, 7
        %v3482 = vsub.s32 %v3479, %v3481
        %v3483 = vrot.slane %v3467, %v3482
        %v3485 = vunpack.c.l.s4 1966171168
        %v3486 = vunpack.c.0.s8 %v3485
        %v3487 = vlaneseq
        %v3488 = vshrl.u32 %v3487, 7
        %v3489 = vsub.s32 %v3486, %v3488
        %v3490 = vrot.slane %v3474, %v3489
        %v3492 = vunpack.c.l.s4 1966171168
        %v3493 = vunpack.c.0.s8 %v3492
        %v3494 = vlaneseq
        %v3495 = vshrl.u32 %v3494, 7
        %v3496 = vsub.s32 %v3493, %v3495
        %v3497 = vrot.slane %v3475, %v3496
        %v3499 = vunpack.c.l.s4 1966171168
        %v3500 = vunpack.c.0.s8 %v3499
        %v3501 = vlaneseq
        %v3502 = vshrl.u32 %v3501, 7
        %v3503 = vsub.s32 %v3500, %v3502
        %v3504 = vrot.slane %v3476, %v3503
        %v3505 = vcombine.high %v3483, %v3483
        %v3506 = vcombine.high %v3490, %v3490
        %v3507 = vcombine.high %v3497, %v3497
        %v3508 = vcombine.high %v3504, %v3504
        %v3509 = vcombine.high %v341, %v341
        %v3511 = vunpack.c.l.s4 1966171168
        %v3512 = vunpack.c.0.s8 %v3511
        %v3513 = vlaneseq
        %v3514 = vshrl.u32 %v3513, 7
        %v3515 = vsub.s32 %v3512, %v3514
        %v3516 = vrot.slane %v341, %v3515
        %v3518 = vunpack.c.l.s4 1966171168
        %v3519 = vunpack.c.0.s8 %v3518
        %v3520 = vlaneseq
        %v3521 = vshrl.u32 %v3520, 7
        %v3522 = vsub.s32 %v3519, %v3521
        %v3523 = vrot.slane %v3509, %v3522
        %v3524 = vcombine.high %v3516, %v3516
        %v3525 = vcombine.high %v3523, %v3523
        %v3527 = vunpack.c.l.s4 1966171168
        %v3528 = vunpack.c.0.s8 %v3527
        %v3529 = vlaneseq
        %v3530 = vshrl.u32 %v3529, 7
        %v3531 = vsub.s32 %v3528, %v3530
        %v3532 = vrot.slane %v3516, %v3531
        %v3534 = vunpack.c.l.s4 1966171168
        %v3535 = vunpack.c.0.s8 %v3534
        %v3536 = vlaneseq
        %v3537 = vshrl.u32 %v3536, 7
        %v3538 = vsub.s32 %v3535, %v3537
        %v3539 = vrot.slane %v3523, %v3538
        %v3541 = vunpack.c.l.s4 1966171168
        %v3542 = vunpack.c.0.s8 %v3541
        %v3543 = vlaneseq
        %v3544 = vshrl.u32 %v3543, 7
        %v3545 = vsub.s32 %v3542, %v3544
        %v3546 = vrot.slane %v3524, %v3545
        %v3548 = vunpack.c.l.s4 1966171168
        %v3549 = vunpack.c.0.s8 %v3548
        %v3550 = vlaneseq
        %v3551 = vshrl.u32 %v3550, 7
        %v3552 = vsub.s32 %v3549, %v3551
        %v3553 = vrot.slane %v3525, %v3552
        %v3554 = vcombine.high %v3532, %v3532
        %v3555 = vcombine.high %v3539, %v3539
        %v3556 = vcombine.high %v3546, %v3546
        %v3557 = vcombine.high %v3553, %v3553
        %v3558 = vcombine.high %v342, %v342
        %v3560 = vunpack.c.l.s4 1966171168
        %v3561 = vunpack.c.0.s8 %v3560
        %v3562 = vlaneseq
        %v3563 = vshrl.u32 %v3562, 7
        %v3564 = vsub.s32 %v3561, %v3563
        %v3565 = vrot.slane %v342, %v3564
        %v3567 = vunpack.c.l.s4 1966171168
        %v3568 = vunpack.c.0.s8 %v3567
        %v3569 = vlaneseq
        %v3570 = vshrl.u32 %v3569, 7
        %v3571 = vsub.s32 %v3568, %v3570
        %v3572 = vrot.slane %v3558, %v3571
        %v3573 = vcombine.high %v3565, %v3565
        %v3574 = vcombine.high %v3572, %v3572
        %v3576 = vunpack.c.l.s4 1966171168
        %v3577 = vunpack.c.0.s8 %v3576
        %v3578 = vlaneseq
        %v3579 = vshrl.u32 %v3578, 7
        %v3580 = vsub.s32 %v3577, %v3579
        %v3581 = vrot.slane %v3565, %v3580
        %v3583 = vunpack.c.l.s4 1966171168
        %v3584 = vunpack.c.0.s8 %v3583
        %v3585 = vlaneseq
        %v3586 = vshrl.u32 %v3585, 7
        %v3587 = vsub.s32 %v3584, %v3586
        %v3588 = vrot.slane %v3572, %v3587
        %v3590 = vunpack.c.l.s4 1966171168
        %v3591 = vunpack.c.0.s8 %v3590
        %v3592 = vlaneseq
        %v3593 = vshrl.u32 %v3592, 7
        %v3594 = vsub.s32 %v3591, %v3593
        %v3595 = vrot.slane %v3573, %v3594
        %v3597 = vunpack.c.l.s4 1966171168
        %v3598 = vunpack.c.0.s8 %v3597
        %v3599 = vlaneseq
        %v3600 = vshrl.u32 %v3599, 7
        %v3601 = vsub.s32 %v3598, %v3600
        %v3602 = vrot.slane %v3574, %v3601
        %v3603 = vcombine.high %v3581, %v3581
        %v3604 = vcombine.high %v3588, %v3588
        %v3605 = vcombine.high %v3595, %v3595
        %v3606 = vcombine.high %v3602, %v3602
        %v3607 = vcombine.high %v343, %v343
        %v3609 = vunpack.c.l.s4 1966171168
        %v3610 = vunpack.c.0.s8 %v3609
        %v3611 = vlaneseq
        %v3612 = vshrl.u32 %v3611, 7
        %v3613 = vsub.s32 %v3610, %v3612
        %v3614 = vrot.slane %v343, %v3613
        %v3616 = vunpack.c.l.s4 1966171168
        %v3617 = vunpack.c.0.s8 %v3616
        %v3618 = vlaneseq
        %v3619 = vshrl.u32 %v3618, 7
        %v3620 = vsub.s32 %v3617, %v3619
        %v3621 = vrot.slane %v3607, %v3620
        %v3622 = vcombine.high %v3614, %v3614
        %v3623 = vcombine.high %v3621, %v3621
        %v3625 = vunpack.c.l.s4 1966171168
        %v3626 = vunpack.c.0.s8 %v3625
        %v3627 = vlaneseq
        %v3628 = vshrl.u32 %v3627, 7
        %v3629 = vsub.s32 %v3626, %v3628
        %v3630 = vrot.slane %v3614, %v3629
        %v3632 = vunpack.c.l.s4 1966171168
        %v3633 = vunpack.c.0.s8 %v3632
        %v3634 = vlaneseq
        %v3635 = vshrl.u32 %v3634, 7
        %v3636 = vsub.s32 %v3633, %v3635
        %v3637 = vrot.slane %v3621, %v3636
        %v3639 = vunpack.c.l.s4 1966171168
        %v3640 = vunpack.c.0.s8 %v3639
        %v3641 = vlaneseq
        %v3642 = vshrl.u32 %v3641, 7
        %v3643 = vsub.s32 %v3640, %v3642
        %v3644 = vrot.slane %v3622, %v3643
        %v3646 = vunpack.c.l.s4 1966171168
        %v3647 = vunpack.c.0.s8 %v3646
        %v3648 = vlaneseq
        %v3649 = vshrl.u32 %v3648, 7
        %v3650 = vsub.s32 %v3647, %v3649
        %v3651 = vrot.slane %v3623, %v3650
        %v3652 = vcombine.high %v3630, %v3630
        %v3653 = vcombine.high %v3637, %v3637
        %v3654 = vcombine.high %v3644, %v3644
        %v3655 = vcombine.high %v3651, %v3651
        %v3656 = vcombine.high %v344, %v344
        %v3658 = vunpack.c.l.s4 1966171168
        %v3659 = vunpack.c.0.s8 %v3658
        %v3660 = vlaneseq
        %v3661 = vshrl.u32 %v3660, 7
        %v3662 = vsub.s32 %v3659, %v3661
        %v3663 = vrot.slane %v344, %v3662
        %v3665 = vunpack.c.l.s4 1966171168
        %v3666 = vunpack.c.0.s8 %v3665
        %v3667 = vlaneseq
        %v3668 = vshrl.u32 %v3667, 7
        %v3669 = vsub.s32 %v3666, %v3668
        %v3670 = vrot.slane %v3656, %v3669
        %v3671 = vcombine.high %v3663, %v3663
        %v3672 = vcombine.high %v3670, %v3670
        %v3674 = vunpack.c.l.s4 1966171168
        %v3675 = vunpack.c.0.s8 %v3674
        %v3676 = vlaneseq
        %v3677 = vshrl.u32 %v3676, 7
        %v3678 = vsub.s32 %v3675, %v3677
        %v3679 = vrot.slane %v3663, %v3678
        %v3681 = vunpack.c.l.s4 1966171168
        %v3682 = vunpack.c.0.s8 %v3681
        %v3683 = vlaneseq
        %v3684 = vshrl.u32 %v3683, 7
        %v3685 = vsub.s32 %v3682, %v3684
        %v3686 = vrot.slane %v3670, %v3685
        %v3688 = vunpack.c.l.s4 1966171168
        %v3689 = vunpack.c.0.s8 %v3688
        %v3690 = vlaneseq
        %v3691 = vshrl.u32 %v3690, 7
        %v3692 = vsub.s32 %v3689, %v3691
        %v3693 = vrot.slane %v3671, %v3692
        %v3695 = vunpack.c.l.s4 1966171168
        %v3696 = vunpack.c.0.s8 %v3695
        %v3697 = vlaneseq
        %v3698 = vshrl.u32 %v3697, 7
        %v3699 = vsub.s32 %v3696, %v3698
        %v3700 = vrot.slane %v3672, %v3699
        %v3701 = vcombine.high %v3679, %v3679
        %v3702 = vcombine.high %v3686, %v3686
        %v3703 = vcombine.high %v3693, %v3693
        %v3704 = vcombine.high %v3700, %v3700
        %v3705 = vcombine.high %v345, %v345
        %v3707 = vunpack.c.l.s4 1966171168
        %v3708 = vunpack.c.0.s8 %v3707
        %v3709 = vlaneseq
        %v3710 = vshrl.u32 %v3709, 7
        %v3711 = vsub.s32 %v3708, %v3710
        %v3712 = vrot.slane %v345, %v3711
        %v3714 = vunpack.c.l.s4 1966171168
        %v3715 = vunpack.c.0.s8 %v3714
        %v3716 = vlaneseq
        %v3717 = vshrl.u32 %v3716, 7
        %v3718 = vsub.s32 %v3715, %v3717
        %v3719 = vrot.slane %v3705, %v3718
        %v3720 = vcombine.high %v3712, %v3712
        %v3721 = vcombine.high %v3719, %v3719
        %v3723 = vunpack.c.l.s4 1966171168
        %v3724 = vunpack.c.0.s8 %v3723
        %v3725 = vlaneseq
        %v3726 = vshrl.u32 %v3725, 7
        %v3727 = vsub.s32 %v3724, %v3726
        %v3728 = vrot.slane %v3712, %v3727
        %v3730 = vunpack.c.l.s4 1966171168
        %v3731 = vunpack.c.0.s8 %v3730
        %v3732 = vlaneseq
        %v3733 = vshrl.u32 %v3732, 7
        %v3734 = vsub.s32 %v3731, %v3733
        %v3735 = vrot.slane %v3719, %v3734
        %v3737 = vunpack.c.l.s4 1966171168
        %v3738 = vunpack.c.0.s8 %v3737
        %v3739 = vlaneseq
        %v3740 = vshrl.u32 %v3739, 7
        %v3741 = vsub.s32 %v3738, %v3740
        %v3742 = vrot.slane %v3720, %v3741
        %v3744 = vunpack.c.l.s4 1966171168
        %v3745 = vunpack.c.0.s8 %v3744
        %v3746 = vlaneseq
        %v3747 = vshrl.u32 %v3746, 7
        %v3748 = vsub.s32 %v3745, %v3747
        %v3749 = vrot.slane %v3721, %v3748
        %v3750 = vcombine.high %v3728, %v3728
        %v3751 = vcombine.high %v3735, %v3735
        %v3752 = vcombine.high %v3742, %v3742
        %v3753 = vcombine.high %v3749, %v3749
        %v3754 = vcombine.high %v346, %v346
        %v3756 = vunpack.c.l.s4 1966171168
        %v3757 = vunpack.c.0.s8 %v3756
        %v3758 = vlaneseq
        %v3759 = vshrl.u32 %v3758, 7
        %v3760 = vsub.s32 %v3757, %v3759
        %v3761 = vrot.slane %v346, %v3760
        %v3763 = vunpack.c.l.s4 1966171168
        %v3764 = vunpack.c.0.s8 %v3763
        %v3765 = vlaneseq
        %v3766 = vshrl.u32 %v3765, 7
        %v3767 = vsub.s32 %v3764, %v3766
        %v3768 = vrot.slane %v3754, %v3767
        %v3769 = vcombine.high %v3761, %v3761
        %v3770 = vcombine.high %v3768, %v3768
        %v3772 = vunpack.c.l.s4 1966171168
        %v3773 = vunpack.c.0.s8 %v3772
        %v3774 = vlaneseq
        %v3775 = vshrl.u32 %v3774, 7
        %v3776 = vsub.s32 %v3773, %v3775
        %v3777 = vrot.slane %v3761, %v3776
        %v3779 = vunpack.c.l.s4 1966171168
        %v3780 = vunpack.c.0.s8 %v3779
        %v3781 = vlaneseq
        %v3782 = vshrl.u32 %v3781, 7
        %v3783 = vsub.s32 %v3780, %v3782
        %v3784 = vrot.slane %v3768, %v3783
        %v3786 = vunpack.c.l.s4 1966171168
        %v3787 = vunpack.c.0.s8 %v3786
        %v3788 = vlaneseq
        %v3789 = vshrl.u32 %v3788, 7
        %v3790 = vsub.s32 %v3787, %v3789
        %v3791 = vrot.slane %v3769, %v3790
        %v3793 = vunpack.c.l.s4 1966171168
        %v3794 = vunpack.c.0.s8 %v3793
        %v3795 = vlaneseq
        %v3796 = vshrl.u32 %v3795, 7
        %v3797 = vsub.s32 %v3794, %v3796
        %v3798 = vrot.slane %v3770, %v3797
        %v3799 = vcombine.high %v3777, %v3777
        %v3800 = vcombine.high %v3784, %v3784
        %v3801 = vcombine.high %v3791, %v3791
        %v3802 = vcombine.high %v3798, %v3798
        %v3803 = vcombine.high %v347, %v347
        %v3805 = vunpack.c.l.s4 1966171168
        %v3806 = vunpack.c.0.s8 %v3805
        %v3807 = vlaneseq
        %v3808 = vshrl.u32 %v3807, 7
        %v3809 = vsub.s32 %v3806, %v3808
        %v3810 = vrot.slane %v347, %v3809
        %v3812 = vunpack.c.l.s4 1966171168
        %v3813 = vunpack.c.0.s8 %v3812
        %v3814 = vlaneseq
        %v3815 = vshrl.u32 %v3814, 7
        %v3816 = vsub.s32 %v3813, %v3815
        %v3817 = vrot.slane %v3803, %v3816
        %v3818 = vcombine.high %v3810, %v3810
        %v3819 = vcombine.high %v3817, %v3817
        %v3821 = vunpack.c.l.s4 1966171168
        %v3822 = vunpack.c.0.s8 %v3821
        %v3823 = vlaneseq
        %v3824 = vshrl.u32 %v3823, 7
        %v3825 = vsub.s32 %v3822, %v3824
        %v3826 = vrot.slane %v3810, %v3825
        %v3828 = vunpack.c.l.s4 1966171168
        %v3829 = vunpack.c.0.s8 %v3828
        %v3830 = vlaneseq
        %v3831 = vshrl.u32 %v3830, 7
        %v3832 = vsub.s32 %v3829, %v3831
        %v3833 = vrot.slane %v3817, %v3832
        %v3835 = vunpack.c.l.s4 1966171168
        %v3836 = vunpack.c.0.s8 %v3835
        %v3837 = vlaneseq
        %v3838 = vshrl.u32 %v3837, 7
        %v3839 = vsub.s32 %v3836, %v3838
        %v3840 = vrot.slane %v3818, %v3839
        %v3842 = vunpack.c.l.s4 1966171168
        %v3843 = vunpack.c.0.s8 %v3842
        %v3844 = vlaneseq
        %v3845 = vshrl.u32 %v3844, 7
        %v3846 = vsub.s32 %v3843, %v3845
        %v3847 = vrot.slane %v3819, %v3846
        %v3848 = vcombine.high %v3826, %v3826
        %v3849 = vcombine.high %v3833, %v3833
        %v3850 = vcombine.high %v3840, %v3840
        %v3851 = vcombine.high %v3847, %v3847
        %4044 = vmatprep.subr.bf16.mxu0 0
        %4045 = vmatpush1.bf16.msra.mxu0 %v1116
        %4046 = vmatprep.subr.bf16.mxu0 0
        %4047 = vmatpush1.bf16.msra.mxu0 %v1117
        %4048 = vmatprep.subr.bf16.mxu0 0
        %4049 = vmatpush1.bf16.msra.mxu0 %v1118
        %4050 = vmatprep.subr.bf16.mxu0 0
        %4051 = vmatpush1.bf16.msra.mxu0 %v1119
        %4052 = vmatprep.subr.bf16.mxu0 0
        %4053 = vmatpush1.bf16.msra.mxu0 %v1120
        %4054 = vmatprep.subr.bf16.mxu0 0
        %4055 = vmatpush1.bf16.msra.mxu0 %v1121
        %4056 = vmatprep.subr.bf16.mxu0 0
        %4057 = vmatpush1.bf16.msra.mxu0 %v1122
        %4058 = vmatprep.subr.bf16.mxu0 0
        %4059 = vmatpush1.bf16.msra.mxu0 %v1123
        %4060 = vmatprep.subr.bf16.mxu0 0
        %4061 = vmatpush1.bf16.msra.mxu0 %v1124
        %4062 = vmatprep.subr.bf16.mxu0 0
        %4063 = vmatpush1.bf16.msra.mxu0 %v1125
        %4064 = vmatprep.subr.bf16.mxu0 0
        %4065 = vmatpush1.bf16.msra.mxu0 %v1126
        %4066 = vmatprep.subr.bf16.mxu0 0
        %4067 = vmatpush1.bf16.msra.mxu0 %v1127
        %4068 = vmatprep.subr.bf16.mxu0 0
        %4069 = vmatpush1.bf16.msra.mxu0 %v1128
        %4070 = vmatprep.subr.bf16.mxu0 0
        %4071 = vmatpush1.bf16.msra.mxu0 %v1129
        %4072 = vmatprep.subr.bf16.mxu0 0
        %4073 = vmatpush1.bf16.msra.mxu0 %v1130
        %4074 = vmatprep.subr.bf16.mxu0 0
        %4075 = vmatpush1.bf16.msra.mxu0 %v1131
        %4076 = vmatprep.mubr.bf16.mxu0 %v2713
        %4077 = vmatmul.mubr.bf16.gmra.mrb[0].mxu0 %v2699
        %v4078 = vpop.f32.mrb[0].mxu0
        %v4079 = vadd.f32 0.0, %v4078
        %v4080 = vpop.f32.mrb[0].mxu0
        %v4081 = vpop.f32.mrb[0].mxu0
        %v4082 = vpop.f32.mrb[0].mxu0
        %4083 = vdwg.mxu0
        %4084 = vmatprep.subr.bf16.mxu0 0
        %4085 = vmatpush1.bf16.msra.mxu0 %v1132
        %4086 = vmatprep.subr.bf16.mxu0 0
        %4087 = vmatpush1.bf16.msra.mxu0 %v1133
        %4088 = vmatprep.subr.bf16.mxu0 0
        %4089 = vmatpush1.bf16.msra.mxu0 %v1134
        %4090 = vmatprep.subr.bf16.mxu0 0
        %4091 = vmatpush1.bf16.msra.mxu0 %v1135
        %4092 = vmatprep.subr.bf16.mxu0 0
        %4093 = vmatpush1.bf16.msra.mxu0 %v1136
        %4094 = vmatprep.subr.bf16.mxu0 0
        %4095 = vmatpush1.bf16.msra.mxu0 %v1137
        %4096 = vmatprep.subr.bf16.mxu0 0
        %4097 = vmatpush1.bf16.msra.mxu0 %v1138
        %4098 = vmatprep.subr.bf16.mxu0 0
        %4099 = vmatpush1.bf16.msra.mxu0 %v1139
        %4100 = vmatprep.subr.bf16.mxu0 0
        %4101 = vmatpush1.bf16.msra.mxu0 %v1140
        %4102 = vmatprep.subr.bf16.mxu0 0
        %4103 = vmatpush1.bf16.msra.mxu0 %v1141
        %4104 = vmatprep.subr.bf16.mxu0 0
        %4105 = vmatpush1.bf16.msra.mxu0 %v1142
        %4106 = vmatprep.subr.bf16.mxu0 0
        %4107 = vmatpush1.bf16.msra.mxu0 %v1143
        %4108 = vmatprep.subr.bf16.mxu0 0
        %4109 = vmatpush1.bf16.msra.mxu0 %v1144
        %4110 = vmatprep.subr.bf16.mxu0 0
        %4111 = vmatpush1.bf16.msra.mxu0 %v1145
        %4112 = vmatprep.subr.bf16.mxu0 0
        %4113 = vmatpush1.bf16.msra.mxu0 %v1146
        %4114 = vmatprep.subr.bf16.mxu0 0
        %4115 = vmatpush1.bf16.msra.mxu0 %v1147
        %4116 = vmatprep.mubr.bf16.mxu0 %v2723
        %4117 = vmatmul.mubr.bf16.gmra.mrb[0].mxu0 %v2721
        %v4118 = vpop.f32.mrb[0].mxu0
        %v4119 = vadd.f32 %v4079, %v4118
        %v4120 = vpop.f32.mrb[0].mxu0
        %v4121 = vpop.f32.mrb[0].mxu0
        %v4122 = vpop.f32.mrb[0].mxu0
        %4123 = vdwg.mxu0
        %4124 = vmatprep.subr.bf16.mxu0 0
        %4125 = vmatpush1.bf16.msra.mxu0 %v1148
        %4126 = vmatprep.subr.bf16.mxu0 0
        %4127 = vmatpush1.bf16.msra.mxu0 %v1149
        %4128 = vmatprep.subr.bf16.mxu0 0
        %4129 = vmatpush1.bf16.msra.mxu0 %v1150
        %4130 = vmatprep.subr.bf16.mxu0 0
        %4131 = vmatpush1.bf16.msra.mxu0 %v1151
        %4132 = vmatprep.subr.bf16.mxu0 0
        %4133 = vmatpush1.bf16.msra.mxu0 %v1152
        %4134 = vmatprep.subr.bf16.mxu0 0
        %4135 = vmatpush1.bf16.msra.mxu0 %v1153
        %4136 = vmatprep.subr.bf16.mxu0 0
        %4137 = vmatpush1.bf16.msra.mxu0 %v1154
        %4138 = vmatprep.subr.bf16.mxu0 0
        %4139 = vmatpush1.bf16.msra.mxu0 %v1155
        %4140 = vmatprep.subr.bf16.mxu0 0
        %4141 = vmatpush1.bf16.msra.mxu0 %v1156
        %4142 = vmatprep.subr.bf16.mxu0 0
        %4143 = vmatpush1.bf16.msra.mxu0 %v1157
        %4144 = vmatprep.subr.bf16.mxu0 0
        %4145 = vmatpush1.bf16.msra.mxu0 %v1158
        %4146 = vmatprep.subr.bf16.mxu0 0
        %4147 = vmatpush1.bf16.msra.mxu0 %v1159
        %4148 = vmatprep.subr.bf16.mxu0 0
        %4149 = vmatpush1.bf16.msra.mxu0 %v1160
        %4150 = vmatprep.subr.bf16.mxu0 0
        %4151 = vmatpush1.bf16.msra.mxu0 %v1161
        %4152 = vmatprep.subr.bf16.mxu0 0
        %4153 = vmatpush1.bf16.msra.mxu0 %v1162
        %4154 = vmatprep.subr.bf16.mxu0 0
        %4155 = vmatpush1.bf16.msra.mxu0 %v1163
        %4156 = vmatprep.mubr.bf16.mxu0 %v2720
        %4157 = vmatmul.mubr.bf16.gmra.mrb[0].mxu0 %v2706
        %v4158 = vpop.f32.mrb[0].mxu0
        %v4159 = vadd.f32 %v4119, %v4158
        %v4160 = vpop.f32.mrb[0].mxu0
        %v4161 = vpop.f32.mrb[0].mxu0
        %v4162 = vpop.f32.mrb[0].mxu0
        %4163 = vdwg.mxu0
        %4164 = vmatprep.subr.bf16.mxu0 0
        %4165 = vmatpush1.bf16.msra.mxu0 %v1164
        %4166 = vmatprep.subr.bf16.mxu0 0
        %4167 = vmatpush1.bf16.msra.mxu0 %v1165
        %4168 = vmatprep.subr.bf16.mxu0 0
        %4169 = vmatpush1.bf16.msra.mxu0 %v1166
        %4170 = vmatprep.subr.bf16.mxu0 0
        %4171 = vmatpush1.bf16.msra.mxu0 %v1167
        %4172 = vmatprep.subr.bf16.mxu0 0
        %4173 = vmatpush1.bf16.msra.mxu0 %v1168
        %4174 = vmatprep.subr.bf16.mxu0 0
        %4175 = vmatpush1.bf16.msra.mxu0 %v1169
        %4176 = vmatprep.subr.bf16.mxu0 0
        %4177 = vmatpush1.bf16.msra.mxu0 %v1170
        %4178 = vmatprep.subr.bf16.mxu0 0
        %4179 = vmatpush1.bf16.msra.mxu0 %v1171
        %4180 = vmatprep.subr.bf16.mxu0 0
        %4181 = vmatpush1.bf16.msra.mxu0 %v1172
        %4182 = vmatprep.subr.bf16.mxu0 0
        %4183 = vmatpush1.bf16.msra.mxu0 %v1173
        %4184 = vmatprep.subr.bf16.mxu0 0
        %4185 = vmatpush1.bf16.msra.mxu0 %v1174
        %4186 = vmatprep.subr.bf16.mxu0 0
        %4187 = vmatpush1.bf16.msra.mxu0 %v1175
        %4188 = vmatprep.subr.bf16.mxu0 0
        %4189 = vmatpush1.bf16.msra.mxu0 %v1176
        %4190 = vmatprep.subr.bf16.mxu0 0
        %4191 = vmatpush1.bf16.msra.mxu0 %v1177
        %4192 = vmatprep.subr.bf16.mxu0 0
        %4193 = vmatpush1.bf16.msra.mxu0 %v1178
        %4194 = vmatprep.subr.bf16.mxu0 0
        %4195 = vmatpush1.bf16.msra.mxu0 %v1179
        %4196 = vmatprep.mubr.bf16.mxu0 %v2724
        %4197 = vmatmul.mubr.bf16.gmra.mrb[0].mxu0 %v2722
        %v4198 = vpop.f32.mrb[0].mxu0
        %v4199 = vadd.f32 %v4159, %v4198
        %v4200 = vpop.f32.mrb[0].mxu0
        %v4201 = vpop.f32.mrb[0].mxu0
        %v4202 = vpop.f32.mrb[0].mxu0
        %4203 = vdwg.mxu0
        %4204 = vmatprep.subr.bf16.mxu0 0
        %4205 = vmatpush1.bf16.msra.mxu0 %v1180
        %4206 = vmatprep.subr.bf16.mxu0 0
        %4207 = vmatpush1.bf16.msra.mxu0 %v1181
        %4208 = vmatprep.subr.bf16.mxu0 0
        %4209 = vmatpush1.bf16.msra.mxu0 %v1182
        %4210 = vmatprep.subr.bf16.mxu0 0
        %4211 = vmatpush1.bf16.msra.mxu0 %v1183
        %4212 = vmatprep.subr.bf16.mxu0 0
        %4213 = vmatpush1.bf16.msra.mxu0 %v1184
        %4214 = vmatprep.subr.bf16.mxu0 0
        %4215 = vmatpush1.bf16.msra.mxu0 %v1185
        %4216 = vmatprep.subr.bf16.mxu0 0
        %4217 = vmatpush1.bf16.msra.mxu0 %v1186
        %4218 = vmatprep.subr.bf16.mxu0 0
        %4219 = vmatpush1.bf16.msra.mxu0 %v1187
        %4220 = vmatprep.subr.bf16.mxu0 0
        %4221 = vmatpush1.bf16.msra.mxu0 %v1188
        %4222 = vmatprep.subr.bf16.mxu0 0
        %4223 = vmatpush1.bf16.msra.mxu0 %v1189
        %4224 = vmatprep.subr.bf16.mxu0 0
        %4225 = vmatpush1.bf16.msra.mxu0 %v1190
        %4226 = vmatprep.subr.bf16.mxu0 0
        %4227 = vmatpush1.bf16.msra.mxu0 %v1191
        %4228 = vmatprep.subr.bf16.mxu0 0
        %4229 = vmatpush1.bf16.msra.mxu0 %v1192
        %4230 = vmatprep.subr.bf16.mxu0 0
        %4231 = vmatpush1.bf16.msra.mxu0 %v1193
        %4232 = vmatprep.subr.bf16.mxu0 0
        %4233 = vmatpush1.bf16.msra.mxu0 %v1194
        %4234 = vmatprep.subr.bf16.mxu0 0
        %4235 = vmatpush1.bf16.msra.mxu0 %v1195
        %4236 = vmatprep.mubr.bf16.mxu0 %v2762
        %4237 = vmatmul.mubr.bf16.gmra.mrb[0].mxu0 %v2748
        %v4238 = vpop.f32.mrb[0].mxu0
        %v4239 = vadd.f32 %v4199, %v4238
        %v4240 = vpop.f32.mrb[0].mxu0
        %v4241 = vpop.f32.mrb[0].mxu0
        %v4242 = vpop.f32.mrb[0].mxu0
        %4243 = vdwg.mxu0
        %4244 = vmatprep.subr.bf16.mxu0 0
        %4245 = vmatpush1.bf16.msra.mxu0 %v1196
        %4246 = vmatprep.subr.bf16.mxu0 0
        %4247 = vmatpush1.bf16.msra.mxu0 %v1197
        %4248 = vmatprep.subr.bf16.mxu0 0
        %4249 = vmatpush1.bf16.msra.mxu0 %v1198
        %4250 = vmatprep.subr.bf16.mxu0 0
        %4251 = vmatpush1.bf16.msra.mxu0 %v1199
        %4252 = vmatprep.subr.bf16.mxu0 0
        %4253 = vmatpush1.bf16.msra.mxu0 %v1200
        %4254 = vmatprep.subr.bf16.mxu0 0
        %4255 = vmatpush1.bf16.msra.mxu0 %v1201
        %4256 = vmatprep.subr.bf16.mxu0 0
        %4257 = vmatpush1.bf16.msra.mxu0 %v1202
        %4258 = vmatprep.subr.bf16.mxu0 0
        %4259 = vmatpush1.bf16.msra.mxu0 %v1203
        %4260 = vmatprep.subr.bf16.mxu0 0
        %4261 = vmatpush1.bf16.msra.mxu0 %v1204
        %4262 = vmatprep.subr.bf16.mxu0 0
        %4263 = vmatpush1.bf16.msra.mxu0 %v1205
        %4264 = vmatprep.subr.bf16.mxu0 0
        %4265 = vmatpush1.bf16.msra.mxu0 %v1206
        %4266 = vmatprep.subr.bf16.mxu0 0
        %4267 = vmatpush1.bf16.msra.mxu0 %v1207
        %4268 = vmatprep.subr.bf16.mxu0 0
        %4269 = vmatpush1.bf16.msra.mxu0 %v1208
        %4270 = vmatprep.subr.bf16.mxu0 0
        %4271 = vmatpush1.bf16.msra.mxu0 %v1209
        %4272 = vmatprep.subr.bf16.mxu0 0
        %4273 = vmatpush1.bf16.msra.mxu0 %v1210
        %4274 = vmatprep.subr.bf16.mxu0 0
        %4275 = vmatpush1.bf16.msra.mxu0 %v1211
        %4276 = vmatprep.mubr.bf16.mxu0 %v2772
        %4277 = vmatmul.mubr.bf16.gmra.mrb[0].mxu0 %v2770
        %v4278 = vpop.f32.mrb[0].mxu0
        %v4279 = vadd.f32 %v4239, %v4278
        %v4280 = vpop.f32.mrb[0].mxu0
        %v4281 = vpop.f32.mrb[0].mxu0
        %v4282 = vpop.f32.mrb[0].mxu0
        %4283 = vdwg.mxu0
        %4284 = vmatprep.subr.bf16.mxu0 0
        %4285 = vmatpush1.bf16.msra.mxu0 %v1212
        %4286 = vmatprep.subr.bf16.mxu0 0
        %4287 = vmatpush1.bf16.msra.mxu0 %v1213
        %4288 = vmatprep.subr.bf16.mxu0 0
        %4289 = vmatpush1.bf16.msra.mxu0 %v1214
        %4290 = vmatprep.subr.bf16.mxu0 0
        %4291 = vmatpush1.bf16.msra.mxu0 %v1215
        %4292 = vmatprep.subr.bf16.mxu0 0
        %4293 = vmatpush1.bf16.msra.mxu0 %v1216
        %4294 = vmatprep.subr.bf16.mxu0 0
        %4295 = vmatpush1.bf16.msra.mxu0 %v1217
        %4296 = vmatprep.subr.bf16.mxu0 0
        %4297 = vmatpush1.bf16.msra.mxu0 %v1218
        %4298 = vmatprep.subr.bf16.mxu0 0
        %4299 = vmatpush1.bf16.msra.mxu0 %v1219
        %4300 = vmatprep.subr.bf16.mxu0 0
        %4301 = vmatpush1.bf16.msra.mxu0 %v1220
        %4302 = vmatprep.subr.bf16.mxu0 0
        %4303 = vmatpush1.bf16.msra.mxu0 %v1221
        %4304 = vmatprep.subr.bf16.mxu0 0
        %4305 = vmatpush1.bf16.msra.mxu0 %v1222
        %4306 = vmatprep.subr.bf16.mxu0 0
        %4307 = vmatpush1.bf16.msra.mxu0 %v1223
        %4308 = vmatprep.subr.bf16.mxu0 0
        %4309 = vmatpush1.bf16.msra.mxu0 %v1224
        %4310 = vmatprep.subr.bf16.mxu0 0
        %4311 = vmatpush1.bf16.msra.mxu0 %v1225
        %4312 = vmatprep.subr.bf16.mxu0 0
        %4313 = vmatpush1.bf16.msra.mxu0 %v1226
        %4314 = vmatprep.subr.bf16.mxu0 0
        %4315 = vmatpush1.bf16.msra.mxu0 %v1227
        %4316 = vmatprep.mubr.bf16.mxu0 %v2769
        %4317 = vmatmul.mubr.bf16.gmra.mrb[0].mxu0 %v2755
        %v4318 = vpop.f32.mrb[0].mxu0
        %v4319 = vadd.f32 %v4279, %v4318
        %v4320 = vpop.f32.mrb[0].mxu0
        %v4321 = vpop.f32.mrb[0].mxu0
        %v4322 = vpop.f32.mrb[0].mxu0
        %4323 = vdwg.mxu0
        %4324 = vmatprep.subr.bf16.mxu0 0
        %4325 = vmatpush1.bf16.msra.mxu0 %v1228
        %4326 = vmatprep.subr.bf16.mxu0 0
        %4327 = vmatpush1.bf16.msra.mxu0 %v1229
        %4328 = vmatprep.subr.bf16.mxu0 0
        %4329 = vmatpush1.bf16.msra.mxu0 %v1230
        %4330 = vmatprep.subr.bf16.mxu0 0
        %4331 = vmatpush1.bf16.msra.mxu0 %v1231
        %4332 = vmatprep.subr.bf16.mxu0 0
        %4333 = vmatpush1.bf16.msra.mxu0 %v1232
        %4334 = vmatprep.subr.bf16.mxu0 0
        %4335 = vmatpush1.bf16.msra.mxu0 %v1233
        %4336 = vmatprep.subr.bf16.mxu0 0
        %4337 = vmatpush1.bf16.msra.mxu0 %v1234
        %4338 = vmatprep.subr.bf16.mxu0 0
        %4339 = vmatpush1.bf16.msra.mxu0 %v1235
        %4340 = vmatprep.subr.bf16.mxu0 0
        %4341 = vmatpush1.bf16.msra.mxu0 %v1236
        %4342 = vmatprep.subr.bf16.mxu0 0
        %4343 = vmatpush1.bf16.msra.mxu0 %v1237
        %4344 = vmatprep.subr.bf16.mxu0 0
        %4345 = vmatpush1.bf16.msra.mxu0 %v1238
        %4346 = vmatprep.subr.bf16.mxu0 0
        %4347 = vmatpush1.bf16.msra.mxu0 %v1239
        %4348 = vmatprep.subr.bf16.mxu0 0
        %4349 = vmatpush1.bf16.msra.mxu0 %v1240
        %4350 = vmatprep.subr.bf16.mxu0 0
        %4351 = vmatpush1.bf16.msra.mxu0 %v1241
        %4352 = vmatprep.subr.bf16.mxu0 0
        %4353 = vmatpush1.bf16.msra.mxu0 %v1242
        %4354 = vmatprep.subr.bf16.mxu0 0
        %4355 = vmatpush1.bf16.msra.mxu0 %v1243
        %4356 = vmatprep.mubr.bf16.mxu0 %v2773
        %4357 = vmatmul.mubr.bf16.gmra.mrb[0].mxu0 %v2771
        %v4358 = vpop.f32.mrb[0].mxu0
        %v4359 = vadd.f32 %v4319, %v4358
        %v4360 = vpop.f32.mrb[0].mxu0
        %v4361 = vpop.f32.mrb[0].mxu0
        %v4362 = vpop.f32.mrb[0].mxu0
        %4363 = vdwg.mxu0
        %4364 = vmatprep.subr.bf16.mxu0 0
        %4365 = vmatpush1.bf16.msra.mxu0 %v1244
        %4366 = vmatprep.subr.bf16.mxu0 0
        %4367 = vmatpush1.bf16.msra.mxu0 %v1245
        %4368 = vmatprep.subr.bf16.mxu0 0
        %4369 = vmatpush1.bf16.msra.mxu0 %v1246
        %4370 = vmatprep.subr.bf16.mxu0 0
        %4371 = vmatpush1.bf16.msra.mxu0 %v1247
        %4372 = vmatprep.subr.bf16.mxu0 0
        %4373 = vmatpush1.bf16.msra.mxu0 %v1248
        %4374 = vmatprep.subr.bf16.mxu0 0
        %4375 = vmatpush1.bf16.msra.mxu0 %v1249
        %4376 = vmatprep.subr.bf16.mxu0 0
        %4377 = vmatpush1.bf16.msra.mxu0 %v1250
        %4378 = vmatprep.subr.bf16.mxu0 0
        %4379 = vmatpush1.bf16.msra.mxu0 %v1251
        %4380 = vmatprep.subr.bf16.mxu0 0
        %4381 = vmatpush1.bf16.msra.mxu0 %v1252
        %4382 = vmatprep.subr.bf16.mxu0 0
        %4383 = vmatpush1.bf16.msra.mxu0 %v1253
        %4384 = vmatprep.subr.bf16.mxu0 0
        %4385 = vmatpush1.bf16.msra.mxu0 %v1254
        %4386 = vmatprep.subr.bf16.mxu0 0
        %4387 = vmatpush1.bf16.msra.mxu0 %v1255
        %4388 = vmatprep.subr.bf16.mxu0 0
        %4389 = vmatpush1.bf16.msra.mxu0 %v1256
        %4390 = vmatprep.subr.bf16.mxu0 0
        %4391 = vmatpush1.bf16.msra.mxu0 %v1257
        %4392 = vmatprep.subr.bf16.mxu0 0
        %4393 = vmatpush1.bf16.msra.mxu0 %v1258
        %4394 = vmatprep.subr.bf16.mxu0 0
        %4395 = vmatpush1.bf16.msra.mxu0 %v1259
        %4396 = vmatprep.mubr.bf16.mxu0 %v2811
        %4397 = vmatmul.mubr.bf16.gmra.mrb[0].mxu0 %v2797
        %v4398 = vpop.f32.mrb[0].mxu0
        %v4399 = vadd.f32 %v4359, %v4398
        %v4400 = vpop.f32.mrb[0].mxu0
        %v4401 = vpop.f32.mrb[0].mxu0
        %v4402 = vpop.f32.mrb[0].mxu0
        %4403 = vdwg.mxu0
        %4404 = vmatprep.subr.bf16.mxu0 0
        %4405 = vmatpush1.bf16.msra.mxu0 %v1260
        %4406 = vmatprep.subr.bf16.mxu0 0
        %4407 = vmatpush1.bf16.msra.mxu0 %v1261
        %4408 = vmatprep.subr.bf16.mxu0 0
        %4409 = vmatpush1.bf16.msra.mxu0 %v1262
        %4410 = vmatprep.subr.bf16.mxu0 0
        %4411 = vmatpush1.bf16.msra.mxu0 %v1263
        %4412 = vmatprep.subr.bf16.mxu0 0
        %4413 = vmatpush1.bf16.msra.mxu0 %v1264
        %4414 = vmatprep.subr.bf16.mxu0 0
        %4415 = vmatpush1.bf16.msra.mxu0 %v1265
        %4416 = vmatprep.subr.bf16.mxu0 0
        %4417 = vmatpush1.bf16.msra.mxu0 %v1266
        %4418 = vmatprep.subr.bf16.mxu0 0
        %4419 = vmatpush1.bf16.msra.mxu0 %v1267
        %4420 = vmatprep.subr.bf16.mxu0 0
        %4421 = vmatpush1.bf16.msra.mxu0 %v1268
        %4422 = vmatprep.subr.bf16.mxu0 0
        %4423 = vmatpush1.bf16.msra.mxu0 %v1269
        %4424 = vmatprep.subr.bf16.mxu0 0
        %4425 = vmatpush1.bf16.msra.mxu0 %v1270
        %4426 = vmatprep.subr.bf16.mxu0 0
        %4427 = vmatpush1.bf16.msra.mxu0 %v1271
        %4428 = vmatprep.subr.bf16.mxu0 0
        %4429 = vmatpush1.bf16.msra.mxu0 %v1272
        %4430 = vmatprep.subr.bf16.mxu0 0
        %4431 = vmatpush1.bf16.msra.mxu0 %v1273
        %4432 = vmatprep.subr.bf16.mxu0 0
        %4433 = vmatpush1.bf16.msra.mxu0 %v1274
        %4434 = vmatprep.subr.bf16.mxu0 0
        %4435 = vmatpush1.bf16.msra.mxu0 %v1275
        %4436 = vmatprep.mubr.bf16.mxu0 %v2821
        %4437 = vmatmul.mubr.bf16.gmra.mrb[0].mxu0 %v2819
        %v4438 = vpop.f32.mrb[0].mxu0
        %v4439 = vadd.f32 %v4399, %v4438
        %v4440 = vpop.f32.mrb[0].mxu0
        %v4441 = vpop.f32.mrb[0].mxu0
        %v4442 = vpop.f32.mrb[0].mxu0
        %4443 = vdwg.mxu0
        %4444 = vmatprep.subr.bf16.mxu0 0
        %4445 = vmatpush1.bf16.msra.mxu0 %v1276
        %4446 = vmatprep.subr.bf16.mxu0 0
        %4447 = vmatpush1.bf16.msra.mxu0 %v1277
        %4448 = vmatprep.subr.bf16.mxu0 0
        %4449 = vmatpush1.bf16.msra.mxu0 %v1278
        %4450 = vmatprep.subr.bf16.mxu0 0
        %4451 = vmatpush1.bf16.msra.mxu0 %v1279
        %4452 = vmatprep.subr.bf16.mxu0 0
        %4453 = vmatpush1.bf16.msra.mxu0 %v1280
        %4454 = vmatprep.subr.bf16.mxu0 0
        %4455 = vmatpush1.bf16.msra.mxu0 %v1281
        %4456 = vmatprep.subr.bf16.mxu0 0
        %4457 = vmatpush1.bf16.msra.mxu0 %v1282
        %4458 = vmatprep.subr.bf16.mxu0 0
        %4459 = vmatpush1.bf16.msra.mxu0 %v1283
        %4460 = vmatprep.subr.bf16.mxu0 0
        %4461 = vmatpush1.bf16.msra.mxu0 %v1284
        %4462 = vmatprep.subr.bf16.mxu0 0
        %4463 = vmatpush1.bf16.msra.mxu0 %v1285
        %4464 = vmatprep.subr.bf16.mxu0 0
        %4465 = vmatpush1.bf16.msra.mxu0 %v1286
        %4466 = vmatprep.subr.bf16.mxu0 0
        %4467 = vmatpush1.bf16.msra.mxu0 %v1287
        %4468 = vmatprep.subr.bf16.mxu0 0
        %4469 = vmatpush1.bf16.msra.mxu0 %v1288
        %4470 = vmatprep.subr.bf16.mxu0 0
        %4471 = vmatpush1.bf16.msra.mxu0 %v1289
        %4472 = vmatprep.subr.bf16.mxu0 0
        %4473 = vmatpush1.bf16.msra.mxu0 %v1290
        %4474 = vmatprep.subr.bf16.mxu0 0
        %4475 = vmatpush1.bf16.msra.mxu0 %v1291
        %4476 = vmatprep.mubr.bf16.mxu0 %v2818
        %4477 = vmatmul.mubr.bf16.gmra.mrb[0].mxu0 %v2804
        %v4478 = vpop.f32.mrb[0].mxu0
        %v4479 = vadd.f32 %v4439, %v4478
        %v4480 = vpop.f32.mrb[0].mxu0
        %v4481 = vpop.f32.mrb[0].mxu0
        %v4482 = vpop.f32.mrb[0].mxu0
        %4483 = vdwg.mxu0
        %4484 = vmatprep.subr.bf16.mxu0 0
        %4485 = vmatpush1.bf16.msra.mxu0 %v1292
        %4486 = vmatprep.subr.bf16.mxu0 0
        %4487 = vmatpush1.bf16.msra.mxu0 %v1293
        %4488 = vmatprep.subr.bf16.mxu0 0
        %4489 = vmatpush1.bf16.msra.mxu0 %v1294
        %4490 = vmatprep.subr.bf16.mxu0 0
        %4491 = vmatpush1.bf16.msra.mxu0 %v1295
        %4492 = vmatprep.subr.bf16.mxu0 0
        %4493 = vmatpush1.bf16.msra.mxu0 %v1296
        %4494 = vmatprep.subr.bf16.mxu0 0
        %4495 = vmatpush1.bf16.msra.mxu0 %v1297
        %4496 = vmatprep.subr.bf16.mxu0 0
        %4497 = vmatpush1.bf16.msra.mxu0 %v1298
        %4498 = vmatprep.subr.bf16.mxu0 0
        %4499 = vmatpush1.bf16.msra.mxu0 %v1299
        %4500 = vmatprep.subr.bf16.mxu0 0
        %4501 = vmatpush1.bf16.msra.mxu0 %v1300
        %4502 = vmatprep.subr.bf16.mxu0 0
        %4503 = vmatpush1.bf16.msra.mxu0 %v1301
        %4504 = vmatprep.subr.bf16.mxu0 0
        %4505 = vmatpush1.bf16.msra.mxu0 %v1302
        %4506 = vmatprep.subr.bf16.mxu0 0
        %4507 = vmatpush1.bf16.msra.mxu0 %v1303
        %4508 = vmatprep.subr.bf16.mxu0 0
        %4509 = vmatpush1.bf16.msra.mxu0 %v1304
        %4510 = vmatprep.subr.bf16.mxu0 0
        %4511 = vmatpush1.bf16.msra.mxu0 %v1305
        %4512 = vmatprep.subr.bf16.mxu0 0
        %4513 = vmatpush1.bf16.msra.mxu0 %v1306
        %4514 = vmatprep.subr.bf16.mxu0 0
        %4515 = vmatpush1.bf16.msra.mxu0 %v1307
        %4516 = vmatprep.mubr.bf16.mxu0 %v2822
        %4517 = vmatmul.mubr.bf16.gmra.mrb[0].mxu0 %v2820
        %v4518 = vpop.f32.mrb[0].mxu0
        %v4519 = vadd.f32 %v4479, %v4518
        %v4520 = vpop.f32.mrb[0].mxu0
        %v4521 = vpop.f32.mrb[0].mxu0
        %v4522 = vpop.f32.mrb[0].mxu0
        %4523 = vdwg.mxu0
        %4524 = vmatprep.subr.bf16.mxu0 0
        %4525 = vmatpush1.bf16.msra.mxu0 %v1308
        %4526 = vmatprep.subr.bf16.mxu0 0
        %4527 = vmatpush1.bf16.msra.mxu0 %v1309
        %4528 = vmatprep.subr.bf16.mxu0 0
        %4529 = vmatpush1.bf16.msra.mxu0 %v1310
        %4530 = vmatprep.subr.bf16.mxu0 0
        %4531 = vmatpush1.bf16.msra.mxu0 %v1311
        %4532 = vmatprep.subr.bf16.mxu0 0
        %4533 = vmatpush1.bf16.msra.mxu0 %v1312
        %4534 = vmatprep.subr.bf16.mxu0 0
        %4535 = vmatpush1.bf16.msra.mxu0 %v1313
        %4536 = vmatprep.subr.bf16.mxu0 0
        %4537 = vmatpush1.bf16.msra.mxu0 %v1314
        %4538 = vmatprep.subr.bf16.mxu0 0
        %4539 = vmatpush1.bf16.msra.mxu0 %v1315
        %4540 = vmatprep.subr.bf16.mxu0 0
        %4541 = vmatpush1.bf16.msra.mxu0 %v1316
        %4542 = vmatprep.subr.bf16.mxu0 0
        %4543 = vmatpush1.bf16.msra.mxu0 %v1317
        %4544 = vmatprep.subr.bf16.mxu0 0
        %4545 = vmatpush1.bf16.msra.mxu0 %v1318
        %4546 = vmatprep.subr.bf16.mxu0 0
        %4547 = vmatpush1.bf16.msra.mxu0 %v1319
        %4548 = vmatprep.subr.bf16.mxu0 0
        %4549 = vmatpush1.bf16.msra.mxu0 %v1320
        %4550 = vmatprep.subr.bf16.mxu0 0
        %4551 = vmatpush1.bf16.msra.mxu0 %v1321
        %4552 = vmatprep.subr.bf16.mxu0 0
        %4553 = vmatpush1.bf16.msra.mxu0 %v1322
        %4554 = vmatprep.subr.bf16.mxu0 0
        %4555 = vmatpush1.bf16.msra.mxu0 %v1323
        %4556 = vmatprep.mubr.bf16.mxu0 %v2860
        %4557 = vmatmul.mubr.bf16.gmra.mrb[0].mxu0 %v2846
        %v4558 = vpop.f32.mrb[0].mxu0
        %v4559 = vadd.f32 %v4519, %v4558
        %v4560 = vpop.f32.mrb[0].mxu0
        %v4561 = vpop.f32.mrb[0].mxu0
        %v4562 = vpop.f32.mrb[0].mxu0
        %4563 = vdwg.mxu0
        %4564 = vmatprep.subr.bf16.mxu0 0
        %4565 = vmatpush1.bf16.msra.mxu0 %v1324
        %4566 = vmatprep.subr.bf16.mxu0 0
        %4567 = vmatpush1.bf16.msra.mxu0 %v1325
        %4568 = vmatprep.subr.bf16.mxu0 0
        %4569 = vmatpush1.bf16.msra.mxu0 %v1326
        %4570 = vmatprep.subr.bf16.mxu0 0
        %4571 = vmatpush1.bf16.msra.mxu0 %v1327
        %4572 = vmatprep.subr.bf16.mxu0 0
        %4573 = vmatpush1.bf16.msra.mxu0 %v1328
        %4574 = vmatprep.subr.bf16.mxu0 0
        %4575 = vmatpush1.bf16.msra.mxu0 %v1329
        %4576 = vmatprep.subr.bf16.mxu0 0
        %4577 = vmatpush1.bf16.msra.mxu0 %v1330
        %4578 = vmatprep.subr.bf16.mxu0 0
        %4579 = vmatpush1.bf16.msra.mxu0 %v1331
        %4580 = vmatprep.subr.bf16.mxu0 0
        %4581 = vmatpush1.bf16.msra.mxu0 %v1332
        %4582 = vmatprep.subr.bf16.mxu0 0
        %4583 = vmatpush1.bf16.msra.mxu0 %v1333
        %4584 = vmatprep.subr.bf16.mxu0 0
        %4585 = vmatpush1.bf16.msra.mxu0 %v1334
        %4586 = vmatprep.subr.bf16.mxu0 0
        %4587 = vmatpush1.bf16.msra.mxu0 %v1335
        %4588 = vmatprep.subr.bf16.mxu0 0
        %4589 = vmatpush1.bf16.msra.mxu0 %v1336
        %4590 = vmatprep.subr.bf16.mxu0 0
        %4591 = vmatpush1.bf16.msra.mxu0 %v1337
        %4592 = vmatprep.subr.bf16.mxu0 0
        %4593 = vmatpush1.bf16.msra.mxu0 %v1338
        %4594 = vmatprep.subr.bf16.mxu0 0
        %4595 = vmatpush1.bf16.msra.mxu0 %v1339
        %4596 = vmatprep.mubr.bf16.mxu0 %v2870
        %4597 = vmatmul.mubr.bf16.gmra.mrb[0].mxu0 %v2868
        %v4598 = vpop.f32.mrb[0].mxu0
        %v4599 = vadd.f32 %v4559, %v4598
        %v4600 = vpop.f32.mrb[0].mxu0
        %v4601 = vpop.f32.mrb[0].mxu0
        %v4602 = vpop.f32.mrb[0].mxu0
        %4603 = vdwg.mxu0
        %4604 = vmatprep.subr.bf16.mxu0 0
        %4605 = vmatpush1.bf16.msra.mxu0 %v1340
        %4606 = vmatprep.subr.bf16.mxu0 0
        %4607 = vmatpush1.bf16.msra.mxu0 %v1341
        %4608 = vmatprep.subr.bf16.mxu0 0
        %4609 = vmatpush1.bf16.msra.mxu0 %v1342
        %4610 = vmatprep.subr.bf16.mxu0 0
        %4611 = vmatpush1.bf16.msra.mxu0 %v1343
        %4612 = vmatprep.subr.bf16.mxu0 0
        %4613 = vmatpush1.bf16.msra.mxu0 %v1344
        %4614 = vmatprep.subr.bf16.mxu0 0
        %4615 = vmatpush1.bf16.msra.mxu0 %v1345
        %4616 = vmatprep.subr.bf16.mxu0 0
        %4617 = vmatpush1.bf16.msra.mxu0 %v1346
        %4618 = vmatprep.subr.bf16.mxu0 0
        %4619 = vmatpush1.bf16.msra.mxu0 %v1347
        %4620 = vmatprep.subr.bf16.mxu0 0
        %4621 = vmatpush1.bf16.msra.mxu0 %v1348
        %4622 = vmatprep.subr.bf16.mxu0 0
        %4623 = vmatpush1.bf16.msra.mxu0 %v1349
        %4624 = vmatprep.subr.bf16.mxu0 0
        %4625 = vmatpush1.bf16.msra.mxu0 %v1350
        %4626 = vmatprep.subr.bf16.mxu0 0
        %4627 = vmatpush1.bf16.msra.mxu0 %v1351
        %4628 = vmatprep.subr.bf16.mxu0 0
        %4629 = vmatpush1.bf16.msra.mxu0 %v1352
        %4630 = vmatprep.subr.bf16.mxu0 0
        %4631 = vmatpush1.bf16.msra.mxu0 %v1353
        %4632 = vmatprep.subr.bf16.mxu0 0
        %4633 = vmatpush1.bf16.msra.mxu0 %v1354
        %4634 = vmatprep.subr.bf16.mxu0 0
        %4635 = vmatpush1.bf16.msra.mxu0 %v1355
        %4636 = vmatprep.mubr.bf16.mxu0 %v2867
        %4637 = vmatmul.mubr.bf16.gmra.mrb[0].mxu0 %v2853
        %v4638 = vpop.f32.mrb[0].mxu0
        %v4639 = vadd.f32 %v4599, %v4638
        %v4640 = vpop.f32.mrb[0].mxu0
        %v4641 = vpop.f32.mrb[0].mxu0
        %v4642 = vpop.f32.mrb[0].mxu0
        %4643 = vdwg.mxu0
        %4644 = vmatprep.subr.bf16.mxu0 0
        %4645 = vmatpush1.bf16.msra.mxu0 %v1356
        %4646 = vmatprep.subr.bf16.mxu0 0
        %4647 = vmatpush1.bf16.msra.mxu0 %v1357
        %4648 = vmatprep.subr.bf16.mxu0 0
        %4649 = vmatpush1.bf16.msra.mxu0 %v1358
        %4650 = vmatprep.subr.bf16.mxu0 0
        %4651 = vmatpush1.bf16.msra.mxu0 %v1359
        %4652 = vmatprep.subr.bf16.mxu0 0
        %4653 = vmatpush1.bf16.msra.mxu0 %v1360
        %4654 = vmatprep.subr.bf16.mxu0 0
        %4655 = vmatpush1.bf16.msra.mxu0 %v1361
        %4656 = vmatprep.subr.bf16.mxu0 0
        %4657 = vmatpush1.bf16.msra.mxu0 %v1362
        %4658 = vmatprep.subr.bf16.mxu0 0
        %4659 = vmatpush1.bf16.msra.mxu0 %v1363
        %4660 = vmatprep.subr.bf16.mxu0 0
        %4661 = vmatpush1.bf16.msra.mxu0 %v1364
        %4662 = vmatprep.subr.bf16.mxu0 0
        %4663 = vmatpush1.bf16.msra.mxu0 %v1365
        %4664 = vmatprep.subr.bf16.mxu0 0
        %4665 = vmatpush1.bf16.msra.mxu0 %v1366
        %4666 = vmatprep.subr.bf16.mxu0 0
        %4667 = vmatpush1.bf16.msra.mxu0 %v1367
        %4668 = vmatprep.subr.bf16.mxu0 0
        %4669 = vmatpush1.bf16.msra.mxu0 %v1368
        %4670 = vmatprep.subr.bf16.mxu0 0
        %4671 = vmatpush1.bf16.msra.mxu0 %v1369
        %4672 = vmatprep.subr.bf16.mxu0 0
        %4673 = vmatpush1.bf16.msra.mxu0 %v1370
        %4674 = vmatprep.subr.bf16.mxu0 0
        %4675 = vmatpush1.bf16.msra.mxu0 %v1371
        %4676 = vmatprep.mubr.bf16.mxu0 %v2871
        %4677 = vmatmul.mubr.bf16.gmra.mrb[0].mxu0 %v2869
        %v4678 = vpop.f32.mrb[0].mxu0
        %v4679 = vadd.f32 %v4639, %v4678
        %v4680 = vpop.f32.mrb[0].mxu0
        %v4681 = vpop.f32.mrb[0].mxu0
        %v4682 = vpop.f32.mrb[0].mxu0
        %4683 = vdwg.mxu0
        %4684 = vmatprep.subr.bf16.mxu0 0
        %4685 = vmatpush1.bf16.msra.mxu0 %v1372
        %4686 = vmatprep.subr.bf16.mxu0 0
        %4687 = vmatpush1.bf16.msra.mxu0 %v1373
        %4688 = vmatprep.subr.bf16.mxu0 0
        %4689 = vmatpush1.bf16.msra.mxu0 %v1374
        %4690 = vmatprep.subr.bf16.mxu0 0
        %4691 = vmatpush1.bf16.msra.mxu0 %v1375
        %4692 = vmatprep.subr.bf16.mxu0 0
        %4693 = vmatpush1.bf16.msra.mxu0 %v1376
        %4694 = vmatprep.subr.bf16.mxu0 0
        %4695 = vmatpush1.bf16.msra.mxu0 %v1377
        %4696 = vmatprep.subr.bf16.mxu0 0
        %4697 = vmatpush1.bf16.msra.mxu0 %v1378
        %4698 = vmatprep.subr.bf16.mxu0 0
        %4699 = vmatpush1.bf16.msra.mxu0 %v1379
        %4700 = vmatprep.subr.bf16.mxu0 0
        %4701 = vmatpush1.bf16.msra.mxu0 %v1380
        %4702 = vmatprep.subr.bf16.mxu0 0
        %4703 = vmatpush1.bf16.msra.mxu0 %v1381
        %4704 = vmatprep.subr.bf16.mxu0 0
        %4705 = vmatpush1.bf16.msra.mxu0 %v1382
        %4706 = vmatprep.subr.bf16.mxu0 0
        %4707 = vmatpush1.bf16.msra.mxu0 %v1383
        %4708 = vmatprep.subr.bf16.mxu0 0
        %4709 = vmatpush1.bf16.msra.mxu0 %v1384
        %4710 = vmatprep.subr.bf16.mxu0 0
        %4711 = vmatpush1.bf16.msra.mxu0 %v1385
        %4712 = vmatprep.subr.bf16.mxu0 0
        %4713 = vmatpush1.bf16.msra.mxu0 %v1386
        %4714 = vmatprep.subr.bf16.mxu0 0
        %4715 = vmatpush1.bf16.msra.mxu0 %v1387
        %4716 = vmatprep.mubr.bf16.mxu0 %v2909
        %4717 = vmatmul.mubr.bf16.gmra.mrb[0].mxu0 %v2895
        %v4718 = vpop.f32.mrb[0].mxu0
        %v4719 = vadd.f32 %v4679, %v4718
        %v4720 = vpop.f32.mrb[0].mxu0
        %v4721 = vpop.f32.mrb[0].mxu0
        %v4722 = vpop.f32.mrb[0].mxu0
        %4723 = vdwg.mxu0
        %4724 = vmatprep.subr.bf16.mxu0 0
        %4725 = vmatpush1.bf16.msra.mxu0 %v1388
        %4726 = vmatprep.subr.bf16.mxu0 0
        %4727 = vmatpush1.bf16.msra.mxu0 %v1389
        %4728 = vmatprep.subr.bf16.mxu0 0
        %4729 = vmatpush1.bf16.msra.mxu0 %v1390
        %4730 = vmatprep.subr.bf16.mxu0 0
        %4731 = vmatpush1.bf16.msra.mxu0 %v1391
        %4732 = vmatprep.subr.bf16.mxu0 0
        %4733 = vmatpush1.bf16.msra.mxu0 %v1392
        %4734 = vmatprep.subr.bf16.mxu0 0
        %4735 = vmatpush1.bf16.msra.mxu0 %v1393
        %4736 = vmatprep.subr.bf16.mxu0 0
        %4737 = vmatpush1.bf16.msra.mxu0 %v1394
        %4738 = vmatprep.subr.bf16.mxu0 0
        %4739 = vmatpush1.bf16.msra.mxu0 %v1395
        %4740 = vmatprep.subr.bf16.mxu0 0
        %4741 = vmatpush1.bf16.msra.mxu0 %v1396
        %4742 = vmatprep.subr.bf16.mxu0 0
        %4743 = vmatpush1.bf16.msra.mxu0 %v1397
        %4744 = vmatprep.subr.bf16.mxu0 0
        %4745 = vmatpush1.bf16.msra.mxu0 %v1398
        %4746 = vmatprep.subr.bf16.mxu0 0
        %4747 = vmatpush1.bf16.msra.mxu0 %v1399
        %4748 = vmatprep.subr.bf16.mxu0 0
        %4749 = vmatpush1.bf16.msra.mxu0 %v1400
        %4750 = vmatprep.subr.bf16.mxu0 0
        %4751 = vmatpush1.bf16.msra.mxu0 %v1401
        %4752 = vmatprep.subr.bf16.mxu0 0
        %4753 = vmatpush1.bf16.msra.mxu0 %v1402
        %4754 = vmatprep.subr.bf16.mxu0 0
        %4755 = vmatpush1.bf16.msra.mxu0 %v1403
        %4756 = vmatprep.mubr.bf16.mxu0 %v2919
        %4757 = vmatmul.mubr.bf16.gmra.mrb[0].mxu0 %v2917
        %v4758 = vpop.f32.mrb[0].mxu0
        %v4759 = vadd.f32 %v4719, %v4758
        %v4760 = vpop.f32.mrb[0].mxu0
        %v4761 = vpop.f32.mrb[0].mxu0
        %v4762 = vpop.f32.mrb[0].mxu0
        %4763 = vdwg.mxu0
        %4764 = vmatprep.subr.bf16.mxu0 0
        %4765 = vmatpush1.bf16.msra.mxu0 %v1404
        %4766 = vmatprep.subr.bf16.mxu0 0
        %4767 = vmatpush1.bf16.msra.mxu0 %v1405
        %4768 = vmatprep.subr.bf16.mxu0 0
        %4769 = vmatpush1.bf16.msra.mxu0 %v1406
        %4770 = vmatprep.subr.bf16.mxu0 0
        %4771 = vmatpush1.bf16.msra.mxu0 %v1407
        %4772 = vmatprep.subr.bf16.mxu0 0
        %4773 = vmatpush1.bf16.msra.mxu0 %v1408
        %4774 = vmatprep.subr.bf16.mxu0 0
        %4775 = vmatpush1.bf16.msra.mxu0 %v1409
        %4776 = vmatprep.subr.bf16.mxu0 0
        %4777 = vmatpush1.bf16.msra.mxu0 %v1410
        %4778 = vmatprep.subr.bf16.mxu0 0
        %4779 = vmatpush1.bf16.msra.mxu0 %v1411
        %4780 = vmatprep.subr.bf16.mxu0 0
        %4781 = vmatpush1.bf16.msra.mxu0 %v1412
        %4782 = vmatprep.subr.bf16.mxu0 0
        %4783 = vmatpush1.bf16.msra.mxu0 %v1413
        %4784 = vmatprep.subr.bf16.mxu0 0
        %4785 = vmatpush1.bf16.msra.mxu0 %v1414
        %4786 = vmatprep.subr.bf16.mxu0 0
        %4787 = vmatpush1.bf16.msra.mxu0 %v1415
        %4788 = vmatprep.subr.bf16.mxu0 0
        %4789 = vmatpush1.bf16.msra.mxu0 %v1416
        %4790 = vmatprep.subr.bf16.mxu0 0
        %4791 = vmatpush1.bf16.msra.mxu0 %v1417
        %4792 = vmatprep.subr.bf16.mxu0 0
        %4793 = vmatpush1.bf16.msra.mxu0 %v1418
        %4794 = vmatprep.subr.bf16.mxu0 0
        %4795 = vmatpush1.bf16.msra.mxu0 %v1419
        %4796 = vmatprep.mubr.bf16.mxu0 %v2916
        %4797 = vmatmul.mubr.bf16.gmra.mrb[0].mxu0 %v2902
        %v4798 = vpop.f32.mrb[0].mxu0
        %v4799 = vadd.f32 %v4759, %v4798
        %v4800 = vpop.f32.mrb[0].mxu0
        %v4801 = vpop.f32.mrb[0].mxu0
        %v4802 = vpop.f32.mrb[0].mxu0
        %4803 = vdwg.mxu0
        %4804 = vmatprep.subr.bf16.mxu0 0
        %4805 = vmatpush1.bf16.msra.mxu0 %v1420
        %4806 = vmatprep.subr.bf16.mxu0 0
        %4807 = vmatpush1.bf16.msra.mxu0 %v1421
        %4808 = vmatprep.subr.bf16.mxu0 0
        %4809 = vmatpush1.bf16.msra.mxu0 %v1422
        %4810 = vmatprep.subr.bf16.mxu0 0
        %4811 = vmatpush1.bf16.msra.mxu0 %v1423
        %4812 = vmatprep.subr.bf16.mxu0 0
        %4813 = vmatpush1.bf16.msra.mxu0 %v1424
        %4814 = vmatprep.subr.bf16.mxu0 0
        %4815 = vmatpush1.bf16.msra.mxu0 %v1425
        %4816 = vmatprep.subr.bf16.mxu0 0
        %4817 = vmatpush1.bf16.msra.mxu0 %v1426
        %4818 = vmatprep.subr.bf16.mxu0 0
        %4819 = vmatpush1.bf16.msra.mxu0 %v1427
        %4820 = vmatprep.subr.bf16.mxu0 0
        %4821 = vmatpush1.bf16.msra.mxu0 %v1428
        %4822 = vmatprep.subr.bf16.mxu0 0
        %4823 = vmatpush1.bf16.msra.mxu0 %v1429
        %4824 = vmatprep.subr.bf16.mxu0 0
        %4825 = vmatpush1.bf16.msra.mxu0 %v1430
        %4826 = vmatprep.subr.bf16.mxu0 0
        %4827 = vmatpush1.bf16.msra.mxu0 %v1431
        %4828 = vmatprep.subr.bf16.mxu0 0
        %4829 = vmatpush1.bf16.msra.mxu0 %v1432
        %4830 = vmatprep.subr.bf16.mxu0 0
        %4831 = vmatpush1.bf16.msra.mxu0 %v1433
        %4832 = vmatprep.subr.bf16.mxu0 0
        %4833 = vmatpush1.bf16.msra.mxu0 %v1434
        %4834 = vmatprep.subr.bf16.mxu0 0
        %4835 = vmatpush1.bf16.msra.mxu0 %v1435
        %4836 = vmatprep.mubr.bf16.mxu0 %v2920
        %4837 = vmatmul.mubr.bf16.gmra.mrb[0].mxu0 %v2918
        %v4838 = vpop.f32.mrb[0].mxu0
        %v4839 = vadd.f32 %v4799, %v4838
        %v4840 = vpop.f32.mrb[0].mxu0
        %v4841 = vpop.f32.mrb[0].mxu0
        %v4842 = vpop.f32.mrb[0].mxu0
        %4843 = vdwg.mxu0
        %4844 = vmatprep.subr.bf16.mxu0 0
        %4845 = vmatpush1.bf16.msra.mxu0 %v1436
        %4846 = vmatprep.subr.bf16.mxu0 0
        %4847 = vmatpush1.bf16.msra.mxu0 %v1437
        %4848 = vmatprep.subr.bf16.mxu0 0
        %4849 = vmatpush1.bf16.msra.mxu0 %v1438
        %4850 = vmatprep.subr.bf16.mxu0 0
        %4851 = vmatpush1.bf16.msra.mxu0 %v1439
        %4852 = vmatprep.subr.bf16.mxu0 0
        %4853 = vmatpush1.bf16.msra.mxu0 %v1440
        %4854 = vmatprep.subr.bf16.mxu0 0
        %4855 = vmatpush1.bf16.msra.mxu0 %v1441
        %4856 = vmatprep.subr.bf16.mxu0 0
        %4857 = vmatpush1.bf16.msra.mxu0 %v1442
        %4858 = vmatprep.subr.bf16.mxu0 0
        %4859 = vmatpush1.bf16.msra.mxu0 %v1443
        %4860 = vmatprep.subr.bf16.mxu0 0
        %4861 = vmatpush1.bf16.msra.mxu0 %v1444
        %4862 = vmatprep.subr.bf16.mxu0 0
        %4863 = vmatpush1.bf16.msra.mxu0 %v1445
        %4864 = vmatprep.subr.bf16.mxu0 0
        %4865 = vmatpush1.bf16.msra.mxu0 %v1446
        %4866 = vmatprep.subr.bf16.mxu0 0
        %4867 = vmatpush1.bf16.msra.mxu0 %v1447
        %4868 = vmatprep.subr.bf16.mxu0 0
        %4869 = vmatpush1.bf16.msra.mxu0 %v1448
        %4870 = vmatprep.subr.bf16.mxu0 0
        %4871 = vmatpush1.bf16.msra.mxu0 %v1449
        %4872 = vmatprep.subr.bf16.mxu0 0
        %4873 = vmatpush1.bf16.msra.mxu0 %v1450
        %4874 = vmatprep.subr.bf16.mxu0 0
        %4875 = vmatpush1.bf16.msra.mxu0 %v1451
        %4876 = vmatprep.mubr.bf16.mxu0 %v2958
        %4877 = vmatmul.mubr.bf16.gmra.mrb[0].mxu0 %v2944
        %v4878 = vpop.f32.mrb[0].mxu0
        %v4879 = vadd.f32 %v4839, %v4878
        %v4880 = vpop.f32.mrb[0].mxu0
        %v4881 = vpop.f32.mrb[0].mxu0
        %v4882 = vpop.f32.mrb[0].mxu0
        %4883 = vdwg.mxu0
        %4884 = vmatprep.subr.bf16.mxu0 0
        %4885 = vmatpush1.bf16.msra.mxu0 %v1452
        %4886 = vmatprep.subr.bf16.mxu0 0
        %4887 = vmatpush1.bf16.msra.mxu0 %v1453
        %4888 = vmatprep.subr.bf16.mxu0 0
        %4889 = vmatpush1.bf16.msra.mxu0 %v1454
        %4890 = vmatprep.subr.bf16.mxu0 0
        %4891 = vmatpush1.bf16.msra.mxu0 %v1455
        %4892 = vmatprep.subr.bf16.mxu0 0
        %4893 = vmatpush1.bf16.msra.mxu0 %v1456
        %4894 = vmatprep.subr.bf16.mxu0 0
        %4895 = vmatpush1.bf16.msra.mxu0 %v1457
        %4896 = vmatprep.subr.bf16.mxu0 0
        %4897 = vmatpush1.bf16.msra.mxu0 %v1458
        %4898 = vmatprep.subr.bf16.mxu0 0
        %4899 = vmatpush1.bf16.msra.mxu0 %v1459
        %4900 = vmatprep.subr.bf16.mxu0 0
        %4901 = vmatpush1.bf16.msra.mxu0 %v1460
        %4902 = vmatprep.subr.bf16.mxu0 0
        %4903 = vmatpush1.bf16.msra.mxu0 %v1461
        %4904 = vmatprep.subr.bf16.mxu0 0
        %4905 = vmatpush1.bf16.msra.mxu0 %v1462
        %4906 = vmatprep.subr.bf16.mxu0 0
        %4907 = vmatpush1.bf16.msra.mxu0 %v1463
        %4908 = vmatprep.subr.bf16.mxu0 0
        %4909 = vmatpush1.bf16.msra.mxu0 %v1464
        %4910 = vmatprep.subr.bf16.mxu0 0
        %4911 = vmatpush1.bf16.msra.mxu0 %v1465
        %4912 = vmatprep.subr.bf16.mxu0 0
        %4913 = vmatpush1.bf16.msra.mxu0 %v1466
        %4914 = vmatprep.subr.bf16.mxu0 0
        %4915 = vmatpush1.bf16.msra.mxu0 %v1467
        %4916 = vmatprep.mubr.bf16.mxu0 %v2968
        %4917 = vmatmul.mubr.bf16.gmra.mrb[0].mxu0 %v2966
        %v4918 = vpop.f32.mrb[0].mxu0
        %v4919 = vadd.f32 %v4879, %v4918
        %v4920 = vpop.f32.mrb[0].mxu0
        %v4921 = vpop.f32.mrb[0].mxu0
        %v4922 = vpop.f32.mrb[0].mxu0
        %4923 = vdwg.mxu0
        %4924 = vmatprep.subr.bf16.mxu0 0
        %4925 = vmatpush1.bf16.msra.mxu0 %v1468
        %4926 = vmatprep.subr.bf16.mxu0 0
        %4927 = vmatpush1.bf16.msra.mxu0 %v1469
        %4928 = vmatprep.subr.bf16.mxu0 0
        %4929 = vmatpush1.bf16.msra.mxu0 %v1470
        %4930 = vmatprep.subr.bf16.mxu0 0
        %4931 = vmatpush1.bf16.msra.mxu0 %v1471
        %4932 = vmatprep.subr.bf16.mxu0 0
        %4933 = vmatpush1.bf16.msra.mxu0 %v1472
        %4934 = vmatprep.subr.bf16.mxu0 0
        %4935 = vmatpush1.bf16.msra.mxu0 %v1473
        %4936 = vmatprep.subr.bf16.mxu0 0
        %4937 = vmatpush1.bf16.msra.mxu0 %v1474
        %4938 = vmatprep.subr.bf16.mxu0 0
        %4939 = vmatpush1.bf16.msra.mxu0 %v1475
        %4940 = vmatprep.subr.bf16.mxu0 0
        %4941 = vmatpush1.bf16.msra.mxu0 %v1476
        %4942 = vmatprep.subr.bf16.mxu0 0
        %4943 = vmatpush1.bf16.msra.mxu0 %v1477
        %4944 = vmatprep.subr.bf16.mxu0 0
        %4945 = vmatpush1.bf16.msra.mxu0 %v1478
        %4946 = vmatprep.subr.bf16.mxu0 0
        %4947 = vmatpush1.bf16.msra.mxu0 %v1479
        %4948 = vmatprep.subr.bf16.mxu0 0
        %4949 = vmatpush1.bf16.msra.mxu0 %v1480
        %4950 = vmatprep.subr.bf16.mxu0 0
        %4951 = vmatpush1.bf16.msra.mxu0 %v1481
        %4952 = vmatprep.subr.bf16.mxu0 0
        %4953 = vmatpush1.bf16.msra.mxu0 %v1482
        %4954 = vmatprep.subr.bf16.mxu0 0
        %4955 = vmatpush1.bf16.msra.mxu0 %v1483
        %4956 = vmatprep.mubr.bf16.mxu0 %v2965
        %4957 = vmatmul.mubr.bf16.gmra.mrb[0].mxu0 %v2951
        %v4958 = vpop.f32.mrb[0].mxu0
        %v4959 = vadd.f32 %v4919, %v4958
        %v4960 = vpop.f32.mrb[0].mxu0
        %v4961 = vpop.f32.mrb[0].mxu0
        %v4962 = vpop.f32.mrb[0].mxu0
        %4963 = vdwg.mxu0
        %4964 = vmatprep.subr.bf16.mxu0 0
        %4965 = vmatpush1.bf16.msra.mxu0 %v1484
        %4966 = vmatprep.subr.bf16.mxu0 0
        %4967 = vmatpush1.bf16.msra.mxu0 %v1485
        %4968 = vmatprep.subr.bf16.mxu0 0
        %4969 = vmatpush1.bf16.msra.mxu0 %v1486
        %4970 = vmatprep.subr.bf16.mxu0 0
        %4971 = vmatpush1.bf16.msra.mxu0 %v1487
        %4972 = vmatprep.subr.bf16.mxu0 0
        %4973 = vmatpush1.bf16.msra.mxu0 %v1488
        %4974 = vmatprep.subr.bf16.mxu0 0
        %4975 = vmatpush1.bf16.msra.mxu0 %v1489
        %4976 = vmatprep.subr.bf16.mxu0 0
        %4977 = vmatpush1.bf16.msra.mxu0 %v1490
        %4978 = vmatprep.subr.bf16.mxu0 0
        %4979 = vmatpush1.bf16.msra.mxu0 %v1491
        %4980 = vmatprep.subr.bf16.mxu0 0
        %4981 = vmatpush1.bf16.msra.mxu0 %v1492
        %4982 = vmatprep.subr.bf16.mxu0 0
        %4983 = vmatpush1.bf16.msra.mxu0 %v1493
        %4984 = vmatprep.subr.bf16.mxu0 0
        %4985 = vmatpush1.bf16.msra.mxu0 %v1494
        %4986 = vmatprep.subr.bf16.mxu0 0
        %4987 = vmatpush1.bf16.msra.mxu0 %v1495
        %4988 = vmatprep.subr.bf16.mxu0 0
        %4989 = vmatpush1.bf16.msra.mxu0 %v1496
        %4990 = vmatprep.subr.bf16.mxu0 0
        %4991 = vmatpush1.bf16.msra.mxu0 %v1497
        %4992 = vmatprep.subr.bf16.mxu0 0
        %4993 = vmatpush1.bf16.msra.mxu0 %v1498
        %4994 = vmatprep.subr.bf16.mxu0 0
        %4995 = vmatpush1.bf16.msra.mxu0 %v1499
        %4996 = vmatprep.mubr.bf16.mxu0 %v2969
        %4997 = vmatmul.mubr.bf16.gmra.mrb[0].mxu0 %v2967
        %v4998 = vpop.f32.mrb[0].mxu0
        %v4999 = vadd.f32 %v4959, %v4998
        %v5000 = vpop.f32.mrb[0].mxu0
        %v5001 = vpop.f32.mrb[0].mxu0
        %v5002 = vpop.f32.mrb[0].mxu0
        %5003 = vdwg.mxu0
        %5004 = vmatprep.subr.bf16.mxu0 0
        %5005 = vmatpush1.bf16.msra.mxu0 %v1500
        %5006 = vmatprep.subr.bf16.mxu0 0
        %5007 = vmatpush1.bf16.msra.mxu0 %v1501
        %5008 = vmatprep.subr.bf16.mxu0 0
        %5009 = vmatpush1.bf16.msra.mxu0 %v1502
        %5010 = vmatprep.subr.bf16.mxu0 0
        %5011 = vmatpush1.bf16.msra.mxu0 %v1503
        %5012 = vmatprep.subr.bf16.mxu0 0
        %5013 = vmatpush1.bf16.msra.mxu0 %v1504
        %5014 = vmatprep.subr.bf16.mxu0 0
        %5015 = vmatpush1.bf16.msra.mxu0 %v1505
        %5016 = vmatprep.subr.bf16.mxu0 0
        %5017 = vmatpush1.bf16.msra.mxu0 %v1506
        %5018 = vmatprep.subr.bf16.mxu0 0
        %5019 = vmatpush1.bf16.msra.mxu0 %v1507
        %5020 = vmatprep.subr.bf16.mxu0 0
        %5021 = vmatpush1.bf16.msra.mxu0 %v1508
        %5022 = vmatprep.subr.bf16.mxu0 0
        %5023 = vmatpush1.bf16.msra.mxu0 %v1509
        %5024 = vmatprep.subr.bf16.mxu0 0
        %5025 = vmatpush1.bf16.msra.mxu0 %v1510
        %5026 = vmatprep.subr.bf16.mxu0 0
        %5027 = vmatpush1.bf16.msra.mxu0 %v1511
        %5028 = vmatprep.subr.bf16.mxu0 0
        %5029 = vmatpush1.bf16.msra.mxu0 %v1512
        %5030 = vmatprep.subr.bf16.mxu0 0
        %5031 = vmatpush1.bf16.msra.mxu0 %v1513
        %5032 = vmatprep.subr.bf16.mxu0 0
        %5033 = vmatpush1.bf16.msra.mxu0 %v1514
        %5034 = vmatprep.subr.bf16.mxu0 0
        %5035 = vmatpush1.bf16.msra.mxu0 %v1515
        %5036 = vmatprep.mubr.bf16.mxu0 %v3007
        %5037 = vmatmul.mubr.bf16.gmra.mrb[0].mxu0 %v2993
        %v5038 = vpop.f32.mrb[0].mxu0
        %v5039 = vadd.f32 %v4999, %v5038
        %v5040 = vpop.f32.mrb[0].mxu0
        %v5041 = vpop.f32.mrb[0].mxu0
        %v5042 = vpop.f32.mrb[0].mxu0
        %5043 = vdwg.mxu0
        %5044 = vmatprep.subr.bf16.mxu0 0
        %5045 = vmatpush1.bf16.msra.mxu0 %v1516
        %5046 = vmatprep.subr.bf16.mxu0 0
        %5047 = vmatpush1.bf16.msra.mxu0 %v1517
        %5048 = vmatprep.subr.bf16.mxu0 0
        %5049 = vmatpush1.bf16.msra.mxu0 %v1518
        %5050 = vmatprep.subr.bf16.mxu0 0
        %5051 = vmatpush1.bf16.msra.mxu0 %v1519
        %5052 = vmatprep.subr.bf16.mxu0 0
        %5053 = vmatpush1.bf16.msra.mxu0 %v1520
        %5054 = vmatprep.subr.bf16.mxu0 0
        %5055 = vmatpush1.bf16.msra.mxu0 %v1521
        %5056 = vmatprep.subr.bf16.mxu0 0
        %5057 = vmatpush1.bf16.msra.mxu0 %v1522
        %5058 = vmatprep.subr.bf16.mxu0 0
        %5059 = vmatpush1.bf16.msra.mxu0 %v1523
        %5060 = vmatprep.subr.bf16.mxu0 0
        %5061 = vmatpush1.bf16.msra.mxu0 %v1524
        %5062 = vmatprep.subr.bf16.mxu0 0
        %5063 = vmatpush1.bf16.msra.mxu0 %v1525
        %5064 = vmatprep.subr.bf16.mxu0 0
        %5065 = vmatpush1.bf16.msra.mxu0 %v1526
        %5066 = vmatprep.subr.bf16.mxu0 0
        %5067 = vmatpush1.bf16.msra.mxu0 %v1527
        %5068 = vmatprep.subr.bf16.mxu0 0
        %5069 = vmatpush1.bf16.msra.mxu0 %v1528
        %5070 = vmatprep.subr.bf16.mxu0 0
        %5071 = vmatpush1.bf16.msra.mxu0 %v1529
        %5072 = vmatprep.subr.bf16.mxu0 0
        %5073 = vmatpush1.bf16.msra.mxu0 %v1530
        %5074 = vmatprep.subr.bf16.mxu0 0
        %5075 = vmatpush1.bf16.msra.mxu0 %v1531
        %5076 = vmatprep.mubr.bf16.mxu0 %v3017
        %5077 = vmatmul.mubr.bf16.gmra.mrb[0].mxu0 %v3015
        %v5078 = vpop.f32.mrb[0].mxu0
        %v5079 = vadd.f32 %v5039, %v5078
        %v5080 = vpop.f32.mrb[0].mxu0
        %v5081 = vpop.f32.mrb[0].mxu0
        %v5082 = vpop.f32.mrb[0].mxu0
        %5083 = vdwg.mxu0
        %5084 = vmatprep.subr.bf16.mxu0 0
        %5085 = vmatpush1.bf16.msra.mxu0 %v1532
        %5086 = vmatprep.subr.bf16.mxu0 0
        %5087 = vmatpush1.bf16.msra.mxu0 %v1533
        %5088 = vmatprep.subr.bf16.mxu0 0
        %5089 = vmatpush1.bf16.msra.mxu0 %v1534
        %5090 = vmatprep.subr.bf16.mxu0 0
        %5091 = vmatpush1.bf16.msra.mxu0 %v1535
        %5092 = vmatprep.subr.bf16.mxu0 0
        %5093 = vmatpush1.bf16.msra.mxu0 %v1536
        %5094 = vmatprep.subr.bf16.mxu0 0
        %5095 = vmatpush1.bf16.msra.mxu0 %v1537
        %5096 = vmatprep.subr.bf16.mxu0 0
        %5097 = vmatpush1.bf16.msra.mxu0 %v1538
        %5098 = vmatprep.subr.bf16.mxu0 0
        %5099 = vmatpush1.bf16.msra.mxu0 %v1539
        %5100 = vmatprep.subr.bf16.mxu0 0
        %5101 = vmatpush1.bf16.msra.mxu0 %v1540
        %5102 = vmatprep.subr.bf16.mxu0 0
        %5103 = vmatpush1.bf16.msra.mxu0 %v1541
        %5104 = vmatprep.subr.bf16.mxu0 0
        %5105 = vmatpush1.bf16.msra.mxu0 %v1542
        %5106 = vmatprep.subr.bf16.mxu0 0
        %5107 = vmatpush1.bf16.msra.mxu0 %v1543
        %5108 = vmatprep.subr.bf16.mxu0 0
        %5109 = vmatpush1.bf16.msra.mxu0 %v1544
        %5110 = vmatprep.subr.bf16.mxu0 0
        %5111 = vmatpush1.bf16.msra.mxu0 %v1545
        %5112 = vmatprep.subr.bf16.mxu0 0
        %5113 = vmatpush1.bf16.msra.mxu0 %v1546
        %5114 = vmatprep.subr.bf16.mxu0 0
        %5115 = vmatpush1.bf16.msra.mxu0 %v1547
        %5116 = vmatprep.mubr.bf16.mxu0 %v3014
        %5117 = vmatmul.mubr.bf16.gmra.mrb[0].mxu0 %v3000
        %v5118 = vpop.f32.mrb[0].mxu0
        %v5119 = vadd.f32 %v5079, %v5118
        %v5120 = vpop.f32.mrb[0].mxu0
        %v5121 = vpop.f32.mrb[0].mxu0
        %v5122 = vpop.f32.mrb[0].mxu0
        %5123 = vdwg.mxu0
        %5124 = vmatprep.subr.bf16.mxu0 0
        %5125 = vmatpush1.bf16.msra.mxu0 %v1548
        %5126 = vmatprep.subr.bf16.mxu0 0
        %5127 = vmatpush1.bf16.msra.mxu0 %v1549
        %5128 = vmatprep.subr.bf16.mxu0 0
        %5129 = vmatpush1.bf16.msra.mxu0 %v1550
        %5130 = vmatprep.subr.bf16.mxu0 0
        %5131 = vmatpush1.bf16.msra.mxu0 %v1551
        %5132 = vmatprep.subr.bf16.mxu0 0
        %5133 = vmatpush1.bf16.msra.mxu0 %v1552
        %5134 = vmatprep.subr.bf16.mxu0 0
        %5135 = vmatpush1.bf16.msra.mxu0 %v1553
        %5136 = vmatprep.subr.bf16.mxu0 0
        %5137 = vmatpush1.bf16.msra.mxu0 %v1554
        %5138 = vmatprep.subr.bf16.mxu0 0
        %5139 = vmatpush1.bf16.msra.mxu0 %v1555
        %5140 = vmatprep.subr.bf16.mxu0 0
        %5141 = vmatpush1.bf16.msra.mxu0 %v1556
        %5142 = vmatprep.subr.bf16.mxu0 0
        %5143 = vmatpush1.bf16.msra.mxu0 %v1557
        %5144 = vmatprep.subr.bf16.mxu0 0
        %5145 = vmatpush1.bf16.msra.mxu0 %v1558
        %5146 = vmatprep.subr.bf16.mxu0 0
        %5147 = vmatpush1.bf16.msra.mxu0 %v1559
        %5148 = vmatprep.subr.bf16.mxu0 0
        %5149 = vmatpush1.bf16.msra.mxu0 %v1560
        %5150 = vmatprep.subr.bf16.mxu0 0
        %5151 = vmatpush1.bf16.msra.mxu0 %v1561
        %5152 = vmatprep.subr.bf16.mxu0 0
        %5153 = vmatpush1.bf16.msra.mxu0 %v1562
        %5154 = vmatprep.subr.bf16.mxu0 0
        %5155 = vmatpush1.bf16.msra.mxu0 %v1563
        %5156 = vmatprep.mubr.bf16.mxu0 %v3018
        %5157 = vmatmul.mubr.bf16.gmra.mrb[0].mxu0 %v3016
        %v5158 = vpop.f32.mrb[0].mxu0
        %v5159 = vadd.f32 %v5119, %v5158
        %v5160 = vpop.f32.mrb[0].mxu0
        %v5161 = vpop.f32.mrb[0].mxu0
        %v5162 = vpop.f32.mrb[0].mxu0
        %5163 = vdwg.mxu0
        %5164 = vmatprep.subr.bf16.mxu0 0
        %5165 = vmatpush1.bf16.msra.mxu0 %v1564
        %5166 = vmatprep.subr.bf16.mxu0 0
        %5167 = vmatpush1.bf16.msra.mxu0 %v1565
        %5168 = vmatprep.subr.bf16.mxu0 0
        %5169 = vmatpush1.bf16.msra.mxu0 %v1566
        %5170 = vmatprep.subr.bf16.mxu0 0
        %5171 = vmatpush1.bf16.msra.mxu0 %v1567
        %5172 = vmatprep.subr.bf16.mxu0 0
        %5173 = vmatpush1.bf16.msra.mxu0 %v1568
        %5174 = vmatprep.subr.bf16.mxu0 0
        %5175 = vmatpush1.bf16.msra.mxu0 %v1569
        %5176 = vmatprep.subr.bf16.mxu0 0
        %5177 = vmatpush1.bf16.msra.mxu0 %v1570
        %5178 = vmatprep.subr.bf16.mxu0 0
        %5179 = vmatpush1.bf16.msra.mxu0 %v1571
        %5180 = vmatprep.subr.bf16.mxu0 0
        %5181 = vmatpush1.bf16.msra.mxu0 %v1572
        %5182 = vmatprep.subr.bf16.mxu0 0
        %5183 = vmatpush1.bf16.msra.mxu0 %v1573
        %5184 = vmatprep.subr.bf16.mxu0 0
        %5185 = vmatpush1.bf16.msra.mxu0 %v1574
        %5186 = vmatprep.subr.bf16.mxu0 0
        %5187 = vmatpush1.bf16.msra.mxu0 %v1575
        %5188 = vmatprep.subr.bf16.mxu0 0
        %5189 = vmatpush1.bf16.msra.mxu0 %v1576
        %5190 = vmatprep.subr.bf16.mxu0 0
        %5191 = vmatpush1.bf16.msra.mxu0 %v1577
        %5192 = vmatprep.subr.bf16.mxu0 0
        %5193 = vmatpush1.bf16.msra.mxu0 %v1578
        %5194 = vmatprep.subr.bf16.mxu0 0
        %5195 = vmatpush1.bf16.msra.mxu0 %v1579
        %5196 = vmatprep.mubr.bf16.mxu0 %v3056
        %5197 = vmatmul.mubr.bf16.gmra.mrb[0].mxu0 %v3042
        %v5198 = vpop.f32.mrb[0].mxu0
        %v5199 = vadd.f32 %v5159, %v5198
        %v5200 = vpop.f32.mrb[0].mxu0
        %v5201 = vpop.f32.mrb[0].mxu0
        %v5202 = vpop.f32.mrb[0].mxu0
        %5203 = vdwg.mxu0
        %5204 = vmatprep.subr.bf16.mxu0 0
        %5205 = vmatpush1.bf16.msra.mxu0 %v1580
        %5206 = vmatprep.subr.bf16.mxu0 0
        %5207 = vmatpush1.bf16.msra.mxu0 %v1581
        %5208 = vmatprep.subr.bf16.mxu0 0
        %5209 = vmatpush1.bf16.msra.mxu0 %v1582
        %5210 = vmatprep.subr.bf16.mxu0 0
        %5211 = vmatpush1.bf16.msra.mxu0 %v1583
        %5212 = vmatprep.subr.bf16.mxu0 0
        %5213 = vmatpush1.bf16.msra.mxu0 %v1584
        %5214 = vmatprep.subr.bf16.mxu0 0
        %5215 = vmatpush1.bf16.msra.mxu0 %v1585
        %5216 = vmatprep.subr.bf16.mxu0 0
        %5217 = vmatpush1.bf16.msra.mxu0 %v1586
        %5218 = vmatprep.subr.bf16.mxu0 0
        %5219 = vmatpush1.bf16.msra.mxu0 %v1587
        %5220 = vmatprep.subr.bf16.mxu0 0
        %5221 = vmatpush1.bf16.msra.mxu0 %v1588
        %5222 = vmatprep.subr.bf16.mxu0 0
        %5223 = vmatpush1.bf16.msra.mxu0 %v1589
        %5224 = vmatprep.subr.bf16.mxu0 0
        %5225 = vmatpush1.bf16.msra.mxu0 %v1590
        %5226 = vmatprep.subr.bf16.mxu0 0
        %5227 = vmatpush1.bf16.msra.mxu0 %v1591
        %5228 = vmatprep.subr.bf16.mxu0 0
        %5229 = vmatpush1.bf16.msra.mxu0 %v1592
        %5230 = vmatprep.subr.bf16.mxu0 0
        %5231 = vmatpush1.bf16.msra.mxu0 %v1593
        %5232 = vmatprep.subr.bf16.mxu0 0
        %5233 = vmatpush1.bf16.msra.mxu0 %v1594
        %5234 = vmatprep.subr.bf16.mxu0 0
        %5235 = vmatpush1.bf16.msra.mxu0 %v1595
        %5236 = vmatprep.mubr.bf16.mxu0 %v3066
        %5237 = vmatmul.mubr.bf16.gmra.mrb[0].mxu0 %v3064
        %v5238 = vpop.f32.mrb[0].mxu0
        %v5239 = vadd.f32 %v5199, %v5238
        %v5240 = vpop.f32.mrb[0].mxu0
        %v5241 = vpop.f32.mrb[0].mxu0
        %v5242 = vpop.f32.mrb[0].mxu0
        %5243 = vdwg.mxu0
        %5244 = vmatprep.subr.bf16.mxu0 0
        %5245 = vmatpush1.bf16.msra.mxu0 %v1596
        %5246 = vmatprep.subr.bf16.mxu0 0
        %5247 = vmatpush1.bf16.msra.mxu0 %v1597
        %5248 = vmatprep.subr.bf16.mxu0 0
        %5249 = vmatpush1.bf16.msra.mxu0 %v1598
        %5250 = vmatprep.subr.bf16.mxu0 0
        %5251 = vmatpush1.bf16.msra.mxu0 %v1599
        %5252 = vmatprep.subr.bf16.mxu0 0
        %5253 = vmatpush1.bf16.msra.mxu0 %v1600
        %5254 = vmatprep.subr.bf16.mxu0 0
        %5255 = vmatpush1.bf16.msra.mxu0 %v1601
        %5256 = vmatprep.subr.bf16.mxu0 0
        %5257 = vmatpush1.bf16.msra.mxu0 %v1602
        %5258 = vmatprep.subr.bf16.mxu0 0
        %5259 = vmatpush1.bf16.msra.mxu0 %v1603
        %5260 = vmatprep.subr.bf16.mxu0 0
        %5261 = vmatpush1.bf16.msra.mxu0 %v1604
        %5262 = vmatprep.subr.bf16.mxu0 0
        %5263 = vmatpush1.bf16.msra.mxu0 %v1605
        %5264 = vmatprep.subr.bf16.mxu0 0
        %5265 = vmatpush1.bf16.msra.mxu0 %v1606
        %5266 = vmatprep.subr.bf16.mxu0 0
        %5267 = vmatpush1.bf16.msra.mxu0 %v1607
        %5268 = vmatprep.subr.bf16.mxu0 0
        %5269 = vmatpush1.bf16.msra.mxu0 %v1608
        %5270 = vmatprep.subr.bf16.mxu0 0
        %5271 = vmatpush1.bf16.msra.mxu0 %v1609
        %5272 = vmatprep.subr.bf16.mxu0 0
        %5273 = vmatpush1.bf16.msra.mxu0 %v1610
        %5274 = vmatprep.subr.bf16.mxu0 0
        %5275 = vmatpush1.bf16.msra.mxu0 %v1611
        %5276 = vmatprep.mubr.bf16.mxu0 %v3063
        %5277 = vmatmul.mubr.bf16.gmra.mrb[0].mxu0 %v3049
        %v5278 = vpop.f32.mrb[0].mxu0
        %v5279 = vadd.f32 %v5239, %v5278
        %v5280 = vpop.f32.mrb[0].mxu0
        %v5281 = vpop.f32.mrb[0].mxu0
        %v5282 = vpop.f32.mrb[0].mxu0
        %5283 = vdwg.mxu0
        %5284 = vmatprep.subr.bf16.mxu0 0
        %5285 = vmatpush1.bf16.msra.mxu0 %v1612
        %5286 = vmatprep.subr.bf16.mxu0 0
        %5287 = vmatpush1.bf16.msra.mxu0 %v1613
        %5288 = vmatprep.subr.bf16.mxu0 0
        %5289 = vmatpush1.bf16.msra.mxu0 %v1614
        %5290 = vmatprep.subr.bf16.mxu0 0
        %5291 = vmatpush1.bf16.msra.mxu0 %v1615
        %5292 = vmatprep.subr.bf16.mxu0 0
        %5293 = vmatpush1.bf16.msra.mxu0 %v1616
        %5294 = vmatprep.subr.bf16.mxu0 0
        %5295 = vmatpush1.bf16.msra.mxu0 %v1617
        %5296 = vmatprep.subr.bf16.mxu0 0
        %5297 = vmatpush1.bf16.msra.mxu0 %v1618
        %5298 = vmatprep.subr.bf16.mxu0 0
        %5299 = vmatpush1.bf16.msra.mxu0 %v1619
        %5300 = vmatprep.subr.bf16.mxu0 0
        %5301 = vmatpush1.bf16.msra.mxu0 %v1620
        %5302 = vmatprep.subr.bf16.mxu0 0
        %5303 = vmatpush1.bf16.msra.mxu0 %v1621
        %5304 = vmatprep.subr.bf16.mxu0 0
        %5305 = vmatpush1.bf16.msra.mxu0 %v1622
        %5306 = vmatprep.subr.bf16.mxu0 0
        %5307 = vmatpush1.bf16.msra.mxu0 %v1623
        %5308 = vmatprep.subr.bf16.mxu0 0
        %5309 = vmatpush1.bf16.msra.mxu0 %v1624
        %5310 = vmatprep.subr.bf16.mxu0 0
        %5311 = vmatpush1.bf16.msra.mxu0 %v1625
        %5312 = vmatprep.subr.bf16.mxu0 0
        %5313 = vmatpush1.bf16.msra.mxu0 %v1626
        %5314 = vmatprep.subr.bf16.mxu0 0
        %5315 = vmatpush1.bf16.msra.mxu0 %v1627
        %5316 = vmatprep.mubr.bf16.mxu0 %v3067
        %5317 = vmatmul.mubr.bf16.gmra.mrb[0].mxu0 %v3065
        %v5318 = vpop.f32.mrb[0].mxu0
        %v5319 = vadd.f32 %v5279, %v5318
        %v5320 = vpop.f32.mrb[0].mxu0
        %v5321 = vpop.f32.mrb[0].mxu0
        %v5322 = vpop.f32.mrb[0].mxu0
        %5323 = vdwg.mxu0
        %5324 = vmatprep.subr.bf16.mxu0 0
        %5325 = vmatpush1.bf16.msra.mxu0 %v1628
        %5326 = vmatprep.subr.bf16.mxu0 0
        %5327 = vmatpush1.bf16.msra.mxu0 %v1629
        %5328 = vmatprep.subr.bf16.mxu0 0
        %5329 = vmatpush1.bf16.msra.mxu0 %v1630
        %5330 = vmatprep.subr.bf16.mxu0 0
        %5331 = vmatpush1.bf16.msra.mxu0 %v1631
        %5332 = vmatprep.subr.bf16.mxu0 0
        %5333 = vmatpush1.bf16.msra.mxu0 %v1632
        %5334 = vmatprep.subr.bf16.mxu0 0
        %5335 = vmatpush1.bf16.msra.mxu0 %v1633
        %5336 = vmatprep.subr.bf16.mxu0 0
        %5337 = vmatpush1.bf16.msra.mxu0 %v1634
        %5338 = vmatprep.subr.bf16.mxu0 0
        %5339 = vmatpush1.bf16.msra.mxu0 %v1635
        %5340 = vmatprep.subr.bf16.mxu0 0
        %5341 = vmatpush1.bf16.msra.mxu0 %v1636
        %5342 = vmatprep.subr.bf16.mxu0 0
        %5343 = vmatpush1.bf16.msra.mxu0 %v1637
        %5344 = vmatprep.subr.bf16.mxu0 0
        %5345 = vmatpush1.bf16.msra.mxu0 %v1638
        %5346 = vmatprep.subr.bf16.mxu0 0
        %5347 = vmatpush1.bf16.msra.mxu0 %v1639
        %5348 = vmatprep.subr.bf16.mxu0 0
        %5349 = vmatpush1.bf16.msra.mxu0 %v1640
        %5350 = vmatprep.subr.bf16.mxu0 0
        %5351 = vmatpush1.bf16.msra.mxu0 %v1641
        %5352 = vmatprep.subr.bf16.mxu0 0
        %5353 = vmatpush1.bf16.msra.mxu0 %v1642
        %5354 = vmatprep.subr.bf16.mxu0 0
        %5355 = vmatpush1.bf16.msra.mxu0 %v1643
        %5356 = vmatprep.mubr.bf16.mxu0 %v3105
        %5357 = vmatmul.mubr.bf16.gmra.mrb[0].mxu0 %v3091
        %v5358 = vpop.f32.mrb[0].mxu0
        %v5359 = vadd.f32 %v5319, %v5358
        %v5360 = vpop.f32.mrb[0].mxu0
        %v5361 = vpop.f32.mrb[0].mxu0
        %v5362 = vpop.f32.mrb[0].mxu0
        %5363 = vdwg.mxu0
        %5364 = vmatprep.subr.bf16.mxu0 0
        %5365 = vmatpush1.bf16.msra.mxu0 %v1644
        %5366 = vmatprep.subr.bf16.mxu0 0
        %5367 = vmatpush1.bf16.msra.mxu0 %v1645
        %5368 = vmatprep.subr.bf16.mxu0 0
        %5369 = vmatpush1.bf16.msra.mxu0 %v1646
        %5370 = vmatprep.subr.bf16.mxu0 0
        %5371 = vmatpush1.bf16.msra.mxu0 %v1647
        %5372 = vmatprep.subr.bf16.mxu0 0
        %5373 = vmatpush1.bf16.msra.mxu0 %v1648
        %5374 = vmatprep.subr.bf16.mxu0 0
        %5375 = vmatpush1.bf16.msra.mxu0 %v1649
        %5376 = vmatprep.subr.bf16.mxu0 0
        %5377 = vmatpush1.bf16.msra.mxu0 %v1650
        %5378 = vmatprep.subr.bf16.mxu0 0
        %5379 = vmatpush1.bf16.msra.mxu0 %v1651
        %5380 = vmatprep.subr.bf16.mxu0 0
        %5381 = vmatpush1.bf16.msra.mxu0 %v1652
        %5382 = vmatprep.subr.bf16.mxu0 0
        %5383 = vmatpush1.bf16.msra.mxu0 %v1653
        %5384 = vmatprep.subr.bf16.mxu0 0
        %5385 = vmatpush1.bf16.msra.mxu0 %v1654
        %5386 = vmatprep.subr.bf16.mxu0 0
        %5387 = vmatpush1.bf16.msra.mxu0 %v1655
        %5388 = vmatprep.subr.bf16.mxu0 0
        %5389 = vmatpush1.bf16.msra.mxu0 %v1656
        %5390 = vmatprep.subr.bf16.mxu0 0
        %5391 = vmatpush1.bf16.msra.mxu0 %v1657
        %5392 = vmatprep.subr.bf16.mxu0 0
        %5393 = vmatpush1.bf16.msra.mxu0 %v1658
        %5394 = vmatprep.subr.bf16.mxu0 0
        %5395 = vmatpush1.bf16.msra.mxu0 %v1659
        %5396 = vmatprep.mubr.bf16.mxu0 %v3115
        %5397 = vmatmul.mubr.bf16.gmra.mrb[0].mxu0 %v3113
        %v5398 = vpop.f32.mrb[0].mxu0
        %v5399 = vadd.f32 %v5359, %v5398
        %v5400 = vpop.f32.mrb[0].mxu0
        %v5401 = vpop.f32.mrb[0].mxu0
        %v5402 = vpop.f32.mrb[0].mxu0
        %5403 = vdwg.mxu0
        %5404 = vmatprep.subr.bf16.mxu0 0
        %5405 = vmatpush1.bf16.msra.mxu0 %v1660
        %5406 = vmatprep.subr.bf16.mxu0 0
        %5407 = vmatpush1.bf16.msra.mxu0 %v1661
        %5408 = vmatprep.subr.bf16.mxu0 0
        %5409 = vmatpush1.bf16.msra.mxu0 %v1662
        %5410 = vmatprep.subr.bf16.mxu0 0
        %5411 = vmatpush1.bf16.msra.mxu0 %v1663
        %5412 = vmatprep.subr.bf16.mxu0 0
        %5413 = vmatpush1.bf16.msra.mxu0 %v1664
        %5414 = vmatprep.subr.bf16.mxu0 0
        %5415 = vmatpush1.bf16.msra.mxu0 %v1665
        %5416 = vmatprep.subr.bf16.mxu0 0
        %5417 = vmatpush1.bf16.msra.mxu0 %v1666
        %5418 = vmatprep.subr.bf16.mxu0 0
        %5419 = vmatpush1.bf16.msra.mxu0 %v1667
        %5420 = vmatprep.subr.bf16.mxu0 0
        %5421 = vmatpush1.bf16.msra.mxu0 %v1668
        %5422 = vmatprep.subr.bf16.mxu0 0
        %5423 = vmatpush1.bf16.msra.mxu0 %v1669
        %5424 = vmatprep.subr.bf16.mxu0 0
        %5425 = vmatpush1.bf16.msra.mxu0 %v1670
        %5426 = vmatprep.subr.bf16.mxu0 0
        %5427 = vmatpush1.bf16.msra.mxu0 %v1671
        %5428 = vmatprep.subr.bf16.mxu0 0
        %5429 = vmatpush1.bf16.msra.mxu0 %v1672
        %5430 = vmatprep.subr.bf16.mxu0 0
        %5431 = vmatpush1.bf16.msra.mxu0 %v1673
        %5432 = vmatprep.subr.bf16.mxu0 0
        %5433 = vmatpush1.bf16.msra.mxu0 %v1674
        %5434 = vmatprep.subr.bf16.mxu0 0
        %5435 = vmatpush1.bf16.msra.mxu0 %v1675
        %5436 = vmatprep.mubr.bf16.mxu0 %v3112
        %5437 = vmatmul.mubr.bf16.gmra.mrb[0].mxu0 %v3098
        %v5438 = vpop.f32.mrb[0].mxu0
        %v5439 = vadd.f32 %v5399, %v5438
        %v5440 = vpop.f32.mrb[0].mxu0
        %v5441 = vpop.f32.mrb[0].mxu0
        %v5442 = vpop.f32.mrb[0].mxu0
        %5443 = vdwg.mxu0
        %5444 = vmatprep.subr.bf16.mxu0 0
        %5445 = vmatpush1.bf16.msra.mxu0 %v1676
        %5446 = vmatprep.subr.bf16.mxu0 0
        %5447 = vmatpush1.bf16.msra.mxu0 %v1677
        %5448 = vmatprep.subr.bf16.mxu0 0
        %5449 = vmatpush1.bf16.msra.mxu0 %v1678
        %5450 = vmatprep.subr.bf16.mxu0 0
        %5451 = vmatpush1.bf16.msra.mxu0 %v1679
        %5452 = vmatprep.subr.bf16.mxu0 0
        %5453 = vmatpush1.bf16.msra.mxu0 %v1680
        %5454 = vmatprep.subr.bf16.mxu0 0
        %5455 = vmatpush1.bf16.msra.mxu0 %v1681
        %5456 = vmatprep.subr.bf16.mxu0 0
        %5457 = vmatpush1.bf16.msra.mxu0 %v1682
        %5458 = vmatprep.subr.bf16.mxu0 0
        %5459 = vmatpush1.bf16.msra.mxu0 %v1683
        %5460 = vmatprep.subr.bf16.mxu0 0
        %5461 = vmatpush1.bf16.msra.mxu0 %v1684
        %5462 = vmatprep.subr.bf16.mxu0 0
        %5463 = vmatpush1.bf16.msra.mxu0 %v1685
        %5464 = vmatprep.subr.bf16.mxu0 0
        %5465 = vmatpush1.bf16.msra.mxu0 %v1686
        %5466 = vmatprep.subr.bf16.mxu0 0
        %5467 = vmatpush1.bf16.msra.mxu0 %v1687
        %5468 = vmatprep.subr.bf16.mxu0 0
        %5469 = vmatpush1.bf16.msra.mxu0 %v1688
        %5470 = vmatprep.subr.bf16.mxu0 0
        %5471 = vmatpush1.bf16.msra.mxu0 %v1689
        %5472 = vmatprep.subr.bf16.mxu0 0
        %5473 = vmatpush1.bf16.msra.mxu0 %v1690
        %5474 = vmatprep.subr.bf16.mxu0 0
        %5475 = vmatpush1.bf16.msra.mxu0 %v1691
        %5476 = vmatprep.mubr.bf16.mxu0 %v3116
        %5477 = vmatmul.mubr.bf16.gmra.mrb[0].mxu0 %v3114
        %v5478 = vpop.f32.mrb[0].mxu0
        %v5479 = vadd.f32 %v5439, %v5478
        %v5480 = vpop.f32.mrb[0].mxu0
        %v5481 = vpop.f32.mrb[0].mxu0
        %v5482 = vpop.f32.mrb[0].mxu0
        %5483 = vdwg.mxu0
        %5484 = vmatprep.subr.bf16.mxu0 0
        %5485 = vmatpush1.bf16.msra.mxu0 %v1692
        %5486 = vmatprep.subr.bf16.mxu0 0
        %5487 = vmatpush1.bf16.msra.mxu0 %v1693
        %5488 = vmatprep.subr.bf16.mxu0 0
        %5489 = vmatpush1.bf16.msra.mxu0 %v1694
        %5490 = vmatprep.subr.bf16.mxu0 0
        %5491 = vmatpush1.bf16.msra.mxu0 %v1695
        %5492 = vmatprep.subr.bf16.mxu0 0
        %5493 = vmatpush1.bf16.msra.mxu0 %v1696
        %5494 = vmatprep.subr.bf16.mxu0 0
        %5495 = vmatpush1.bf16.msra.mxu0 %v1697
        %5496 = vmatprep.subr.bf16.mxu0 0
        %5497 = vmatpush1.bf16.msra.mxu0 %v1698
        %5498 = vmatprep.subr.bf16.mxu0 0
        %5499 = vmatpush1.bf16.msra.mxu0 %v1699
        %5500 = vmatprep.subr.bf16.mxu0 0
        %5501 = vmatpush1.bf16.msra.mxu0 %v1700
        %5502 = vmatprep.subr.bf16.mxu0 0
        %5503 = vmatpush1.bf16.msra.mxu0 %v1701
        %5504 = vmatprep.subr.bf16.mxu0 0
        %5505 = vmatpush1.bf16.msra.mxu0 %v1702
        %5506 = vmatprep.subr.bf16.mxu0 0
        %5507 = vmatpush1.bf16.msra.mxu0 %v1703
        %5508 = vmatprep.subr.bf16.mxu0 0
        %5509 = vmatpush1.bf16.msra.mxu0 %v1704
        %5510 = vmatprep.subr.bf16.mxu0 0
        %5511 = vmatpush1.bf16.msra.mxu0 %v1705
        %5512 = vmatprep.subr.bf16.mxu0 0
        %5513 = vmatpush1.bf16.msra.mxu0 %v1706
        %5514 = vmatprep.subr.bf16.mxu0 0
        %5515 = vmatpush1.bf16.msra.mxu0 %v1707
        %5516 = vmatprep.mubr.bf16.mxu0 %v3154
        %5517 = vmatmul.mubr.bf16.gmra.mrb[0].mxu0 %v3140
        %v5518 = vpop.f32.mrb[0].mxu0
        %v5519 = vadd.f32 %v5479, %v5518
        %v5520 = vpop.f32.mrb[0].mxu0
        %v5521 = vpop.f32.mrb[0].mxu0
        %v5522 = vpop.f32.mrb[0].mxu0
        %5523 = vdwg.mxu0
        %5524 = vmatprep.subr.bf16.mxu0 0
        %5525 = vmatpush1.bf16.msra.mxu0 %v1708
        %5526 = vmatprep.subr.bf16.mxu0 0
        %5527 = vmatpush1.bf16.msra.mxu0 %v1709
        %5528 = vmatprep.subr.bf16.mxu0 0
        %5529 = vmatpush1.bf16.msra.mxu0 %v1710
        %5530 = vmatprep.subr.bf16.mxu0 0
        %5531 = vmatpush1.bf16.msra.mxu0 %v1711
        %5532 = vmatprep.subr.bf16.mxu0 0
        %5533 = vmatpush1.bf16.msra.mxu0 %v1712
        %5534 = vmatprep.subr.bf16.mxu0 0
        %5535 = vmatpush1.bf16.msra.mxu0 %v1713
        %5536 = vmatprep.subr.bf16.mxu0 0
        %5537 = vmatpush1.bf16.msra.mxu0 %v1714
        %5538 = vmatprep.subr.bf16.mxu0 0
        %5539 = vmatpush1.bf16.msra.mxu0 %v1715
        %5540 = vmatprep.subr.bf16.mxu0 0
        %5541 = vmatpush1.bf16.msra.mxu0 %v1716
        %5542 = vmatprep.subr.bf16.mxu0 0
        %5543 = vmatpush1.bf16.msra.mxu0 %v1717
        %5544 = vmatprep.subr.bf16.mxu0 0
        %5545 = vmatpush1.bf16.msra.mxu0 %v1718
        %5546 = vmatprep.subr.bf16.mxu0 0
        %5547 = vmatpush1.bf16.msra.mxu0 %v1719
        %5548 = vmatprep.subr.bf16.mxu0 0
        %5549 = vmatpush1.bf16.msra.mxu0 %v1720
        %5550 = vmatprep.subr.bf16.mxu0 0
        %5551 = vmatpush1.bf16.msra.mxu0 %v1721
        %5552 = vmatprep.subr.bf16.mxu0 0
        %5553 = vmatpush1.bf16.msra.mxu0 %v1722
        %5554 = vmatprep.subr.bf16.mxu0 0
        %5555 = vmatpush1.bf16.msra.mxu0 %v1723
        %5556 = vmatprep.mubr.bf16.mxu0 %v3164
        %5557 = vmatmul.mubr.bf16.gmra.mrb[0].mxu0 %v3162
        %v5558 = vpop.f32.mrb[0].mxu0
        %v5559 = vadd.f32 %v5519, %v5558
        %v5560 = vpop.f32.mrb[0].mxu0
        %v5561 = vpop.f32.mrb[0].mxu0
        %v5562 = vpop.f32.mrb[0].mxu0
        %5563 = vdwg.mxu0
        %5564 = vmatprep.subr.bf16.mxu0 0
        %5565 = vmatpush1.bf16.msra.mxu0 %v1724
        %5566 = vmatprep.subr.bf16.mxu0 0
        %5567 = vmatpush1.bf16.msra.mxu0 %v1725
        %5568 = vmatprep.subr.bf16.mxu0 0
        %5569 = vmatpush1.bf16.msra.mxu0 %v1726
        %5570 = vmatprep.subr.bf16.mxu0 0
        %5571 = vmatpush1.bf16.msra.mxu0 %v1727
        %5572 = vmatprep.subr.bf16.mxu0 0
        %5573 = vmatpush1.bf16.msra.mxu0 %v1728
        %5574 = vmatprep.subr.bf16.mxu0 0
        %5575 = vmatpush1.bf16.msra.mxu0 %v1729
        %5576 = vmatprep.subr.bf16.mxu0 0
        %5577 = vmatpush1.bf16.msra.mxu0 %v1730
        %5578 = vmatprep.subr.bf16.mxu0 0
        %5579 = vmatpush1.bf16.msra.mxu0 %v1731
        %5580 = vmatprep.subr.bf16.mxu0 0
        %5581 = vmatpush1.bf16.msra.mxu0 %v1732
        %5582 = vmatprep.subr.bf16.mxu0 0
        %5583 = vmatpush1.bf16.msra.mxu0 %v1733
        %5584 = vmatprep.subr.bf16.mxu0 0
        %5585 = vmatpush1.bf16.msra.mxu0 %v1734
        %5586 = vmatprep.subr.bf16.mxu0 0
        %5587 = vmatpush1.bf16.msra.mxu0 %v1735
        %5588 = vmatprep.subr.bf16.mxu0 0
        %5589 = vmatpush1.bf16.msra.mxu0 %v1736
        %5590 = vmatprep.subr.bf16.mxu0 0
        %5591 = vmatpush1.bf16.msra.mxu0 %v1737
        %5592 = vmatprep.subr.bf16.mxu0 0
        %5593 = vmatpush1.bf16.msra.mxu0 %v1738
        %5594 = vmatprep.subr.bf16.mxu0 0
        %5595 = vmatpush1.bf16.msra.mxu0 %v1739
        %5596 = vmatprep.mubr.bf16.mxu0 %v3161
        %5597 = vmatmul.mubr.bf16.gmra.mrb[0].mxu0 %v3147
        %v5598 = vpop.f32.mrb[0].mxu0
        %v5599 = vadd.f32 %v5559, %v5598
        %v5600 = vpop.f32.mrb[0].mxu0
        %v5601 = vpop.f32.mrb[0].mxu0
        %v5602 = vpop.f32.mrb[0].mxu0
        %5603 = vdwg.mxu0
        %5604 = vmatprep.subr.bf16.mxu0 0
        %5605 = vmatpush1.bf16.msra.mxu0 %v1740
        %5606 = vmatprep.subr.bf16.mxu0 0
        %5607 = vmatpush1.bf16.msra.mxu0 %v1741
        %5608 = vmatprep.subr.bf16.mxu0 0
        %5609 = vmatpush1.bf16.msra.mxu0 %v1742
        %5610 = vmatprep.subr.bf16.mxu0 0
        %5611 = vmatpush1.bf16.msra.mxu0 %v1743
        %5612 = vmatprep.subr.bf16.mxu0 0
        %5613 = vmatpush1.bf16.msra.mxu0 %v1744
        %5614 = vmatprep.subr.bf16.mxu0 0
        %5615 = vmatpush1.bf16.msra.mxu0 %v1745
        %5616 = vmatprep.subr.bf16.mxu0 0
        %5617 = vmatpush1.bf16.msra.mxu0 %v1746
        %5618 = vmatprep.subr.bf16.mxu0 0
        %5619 = vmatpush1.bf16.msra.mxu0 %v1747
        %5620 = vmatprep.subr.bf16.mxu0 0
        %5621 = vmatpush1.bf16.msra.mxu0 %v1748
        %5622 = vmatprep.subr.bf16.mxu0 0
        %5623 = vmatpush1.bf16.msra.mxu0 %v1749
        %5624 = vmatprep.subr.bf16.mxu0 0
        %5625 = vmatpush1.bf16.msra.mxu0 %v1750
        %5626 = vmatprep.subr.bf16.mxu0 0
        %5627 = vmatpush1.bf16.msra.mxu0 %v1751
        %5628 = vmatprep.subr.bf16.mxu0 0
        %5629 = vmatpush1.bf16.msra.mxu0 %v1752
        %5630 = vmatprep.subr.bf16.mxu0 0
        %5631 = vmatpush1.bf16.msra.mxu0 %v1753
        %5632 = vmatprep.subr.bf16.mxu0 0
        %5633 = vmatpush1.bf16.msra.mxu0 %v1754
        %5634 = vmatprep.subr.bf16.mxu0 0
        %5635 = vmatpush1.bf16.msra.mxu0 %v1755
        %5636 = vmatprep.mubr.bf16.mxu0 %v3165
        %5637 = vmatmul.mubr.bf16.gmra.mrb[0].mxu0 %v3163
        %v5638 = vpop.f32.mrb[0].mxu0
        %v5639 = vadd.f32 %v5599, %v5638
        %v5640 = vpop.f32.mrb[0].mxu0
        %v5641 = vpop.f32.mrb[0].mxu0
        %v5642 = vpop.f32.mrb[0].mxu0
        %5643 = vdwg.mxu0
        %5644 = vmatprep.subr.bf16.mxu0 0
        %5645 = vmatpush1.bf16.msra.mxu0 %v1756
        %5646 = vmatprep.subr.bf16.mxu0 0
        %5647 = vmatpush1.bf16.msra.mxu0 %v1757
        %5648 = vmatprep.subr.bf16.mxu0 0
        %5649 = vmatpush1.bf16.msra.mxu0 %v1758
        %5650 = vmatprep.subr.bf16.mxu0 0
        %5651 = vmatpush1.bf16.msra.mxu0 %v1759
        %5652 = vmatprep.subr.bf16.mxu0 0
        %5653 = vmatpush1.bf16.msra.mxu0 %v1760
        %5654 = vmatprep.subr.bf16.mxu0 0
        %5655 = vmatpush1.bf16.msra.mxu0 %v1761
        %5656 = vmatprep.subr.bf16.mxu0 0
        %5657 = vmatpush1.bf16.msra.mxu0 %v1762
        %5658 = vmatprep.subr.bf16.mxu0 0
        %5659 = vmatpush1.bf16.msra.mxu0 %v1763
        %5660 = vmatprep.subr.bf16.mxu0 0
        %5661 = vmatpush1.bf16.msra.mxu0 %v1764
        %5662 = vmatprep.subr.bf16.mxu0 0
        %5663 = vmatpush1.bf16.msra.mxu0 %v1765
        %5664 = vmatprep.subr.bf16.mxu0 0
        %5665 = vmatpush1.bf16.msra.mxu0 %v1766
        %5666 = vmatprep.subr.bf16.mxu0 0
        %5667 = vmatpush1.bf16.msra.mxu0 %v1767
        %5668 = vmatprep.subr.bf16.mxu0 0
        %5669 = vmatpush1.bf16.msra.mxu0 %v1768
        %5670 = vmatprep.subr.bf16.mxu0 0
        %5671 = vmatpush1.bf16.msra.mxu0 %v1769
        %5672 = vmatprep.subr.bf16.mxu0 0
        %5673 = vmatpush1.bf16.msra.mxu0 %v1770
        %5674 = vmatprep.subr.bf16.mxu0 0
        %5675 = vmatpush1.bf16.msra.mxu0 %v1771
        %5676 = vmatprep.mubr.bf16.mxu0 %v3203
        %5677 = vmatmul.mubr.bf16.gmra.mrb[0].mxu0 %v3189
        %v5678 = vpop.f32.mrb[0].mxu0
        %v5679 = vadd.f32 %v5639, %v5678
        %v5680 = vpop.f32.mrb[0].mxu0
        %v5681 = vpop.f32.mrb[0].mxu0
        %v5682 = vpop.f32.mrb[0].mxu0
        %5683 = vdwg.mxu0
        %5684 = vmatprep.subr.bf16.mxu0 0
        %5685 = vmatpush1.bf16.msra.mxu0 %v1772
        %5686 = vmatprep.subr.bf16.mxu0 0
        %5687 = vmatpush1.bf16.msra.mxu0 %v1773
        %5688 = vmatprep.subr.bf16.mxu0 0
        %5689 = vmatpush1.bf16.msra.mxu0 %v1774
        %5690 = vmatprep.subr.bf16.mxu0 0
        %5691 = vmatpush1.bf16.msra.mxu0 %v1775
        %5692 = vmatprep.subr.bf16.mxu0 0
        %5693 = vmatpush1.bf16.msra.mxu0 %v1776
        %5694 = vmatprep.subr.bf16.mxu0 0
        %5695 = vmatpush1.bf16.msra.mxu0 %v1777
        %5696 = vmatprep.subr.bf16.mxu0 0
        %5697 = vmatpush1.bf16.msra.mxu0 %v1778
        %5698 = vmatprep.subr.bf16.mxu0 0
        %5699 = vmatpush1.bf16.msra.mxu0 %v1779
        %5700 = vmatprep.subr.bf16.mxu0 0
        %5701 = vmatpush1.bf16.msra.mxu0 %v1780
        %5702 = vmatprep.subr.bf16.mxu0 0
        %5703 = vmatpush1.bf16.msra.mxu0 %v1781
        %5704 = vmatprep.subr.bf16.mxu0 0
        %5705 = vmatpush1.bf16.msra.mxu0 %v1782
        %5706 = vmatprep.subr.bf16.mxu0 0
        %5707 = vmatpush1.bf16.msra.mxu0 %v1783
        %5708 = vmatprep.subr.bf16.mxu0 0
        %5709 = vmatpush1.bf16.msra.mxu0 %v1784
        %5710 = vmatprep.subr.bf16.mxu0 0
        %5711 = vmatpush1.bf16.msra.mxu0 %v1785
        %5712 = vmatprep.subr.bf16.mxu0 0
        %5713 = vmatpush1.bf16.msra.mxu0 %v1786
        %5714 = vmatprep.subr.bf16.mxu0 0
        %5715 = vmatpush1.bf16.msra.mxu0 %v1787
        %5716 = vmatprep.mubr.bf16.mxu0 %v3213
        %5717 = vmatmul.mubr.bf16.gmra.mrb[0].mxu0 %v3211
        %v5718 = vpop.f32.mrb[0].mxu0
        %v5719 = vadd.f32 %v5679, %v5718
        %v5720 = vpop.f32.mrb[0].mxu0
        %v5721 = vpop.f32.mrb[0].mxu0
        %v5722 = vpop.f32.mrb[0].mxu0
        %5723 = vdwg.mxu0
        %5724 = vmatprep.subr.bf16.mxu0 0
        %5725 = vmatpush1.bf16.msra.mxu0 %v1788
        %5726 = vmatprep.subr.bf16.mxu0 0
        %5727 = vmatpush1.bf16.msra.mxu0 %v1789
        %5728 = vmatprep.subr.bf16.mxu0 0
        %5729 = vmatpush1.bf16.msra.mxu0 %v1790
        %5730 = vmatprep.subr.bf16.mxu0 0
        %5731 = vmatpush1.bf16.msra.mxu0 %v1791
        %5732 = vmatprep.subr.bf16.mxu0 0
        %5733 = vmatpush1.bf16.msra.mxu0 %v1792
        %5734 = vmatprep.subr.bf16.mxu0 0
        %5735 = vmatpush1.bf16.msra.mxu0 %v1793
        %5736 = vmatprep.subr.bf16.mxu0 0
        %5737 = vmatpush1.bf16.msra.mxu0 %v1794
        %5738 = vmatprep.subr.bf16.mxu0 0
        %5739 = vmatpush1.bf16.msra.mxu0 %v1795
        %5740 = vmatprep.subr.bf16.mxu0 0
        %5741 = vmatpush1.bf16.msra.mxu0 %v1796
        %5742 = vmatprep.subr.bf16.mxu0 0
        %5743 = vmatpush1.bf16.msra.mxu0 %v1797
        %5744 = vmatprep.subr.bf16.mxu0 0
        %5745 = vmatpush1.bf16.msra.mxu0 %v1798
        %5746 = vmatprep.subr.bf16.mxu0 0
        %5747 = vmatpush1.bf16.msra.mxu0 %v1799
        %5748 = vmatprep.subr.bf16.mxu0 0
        %5749 = vmatpush1.bf16.msra.mxu0 %v1800
        %5750 = vmatprep.subr.bf16.mxu0 0
        %5751 = vmatpush1.bf16.msra.mxu0 %v1801
        %5752 = vmatprep.subr.bf16.mxu0 0
        %5753 = vmatpush1.bf16.msra.mxu0 %v1802
        %5754 = vmatprep.subr.bf16.mxu0 0
        %5755 = vmatpush1.bf16.msra.mxu0 %v1803
        %5756 = vmatprep.mubr.bf16.mxu0 %v3210
        %5757 = vmatmul.mubr.bf16.gmra.mrb[0].mxu0 %v3196
        %v5758 = vpop.f32.mrb[0].mxu0
        %v5759 = vadd.f32 %v5719, %v5758
        %v5760 = vpop.f32.mrb[0].mxu0
        %v5761 = vpop.f32.mrb[0].mxu0
        %v5762 = vpop.f32.mrb[0].mxu0
        %5763 = vdwg.mxu0
        %5764 = vmatprep.subr.bf16.mxu0 0
        %5765 = vmatpush1.bf16.msra.mxu0 %v1804
        %5766 = vmatprep.subr.bf16.mxu0 0
        %5767 = vmatpush1.bf16.msra.mxu0 %v1805
        %5768 = vmatprep.subr.bf16.mxu0 0
        %5769 = vmatpush1.bf16.msra.mxu0 %v1806
        %5770 = vmatprep.subr.bf16.mxu0 0
        %5771 = vmatpush1.bf16.msra.mxu0 %v1807
        %5772 = vmatprep.subr.bf16.mxu0 0
        %5773 = vmatpush1.bf16.msra.mxu0 %v1808
        %5774 = vmatprep.subr.bf16.mxu0 0
        %5775 = vmatpush1.bf16.msra.mxu0 %v1809
        %5776 = vmatprep.subr.bf16.mxu0 0
        %5777 = vmatpush1.bf16.msra.mxu0 %v1810
        %5778 = vmatprep.subr.bf16.mxu0 0
        %5779 = vmatpush1.bf16.msra.mxu0 %v1811
        %5780 = vmatprep.subr.bf16.mxu0 0
        %5781 = vmatpush1.bf16.msra.mxu0 %v1812
        %5782 = vmatprep.subr.bf16.mxu0 0
        %5783 = vmatpush1.bf16.msra.mxu0 %v1813
        %5784 = vmatprep.subr.bf16.mxu0 0
        %5785 = vmatpush1.bf16.msra.mxu0 %v1814
        %5786 = vmatprep.subr.bf16.mxu0 0
        %5787 = vmatpush1.bf16.msra.mxu0 %v1815
        %5788 = vmatprep.subr.bf16.mxu0 0
        %5789 = vmatpush1.bf16.msra.mxu0 %v1816
        %5790 = vmatprep.subr.bf16.mxu0 0
        %5791 = vmatpush1.bf16.msra.mxu0 %v1817
        %5792 = vmatprep.subr.bf16.mxu0 0
        %5793 = vmatpush1.bf16.msra.mxu0 %v1818
        %5794 = vmatprep.subr.bf16.mxu0 0
        %5795 = vmatpush1.bf16.msra.mxu0 %v1819
        %5796 = vmatprep.mubr.bf16.mxu0 %v3214
        %5797 = vmatmul.mubr.bf16.gmra.mrb[0].mxu0 %v3212
        %v5798 = vpop.f32.mrb[0].mxu0
        %v5799 = vadd.f32 %v5759, %v5798
        %v5800 = vpop.f32.mrb[0].mxu0
        %v5801 = vpop.f32.mrb[0].mxu0
        %v5802 = vpop.f32.mrb[0].mxu0
        %5803 = vdwg.mxu0
        %5804 = vmatprep.subr.bf16.mxu0 0
        %5805 = vmatpush1.bf16.msra.mxu0 %v1820
        %5806 = vmatprep.subr.bf16.mxu0 0
        %5807 = vmatpush1.bf16.msra.mxu0 %v1821
        %5808 = vmatprep.subr.bf16.mxu0 0
        %5809 = vmatpush1.bf16.msra.mxu0 %v1822
        %5810 = vmatprep.subr.bf16.mxu0 0
        %5811 = vmatpush1.bf16.msra.mxu0 %v1823
        %5812 = vmatprep.subr.bf16.mxu0 0
        %5813 = vmatpush1.bf16.msra.mxu0 %v1824
        %5814 = vmatprep.subr.bf16.mxu0 0
        %5815 = vmatpush1.bf16.msra.mxu0 %v1825
        %5816 = vmatprep.subr.bf16.mxu0 0
        %5817 = vmatpush1.bf16.msra.mxu0 %v1826
        %5818 = vmatprep.subr.bf16.mxu0 0
        %5819 = vmatpush1.bf16.msra.mxu0 %v1827
        %5820 = vmatprep.subr.bf16.mxu0 0
        %5821 = vmatpush1.bf16.msra.mxu0 %v1828
        %5822 = vmatprep.subr.bf16.mxu0 0
        %5823 = vmatpush1.bf16.msra.mxu0 %v1829
        %5824 = vmatprep.subr.bf16.mxu0 0
        %5825 = vmatpush1.bf16.msra.mxu0 %v1830
        %5826 = vmatprep.subr.bf16.mxu0 0
        %5827 = vmatpush1.bf16.msra.mxu0 %v1831
        %5828 = vmatprep.subr.bf16.mxu0 0
        %5829 = vmatpush1.bf16.msra.mxu0 %v1832
        %5830 = vmatprep.subr.bf16.mxu0 0
        %5831 = vmatpush1.bf16.msra.mxu0 %v1833
        %5832 = vmatprep.subr.bf16.mxu0 0
        %5833 = vmatpush1.bf16.msra.mxu0 %v1834
        %5834 = vmatprep.subr.bf16.mxu0 0
        %5835 = vmatpush1.bf16.msra.mxu0 %v1835
        %5836 = vmatprep.mubr.bf16.mxu0 %v3252
        %5837 = vmatmul.mubr.bf16.gmra.mrb[0].mxu0 %v3238
        %v5838 = vpop.f32.mrb[0].mxu0
        %v5839 = vadd.f32 %v5799, %v5838
        %v5840 = vpop.f32.mrb[0].mxu0
        %v5841 = vpop.f32.mrb[0].mxu0
        %v5842 = vpop.f32.mrb[0].mxu0
        %5843 = vdwg.mxu0
        %5844 = vmatprep.subr.bf16.mxu0 0
        %5845 = vmatpush1.bf16.msra.mxu0 %v1836
        %5846 = vmatprep.subr.bf16.mxu0 0
        %5847 = vmatpush1.bf16.msra.mxu0 %v1837
        %5848 = vmatprep.subr.bf16.mxu0 0
        %5849 = vmatpush1.bf16.msra.mxu0 %v1838
        %5850 = vmatprep.subr.bf16.mxu0 0
        %5851 = vmatpush1.bf16.msra.mxu0 %v1839
        %5852 = vmatprep.subr.bf16.mxu0 0
        %5853 = vmatpush1.bf16.msra.mxu0 %v1840
        %5854 = vmatprep.subr.bf16.mxu0 0
        %5855 = vmatpush1.bf16.msra.mxu0 %v1841
        %5856 = vmatprep.subr.bf16.mxu0 0
        %5857 = vmatpush1.bf16.msra.mxu0 %v1842
        %5858 = vmatprep.subr.bf16.mxu0 0
        %5859 = vmatpush1.bf16.msra.mxu0 %v1843
        %5860 = vmatprep.subr.bf16.mxu0 0
        %5861 = vmatpush1.bf16.msra.mxu0 %v1844
        %5862 = vmatprep.subr.bf16.mxu0 0
        %5863 = vmatpush1.bf16.msra.mxu0 %v1845
        %5864 = vmatprep.subr.bf16.mxu0 0
        %5865 = vmatpush1.bf16.msra.mxu0 %v1846
        %5866 = vmatprep.subr.bf16.mxu0 0
        %5867 = vmatpush1.bf16.msra.mxu0 %v1847
        %5868 = vmatprep.subr.bf16.mxu0 0
        %5869 = vmatpush1.bf16.msra.mxu0 %v1848
        %5870 = vmatprep.subr.bf16.mxu0 0
        %5871 = vmatpush1.bf16.msra.mxu0 %v1849
        %5872 = vmatprep.subr.bf16.mxu0 0
        %5873 = vmatpush1.bf16.msra.mxu0 %v1850
        %5874 = vmatprep.subr.bf16.mxu0 0
        %5875 = vmatpush1.bf16.msra.mxu0 %v1851
        %5876 = vmatprep.mubr.bf16.mxu0 %v3262
        %5877 = vmatmul.mubr.bf16.gmra.mrb[0].mxu0 %v3260
        %v5878 = vpop.f32.mrb[0].mxu0
        %v5879 = vadd.f32 %v5839, %v5878
        %v5880 = vpop.f32.mrb[0].mxu0
        %v5881 = vpop.f32.mrb[0].mxu0
        %v5882 = vpop.f32.mrb[0].mxu0
        %5883 = vdwg.mxu0
        %5884 = vmatprep.subr.bf16.mxu0 0
        %5885 = vmatpush1.bf16.msra.mxu0 %v1852
        %5886 = vmatprep.subr.bf16.mxu0 0
        %5887 = vmatpush1.bf16.msra.mxu0 %v1853
        %5888 = vmatprep.subr.bf16.mxu0 0
        %5889 = vmatpush1.bf16.msra.mxu0 %v1854
        %5890 = vmatprep.subr.bf16.mxu0 0
        %5891 = vmatpush1.bf16.msra.mxu0 %v1855
        %5892 = vmatprep.subr.bf16.mxu0 0
        %5893 = vmatpush1.bf16.msra.mxu0 %v1856
        %5894 = vmatprep.subr.bf16.mxu0 0
        %5895 = vmatpush1.bf16.msra.mxu0 %v1857
        %5896 = vmatprep.subr.bf16.mxu0 0
        %5897 = vmatpush1.bf16.msra.mxu0 %v1858
        %5898 = vmatprep.subr.bf16.mxu0 0
        %5899 = vmatpush1.bf16.msra.mxu0 %v1859
        %5900 = vmatprep.subr.bf16.mxu0 0
        %5901 = vmatpush1.bf16.msra.mxu0 %v1860
        %5902 = vmatprep.subr.bf16.mxu0 0
        %5903 = vmatpush1.bf16.msra.mxu0 %v1861
        %5904 = vmatprep.subr.bf16.mxu0 0
        %5905 = vmatpush1.bf16.msra.mxu0 %v1862
        %5906 = vmatprep.subr.bf16.mxu0 0
        %5907 = vmatpush1.bf16.msra.mxu0 %v1863
        %5908 = vmatprep.subr.bf16.mxu0 0
        %5909 = vmatpush1.bf16.msra.mxu0 %v1864
        %5910 = vmatprep.subr.bf16.mxu0 0
        %5911 = vmatpush1.bf16.msra.mxu0 %v1865
        %5912 = vmatprep.subr.bf16.mxu0 0
        %5913 = vmatpush1.bf16.msra.mxu0 %v1866
        %5914 = vmatprep.subr.bf16.mxu0 0
        %5915 = vmatpush1.bf16.msra.mxu0 %v1867
        %5916 = vmatprep.mubr.bf16.mxu0 %v3259
        %5917 = vmatmul.mubr.bf16.gmra.mrb[0].mxu0 %v3245
        %v5918 = vpop.f32.mrb[0].mxu0
        %v5919 = vadd.f32 %v5879, %v5918
        %v5920 = vpop.f32.mrb[0].mxu0
        %v5921 = vpop.f32.mrb[0].mxu0
        %v5922 = vpop.f32.mrb[0].mxu0
        %5923 = vdwg.mxu0
        %5924 = vmatprep.subr.bf16.mxu0 0
        %5925 = vmatpush1.bf16.msra.mxu0 %v1868
        %5926 = vmatprep.subr.bf16.mxu0 0
        %5927 = vmatpush1.bf16.msra.mxu0 %v1869
        %5928 = vmatprep.subr.bf16.mxu0 0
        %5929 = vmatpush1.bf16.msra.mxu0 %v1870
        %5930 = vmatprep.subr.bf16.mxu0 0
        %5931 = vmatpush1.bf16.msra.mxu0 %v1871
        %5932 = vmatprep.subr.bf16.mxu0 0
        %5933 = vmatpush1.bf16.msra.mxu0 %v1872
        %5934 = vmatprep.subr.bf16.mxu0 0
        %5935 = vmatpush1.bf16.msra.mxu0 %v1873
        %5936 = vmatprep.subr.bf16.mxu0 0
        %5937 = vmatpush1.bf16.msra.mxu0 %v1874
        %5938 = vmatprep.subr.bf16.mxu0 0
        %5939 = vmatpush1.bf16.msra.mxu0 %v1875
        %5940 = vmatprep.subr.bf16.mxu0 0
        %5941 = vmatpush1.bf16.msra.mxu0 %v1876
        %5942 = vmatprep.subr.bf16.mxu0 0
        %5943 = vmatpush1.bf16.msra.mxu0 %v1877
        %5944 = vmatprep.subr.bf16.mxu0 0
        %5945 = vmatpush1.bf16.msra.mxu0 %v1878
        %5946 = vmatprep.subr.bf16.mxu0 0
        %5947 = vmatpush1.bf16.msra.mxu0 %v1879
        %5948 = vmatprep.subr.bf16.mxu0 0
        %5949 = vmatpush1.bf16.msra.mxu0 %v1880
        %5950 = vmatprep.subr.bf16.mxu0 0
        %5951 = vmatpush1.bf16.msra.mxu0 %v1881
        %5952 = vmatprep.subr.bf16.mxu0 0
        %5953 = vmatpush1.bf16.msra.mxu0 %v1882
        %5954 = vmatprep.subr.bf16.mxu0 0
        %5955 = vmatpush1.bf16.msra.mxu0 %v1883
        %5956 = vmatprep.mubr.bf16.mxu0 %v3263
        %5957 = vmatmul.mubr.bf16.gmra.mrb[0].mxu0 %v3261
        %v5958 = vpop.f32.mrb[0].mxu0
        %v5959 = vadd.f32 %v5919, %v5958
        %v5960 = vpop.f32.mrb[0].mxu0
        %v5961 = vpop.f32.mrb[0].mxu0
        %v5962 = vpop.f32.mrb[0].mxu0
        %5963 = vdwg.mxu0
        %5964 = vmatprep.subr.bf16.mxu0 0
        %5965 = vmatpush1.bf16.msra.mxu0 %v1884
        %5966 = vmatprep.subr.bf16.mxu0 0
        %5967 = vmatpush1.bf16.msra.mxu0 %v1885
        %5968 = vmatprep.subr.bf16.mxu0 0
        %5969 = vmatpush1.bf16.msra.mxu0 %v1886
        %5970 = vmatprep.subr.bf16.mxu0 0
        %5971 = vmatpush1.bf16.msra.mxu0 %v1887
        %5972 = vmatprep.subr.bf16.mxu0 0
        %5973 = vmatpush1.bf16.msra.mxu0 %v1888
        %5974 = vmatprep.subr.bf16.mxu0 0
        %5975 = vmatpush1.bf16.msra.mxu0 %v1889
        %5976 = vmatprep.subr.bf16.mxu0 0
        %5977 = vmatpush1.bf16.msra.mxu0 %v1890
        %5978 = vmatprep.subr.bf16.mxu0 0
        %5979 = vmatpush1.bf16.msra.mxu0 %v1891
        %5980 = vmatprep.subr.bf16.mxu0 0
        %5981 = vmatpush1.bf16.msra.mxu0 %v1892
        %5982 = vmatprep.subr.bf16.mxu0 0
        %5983 = vmatpush1.bf16.msra.mxu0 %v1893
        %5984 = vmatprep.subr.bf16.mxu0 0
        %5985 = vmatpush1.bf16.msra.mxu0 %v1894
        %5986 = vmatprep.subr.bf16.mxu0 0
        %5987 = vmatpush1.bf16.msra.mxu0 %v1895
        %5988 = vmatprep.subr.bf16.mxu0 0
        %5989 = vmatpush1.bf16.msra.mxu0 %v1896
        %5990 = vmatprep.subr.bf16.mxu0 0
        %5991 = vmatpush1.bf16.msra.mxu0 %v1897
        %5992 = vmatprep.subr.bf16.mxu0 0
        %5993 = vmatpush1.bf16.msra.mxu0 %v1898
        %5994 = vmatprep.subr.bf16.mxu0 0
        %5995 = vmatpush1.bf16.msra.mxu0 %v1899
        %5996 = vmatprep.mubr.bf16.mxu0 %v3301
        %5997 = vmatmul.mubr.bf16.gmra.mrb[0].mxu0 %v3287
        %v5998 = vpop.f32.mrb[0].mxu0
        %v5999 = vadd.f32 %v5959, %v5998
        %v6000 = vpop.f32.mrb[0].mxu0
        %v6001 = vpop.f32.mrb[0].mxu0
        %v6002 = vpop.f32.mrb[0].mxu0
        %6003 = vdwg.mxu0
        %6004 = vmatprep.subr.bf16.mxu0 0
        %6005 = vmatpush1.bf16.msra.mxu0 %v1900
        %6006 = vmatprep.subr.bf16.mxu0 0
        %6007 = vmatpush1.bf16.msra.mxu0 %v1901
        %6008 = vmatprep.subr.bf16.mxu0 0
        %6009 = vmatpush1.bf16.msra.mxu0 %v1902
        %6010 = vmatprep.subr.bf16.mxu0 0
        %6011 = vmatpush1.bf16.msra.mxu0 %v1903
        %6012 = vmatprep.subr.bf16.mxu0 0
        %6013 = vmatpush1.bf16.msra.mxu0 %v1904
        %6014 = vmatprep.subr.bf16.mxu0 0
        %6015 = vmatpush1.bf16.msra.mxu0 %v1905
        %6016 = vmatprep.subr.bf16.mxu0 0
        %6017 = vmatpush1.bf16.msra.mxu0 %v1906
        %6018 = vmatprep.subr.bf16.mxu0 0
        %6019 = vmatpush1.bf16.msra.mxu0 %v1907
        %6020 = vmatprep.subr.bf16.mxu0 0
        %6021 = vmatpush1.bf16.msra.mxu0 %v1908
        %6022 = vmatprep.subr.bf16.mxu0 0
        %6023 = vmatpush1.bf16.msra.mxu0 %v1909
        %6024 = vmatprep.subr.bf16.mxu0 0
        %6025 = vmatpush1.bf16.msra.mxu0 %v1910
        %6026 = vmatprep.subr.bf16.mxu0 0
        %6027 = vmatpush1.bf16.msra.mxu0 %v1911
        %6028 = vmatprep.subr.bf16.mxu0 0
        %6029 = vmatpush1.bf16.msra.mxu0 %v1912
        %6030 = vmatprep.subr.bf16.mxu0 0
        %6031 = vmatpush1.bf16.msra.mxu0 %v1913
        %6032 = vmatprep.subr.bf16.mxu0 0
        %6033 = vmatpush1.bf16.msra.mxu0 %v1914
        %6034 = vmatprep.subr.bf16.mxu0 0
        %6035 = vmatpush1.bf16.msra.mxu0 %v1915
        %6036 = vmatprep.mubr.bf16.mxu0 %v3311
        %6037 = vmatmul.mubr.bf16.gmra.mrb[0].mxu0 %v3309
        %v6038 = vpop.f32.mrb[0].mxu0
        %v6039 = vadd.f32 %v5999, %v6038
        %v6040 = vpop.f32.mrb[0].mxu0
        %v6041 = vpop.f32.mrb[0].mxu0
        %v6042 = vpop.f32.mrb[0].mxu0
        %6043 = vdwg.mxu0
        %6044 = vmatprep.subr.bf16.mxu0 0
        %6045 = vmatpush1.bf16.msra.mxu0 %v1916
        %6046 = vmatprep.subr.bf16.mxu0 0
        %6047 = vmatpush1.bf16.msra.mxu0 %v1917
        %6048 = vmatprep.subr.bf16.mxu0 0
        %6049 = vmatpush1.bf16.msra.mxu0 %v1918
        %6050 = vmatprep.subr.bf16.mxu0 0
        %6051 = vmatpush1.bf16.msra.mxu0 %v1919
        %6052 = vmatprep.subr.bf16.mxu0 0
        %6053 = vmatpush1.bf16.msra.mxu0 %v1920
        %6054 = vmatprep.subr.bf16.mxu0 0
        %6055 = vmatpush1.bf16.msra.mxu0 %v1921
        %6056 = vmatprep.subr.bf16.mxu0 0
        %6057 = vmatpush1.bf16.msra.mxu0 %v1922
        %6058 = vmatprep.subr.bf16.mxu0 0
        %6059 = vmatpush1.bf16.msra.mxu0 %v1923
        %6060 = vmatprep.subr.bf16.mxu0 0
        %6061 = vmatpush1.bf16.msra.mxu0 %v1924
        %6062 = vmatprep.subr.bf16.mxu0 0
        %6063 = vmatpush1.bf16.msra.mxu0 %v1925
        %6064 = vmatprep.subr.bf16.mxu0 0
        %6065 = vmatpush1.bf16.msra.mxu0 %v1926
        %6066 = vmatprep.subr.bf16.mxu0 0
        %6067 = vmatpush1.bf16.msra.mxu0 %v1927
        %6068 = vmatprep.subr.bf16.mxu0 0
        %6069 = vmatpush1.bf16.msra.mxu0 %v1928
        %6070 = vmatprep.subr.bf16.mxu0 0
        %6071 = vmatpush1.bf16.msra.mxu0 %v1929
        %6072 = vmatprep.subr.bf16.mxu0 0
        %6073 = vmatpush1.bf16.msra.mxu0 %v1930
        %6074 = vmatprep.subr.bf16.mxu0 0
        %6075 = vmatpush1.bf16.msra.mxu0 %v1931
        %6076 = vmatprep.mubr.bf16.mxu0 %v3308
        %6077 = vmatmul.mubr.bf16.gmra.mrb[0].mxu0 %v3294
        %v6078 = vpop.f32.mrb[0].mxu0
        %v6079 = vadd.f32 %v6039, %v6078
        %v6080 = vpop.f32.mrb[0].mxu0
        %v6081 = vpop.f32.mrb[0].mxu0
        %v6082 = vpop.f32.mrb[0].mxu0
        %6083 = vdwg.mxu0
        %6084 = vmatprep.subr.bf16.mxu0 0
        %6085 = vmatpush1.bf16.msra.mxu0 %v1932
        %6086 = vmatprep.subr.bf16.mxu0 0
        %6087 = vmatpush1.bf16.msra.mxu0 %v1933
        %6088 = vmatprep.subr.bf16.mxu0 0
        %6089 = vmatpush1.bf16.msra.mxu0 %v1934
        %6090 = vmatprep.subr.bf16.mxu0 0
        %6091 = vmatpush1.bf16.msra.mxu0 %v1935
        %6092 = vmatprep.subr.bf16.mxu0 0
        %6093 = vmatpush1.bf16.msra.mxu0 %v1936
        %6094 = vmatprep.subr.bf16.mxu0 0
        %6095 = vmatpush1.bf16.msra.mxu0 %v1937
        %6096 = vmatprep.subr.bf16.mxu0 0
        %6097 = vmatpush1.bf16.msra.mxu0 %v1938
        %6098 = vmatprep.subr.bf16.mxu0 0
        %6099 = vmatpush1.bf16.msra.mxu0 %v1939
        %6100 = vmatprep.subr.bf16.mxu0 0
        %6101 = vmatpush1.bf16.msra.mxu0 %v1940
        %6102 = vmatprep.subr.bf16.mxu0 0
        %6103 = vmatpush1.bf16.msra.mxu0 %v1941
        %6104 = vmatprep.subr.bf16.mxu0 0
        %6105 = vmatpush1.bf16.msra.mxu0 %v1942
        %6106 = vmatprep.subr.bf16.mxu0 0
        %6107 = vmatpush1.bf16.msra.mxu0 %v1943
        %6108 = vmatprep.subr.bf16.mxu0 0
        %6109 = vmatpush1.bf16.msra.mxu0 %v1944
        %6110 = vmatprep.subr.bf16.mxu0 0
        %6111 = vmatpush1.bf16.msra.mxu0 %v1945
        %6112 = vmatprep.subr.bf16.mxu0 0
        %6113 = vmatpush1.bf16.msra.mxu0 %v1946
        %6114 = vmatprep.subr.bf16.mxu0 0
        %6115 = vmatpush1.bf16.msra.mxu0 %v1947
        %6116 = vmatprep.mubr.bf16.mxu0 %v3312
        %6117 = vmatmul.mubr.bf16.gmra.mrb[0].mxu0 %v3310
        %v6118 = vpop.f32.mrb[0].mxu0
        %v6119 = vadd.f32 %v6079, %v6118
        %v6120 = vpop.f32.mrb[0].mxu0
        %v6121 = vpop.f32.mrb[0].mxu0
        %v6122 = vpop.f32.mrb[0].mxu0
        %6123 = vdwg.mxu0
        %6124 = vmatprep.subr.bf16.mxu0 0
        %6125 = vmatpush1.bf16.msra.mxu0 %v1948
        %6126 = vmatprep.subr.bf16.mxu0 0
        %6127 = vmatpush1.bf16.msra.mxu0 %v1949
        %6128 = vmatprep.subr.bf16.mxu0 0
        %6129 = vmatpush1.bf16.msra.mxu0 %v1950
        %6130 = vmatprep.subr.bf16.mxu0 0
        %6131 = vmatpush1.bf16.msra.mxu0 %v1951
        %6132 = vmatprep.subr.bf16.mxu0 0
        %6133 = vmatpush1.bf16.msra.mxu0 %v1952
        %6134 = vmatprep.subr.bf16.mxu0 0
        %6135 = vmatpush1.bf16.msra.mxu0 %v1953
        %6136 = vmatprep.subr.bf16.mxu0 0
        %6137 = vmatpush1.bf16.msra.mxu0 %v1954
        %6138 = vmatprep.subr.bf16.mxu0 0
        %6139 = vmatpush1.bf16.msra.mxu0 %v1955
        %6140 = vmatprep.subr.bf16.mxu0 0
        %6141 = vmatpush1.bf16.msra.mxu0 %v1956
        %6142 = vmatprep.subr.bf16.mxu0 0
        %6143 = vmatpush1.bf16.msra.mxu0 %v1957
        %6144 = vmatprep.subr.bf16.mxu0 0
        %6145 = vmatpush1.bf16.msra.mxu0 %v1958
        %6146 = vmatprep.subr.bf16.mxu0 0
        %6147 = vmatpush1.bf16.msra.mxu0 %v1959
        %6148 = vmatprep.subr.bf16.mxu0 0
        %6149 = vmatpush1.bf16.msra.mxu0 %v1960
        %6150 = vmatprep.subr.bf16.mxu0 0
        %6151 = vmatpush1.bf16.msra.mxu0 %v1961
        %6152 = vmatprep.subr.bf16.mxu0 0
        %6153 = vmatpush1.bf16.msra.mxu0 %v1962
        %6154 = vmatprep.subr.bf16.mxu0 0
        %6155 = vmatpush1.bf16.msra.mxu0 %v1963
        %6156 = vmatprep.mubr.bf16.mxu0 %v3350
        %6157 = vmatmul.mubr.bf16.gmra.mrb[0].mxu0 %v3336
        %v6158 = vpop.f32.mrb[0].mxu0
        %v6159 = vadd.f32 %v6119, %v6158
        %v6160 = vpop.f32.mrb[0].mxu0
        %v6161 = vpop.f32.mrb[0].mxu0
        %v6162 = vpop.f32.mrb[0].mxu0
        %6163 = vdwg.mxu0
        %6164 = vmatprep.subr.bf16.mxu0 0
        %6165 = vmatpush1.bf16.msra.mxu0 %v1964
        %6166 = vmatprep.subr.bf16.mxu0 0
        %6167 = vmatpush1.bf16.msra.mxu0 %v1965
        %6168 = vmatprep.subr.bf16.mxu0 0
        %6169 = vmatpush1.bf16.msra.mxu0 %v1966
        %6170 = vmatprep.subr.bf16.mxu0 0
        %6171 = vmatpush1.bf16.msra.mxu0 %v1967
        %6172 = vmatprep.subr.bf16.mxu0 0
        %6173 = vmatpush1.bf16.msra.mxu0 %v1968
        %6174 = vmatprep.subr.bf16.mxu0 0
        %6175 = vmatpush1.bf16.msra.mxu0 %v1969
        %6176 = vmatprep.subr.bf16.mxu0 0
        %6177 = vmatpush1.bf16.msra.mxu0 %v1970
        %6178 = vmatprep.subr.bf16.mxu0 0
        %6179 = vmatpush1.bf16.msra.mxu0 %v1971
        %6180 = vmatprep.subr.bf16.mxu0 0
        %6181 = vmatpush1.bf16.msra.mxu0 %v1972
        %6182 = vmatprep.subr.bf16.mxu0 0
        %6183 = vmatpush1.bf16.msra.mxu0 %v1973
        %6184 = vmatprep.subr.bf16.mxu0 0
        %6185 = vmatpush1.bf16.msra.mxu0 %v1974
        %6186 = vmatprep.subr.bf16.mxu0 0
        %6187 = vmatpush1.bf16.msra.mxu0 %v1975
        %6188 = vmatprep.subr.bf16.mxu0 0
        %6189 = vmatpush1.bf16.msra.mxu0 %v1976
        %6190 = vmatprep.subr.bf16.mxu0 0
        %6191 = vmatpush1.bf16.msra.mxu0 %v1977
        %6192 = vmatprep.subr.bf16.mxu0 0
        %6193 = vmatpush1.bf16.msra.mxu0 %v1978
        %6194 = vmatprep.subr.bf16.mxu0 0
        %6195 = vmatpush1.bf16.msra.mxu0 %v1979
        %6196 = vmatprep.mubr.bf16.mxu0 %v3360
        %6197 = vmatmul.mubr.bf16.gmra.mrb[0].mxu0 %v3358
        %v6198 = vpop.f32.mrb[0].mxu0
        %v6199 = vadd.f32 %v6159, %v6198
        %v6200 = vpop.f32.mrb[0].mxu0
        %v6201 = vpop.f32.mrb[0].mxu0
        %v6202 = vpop.f32.mrb[0].mxu0
        %6203 = vdwg.mxu0
        %6204 = vmatprep.subr.bf16.mxu0 0
        %6205 = vmatpush1.bf16.msra.mxu0 %v1980
        %6206 = vmatprep.subr.bf16.mxu0 0
        %6207 = vmatpush1.bf16.msra.mxu0 %v1981
        %6208 = vmatprep.subr.bf16.mxu0 0
        %6209 = vmatpush1.bf16.msra.mxu0 %v1982
        %6210 = vmatprep.subr.bf16.mxu0 0
        %6211 = vmatpush1.bf16.msra.mxu0 %v1983
        %6212 = vmatprep.subr.bf16.mxu0 0
        %6213 = vmatpush1.bf16.msra.mxu0 %v1984
        %6214 = vmatprep.subr.bf16.mxu0 0
        %6215 = vmatpush1.bf16.msra.mxu0 %v1985
        %6216 = vmatprep.subr.bf16.mxu0 0
        %6217 = vmatpush1.bf16.msra.mxu0 %v1986
        %6218 = vmatprep.subr.bf16.mxu0 0
        %6219 = vmatpush1.bf16.msra.mxu0 %v1987
        %6220 = vmatprep.subr.bf16.mxu0 0
        %6221 = vmatpush1.bf16.msra.mxu0 %v1988
        %6222 = vmatprep.subr.bf16.mxu0 0
        %6223 = vmatpush1.bf16.msra.mxu0 %v1989
        %6224 = vmatprep.subr.bf16.mxu0 0
        %6225 = vmatpush1.bf16.msra.mxu0 %v1990
        %6226 = vmatprep.subr.bf16.mxu0 0
        %6227 = vmatpush1.bf16.msra.mxu0 %v1991
        %6228 = vmatprep.subr.bf16.mxu0 0
        %6229 = vmatpush1.bf16.msra.mxu0 %v1992
        %6230 = vmatprep.subr.bf16.mxu0 0
        %6231 = vmatpush1.bf16.msra.mxu0 %v1993
        %6232 = vmatprep.subr.bf16.mxu0 0
        %6233 = vmatpush1.bf16.msra.mxu0 %v1994
        %6234 = vmatprep.subr.bf16.mxu0 0
        %6235 = vmatpush1.bf16.msra.mxu0 %v1995
        %6236 = vmatprep.mubr.bf16.mxu0 %v3357
        %6237 = vmatmul.mubr.bf16.gmra.mrb[0].mxu0 %v3343
        %v6238 = vpop.f32.mrb[0].mxu0
        %v6239 = vadd.f32 %v6199, %v6238
        %v6240 = vpop.f32.mrb[0].mxu0
        %v6241 = vpop.f32.mrb[0].mxu0
        %v6242 = vpop.f32.mrb[0].mxu0
        %6243 = vdwg.mxu0
        %6244 = vmatprep.subr.bf16.mxu0 0
        %6245 = vmatpush1.bf16.msra.mxu0 %v1996
        %6246 = vmatprep.subr.bf16.mxu0 0
        %6247 = vmatpush1.bf16.msra.mxu0 %v1997
        %6248 = vmatprep.subr.bf16.mxu0 0
        %6249 = vmatpush1.bf16.msra.mxu0 %v1998
        %6250 = vmatprep.subr.bf16.mxu0 0
        %6251 = vmatpush1.bf16.msra.mxu0 %v1999
        %6252 = vmatprep.subr.bf16.mxu0 0
        %6253 = vmatpush1.bf16.msra.mxu0 %v2000
        %6254 = vmatprep.subr.bf16.mxu0 0
        %6255 = vmatpush1.bf16.msra.mxu0 %v2001
        %6256 = vmatprep.subr.bf16.mxu0 0
        %6257 = vmatpush1.bf16.msra.mxu0 %v2002
        %6258 = vmatprep.subr.bf16.mxu0 0
        %6259 = vmatpush1.bf16.msra.mxu0 %v2003
        %6260 = vmatprep.subr.bf16.mxu0 0
        %6261 = vmatpush1.bf16.msra.mxu0 %v2004
        %6262 = vmatprep.subr.bf16.mxu0 0
        %6263 = vmatpush1.bf16.msra.mxu0 %v2005
        %6264 = vmatprep.subr.bf16.mxu0 0
        %6265 = vmatpush1.bf16.msra.mxu0 %v2006
        %6266 = vmatprep.subr.bf16.mxu0 0
        %6267 = vmatpush1.bf16.msra.mxu0 %v2007
        %6268 = vmatprep.subr.bf16.mxu0 0
        %6269 = vmatpush1.bf16.msra.mxu0 %v2008
        %6270 = vmatprep.subr.bf16.mxu0 0
        %6271 = vmatpush1.bf16.msra.mxu0 %v2009
        %6272 = vmatprep.subr.bf16.mxu0 0
        %6273 = vmatpush1.bf16.msra.mxu0 %v2010
        %6274 = vmatprep.subr.bf16.mxu0 0
        %6275 = vmatpush1.bf16.msra.mxu0 %v2011
        %6276 = vmatprep.mubr.bf16.mxu0 %v3361
        %6277 = vmatmul.mubr.bf16.gmra.mrb[0].mxu0 %v3359
        %v6278 = vpop.f32.mrb[0].mxu0
        %v6279 = vadd.f32 %v6239, %v6278
        %v6280 = vpop.f32.mrb[0].mxu0
        %v6281 = vpop.f32.mrb[0].mxu0
        %v6282 = vpop.f32.mrb[0].mxu0
        %6283 = vdwg.mxu0
        %6284 = vmatprep.subr.bf16.mxu0 0
        %6285 = vmatpush1.bf16.msra.mxu0 %v2012
        %6286 = vmatprep.subr.bf16.mxu0 0
        %6287 = vmatpush1.bf16.msra.mxu0 %v2013
        %6288 = vmatprep.subr.bf16.mxu0 0
        %6289 = vmatpush1.bf16.msra.mxu0 %v2014
        %6290 = vmatprep.subr.bf16.mxu0 0
        %6291 = vmatpush1.bf16.msra.mxu0 %v2015
        %6292 = vmatprep.subr.bf16.mxu0 0
        %6293 = vmatpush1.bf16.msra.mxu0 %v2016
        %6294 = vmatprep.subr.bf16.mxu0 0
        %6295 = vmatpush1.bf16.msra.mxu0 %v2017
        %6296 = vmatprep.subr.bf16.mxu0 0
        %6297 = vmatpush1.bf16.msra.mxu0 %v2018
        %6298 = vmatprep.subr.bf16.mxu0 0
        %6299 = vmatpush1.bf16.msra.mxu0 %v2019
        %6300 = vmatprep.subr.bf16.mxu0 0
        %6301 = vmatpush1.bf16.msra.mxu0 %v2020
        %6302 = vmatprep.subr.bf16.mxu0 0
        %6303 = vmatpush1.bf16.msra.mxu0 %v2021
        %6304 = vmatprep.subr.bf16.mxu0 0
        %6305 = vmatpush1.bf16.msra.mxu0 %v2022
        %6306 = vmatprep.subr.bf16.mxu0 0
        %6307 = vmatpush1.bf16.msra.mxu0 %v2023
        %6308 = vmatprep.subr.bf16.mxu0 0
        %6309 = vmatpush1.bf16.msra.mxu0 %v2024
        %6310 = vmatprep.subr.bf16.mxu0 0
        %6311 = vmatpush1.bf16.msra.mxu0 %v2025
        %6312 = vmatprep.subr.bf16.mxu0 0
        %6313 = vmatpush1.bf16.msra.mxu0 %v2026
        %6314 = vmatprep.subr.bf16.mxu0 0
        %6315 = vmatpush1.bf16.msra.mxu0 %v2027
        %6316 = vmatprep.mubr.bf16.mxu0 %v3399
        %6317 = vmatmul.mubr.bf16.gmra.mrb[0].mxu0 %v3385
        %v6318 = vpop.f32.mrb[0].mxu0
        %v6319 = vadd.f32 %v6279, %v6318
        %v6320 = vpop.f32.mrb[0].mxu0
        %v6321 = vpop.f32.mrb[0].mxu0
        %v6322 = vpop.f32.mrb[0].mxu0
        %6323 = vdwg.mxu0
        %6324 = vmatprep.subr.bf16.mxu0 0
        %6325 = vmatpush1.bf16.msra.mxu0 %v2028
        %6326 = vmatprep.subr.bf16.mxu0 0
        %6327 = vmatpush1.bf16.msra.mxu0 %v2029
        %6328 = vmatprep.subr.bf16.mxu0 0
        %6329 = vmatpush1.bf16.msra.mxu0 %v2030
        %6330 = vmatprep.subr.bf16.mxu0 0
        %6331 = vmatpush1.bf16.msra.mxu0 %v2031
        %6332 = vmatprep.subr.bf16.mxu0 0
        %6333 = vmatpush1.bf16.msra.mxu0 %v2032
        %6334 = vmatprep.subr.bf16.mxu0 0
        %6335 = vmatpush1.bf16.msra.mxu0 %v2033
        %6336 = vmatprep.subr.bf16.mxu0 0
        %6337 = vmatpush1.bf16.msra.mxu0 %v2034
        %6338 = vmatprep.subr.bf16.mxu0 0
        %6339 = vmatpush1.bf16.msra.mxu0 %v2035
        %6340 = vmatprep.subr.bf16.mxu0 0
        %6341 = vmatpush1.bf16.msra.mxu0 %v2036
        %6342 = vmatprep.subr.bf16.mxu0 0
        %6343 = vmatpush1.bf16.msra.mxu0 %v2037
        %6344 = vmatprep.subr.bf16.mxu0 0
        %6345 = vmatpush1.bf16.msra.mxu0 %v2038
        %6346 = vmatprep.subr.bf16.mxu0 0
        %6347 = vmatpush1.bf16.msra.mxu0 %v2039
        %6348 = vmatprep.subr.bf16.mxu0 0
        %6349 = vmatpush1.bf16.msra.mxu0 %v2040
        %6350 = vmatprep.subr.bf16.mxu0 0
        %6351 = vmatpush1.bf16.msra.mxu0 %v2041
        %6352 = vmatprep.subr.bf16.mxu0 0
        %6353 = vmatpush1.bf16.msra.mxu0 %v2042
        %6354 = vmatprep.subr.bf16.mxu0 0
        %6355 = vmatpush1.bf16.msra.mxu0 %v2043
        %6356 = vmatprep.mubr.bf16.mxu0 %v3409
        %6357 = vmatmul.mubr.bf16.gmra.mrb[0].mxu0 %v3407
        %v6358 = vpop.f32.mrb[0].mxu0
        %v6359 = vadd.f32 %v6319, %v6358
        %v6360 = vpop.f32.mrb[0].mxu0
        %v6361 = vpop.f32.mrb[0].mxu0
        %v6362 = vpop.f32.mrb[0].mxu0
        %6363 = vdwg.mxu0
        %6364 = vmatprep.subr.bf16.mxu0 0
        %6365 = vmatpush1.bf16.msra.mxu0 %v2044
        %6366 = vmatprep.subr.bf16.mxu0 0
        %6367 = vmatpush1.bf16.msra.mxu0 %v2045
        %6368 = vmatprep.subr.bf16.mxu0 0
        %6369 = vmatpush1.bf16.msra.mxu0 %v2046
        %6370 = vmatprep.subr.bf16.mxu0 0
        %6371 = vmatpush1.bf16.msra.mxu0 %v2047
        %6372 = vmatprep.subr.bf16.mxu0 0
        %6373 = vmatpush1.bf16.msra.mxu0 %v2048
        %6374 = vmatprep.subr.bf16.mxu0 0
        %6375 = vmatpush1.bf16.msra.mxu0 %v2049
        %6376 = vmatprep.subr.bf16.mxu0 0
        %6377 = vmatpush1.bf16.msra.mxu0 %v2050
        %6378 = vmatprep.subr.bf16.mxu0 0
        %6379 = vmatpush1.bf16.msra.mxu0 %v2051
        %6380 = vmatprep.subr.bf16.mxu0 0
        %6381 = vmatpush1.bf16.msra.mxu0 %v2052
        %6382 = vmatprep.subr.bf16.mxu0 0
        %6383 = vmatpush1.bf16.msra.mxu0 %v2053
        %6384 = vmatprep.subr.bf16.mxu0 0
        %6385 = vmatpush1.bf16.msra.mxu0 %v2054
        %6386 = vmatprep.subr.bf16.mxu0 0
        %6387 = vmatpush1.bf16.msra.mxu0 %v2055
        %6388 = vmatprep.subr.bf16.mxu0 0
        %6389 = vmatpush1.bf16.msra.mxu0 %v2056
        %6390 = vmatprep.subr.bf16.mxu0 0
        %6391 = vmatpush1.bf16.msra.mxu0 %v2057
        %6392 = vmatprep.subr.bf16.mxu0 0
        %6393 = vmatpush1.bf16.msra.mxu0 %v2058
        %6394 = vmatprep.subr.bf16.mxu0 0
        %6395 = vmatpush1.bf16.msra.mxu0 %v2059
        %6396 = vmatprep.mubr.bf16.mxu0 %v3406
        %6397 = vmatmul.mubr.bf16.gmra.mrb[0].mxu0 %v3392
        %v6398 = vpop.f32.mrb[0].mxu0
        %v6399 = vadd.f32 %v6359, %v6398
        %v6400 = vpop.f32.mrb[0].mxu0
        %v6401 = vpop.f32.mrb[0].mxu0
        %v6402 = vpop.f32.mrb[0].mxu0
        %6403 = vdwg.mxu0
        %6404 = vmatprep.subr.bf16.mxu0 0
        %6405 = vmatpush1.bf16.msra.mxu0 %v2060
        %6406 = vmatprep.subr.bf16.mxu0 0
        %6407 = vmatpush1.bf16.msra.mxu0 %v2061
        %6408 = vmatprep.subr.bf16.mxu0 0
        %6409 = vmatpush1.bf16.msra.mxu0 %v2062
        %6410 = vmatprep.subr.bf16.mxu0 0
        %6411 = vmatpush1.bf16.msra.mxu0 %v2063
        %6412 = vmatprep.subr.bf16.mxu0 0
        %6413 = vmatpush1.bf16.msra.mxu0 %v2064
        %6414 = vmatprep.subr.bf16.mxu0 0
        %6415 = vmatpush1.bf16.msra.mxu0 %v2065
        %6416 = vmatprep.subr.bf16.mxu0 0
        %6417 = vmatpush1.bf16.msra.mxu0 %v2066
        %6418 = vmatprep.subr.bf16.mxu0 0
        %6419 = vmatpush1.bf16.msra.mxu0 %v2067
        %6420 = vmatprep.subr.bf16.mxu0 0
        %6421 = vmatpush1.bf16.msra.mxu0 %v2068
        %6422 = vmatprep.subr.bf16.mxu0 0
        %6423 = vmatpush1.bf16.msra.mxu0 %v2069
        %6424 = vmatprep.subr.bf16.mxu0 0
        %6425 = vmatpush1.bf16.msra.mxu0 %v2070
        %6426 = vmatprep.subr.bf16.mxu0 0
        %6427 = vmatpush1.bf16.msra.mxu0 %v2071
        %6428 = vmatprep.subr.bf16.mxu0 0
        %6429 = vmatpush1.bf16.msra.mxu0 %v2072
        %6430 = vmatprep.subr.bf16.mxu0 0
        %6431 = vmatpush1.bf16.msra.mxu0 %v2073
        %6432 = vmatprep.subr.bf16.mxu0 0
        %6433 = vmatpush1.bf16.msra.mxu0 %v2074
        %6434 = vmatprep.subr.bf16.mxu0 0
        %6435 = vmatpush1.bf16.msra.mxu0 %v2075
        %6436 = vmatprep.mubr.bf16.mxu0 %v3410
        %6437 = vmatmul.mubr.bf16.gmra.mrb[0].mxu0 %v3408
        %v6438 = vpop.f32.mrb[0].mxu0
        %v6439 = vadd.f32 %v6399, %v6438
        %v6440 = vpop.f32.mrb[0].mxu0
        %v6441 = vpop.f32.mrb[0].mxu0
        %v6442 = vpop.f32.mrb[0].mxu0
        %6443 = vdwg.mxu0
        %6444 = vmatprep.subr.bf16.mxu0 0
        %6445 = vmatpush1.bf16.msra.mxu0 %v2076
        %6446 = vmatprep.subr.bf16.mxu0 0
        %6447 = vmatpush1.bf16.msra.mxu0 %v2077
        %6448 = vmatprep.subr.bf16.mxu0 0
        %6449 = vmatpush1.bf16.msra.mxu0 %v2078
        %6450 = vmatprep.subr.bf16.mxu0 0
        %6451 = vmatpush1.bf16.msra.mxu0 %v2079
        %6452 = vmatprep.subr.bf16.mxu0 0
        %6453 = vmatpush1.bf16.msra.mxu0 %v2080
        %6454 = vmatprep.subr.bf16.mxu0 0
        %6455 = vmatpush1.bf16.msra.mxu0 %v2081
        %6456 = vmatprep.subr.bf16.mxu0 0
        %6457 = vmatpush1.bf16.msra.mxu0 %v2082
        %6458 = vmatprep.subr.bf16.mxu0 0
        %6459 = vmatpush1.bf16.msra.mxu0 %v2083
        %6460 = vmatprep.subr.bf16.mxu0 0
        %6461 = vmatpush1.bf16.msra.mxu0 %v2084
        %6462 = vmatprep.subr.bf16.mxu0 0
        %6463 = vmatpush1.bf16.msra.mxu0 %v2085
        %6464 = vmatprep.subr.bf16.mxu0 0
        %6465 = vmatpush1.bf16.msra.mxu0 %v2086
        %6466 = vmatprep.subr.bf16.mxu0 0
        %6467 = vmatpush1.bf16.msra.mxu0 %v2087
        %6468 = vmatprep.subr.bf16.mxu0 0
        %6469 = vmatpush1.bf16.msra.mxu0 %v2088
        %6470 = vmatprep.subr.bf16.mxu0 0
        %6471 = vmatpush1.bf16.msra.mxu0 %v2089
        %6472 = vmatprep.subr.bf16.mxu0 0
        %6473 = vmatpush1.bf16.msra.mxu0 %v2090
        %6474 = vmatprep.subr.bf16.mxu0 0
        %6475 = vmatpush1.bf16.msra.mxu0 %v2091
        %6476 = vmatprep.mubr.bf16.mxu0 %v3448
        %6477 = vmatmul.mubr.bf16.gmra.mrb[0].mxu0 %v3434
        %v6478 = vpop.f32.mrb[0].mxu0
        %v6479 = vadd.f32 %v6439, %v6478
        %v6480 = vpop.f32.mrb[0].mxu0
        %v6481 = vpop.f32.mrb[0].mxu0
        %v6482 = vpop.f32.mrb[0].mxu0
        %6483 = vdwg.mxu0
        %6484 = vmatprep.subr.bf16.mxu0 0
        %6485 = vmatpush1.bf16.msra.mxu0 %v2092
        %6486 = vmatprep.subr.bf16.mxu0 0
        %6487 = vmatpush1.bf16.msra.mxu0 %v2093
        %6488 = vmatprep.subr.bf16.mxu0 0
        %6489 = vmatpush1.bf16.msra.mxu0 %v2094
        %6490 = vmatprep.subr.bf16.mxu0 0
        %6491 = vmatpush1.bf16.msra.mxu0 %v2095
        %6492 = vmatprep.subr.bf16.mxu0 0
        %6493 = vmatpush1.bf16.msra.mxu0 %v2096
        %6494 = vmatprep.subr.bf16.mxu0 0
        %6495 = vmatpush1.bf16.msra.mxu0 %v2097
        %6496 = vmatprep.subr.bf16.mxu0 0
        %6497 = vmatpush1.bf16.msra.mxu0 %v2098
        %6498 = vmatprep.subr.bf16.mxu0 0
        %6499 = vmatpush1.bf16.msra.mxu0 %v2099
        %6500 = vmatprep.subr.bf16.mxu0 0
        %6501 = vmatpush1.bf16.msra.mxu0 %v2100
        %6502 = vmatprep.subr.bf16.mxu0 0
        %6503 = vmatpush1.bf16.msra.mxu0 %v2101
        %6504 = vmatprep.subr.bf16.mxu0 0
        %6505 = vmatpush1.bf16.msra.mxu0 %v2102
        %6506 = vmatprep.subr.bf16.mxu0 0
        %6507 = vmatpush1.bf16.msra.mxu0 %v2103
        %6508 = vmatprep.subr.bf16.mxu0 0
        %6509 = vmatpush1.bf16.msra.mxu0 %v2104
        %6510 = vmatprep.subr.bf16.mxu0 0
        %6511 = vmatpush1.bf16.msra.mxu0 %v2105
        %6512 = vmatprep.subr.bf16.mxu0 0
        %6513 = vmatpush1.bf16.msra.mxu0 %v2106
        %6514 = vmatprep.subr.bf16.mxu0 0
        %6515 = vmatpush1.bf16.msra.mxu0 %v2107
        %6516 = vmatprep.mubr.bf16.mxu0 %v3458
        %6517 = vmatmul.mubr.bf16.gmra.mrb[0].mxu0 %v3456
        %v6518 = vpop.f32.mrb[0].mxu0
        %v6519 = vadd.f32 %v6479, %v6518
        %v6520 = vpop.f32.mrb[0].mxu0
        %v6521 = vpop.f32.mrb[0].mxu0
        %v6522 = vpop.f32.mrb[0].mxu0
        %6523 = vdwg.mxu0
        %6524 = vmatprep.subr.bf16.mxu0 0
        %6525 = vmatpush1.bf16.msra.mxu0 %v2108
        %6526 = vmatprep.subr.bf16.mxu0 0
        %6527 = vmatpush1.bf16.msra.mxu0 %v2109
        %6528 = vmatprep.subr.bf16.mxu0 0
        %6529 = vmatpush1.bf16.msra.mxu0 %v2110
        %6530 = vmatprep.subr.bf16.mxu0 0
        %6531 = vmatpush1.bf16.msra.mxu0 %v2111
        %6532 = vmatprep.subr.bf16.mxu0 0
        %6533 = vmatpush1.bf16.msra.mxu0 %v2112
        %6534 = vmatprep.subr.bf16.mxu0 0
        %6535 = vmatpush1.bf16.msra.mxu0 %v2113
        %6536 = vmatprep.subr.bf16.mxu0 0
        %6537 = vmatpush1.bf16.msra.mxu0 %v2114
        %6538 = vmatprep.subr.bf16.mxu0 0
        %6539 = vmatpush1.bf16.msra.mxu0 %v2115
        %6540 = vmatprep.subr.bf16.mxu0 0
        %6541 = vmatpush1.bf16.msra.mxu0 %v2116
        %6542 = vmatprep.subr.bf16.mxu0 0
        %6543 = vmatpush1.bf16.msra.mxu0 %v2117
        %6544 = vmatprep.subr.bf16.mxu0 0
        %6545 = vmatpush1.bf16.msra.mxu0 %v2118
        %6546 = vmatprep.subr.bf16.mxu0 0
        %6547 = vmatpush1.bf16.msra.mxu0 %v2119
        %6548 = vmatprep.subr.bf16.mxu0 0
        %6549 = vmatpush1.bf16.msra.mxu0 %v2120
        %6550 = vmatprep.subr.bf16.mxu0 0
        %6551 = vmatpush1.bf16.msra.mxu0 %v2121
        %6552 = vmatprep.subr.bf16.mxu0 0
        %6553 = vmatpush1.bf16.msra.mxu0 %v2122
        %6554 = vmatprep.subr.bf16.mxu0 0
        %6555 = vmatpush1.bf16.msra.mxu0 %v2123
        %6556 = vmatprep.mubr.bf16.mxu0 %v3455
        %6557 = vmatmul.mubr.bf16.gmra.mrb[0].mxu0 %v3441
        %v6558 = vpop.f32.mrb[0].mxu0
        %v6559 = vadd.f32 %v6519, %v6558
        %v6560 = vpop.f32.mrb[0].mxu0
        %v6561 = vpop.f32.mrb[0].mxu0
        %v6562 = vpop.f32.mrb[0].mxu0
        %6563 = vdwg.mxu0
        %6564 = vmatprep.subr.bf16.mxu0 0
        %6565 = vmatpush1.bf16.msra.mxu0 %v2124
        %6566 = vmatprep.subr.bf16.mxu0 0
        %6567 = vmatpush1.bf16.msra.mxu0 %v2125
        %6568 = vmatprep.subr.bf16.mxu0 0
        %6569 = vmatpush1.bf16.msra.mxu0 %v2126
        %6570 = vmatprep.subr.bf16.mxu0 0
        %6571 = vmatpush1.bf16.msra.mxu0 %v2127
        %6572 = vmatprep.subr.bf16.mxu0 0
        %6573 = vmatpush1.bf16.msra.mxu0 %v2128
        %6574 = vmatprep.subr.bf16.mxu0 0
        %6575 = vmatpush1.bf16.msra.mxu0 %v2129
        %6576 = vmatprep.subr.bf16.mxu0 0
        %6577 = vmatpush1.bf16.msra.mxu0 %v2130
        %6578 = vmatprep.subr.bf16.mxu0 0
        %6579 = vmatpush1.bf16.msra.mxu0 %v2131
        %6580 = vmatprep.subr.bf16.mxu0 0
        %6581 = vmatpush1.bf16.msra.mxu0 %v2132
        %6582 = vmatprep.subr.bf16.mxu0 0
        %6583 = vmatpush1.bf16.msra.mxu0 %v2133
        %6584 = vmatprep.subr.bf16.mxu0 0
        %6585 = vmatpush1.bf16.msra.mxu0 %v2134
        %6586 = vmatprep.subr.bf16.mxu0 0
        %6587 = vmatpush1.bf16.msra.mxu0 %v2135
        %6588 = vmatprep.subr.bf16.mxu0 0
        %6589 = vmatpush1.bf16.msra.mxu0 %v2136
        %6590 = vmatprep.subr.bf16.mxu0 0
        %6591 = vmatpush1.bf16.msra.mxu0 %v2137
        %6592 = vmatprep.subr.bf16.mxu0 0
        %6593 = vmatpush1.bf16.msra.mxu0 %v2138
        %6594 = vmatprep.subr.bf16.mxu0 0
        %6595 = vmatpush1.bf16.msra.mxu0 %v2139
        %6596 = vmatprep.mubr.bf16.mxu0 %v3459
        %6597 = vmatmul.mubr.bf16.gmra.mrb[0].mxu0 %v3457
        %v6598 = vpop.f32.mrb[0].mxu0
        %v6599 = vadd.f32 %v6559, %v6598
        %v6600 = vpop.f32.mrb[0].mxu0
        %v6601 = vpop.f32.mrb[0].mxu0
        %v6602 = vpop.f32.mrb[0].mxu0
        %6603 = vdwg.mxu0
        %6604 = vmatprep.subr.bf16.mxu0 0
        %6605 = vmatpush1.bf16.msra.mxu0 %v2140
        %6606 = vmatprep.subr.bf16.mxu0 0
        %6607 = vmatpush1.bf16.msra.mxu0 %v2141
        %6608 = vmatprep.subr.bf16.mxu0 0
        %6609 = vmatpush1.bf16.msra.mxu0 %v2142
        %6610 = vmatprep.subr.bf16.mxu0 0
        %6611 = vmatpush1.bf16.msra.mxu0 %v2143
        %6612 = vmatprep.subr.bf16.mxu0 0
        %6613 = vmatpush1.bf16.msra.mxu0 %v2144
        %6614 = vmatprep.subr.bf16.mxu0 0
        %6615 = vmatpush1.bf16.msra.mxu0 %v2145
        %6616 = vmatprep.subr.bf16.mxu0 0
        %6617 = vmatpush1.bf16.msra.mxu0 %v2146
        %6618 = vmatprep.subr.bf16.mxu0 0
        %6619 = vmatpush1.bf16.msra.mxu0 %v2147
        %6620 = vmatprep.subr.bf16.mxu0 0
        %6621 = vmatpush1.bf16.msra.mxu0 %v2148
        %6622 = vmatprep.subr.bf16.mxu0 0
        %6623 = vmatpush1.bf16.msra.mxu0 %v2149
        %6624 = vmatprep.subr.bf16.mxu0 0
        %6625 = vmatpush1.bf16.msra.mxu0 %v2150
        %6626 = vmatprep.subr.bf16.mxu0 0
        %6627 = vmatpush1.bf16.msra.mxu0 %v2151
        %6628 = vmatprep.subr.bf16.mxu0 0
        %6629 = vmatpush1.bf16.msra.mxu0 %v2152
        %6630 = vmatprep.subr.bf16.mxu0 0
        %6631 = vmatpush1.bf16.msra.mxu0 %v2153
        %6632 = vmatprep.subr.bf16.mxu0 0
        %6633 = vmatpush1.bf16.msra.mxu0 %v2154
        %6634 = vmatprep.subr.bf16.mxu0 0
        %6635 = vmatpush1.bf16.msra.mxu0 %v2155
        %6636 = vmatprep.mubr.bf16.mxu0 %v3497
        %6637 = vmatmul.mubr.bf16.gmra.mrb[0].mxu0 %v3483
        %v6638 = vpop.f32.mrb[0].mxu0
        %v6639 = vadd.f32 %v6599, %v6638
        %v6640 = vpop.f32.mrb[0].mxu0
        %v6641 = vpop.f32.mrb[0].mxu0
        %v6642 = vpop.f32.mrb[0].mxu0
        %6643 = vdwg.mxu0
        %6644 = vmatprep.subr.bf16.mxu0 0
        %6645 = vmatpush1.bf16.msra.mxu0 %v2156
        %6646 = vmatprep.subr.bf16.mxu0 0
        %6647 = vmatpush1.bf16.msra.mxu0 %v2157
        %6648 = vmatprep.subr.bf16.mxu0 0
        %6649 = vmatpush1.bf16.msra.mxu0 %v2158
        %6650 = vmatprep.subr.bf16.mxu0 0
        %6651 = vmatpush1.bf16.msra.mxu0 %v2159
        %6652 = vmatprep.subr.bf16.mxu0 0
        %6653 = vmatpush1.bf16.msra.mxu0 %v2160
        %6654 = vmatprep.subr.bf16.mxu0 0
        %6655 = vmatpush1.bf16.msra.mxu0 %v2161
        %6656 = vmatprep.subr.bf16.mxu0 0
        %6657 = vmatpush1.bf16.msra.mxu0 %v2162
        %6658 = vmatprep.subr.bf16.mxu0 0
        %6659 = vmatpush1.bf16.msra.mxu0 %v2163
        %6660 = vmatprep.subr.bf16.mxu0 0
        %6661 = vmatpush1.bf16.msra.mxu0 %v2164
        %6662 = vmatprep.subr.bf16.mxu0 0
        %6663 = vmatpush1.bf16.msra.mxu0 %v2165
        %6664 = vmatprep.subr.bf16.mxu0 0
        %6665 = vmatpush1.bf16.msra.mxu0 %v2166
        %6666 = vmatprep.subr.bf16.mxu0 0
        %6667 = vmatpush1.bf16.msra.mxu0 %v2167
        %6668 = vmatprep.subr.bf16.mxu0 0
        %6669 = vmatpush1.bf16.msra.mxu0 %v2168
        %6670 = vmatprep.subr.bf16.mxu0 0
        %6671 = vmatpush1.bf16.msra.mxu0 %v2169
        %6672 = vmatprep.subr.bf16.mxu0 0
        %6673 = vmatpush1.bf16.msra.mxu0 %v2170
        %6674 = vmatprep.subr.bf16.mxu0 0
        %6675 = vmatpush1.bf16.msra.mxu0 %v2171
        %6676 = vmatprep.mubr.bf16.mxu0 %v3507
        %6677 = vmatmul.mubr.bf16.gmra.mrb[0].mxu0 %v3505
        %v6678 = vpop.f32.mrb[0].mxu0
        %v6679 = vadd.f32 %v6639, %v6678
        %v6680 = vpop.f32.mrb[0].mxu0
        %v6681 = vpop.f32.mrb[0].mxu0
        %v6682 = vpop.f32.mrb[0].mxu0
        %6683 = vdwg.mxu0
        %6684 = vmatprep.subr.bf16.mxu0 0
        %6685 = vmatpush1.bf16.msra.mxu0 %v2172
        %6686 = vmatprep.subr.bf16.mxu0 0
        %6687 = vmatpush1.bf16.msra.mxu0 %v2173
        %6688 = vmatprep.subr.bf16.mxu0 0
        %6689 = vmatpush1.bf16.msra.mxu0 %v2174
        %6690 = vmatprep.subr.bf16.mxu0 0
        %6691 = vmatpush1.bf16.msra.mxu0 %v2175
        %6692 = vmatprep.subr.bf16.mxu0 0
        %6693 = vmatpush1.bf16.msra.mxu0 %v2176
        %6694 = vmatprep.subr.bf16.mxu0 0
        %6695 = vmatpush1.bf16.msra.mxu0 %v2177
        %6696 = vmatprep.subr.bf16.mxu0 0
        %6697 = vmatpush1.bf16.msra.mxu0 %v2178
        %6698 = vmatprep.subr.bf16.mxu0 0
        %6699 = vmatpush1.bf16.msra.mxu0 %v2179
        %6700 = vmatprep.subr.bf16.mxu0 0
        %6701 = vmatpush1.bf16.msra.mxu0 %v2180
        %6702 = vmatprep.subr.bf16.mxu0 0
        %6703 = vmatpush1.bf16.msra.mxu0 %v2181
        %6704 = vmatprep.subr.bf16.mxu0 0
        %6705 = vmatpush1.bf16.msra.mxu0 %v2182
        %6706 = vmatprep.subr.bf16.mxu0 0
        %6707 = vmatpush1.bf16.msra.mxu0 %v2183
        %6708 = vmatprep.subr.bf16.mxu0 0
        %6709 = vmatpush1.bf16.msra.mxu0 %v2184
        %6710 = vmatprep.subr.bf16.mxu0 0
        %6711 = vmatpush1.bf16.msra.mxu0 %v2185
        %6712 = vmatprep.subr.bf16.mxu0 0
        %6713 = vmatpush1.bf16.msra.mxu0 %v2186
        %6714 = vmatprep.subr.bf16.mxu0 0
        %6715 = vmatpush1.bf16.msra.mxu0 %v2187
        %6716 = vmatprep.mubr.bf16.mxu0 %v3504
        %6717 = vmatmul.mubr.bf16.gmra.mrb[0].mxu0 %v3490
        %v6718 = vpop.f32.mrb[0].mxu0
        %v6719 = vadd.f32 %v6679, %v6718
        %v6720 = vpop.f32.mrb[0].mxu0
        %v6721 = vpop.f32.mrb[0].mxu0
        %v6722 = vpop.f32.mrb[0].mxu0
        %6723 = vdwg.mxu0
        %6724 = vmatprep.subr.bf16.mxu0 0
        %6725 = vmatpush1.bf16.msra.mxu0 %v2188
        %6726 = vmatprep.subr.bf16.mxu0 0
        %6727 = vmatpush1.bf16.msra.mxu0 %v2189
        %6728 = vmatprep.subr.bf16.mxu0 0
        %6729 = vmatpush1.bf16.msra.mxu0 %v2190
        %6730 = vmatprep.subr.bf16.mxu0 0
        %6731 = vmatpush1.bf16.msra.mxu0 %v2191
        %6732 = vmatprep.subr.bf16.mxu0 0
        %6733 = vmatpush1.bf16.msra.mxu0 %v2192
        %6734 = vmatprep.subr.bf16.mxu0 0
        %6735 = vmatpush1.bf16.msra.mxu0 %v2193
        %6736 = vmatprep.subr.bf16.mxu0 0
        %6737 = vmatpush1.bf16.msra.mxu0 %v2194
        %6738 = vmatprep.subr.bf16.mxu0 0
        %6739 = vmatpush1.bf16.msra.mxu0 %v2195
        %6740 = vmatprep.subr.bf16.mxu0 0
        %6741 = vmatpush1.bf16.msra.mxu0 %v2196
        %6742 = vmatprep.subr.bf16.mxu0 0
        %6743 = vmatpush1.bf16.msra.mxu0 %v2197
        %6744 = vmatprep.subr.bf16.mxu0 0
        %6745 = vmatpush1.bf16.msra.mxu0 %v2198
        %6746 = vmatprep.subr.bf16.mxu0 0
        %6747 = vmatpush1.bf16.msra.mxu0 %v2199
        %6748 = vmatprep.subr.bf16.mxu0 0
        %6749 = vmatpush1.bf16.msra.mxu0 %v2200
        %6750 = vmatprep.subr.bf16.mxu0 0
        %6751 = vmatpush1.bf16.msra.mxu0 %v2201
        %6752 = vmatprep.subr.bf16.mxu0 0
        %6753 = vmatpush1.bf16.msra.mxu0 %v2202
        %6754 = vmatprep.subr.bf16.mxu0 0
        %6755 = vmatpush1.bf16.msra.mxu0 %v2203
        %6756 = vmatprep.mubr.bf16.mxu0 %v3508
        %6757 = vmatmul.mubr.bf16.gmra.mrb[0].mxu0 %v3506
        %v6758 = vpop.f32.mrb[0].mxu0
        %v6759 = vadd.f32 %v6719, %v6758
        %v6760 = vpop.f32.mrb[0].mxu0
        %v6761 = vpop.f32.mrb[0].mxu0
        %v6762 = vpop.f32.mrb[0].mxu0
        %6763 = vdwg.mxu0
        %6764 = vmatprep.subr.bf16.mxu0 0
        %6765 = vmatpush1.bf16.msra.mxu0 %v2204
        %6766 = vmatprep.subr.bf16.mxu0 0
        %6767 = vmatpush1.bf16.msra.mxu0 %v2205
        %6768 = vmatprep.subr.bf16.mxu0 0
        %6769 = vmatpush1.bf16.msra.mxu0 %v2206
        %6770 = vmatprep.subr.bf16.mxu0 0
        %6771 = vmatpush1.bf16.msra.mxu0 %v2207
        %6772 = vmatprep.subr.bf16.mxu0 0
        %6773 = vmatpush1.bf16.msra.mxu0 %v2208
        %6774 = vmatprep.subr.bf16.mxu0 0
        %6775 = vmatpush1.bf16.msra.mxu0 %v2209
        %6776 = vmatprep.subr.bf16.mxu0 0
        %6777 = vmatpush1.bf16.msra.mxu0 %v2210
        %6778 = vmatprep.subr.bf16.mxu0 0
        %6779 = vmatpush1.bf16.msra.mxu0 %v2211
        %6780 = vmatprep.subr.bf16.mxu0 0
        %6781 = vmatpush1.bf16.msra.mxu0 %v2212
        %6782 = vmatprep.subr.bf16.mxu0 0
        %6783 = vmatpush1.bf16.msra.mxu0 %v2213
        %6784 = vmatprep.subr.bf16.mxu0 0
        %6785 = vmatpush1.bf16.msra.mxu0 %v2214
        %6786 = vmatprep.subr.bf16.mxu0 0
        %6787 = vmatpush1.bf16.msra.mxu0 %v2215
        %6788 = vmatprep.subr.bf16.mxu0 0
        %6789 = vmatpush1.bf16.msra.mxu0 %v2216
        %6790 = vmatprep.subr.bf16.mxu0 0
        %6791 = vmatpush1.bf16.msra.mxu0 %v2217
        %6792 = vmatprep.subr.bf16.mxu0 0
        %6793 = vmatpush1.bf16.msra.mxu0 %v2218
        %6794 = vmatprep.subr.bf16.mxu0 0
        %6795 = vmatpush1.bf16.msra.mxu0 %v2219
        %6796 = vmatprep.mubr.bf16.mxu0 %v3546
        %6797 = vmatmul.mubr.bf16.gmra.mrb[0].mxu0 %v3532
        %v6798 = vpop.f32.mrb[0].mxu0
        %v6799 = vadd.f32 %v6759, %v6798
        %v6800 = vpop.f32.mrb[0].mxu0
        %v6801 = vpop.f32.mrb[0].mxu0
        %v6802 = vpop.f32.mrb[0].mxu0
        %6803 = vdwg.mxu0
        %6804 = vmatprep.subr.bf16.mxu0 0
        %6805 = vmatpush1.bf16.msra.mxu0 %v2220
        %6806 = vmatprep.subr.bf16.mxu0 0
        %6807 = vmatpush1.bf16.msra.mxu0 %v2221
        %6808 = vmatprep.subr.bf16.mxu0 0
        %6809 = vmatpush1.bf16.msra.mxu0 %v2222
        %6810 = vmatprep.subr.bf16.mxu0 0
        %6811 = vmatpush1.bf16.msra.mxu0 %v2223
        %6812 = vmatprep.subr.bf16.mxu0 0
        %6813 = vmatpush1.bf16.msra.mxu0 %v2224
        %6814 = vmatprep.subr.bf16.mxu0 0
        %6815 = vmatpush1.bf16.msra.mxu0 %v2225
        %6816 = vmatprep.subr.bf16.mxu0 0
        %6817 = vmatpush1.bf16.msra.mxu0 %v2226
        %6818 = vmatprep.subr.bf16.mxu0 0
        %6819 = vmatpush1.bf16.msra.mxu0 %v2227
        %6820 = vmatprep.subr.bf16.mxu0 0
        %6821 = vmatpush1.bf16.msra.mxu0 %v2228
        %6822 = vmatprep.subr.bf16.mxu0 0
        %6823 = vmatpush1.bf16.msra.mxu0 %v2229
        %6824 = vmatprep.subr.bf16.mxu0 0
        %6825 = vmatpush1.bf16.msra.mxu0 %v2230
        %6826 = vmatprep.subr.bf16.mxu0 0
        %6827 = vmatpush1.bf16.msra.mxu0 %v2231
        %6828 = vmatprep.subr.bf16.mxu0 0
        %6829 = vmatpush1.bf16.msra.mxu0 %v2232
        %6830 = vmatprep.subr.bf16.mxu0 0
        %6831 = vmatpush1.bf16.msra.mxu0 %v2233
        %6832 = vmatprep.subr.bf16.mxu0 0
        %6833 = vmatpush1.bf16.msra.mxu0 %v2234
        %6834 = vmatprep.subr.bf16.mxu0 0
        %6835 = vmatpush1.bf16.msra.mxu0 %v2235
        %6836 = vmatprep.mubr.bf16.mxu0 %v3556
        %6837 = vmatmul.mubr.bf16.gmra.mrb[0].mxu0 %v3554
        %v6838 = vpop.f32.mrb[0].mxu0
        %v6839 = vadd.f32 %v6799, %v6838
        %v6840 = vpop.f32.mrb[0].mxu0
        %v6841 = vpop.f32.mrb[0].mxu0
        %v6842 = vpop.f32.mrb[0].mxu0
        %6843 = vdwg.mxu0
        %6844 = vmatprep.subr.bf16.mxu0 0
        %6845 = vmatpush1.bf16.msra.mxu0 %v2236
        %6846 = vmatprep.subr.bf16.mxu0 0
        %6847 = vmatpush1.bf16.msra.mxu0 %v2237
        %6848 = vmatprep.subr.bf16.mxu0 0
        %6849 = vmatpush1.bf16.msra.mxu0 %v2238
        %6850 = vmatprep.subr.bf16.mxu0 0
        %6851 = vmatpush1.bf16.msra.mxu0 %v2239
        %6852 = vmatprep.subr.bf16.mxu0 0
        %6853 = vmatpush1.bf16.msra.mxu0 %v2240
        %6854 = vmatprep.subr.bf16.mxu0 0
        %6855 = vmatpush1.bf16.msra.mxu0 %v2241
        %6856 = vmatprep.subr.bf16.mxu0 0
        %6857 = vmatpush1.bf16.msra.mxu0 %v2242
        %6858 = vmatprep.subr.bf16.mxu0 0
        %6859 = vmatpush1.bf16.msra.mxu0 %v2243
        %6860 = vmatprep.subr.bf16.mxu0 0
        %6861 = vmatpush1.bf16.msra.mxu0 %v2244
        %6862 = vmatprep.subr.bf16.mxu0 0
        %6863 = vmatpush1.bf16.msra.mxu0 %v2245
        %6864 = vmatprep.subr.bf16.mxu0 0
        %6865 = vmatpush1.bf16.msra.mxu0 %v2246
        %6866 = vmatprep.subr.bf16.mxu0 0
        %6867 = vmatpush1.bf16.msra.mxu0 %v2247
        %6868 = vmatprep.subr.bf16.mxu0 0
        %6869 = vmatpush1.bf16.msra.mxu0 %v2248
        %6870 = vmatprep.subr.bf16.mxu0 0
        %6871 = vmatpush1.bf16.msra.mxu0 %v2249
        %6872 = vmatprep.subr.bf16.mxu0 0
        %6873 = vmatpush1.bf16.msra.mxu0 %v2250
        %6874 = vmatprep.subr.bf16.mxu0 0
        %6875 = vmatpush1.bf16.msra.mxu0 %v2251
        %6876 = vmatprep.mubr.bf16.mxu0 %v3553
        %6877 = vmatmul.mubr.bf16.gmra.mrb[0].mxu0 %v3539
        %v6878 = vpop.f32.mrb[0].mxu0
        %v6879 = vadd.f32 %v6839, %v6878
        %v6880 = vpop.f32.mrb[0].mxu0
        %v6881 = vpop.f32.mrb[0].mxu0
        %v6882 = vpop.f32.mrb[0].mxu0
        %6883 = vdwg.mxu0
        %6884 = vmatprep.subr.bf16.mxu0 0
        %6885 = vmatpush1.bf16.msra.mxu0 %v2252
        %6886 = vmatprep.subr.bf16.mxu0 0
        %6887 = vmatpush1.bf16.msra.mxu0 %v2253
        %6888 = vmatprep.subr.bf16.mxu0 0
        %6889 = vmatpush1.bf16.msra.mxu0 %v2254
        %6890 = vmatprep.subr.bf16.mxu0 0
        %6891 = vmatpush1.bf16.msra.mxu0 %v2255
        %6892 = vmatprep.subr.bf16.mxu0 0
        %6893 = vmatpush1.bf16.msra.mxu0 %v2256
        %6894 = vmatprep.subr.bf16.mxu0 0
        %6895 = vmatpush1.bf16.msra.mxu0 %v2257
        %6896 = vmatprep.subr.bf16.mxu0 0
        %6897 = vmatpush1.bf16.msra.mxu0 %v2258
        %6898 = vmatprep.subr.bf16.mxu0 0
        %6899 = vmatpush1.bf16.msra.mxu0 %v2259
        %6900 = vmatprep.subr.bf16.mxu0 0
        %6901 = vmatpush1.bf16.msra.mxu0 %v2260
        %6902 = vmatprep.subr.bf16.mxu0 0
        %6903 = vmatpush1.bf16.msra.mxu0 %v2261
        %6904 = vmatprep.subr.bf16.mxu0 0
        %6905 = vmatpush1.bf16.msra.mxu0 %v2262
        %6906 = vmatprep.subr.bf16.mxu0 0
        %6907 = vmatpush1.bf16.msra.mxu0 %v2263
        %6908 = vmatprep.subr.bf16.mxu0 0
        %6909 = vmatpush1.bf16.msra.mxu0 %v2264
        %6910 = vmatprep.subr.bf16.mxu0 0
        %6911 = vmatpush1.bf16.msra.mxu0 %v2265
        %6912 = vmatprep.subr.bf16.mxu0 0
        %6913 = vmatpush1.bf16.msra.mxu0 %v2266
        %6914 = vmatprep.subr.bf16.mxu0 0
        %6915 = vmatpush1.bf16.msra.mxu0 %v2267
        %6916 = vmatprep.mubr.bf16.mxu0 %v3557
        %6917 = vmatmul.mubr.bf16.gmra.mrb[0].mxu0 %v3555
        %v6918 = vpop.f32.mrb[0].mxu0
        %v6919 = vadd.f32 %v6879, %v6918
        %v6920 = vpop.f32.mrb[0].mxu0
        %v6921 = vpop.f32.mrb[0].mxu0
        %v6922 = vpop.f32.mrb[0].mxu0
        %6923 = vdwg.mxu0
        %6924 = vmatprep.subr.bf16.mxu0 0
        %6925 = vmatpush1.bf16.msra.mxu0 %v2268
        %6926 = vmatprep.subr.bf16.mxu0 0
        %6927 = vmatpush1.bf16.msra.mxu0 %v2269
        %6928 = vmatprep.subr.bf16.mxu0 0
        %6929 = vmatpush1.bf16.msra.mxu0 %v2270
        %6930 = vmatprep.subr.bf16.mxu0 0
        %6931 = vmatpush1.bf16.msra.mxu0 %v2271
        %6932 = vmatprep.subr.bf16.mxu0 0
        %6933 = vmatpush1.bf16.msra.mxu0 %v2272
        %6934 = vmatprep.subr.bf16.mxu0 0
        %6935 = vmatpush1.bf16.msra.mxu0 %v2273
        %6936 = vmatprep.subr.bf16.mxu0 0
        %6937 = vmatpush1.bf16.msra.mxu0 %v2274
        %6938 = vmatprep.subr.bf16.mxu0 0
        %6939 = vmatpush1.bf16.msra.mxu0 %v2275
        %6940 = vmatprep.subr.bf16.mxu0 0
        %6941 = vmatpush1.bf16.msra.mxu0 %v2276
        %6942 = vmatprep.subr.bf16.mxu0 0
        %6943 = vmatpush1.bf16.msra.mxu0 %v2277
        %6944 = vmatprep.subr.bf16.mxu0 0
        %6945 = vmatpush1.bf16.msra.mxu0 %v2278
        %6946 = vmatprep.subr.bf16.mxu0 0
        %6947 = vmatpush1.bf16.msra.mxu0 %v2279
        %6948 = vmatprep.subr.bf16.mxu0 0
        %6949 = vmatpush1.bf16.msra.mxu0 %v2280
        %6950 = vmatprep.subr.bf16.mxu0 0
        %6951 = vmatpush1.bf16.msra.mxu0 %v2281
        %6952 = vmatprep.subr.bf16.mxu0 0
        %6953 = vmatpush1.bf16.msra.mxu0 %v2282
        %6954 = vmatprep.subr.bf16.mxu0 0
        %6955 = vmatpush1.bf16.msra.mxu0 %v2283
        %6956 = vmatprep.mubr.bf16.mxu0 %v3595
        %6957 = vmatmul.mubr.bf16.gmra.mrb[0].mxu0 %v3581
        %v6958 = vpop.f32.mrb[0].mxu0
        %v6959 = vadd.f32 %v6919, %v6958
        %v6960 = vpop.f32.mrb[0].mxu0
        %v6961 = vpop.f32.mrb[0].mxu0
        %v6962 = vpop.f32.mrb[0].mxu0
        %6963 = vdwg.mxu0
        %6964 = vmatprep.subr.bf16.mxu0 0
        %6965 = vmatpush1.bf16.msra.mxu0 %v2284
        %6966 = vmatprep.subr.bf16.mxu0 0
        %6967 = vmatpush1.bf16.msra.mxu0 %v2285
        %6968 = vmatprep.subr.bf16.mxu0 0
        %6969 = vmatpush1.bf16.msra.mxu0 %v2286
        %6970 = vmatprep.subr.bf16.mxu0 0
        %6971 = vmatpush1.bf16.msra.mxu0 %v2287
        %6972 = vmatprep.subr.bf16.mxu0 0
        %6973 = vmatpush1.bf16.msra.mxu0 %v2288
        %6974 = vmatprep.subr.bf16.mxu0 0
        %6975 = vmatpush1.bf16.msra.mxu0 %v2289
        %6976 = vmatprep.subr.bf16.mxu0 0
        %6977 = vmatpush1.bf16.msra.mxu0 %v2290
        %6978 = vmatprep.subr.bf16.mxu0 0
        %6979 = vmatpush1.bf16.msra.mxu0 %v2291
        %6980 = vmatprep.subr.bf16.mxu0 0
        %6981 = vmatpush1.bf16.msra.mxu0 %v2292
        %6982 = vmatprep.subr.bf16.mxu0 0
        %6983 = vmatpush1.bf16.msra.mxu0 %v2293
        %6984 = vmatprep.subr.bf16.mxu0 0
        %6985 = vmatpush1.bf16.msra.mxu0 %v2294
        %6986 = vmatprep.subr.bf16.mxu0 0
        %6987 = vmatpush1.bf16.msra.mxu0 %v2295
        %6988 = vmatprep.subr.bf16.mxu0 0
        %6989 = vmatpush1.bf16.msra.mxu0 %v2296
        %6990 = vmatprep.subr.bf16.mxu0 0
        %6991 = vmatpush1.bf16.msra.mxu0 %v2297
        %6992 = vmatprep.subr.bf16.mxu0 0
        %6993 = vmatpush1.bf16.msra.mxu0 %v2298
        %6994 = vmatprep.subr.bf16.mxu0 0
        %6995 = vmatpush1.bf16.msra.mxu0 %v2299
        %6996 = vmatprep.mubr.bf16.mxu0 %v3605
        %6997 = vmatmul.mubr.bf16.gmra.mrb[0].mxu0 %v3603
        %v6998 = vpop.f32.mrb[0].mxu0
        %v6999 = vadd.f32 %v6959, %v6998
        %v7000 = vpop.f32.mrb[0].mxu0
        %v7001 = vpop.f32.mrb[0].mxu0
        %v7002 = vpop.f32.mrb[0].mxu0
        %7003 = vdwg.mxu0
        %7004 = vmatprep.subr.bf16.mxu0 0
        %7005 = vmatpush1.bf16.msra.mxu0 %v2300
        %7006 = vmatprep.subr.bf16.mxu0 0
        %7007 = vmatpush1.bf16.msra.mxu0 %v2301
        %7008 = vmatprep.subr.bf16.mxu0 0
        %7009 = vmatpush1.bf16.msra.mxu0 %v2302
        %7010 = vmatprep.subr.bf16.mxu0 0
        %7011 = vmatpush1.bf16.msra.mxu0 %v2303
        %7012 = vmatprep.subr.bf16.mxu0 0
        %7013 = vmatpush1.bf16.msra.mxu0 %v2304
        %7014 = vmatprep.subr.bf16.mxu0 0
        %7015 = vmatpush1.bf16.msra.mxu0 %v2305
        %7016 = vmatprep.subr.bf16.mxu0 0
        %7017 = vmatpush1.bf16.msra.mxu0 %v2306
        %7018 = vmatprep.subr.bf16.mxu0 0
        %7019 = vmatpush1.bf16.msra.mxu0 %v2307
        %7020 = vmatprep.subr.bf16.mxu0 0
        %7021 = vmatpush1.bf16.msra.mxu0 %v2308
        %7022 = vmatprep.subr.bf16.mxu0 0
        %7023 = vmatpush1.bf16.msra.mxu0 %v2309
        %7024 = vmatprep.subr.bf16.mxu0 0
        %7025 = vmatpush1.bf16.msra.mxu0 %v2310
        %7026 = vmatprep.subr.bf16.mxu0 0
        %7027 = vmatpush1.bf16.msra.mxu0 %v2311
        %7028 = vmatprep.subr.bf16.mxu0 0
        %7029 = vmatpush1.bf16.msra.mxu0 %v2312
        %7030 = vmatprep.subr.bf16.mxu0 0
        %7031 = vmatpush1.bf16.msra.mxu0 %v2313
        %7032 = vmatprep.subr.bf16.mxu0 0
        %7033 = vmatpush1.bf16.msra.mxu0 %v2314
        %7034 = vmatprep.subr.bf16.mxu0 0
        %7035 = vmatpush1.bf16.msra.mxu0 %v2315
        %7036 = vmatprep.mubr.bf16.mxu0 %v3602
        %7037 = vmatmul.mubr.bf16.gmra.mrb[0].mxu0 %v3588
        %v7038 = vpop.f32.mrb[0].mxu0
        %v7039 = vadd.f32 %v6999, %v7038
        %v7040 = vpop.f32.mrb[0].mxu0
        %v7041 = vpop.f32.mrb[0].mxu0
        %v7042 = vpop.f32.mrb[0].mxu0
        %7043 = vdwg.mxu0
        %7044 = vmatprep.subr.bf16.mxu0 0
        %7045 = vmatpush1.bf16.msra.mxu0 %v2316
        %7046 = vmatprep.subr.bf16.mxu0 0
        %7047 = vmatpush1.bf16.msra.mxu0 %v2317
        %7048 = vmatprep.subr.bf16.mxu0 0
        %7049 = vmatpush1.bf16.msra.mxu0 %v2318
        %7050 = vmatprep.subr.bf16.mxu0 0
        %7051 = vmatpush1.bf16.msra.mxu0 %v2319
        %7052 = vmatprep.subr.bf16.mxu0 0
        %7053 = vmatpush1.bf16.msra.mxu0 %v2320
        %7054 = vmatprep.subr.bf16.mxu0 0
        %7055 = vmatpush1.bf16.msra.mxu0 %v2321
        %7056 = vmatprep.subr.bf16.mxu0 0
        %7057 = vmatpush1.bf16.msra.mxu0 %v2322
        %7058 = vmatprep.subr.bf16.mxu0 0
        %7059 = vmatpush1.bf16.msra.mxu0 %v2323
        %7060 = vmatprep.subr.bf16.mxu0 0
        %7061 = vmatpush1.bf16.msra.mxu0 %v2324
        %7062 = vmatprep.subr.bf16.mxu0 0
        %7063 = vmatpush1.bf16.msra.mxu0 %v2325
        %7064 = vmatprep.subr.bf16.mxu0 0
        %7065 = vmatpush1.bf16.msra.mxu0 %v2326
        %7066 = vmatprep.subr.bf16.mxu0 0
        %7067 = vmatpush1.bf16.msra.mxu0 %v2327
        %7068 = vmatprep.subr.bf16.mxu0 0
        %7069 = vmatpush1.bf16.msra.mxu0 %v2328
        %7070 = vmatprep.subr.bf16.mxu0 0
        %7071 = vmatpush1.bf16.msra.mxu0 %v2329
        %7072 = vmatprep.subr.bf16.mxu0 0
        %7073 = vmatpush1.bf16.msra.mxu0 %v2330
        %7074 = vmatprep.subr.bf16.mxu0 0
        %7075 = vmatpush1.bf16.msra.mxu0 %v2331
        %7076 = vmatprep.mubr.bf16.mxu0 %v3606
        %7077 = vmatmul.mubr.bf16.gmra.mrb[0].mxu0 %v3604
        %v7078 = vpop.f32.mrb[0].mxu0
        %v7079 = vadd.f32 %v7039, %v7078
        %v7080 = vpop.f32.mrb[0].mxu0
        %v7081 = vpop.f32.mrb[0].mxu0
        %v7082 = vpop.f32.mrb[0].mxu0
        %7083 = vdwg.mxu0
        %7084 = vmatprep.subr.bf16.mxu0 0
        %7085 = vmatpush1.bf16.msra.mxu0 %v2332
        %7086 = vmatprep.subr.bf16.mxu0 0
        %7087 = vmatpush1.bf16.msra.mxu0 %v2333
        %7088 = vmatprep.subr.bf16.mxu0 0
        %7089 = vmatpush1.bf16.msra.mxu0 %v2334
        %7090 = vmatprep.subr.bf16.mxu0 0
        %7091 = vmatpush1.bf16.msra.mxu0 %v2335
        %7092 = vmatprep.subr.bf16.mxu0 0
        %7093 = vmatpush1.bf16.msra.mxu0 %v2336
        %7094 = vmatprep.subr.bf16.mxu0 0
        %7095 = vmatpush1.bf16.msra.mxu0 %v2337
        %7096 = vmatprep.subr.bf16.mxu0 0
        %7097 = vmatpush1.bf16.msra.mxu0 %v2338
        %7098 = vmatprep.subr.bf16.mxu0 0
        %7099 = vmatpush1.bf16.msra.mxu0 %v2339
        %7100 = vmatprep.subr.bf16.mxu0 0
        %7101 = vmatpush1.bf16.msra.mxu0 %v2340
        %7102 = vmatprep.subr.bf16.mxu0 0
        %7103 = vmatpush1.bf16.msra.mxu0 %v2341
        %7104 = vmatprep.subr.bf16.mxu0 0
        %7105 = vmatpush1.bf16.msra.mxu0 %v2342
        %7106 = vmatprep.subr.bf16.mxu0 0
        %7107 = vmatpush1.bf16.msra.mxu0 %v2343
        %7108 = vmatprep.subr.bf16.mxu0 0
        %7109 = vmatpush1.bf16.msra.mxu0 %v2344
        %7110 = vmatprep.subr.bf16.mxu0 0
        %7111 = vmatpush1.bf16.msra.mxu0 %v2345
        %7112 = vmatprep.subr.bf16.mxu0 0
        %7113 = vmatpush1.bf16.msra.mxu0 %v2346
        %7114 = vmatprep.subr.bf16.mxu0 0
        %7115 = vmatpush1.bf16.msra.mxu0 %v2347
        %7116 = vmatprep.mubr.bf16.mxu0 %v3644
        %7117 = vmatmul.mubr.bf16.gmra.mrb[0].mxu0 %v3630
        %v7118 = vpop.f32.mrb[0].mxu0
        %v7119 = vadd.f32 %v7079, %v7118
        %v7120 = vpop.f32.mrb[0].mxu0
        %v7121 = vpop.f32.mrb[0].mxu0
        %v7122 = vpop.f32.mrb[0].mxu0
        %7123 = vdwg.mxu0
        %7124 = vmatprep.subr.bf16.mxu0 0
        %7125 = vmatpush1.bf16.msra.mxu0 %v2348
        %7126 = vmatprep.subr.bf16.mxu0 0
        %7127 = vmatpush1.bf16.msra.mxu0 %v2349
        %7128 = vmatprep.subr.bf16.mxu0 0
        %7129 = vmatpush1.bf16.msra.mxu0 %v2350
        %7130 = vmatprep.subr.bf16.mxu0 0
        %7131 = vmatpush1.bf16.msra.mxu0 %v2351
        %7132 = vmatprep.subr.bf16.mxu0 0
        %7133 = vmatpush1.bf16.msra.mxu0 %v2352
        %7134 = vmatprep.subr.bf16.mxu0 0
        %7135 = vmatpush1.bf16.msra.mxu0 %v2353
        %7136 = vmatprep.subr.bf16.mxu0 0
        %7137 = vmatpush1.bf16.msra.mxu0 %v2354
        %7138 = vmatprep.subr.bf16.mxu0 0
        %7139 = vmatpush1.bf16.msra.mxu0 %v2355
        %7140 = vmatprep.subr.bf16.mxu0 0
        %7141 = vmatpush1.bf16.msra.mxu0 %v2356
        %7142 = vmatprep.subr.bf16.mxu0 0
        %7143 = vmatpush1.bf16.msra.mxu0 %v2357
        %7144 = vmatprep.subr.bf16.mxu0 0
        %7145 = vmatpush1.bf16.msra.mxu0 %v2358
        %7146 = vmatprep.subr.bf16.mxu0 0
        %7147 = vmatpush1.bf16.msra.mxu0 %v2359
        %7148 = vmatprep.subr.bf16.mxu0 0
        %7149 = vmatpush1.bf16.msra.mxu0 %v2360
        %7150 = vmatprep.subr.bf16.mxu0 0
        %7151 = vmatpush1.bf16.msra.mxu0 %v2361
        %7152 = vmatprep.subr.bf16.mxu0 0
        %7153 = vmatpush1.bf16.msra.mxu0 %v2362
        %7154 = vmatprep.subr.bf16.mxu0 0
        %7155 = vmatpush1.bf16.msra.mxu0 %v2363
        %7156 = vmatprep.mubr.bf16.mxu0 %v3654
        %7157 = vmatmul.mubr.bf16.gmra.mrb[0].mxu0 %v3652
        %v7158 = vpop.f32.mrb[0].mxu0
        %v7159 = vadd.f32 %v7119, %v7158
        %v7160 = vpop.f32.mrb[0].mxu0
        %v7161 = vpop.f32.mrb[0].mxu0
        %v7162 = vpop.f32.mrb[0].mxu0
        %7163 = vdwg.mxu0
        %7164 = vmatprep.subr.bf16.mxu0 0
        %7165 = vmatpush1.bf16.msra.mxu0 %v2364
        %7166 = vmatprep.subr.bf16.mxu0 0
        %7167 = vmatpush1.bf16.msra.mxu0 %v2365
        %7168 = vmatprep.subr.bf16.mxu0 0
        %7169 = vmatpush1.bf16.msra.mxu0 %v2366
        %7170 = vmatprep.subr.bf16.mxu0 0
        %7171 = vmatpush1.bf16.msra.mxu0 %v2367
        %7172 = vmatprep.subr.bf16.mxu0 0
        %7173 = vmatpush1.bf16.msra.mxu0 %v2368
        %7174 = vmatprep.subr.bf16.mxu0 0
        %7175 = vmatpush1.bf16.msra.mxu0 %v2369
        %7176 = vmatprep.subr.bf16.mxu0 0
        %7177 = vmatpush1.bf16.msra.mxu0 %v2370
        %7178 = vmatprep.subr.bf16.mxu0 0
        %7179 = vmatpush1.bf16.msra.mxu0 %v2371
        %7180 = vmatprep.subr.bf16.mxu0 0
        %7181 = vmatpush1.bf16.msra.mxu0 %v2372
        %7182 = vmatprep.subr.bf16.mxu0 0
        %7183 = vmatpush1.bf16.msra.mxu0 %v2373
        %7184 = vmatprep.subr.bf16.mxu0 0
        %7185 = vmatpush1.bf16.msra.mxu0 %v2374
        %7186 = vmatprep.subr.bf16.mxu0 0
        %7187 = vmatpush1.bf16.msra.mxu0 %v2375
        %7188 = vmatprep.subr.bf16.mxu0 0
        %7189 = vmatpush1.bf16.msra.mxu0 %v2376
        %7190 = vmatprep.subr.bf16.mxu0 0
        %7191 = vmatpush1.bf16.msra.mxu0 %v2377
        %7192 = vmatprep.subr.bf16.mxu0 0
        %7193 = vmatpush1.bf16.msra.mxu0 %v2378
        %7194 = vmatprep.subr.bf16.mxu0 0
        %7195 = vmatpush1.bf16.msra.mxu0 %v2379
        %7196 = vmatprep.mubr.bf16.mxu0 %v3651
        %7197 = vmatmul.mubr.bf16.gmra.mrb[0].mxu0 %v3637
        %v7198 = vpop.f32.mrb[0].mxu0
        %v7199 = vadd.f32 %v7159, %v7198
        %v7200 = vpop.f32.mrb[0].mxu0
        %v7201 = vpop.f32.mrb[0].mxu0
        %v7202 = vpop.f32.mrb[0].mxu0
        %7203 = vdwg.mxu0
        %7204 = vmatprep.subr.bf16.mxu0 0
        %7205 = vmatpush1.bf16.msra.mxu0 %v2380
        %7206 = vmatprep.subr.bf16.mxu0 0
        %7207 = vmatpush1.bf16.msra.mxu0 %v2381
        %7208 = vmatprep.subr.bf16.mxu0 0
        %7209 = vmatpush1.bf16.msra.mxu0 %v2382
        %7210 = vmatprep.subr.bf16.mxu0 0
        %7211 = vmatpush1.bf16.msra.mxu0 %v2383
        %7212 = vmatprep.subr.bf16.mxu0 0
        %7213 = vmatpush1.bf16.msra.mxu0 %v2384
        %7214 = vmatprep.subr.bf16.mxu0 0
        %7215 = vmatpush1.bf16.msra.mxu0 %v2385
        %7216 = vmatprep.subr.bf16.mxu0 0
        %7217 = vmatpush1.bf16.msra.mxu0 %v2386
        %7218 = vmatprep.subr.bf16.mxu0 0
        %7219 = vmatpush1.bf16.msra.mxu0 %v2387
        %7220 = vmatprep.subr.bf16.mxu0 0
        %7221 = vmatpush1.bf16.msra.mxu0 %v2388
        %7222 = vmatprep.subr.bf16.mxu0 0
        %7223 = vmatpush1.bf16.msra.mxu0 %v2389
        %7224 = vmatprep.subr.bf16.mxu0 0
        %7225 = vmatpush1.bf16.msra.mxu0 %v2390
        %7226 = vmatprep.subr.bf16.mxu0 0
        %7227 = vmatpush1.bf16.msra.mxu0 %v2391
        %7228 = vmatprep.subr.bf16.mxu0 0
        %7229 = vmatpush1.bf16.msra.mxu0 %v2392
        %7230 = vmatprep.subr.bf16.mxu0 0
        %7231 = vmatpush1.bf16.msra.mxu0 %v2393
        %7232 = vmatprep.subr.bf16.mxu0 0
        %7233 = vmatpush1.bf16.msra.mxu0 %v2394
        %7234 = vmatprep.subr.bf16.mxu0 0
        %7235 = vmatpush1.bf16.msra.mxu0 %v2395
        %7236 = vmatprep.mubr.bf16.mxu0 %v3655
        %7237 = vmatmul.mubr.bf16.gmra.mrb[0].mxu0 %v3653
        %v7238 = vpop.f32.mrb[0].mxu0
        %v7239 = vadd.f32 %v7199, %v7238
        %v7240 = vpop.f32.mrb[0].mxu0
        %v7241 = vpop.f32.mrb[0].mxu0
        %v7242 = vpop.f32.mrb[0].mxu0
        %7243 = vdwg.mxu0
        %7244 = vmatprep.subr.bf16.mxu0 0
        %7245 = vmatpush1.bf16.msra.mxu0 %v2396
        %7246 = vmatprep.subr.bf16.mxu0 0
        %7247 = vmatpush1.bf16.msra.mxu0 %v2397
        %7248 = vmatprep.subr.bf16.mxu0 0
        %7249 = vmatpush1.bf16.msra.mxu0 %v2398
        %7250 = vmatprep.subr.bf16.mxu0 0
        %7251 = vmatpush1.bf16.msra.mxu0 %v2399
        %7252 = vmatprep.subr.bf16.mxu0 0
        %7253 = vmatpush1.bf16.msra.mxu0 %v2400
        %7254 = vmatprep.subr.bf16.mxu0 0
        %7255 = vmatpush1.bf16.msra.mxu0 %v2401
        %7256 = vmatprep.subr.bf16.mxu0 0
        %7257 = vmatpush1.bf16.msra.mxu0 %v2402
        %7258 = vmatprep.subr.bf16.mxu0 0
        %7259 = vmatpush1.bf16.msra.mxu0 %v2403
        %7260 = vmatprep.subr.bf16.mxu0 0
        %7261 = vmatpush1.bf16.msra.mxu0 %v2404
        %7262 = vmatprep.subr.bf16.mxu0 0
        %7263 = vmatpush1.bf16.msra.mxu0 %v2405
        %7264 = vmatprep.subr.bf16.mxu0 0
        %7265 = vmatpush1.bf16.msra.mxu0 %v2406
        %7266 = vmatprep.subr.bf16.mxu0 0
        %7267 = vmatpush1.bf16.msra.mxu0 %v2407
        %7268 = vmatprep.subr.bf16.mxu0 0
        %7269 = vmatpush1.bf16.msra.mxu0 %v2408
        %7270 = vmatprep.subr.bf16.mxu0 0
        %7271 = vmatpush1.bf16.msra.mxu0 %v2409
        %7272 = vmatprep.subr.bf16.mxu0 0
        %7273 = vmatpush1.bf16.msra.mxu0 %v2410
        %7274 = vmatprep.subr.bf16.mxu0 0
        %7275 = vmatpush1.bf16.msra.mxu0 %v2411
        %7276 = vmatprep.mubr.bf16.mxu0 %v3693
        %7277 = vmatmul.mubr.bf16.gmra.mrb[0].mxu0 %v3679
        %v7278 = vpop.f32.mrb[0].mxu0
        %v7279 = vadd.f32 %v7239, %v7278
        %v7280 = vpop.f32.mrb[0].mxu0
        %v7281 = vpop.f32.mrb[0].mxu0
        %v7282 = vpop.f32.mrb[0].mxu0
        %7283 = vdwg.mxu0
        %7284 = vmatprep.subr.bf16.mxu0 0
        %7285 = vmatpush1.bf16.msra.mxu0 %v2412
        %7286 = vmatprep.subr.bf16.mxu0 0
        %7287 = vmatpush1.bf16.msra.mxu0 %v2413
        %7288 = vmatprep.subr.bf16.mxu0 0
        %7289 = vmatpush1.bf16.msra.mxu0 %v2414
        %7290 = vmatprep.subr.bf16.mxu0 0
        %7291 = vmatpush1.bf16.msra.mxu0 %v2415
        %7292 = vmatprep.subr.bf16.mxu0 0
        %7293 = vmatpush1.bf16.msra.mxu0 %v2416
        %7294 = vmatprep.subr.bf16.mxu0 0
        %7295 = vmatpush1.bf16.msra.mxu0 %v2417
        %7296 = vmatprep.subr.bf16.mxu0 0
        %7297 = vmatpush1.bf16.msra.mxu0 %v2418
        %7298 = vmatprep.subr.bf16.mxu0 0
        %7299 = vmatpush1.bf16.msra.mxu0 %v2419
        %7300 = vmatprep.subr.bf16.mxu0 0
        %7301 = vmatpush1.bf16.msra.mxu0 %v2420
        %7302 = vmatprep.subr.bf16.mxu0 0
        %7303 = vmatpush1.bf16.msra.mxu0 %v2421
        %7304 = vmatprep.subr.bf16.mxu0 0
        %7305 = vmatpush1.bf16.msra.mxu0 %v2422
        %7306 = vmatprep.subr.bf16.mxu0 0
        %7307 = vmatpush1.bf16.msra.mxu0 %v2423
        %7308 = vmatprep.subr.bf16.mxu0 0
        %7309 = vmatpush1.bf16.msra.mxu0 %v2424
        %7310 = vmatprep.subr.bf16.mxu0 0
        %7311 = vmatpush1.bf16.msra.mxu0 %v2425
        %7312 = vmatprep.subr.bf16.mxu0 0
        %7313 = vmatpush1.bf16.msra.mxu0 %v2426
        %7314 = vmatprep.subr.bf16.mxu0 0
        %7315 = vmatpush1.bf16.msra.mxu0 %v2427
        %7316 = vmatprep.mubr.bf16.mxu0 %v3703
        %7317 = vmatmul.mubr.bf16.gmra.mrb[0].mxu0 %v3701
        %v7318 = vpop.f32.mrb[0].mxu0
        %v7319 = vadd.f32 %v7279, %v7318
        %v7320 = vpop.f32.mrb[0].mxu0
        %v7321 = vpop.f32.mrb[0].mxu0
        %v7322 = vpop.f32.mrb[0].mxu0
        %7323 = vdwg.mxu0
        %7324 = vmatprep.subr.bf16.mxu0 0
        %7325 = vmatpush1.bf16.msra.mxu0 %v2428
        %7326 = vmatprep.subr.bf16.mxu0 0
        %7327 = vmatpush1.bf16.msra.mxu0 %v2429
        %7328 = vmatprep.subr.bf16.mxu0 0
        %7329 = vmatpush1.bf16.msra.mxu0 %v2430
        %7330 = vmatprep.subr.bf16.mxu0 0
        %7331 = vmatpush1.bf16.msra.mxu0 %v2431
        %7332 = vmatprep.subr.bf16.mxu0 0
        %7333 = vmatpush1.bf16.msra.mxu0 %v2432
        %7334 = vmatprep.subr.bf16.mxu0 0
        %7335 = vmatpush1.bf16.msra.mxu0 %v2433
        %7336 = vmatprep.subr.bf16.mxu0 0
        %7337 = vmatpush1.bf16.msra.mxu0 %v2434
        %7338 = vmatprep.subr.bf16.mxu0 0
        %7339 = vmatpush1.bf16.msra.mxu0 %v2435
        %7340 = vmatprep.subr.bf16.mxu0 0
        %7341 = vmatpush1.bf16.msra.mxu0 %v2436
        %7342 = vmatprep.subr.bf16.mxu0 0
        %7343 = vmatpush1.bf16.msra.mxu0 %v2437
        %7344 = vmatprep.subr.bf16.mxu0 0
        %7345 = vmatpush1.bf16.msra.mxu0 %v2438
        %7346 = vmatprep.subr.bf16.mxu0 0
        %7347 = vmatpush1.bf16.msra.mxu0 %v2439
        %7348 = vmatprep.subr.bf16.mxu0 0
        %7349 = vmatpush1.bf16.msra.mxu0 %v2440
        %7350 = vmatprep.subr.bf16.mxu0 0
        %7351 = vmatpush1.bf16.msra.mxu0 %v2441
        %7352 = vmatprep.subr.bf16.mxu0 0
        %7353 = vmatpush1.bf16.msra.mxu0 %v2442
        %7354 = vmatprep.subr.bf16.mxu0 0
        %7355 = vmatpush1.bf16.msra.mxu0 %v2443
        %7356 = vmatprep.mubr.bf16.mxu0 %v3700
        %7357 = vmatmul.mubr.bf16.gmra.mrb[0].mxu0 %v3686
        %v7358 = vpop.f32.mrb[0].mxu0
        %v7359 = vadd.f32 %v7319, %v7358
        %v7360 = vpop.f32.mrb[0].mxu0
        %v7361 = vpop.f32.mrb[0].mxu0
        %v7362 = vpop.f32.mrb[0].mxu0
        %7363 = vdwg.mxu0
        %7364 = vmatprep.subr.bf16.mxu0 0
        %7365 = vmatpush1.bf16.msra.mxu0 %v2444
        %7366 = vmatprep.subr.bf16.mxu0 0
        %7367 = vmatpush1.bf16.msra.mxu0 %v2445
        %7368 = vmatprep.subr.bf16.mxu0 0
        %7369 = vmatpush1.bf16.msra.mxu0 %v2446
        %7370 = vmatprep.subr.bf16.mxu0 0
        %7371 = vmatpush1.bf16.msra.mxu0 %v2447
        %7372 = vmatprep.subr.bf16.mxu0 0
        %7373 = vmatpush1.bf16.msra.mxu0 %v2448
        %7374 = vmatprep.subr.bf16.mxu0 0
        %7375 = vmatpush1.bf16.msra.mxu0 %v2449
        %7376 = vmatprep.subr.bf16.mxu0 0
        %7377 = vmatpush1.bf16.msra.mxu0 %v2450
        %7378 = vmatprep.subr.bf16.mxu0 0
        %7379 = vmatpush1.bf16.msra.mxu0 %v2451
        %7380 = vmatprep.subr.bf16.mxu0 0
        %7381 = vmatpush1.bf16.msra.mxu0 %v2452
        %7382 = vmatprep.subr.bf16.mxu0 0
        %7383 = vmatpush1.bf16.msra.mxu0 %v2453
        %7384 = vmatprep.subr.bf16.mxu0 0
        %7385 = vmatpush1.bf16.msra.mxu0 %v2454
        %7386 = vmatprep.subr.bf16.mxu0 0
        %7387 = vmatpush1.bf16.msra.mxu0 %v2455
        %7388 = vmatprep.subr.bf16.mxu0 0
        %7389 = vmatpush1.bf16.msra.mxu0 %v2456
        %7390 = vmatprep.subr.bf16.mxu0 0
        %7391 = vmatpush1.bf16.msra.mxu0 %v2457
        %7392 = vmatprep.subr.bf16.mxu0 0
        %7393 = vmatpush1.bf16.msra.mxu0 %v2458
        %7394 = vmatprep.subr.bf16.mxu0 0
        %7395 = vmatpush1.bf16.msra.mxu0 %v2459
        %7396 = vmatprep.mubr.bf16.mxu0 %v3704
        %7397 = vmatmul.mubr.bf16.gmra.mrb[0].mxu0 %v3702
        %v7398 = vpop.f32.mrb[0].mxu0
        %v7399 = vadd.f32 %v7359, %v7398
        %v7400 = vpop.f32.mrb[0].mxu0
        %v7401 = vpop.f32.mrb[0].mxu0
        %v7402 = vpop.f32.mrb[0].mxu0
        %7403 = vdwg.mxu0
        %7404 = vmatprep.subr.bf16.mxu0 0
        %7405 = vmatpush1.bf16.msra.mxu0 %v2460
        %7406 = vmatprep.subr.bf16.mxu0 0
        %7407 = vmatpush1.bf16.msra.mxu0 %v2461
        %7408 = vmatprep.subr.bf16.mxu0 0
        %7409 = vmatpush1.bf16.msra.mxu0 %v2462
        %7410 = vmatprep.subr.bf16.mxu0 0
        %7411 = vmatpush1.bf16.msra.mxu0 %v2463
        %7412 = vmatprep.subr.bf16.mxu0 0
        %7413 = vmatpush1.bf16.msra.mxu0 %v2464
        %7414 = vmatprep.subr.bf16.mxu0 0
        %7415 = vmatpush1.bf16.msra.mxu0 %v2465
        %7416 = vmatprep.subr.bf16.mxu0 0
        %7417 = vmatpush1.bf16.msra.mxu0 %v2466
        %7418 = vmatprep.subr.bf16.mxu0 0
        %7419 = vmatpush1.bf16.msra.mxu0 %v2467
        %7420 = vmatprep.subr.bf16.mxu0 0
        %7421 = vmatpush1.bf16.msra.mxu0 %v2468
        %7422 = vmatprep.subr.bf16.mxu0 0
        %7423 = vmatpush1.bf16.msra.mxu0 %v2469
        %7424 = vmatprep.subr.bf16.mxu0 0
        %7425 = vmatpush1.bf16.msra.mxu0 %v2470
        %7426 = vmatprep.subr.bf16.mxu0 0
        %7427 = vmatpush1.bf16.msra.mxu0 %v2471
        %7428 = vmatprep.subr.bf16.mxu0 0
        %7429 = vmatpush1.bf16.msra.mxu0 %v2472
        %7430 = vmatprep.subr.bf16.mxu0 0
        %7431 = vmatpush1.bf16.msra.mxu0 %v2473
        %7432 = vmatprep.subr.bf16.mxu0 0
        %7433 = vmatpush1.bf16.msra.mxu0 %v2474
        %7434 = vmatprep.subr.bf16.mxu0 0
        %7435 = vmatpush1.bf16.msra.mxu0 %v2475
        %7436 = vmatprep.mubr.bf16.mxu0 %v3742
        %7437 = vmatmul.mubr.bf16.gmra.mrb[0].mxu0 %v3728
        %v7438 = vpop.f32.mrb[0].mxu0
        %v7439 = vadd.f32 %v7399, %v7438
        %v7440 = vpop.f32.mrb[0].mxu0
        %v7441 = vpop.f32.mrb[0].mxu0
        %v7442 = vpop.f32.mrb[0].mxu0
        %7443 = vdwg.mxu0
        %7444 = vmatprep.subr.bf16.mxu0 0
        %7445 = vmatpush1.bf16.msra.mxu0 %v2476
        %7446 = vmatprep.subr.bf16.mxu0 0
        %7447 = vmatpush1.bf16.msra.mxu0 %v2477
        %7448 = vmatprep.subr.bf16.mxu0 0
        %7449 = vmatpush1.bf16.msra.mxu0 %v2478
        %7450 = vmatprep.subr.bf16.mxu0 0
        %7451 = vmatpush1.bf16.msra.mxu0 %v2479
        %7452 = vmatprep.subr.bf16.mxu0 0
        %7453 = vmatpush1.bf16.msra.mxu0 %v2480
        %7454 = vmatprep.subr.bf16.mxu0 0
        %7455 = vmatpush1.bf16.msra.mxu0 %v2481
        %7456 = vmatprep.subr.bf16.mxu0 0
        %7457 = vmatpush1.bf16.msra.mxu0 %v2482
        %7458 = vmatprep.subr.bf16.mxu0 0
        %7459 = vmatpush1.bf16.msra.mxu0 %v2483
        %7460 = vmatprep.subr.bf16.mxu0 0
        %7461 = vmatpush1.bf16.msra.mxu0 %v2484
        %7462 = vmatprep.subr.bf16.mxu0 0
        %7463 = vmatpush1.bf16.msra.mxu0 %v2485
        %7464 = vmatprep.subr.bf16.mxu0 0
        %7465 = vmatpush1.bf16.msra.mxu0 %v2486
        %7466 = vmatprep.subr.bf16.mxu0 0
        %7467 = vmatpush1.bf16.msra.mxu0 %v2487
        %7468 = vmatprep.subr.bf16.mxu0 0
        %7469 = vmatpush1.bf16.msra.mxu0 %v2488
        %7470 = vmatprep.subr.bf16.mxu0 0
        %7471 = vmatpush1.bf16.msra.mxu0 %v2489
        %7472 = vmatprep.subr.bf16.mxu0 0
        %7473 = vmatpush1.bf16.msra.mxu0 %v2490
        %7474 = vmatprep.subr.bf16.mxu0 0
        %7475 = vmatpush1.bf16.msra.mxu0 %v2491
        %7476 = vmatprep.mubr.bf16.mxu0 %v3752
        %7477 = vmatmul.mubr.bf16.gmra.mrb[0].mxu0 %v3750
        %v7478 = vpop.f32.mrb[0].mxu0
        %v7479 = vadd.f32 %v7439, %v7478
        %v7480 = vpop.f32.mrb[0].mxu0
        %v7481 = vpop.f32.mrb[0].mxu0
        %v7482 = vpop.f32.mrb[0].mxu0
        %7483 = vdwg.mxu0
        %7484 = vmatprep.subr.bf16.mxu0 0
        %7485 = vmatpush1.bf16.msra.mxu0 %v2492
        %7486 = vmatprep.subr.bf16.mxu0 0
        %7487 = vmatpush1.bf16.msra.mxu0 %v2493
        %7488 = vmatprep.subr.bf16.mxu0 0
        %7489 = vmatpush1.bf16.msra.mxu0 %v2494
        %7490 = vmatprep.subr.bf16.mxu0 0
        %7491 = vmatpush1.bf16.msra.mxu0 %v2495
        %7492 = vmatprep.subr.bf16.mxu0 0
        %7493 = vmatpush1.bf16.msra.mxu0 %v2496
        %7494 = vmatprep.subr.bf16.mxu0 0
        %7495 = vmatpush1.bf16.msra.mxu0 %v2497
        %7496 = vmatprep.subr.bf16.mxu0 0
        %7497 = vmatpush1.bf16.msra.mxu0 %v2498
        %7498 = vmatprep.subr.bf16.mxu0 0
        %7499 = vmatpush1.bf16.msra.mxu0 %v2499
        %7500 = vmatprep.subr.bf16.mxu0 0
        %7501 = vmatpush1.bf16.msra.mxu0 %v2500
        %7502 = vmatprep.subr.bf16.mxu0 0
        %7503 = vmatpush1.bf16.msra.mxu0 %v2501
        %7504 = vmatprep.subr.bf16.mxu0 0
        %7505 = vmatpush1.bf16.msra.mxu0 %v2502
        %7506 = vmatprep.subr.bf16.mxu0 0
        %7507 = vmatpush1.bf16.msra.mxu0 %v2503
        %7508 = vmatprep.subr.bf16.mxu0 0
        %7509 = vmatpush1.bf16.msra.mxu0 %v2504
        %7510 = vmatprep.subr.bf16.mxu0 0
        %7511 = vmatpush1.bf16.msra.mxu0 %v2505
        %7512 = vmatprep.subr.bf16.mxu0 0
        %7513 = vmatpush1.bf16.msra.mxu0 %v2506
        %7514 = vmatprep.subr.bf16.mxu0 0
        %7515 = vmatpush1.bf16.msra.mxu0 %v2507
        %7516 = vmatprep.mubr.bf16.mxu0 %v3749
        %7517 = vmatmul.mubr.bf16.gmra.mrb[0].mxu0 %v3735
        %v7518 = vpop.f32.mrb[0].mxu0
        %v7519 = vadd.f32 %v7479, %v7518
        %v7520 = vpop.f32.mrb[0].mxu0
        %v7521 = vpop.f32.mrb[0].mxu0
        %v7522 = vpop.f32.mrb[0].mxu0
        %7523 = vdwg.mxu0
        %7524 = vmatprep.subr.bf16.mxu0 0
        %7525 = vmatpush1.bf16.msra.mxu0 %v2508
        %7526 = vmatprep.subr.bf16.mxu0 0
        %7527 = vmatpush1.bf16.msra.mxu0 %v2509
        %7528 = vmatprep.subr.bf16.mxu0 0
        %7529 = vmatpush1.bf16.msra.mxu0 %v2510
        %7530 = vmatprep.subr.bf16.mxu0 0
        %7531 = vmatpush1.bf16.msra.mxu0 %v2511
        %7532 = vmatprep.subr.bf16.mxu0 0
        %7533 = vmatpush1.bf16.msra.mxu0 %v2512
        %7534 = vmatprep.subr.bf16.mxu0 0
        %7535 = vmatpush1.bf16.msra.mxu0 %v2513
        %7536 = vmatprep.subr.bf16.mxu0 0
        %7537 = vmatpush1.bf16.msra.mxu0 %v2514
        %7538 = vmatprep.subr.bf16.mxu0 0
        %7539 = vmatpush1.bf16.msra.mxu0 %v2515
        %7540 = vmatprep.subr.bf16.mxu0 0
        %7541 = vmatpush1.bf16.msra.mxu0 %v2516
        %7542 = vmatprep.subr.bf16.mxu0 0
        %7543 = vmatpush1.bf16.msra.mxu0 %v2517
        %7544 = vmatprep.subr.bf16.mxu0 0
        %7545 = vmatpush1.bf16.msra.mxu0 %v2518
        %7546 = vmatprep.subr.bf16.mxu0 0
        %7547 = vmatpush1.bf16.msra.mxu0 %v2519
        %7548 = vmatprep.subr.bf16.mxu0 0
        %7549 = vmatpush1.bf16.msra.mxu0 %v2520
        %7550 = vmatprep.subr.bf16.mxu0 0
        %7551 = vmatpush1.bf16.msra.mxu0 %v2521
        %7552 = vmatprep.subr.bf16.mxu0 0
        %7553 = vmatpush1.bf16.msra.mxu0 %v2522
        %7554 = vmatprep.subr.bf16.mxu0 0
        %7555 = vmatpush1.bf16.msra.mxu0 %v2523
        %7556 = vmatprep.mubr.bf16.mxu0 %v3753
        %7557 = vmatmul.mubr.bf16.gmra.mrb[0].mxu0 %v3751
        %v7558 = vpop.f32.mrb[0].mxu0
        %v7559 = vadd.f32 %v7519, %v7558
        %v7560 = vpop.f32.mrb[0].mxu0
        %v7561 = vpop.f32.mrb[0].mxu0
        %v7562 = vpop.f32.mrb[0].mxu0
        %7563 = vdwg.mxu0
        %7564 = vmatprep.subr.bf16.mxu0 0
        %7565 = vmatpush1.bf16.msra.mxu0 %v2524
        %7566 = vmatprep.subr.bf16.mxu0 0
        %7567 = vmatpush1.bf16.msra.mxu0 %v2525
        %7568 = vmatprep.subr.bf16.mxu0 0
        %7569 = vmatpush1.bf16.msra.mxu0 %v2526
        %7570 = vmatprep.subr.bf16.mxu0 0
        %7571 = vmatpush1.bf16.msra.mxu0 %v2527
        %7572 = vmatprep.subr.bf16.mxu0 0
        %7573 = vmatpush1.bf16.msra.mxu0 %v2528
        %7574 = vmatprep.subr.bf16.mxu0 0
        %7575 = vmatpush1.bf16.msra.mxu0 %v2529
        %7576 = vmatprep.subr.bf16.mxu0 0
        %7577 = vmatpush1.bf16.msra.mxu0 %v2530
        %7578 = vmatprep.subr.bf16.mxu0 0
        %7579 = vmatpush1.bf16.msra.mxu0 %v2531
        %7580 = vmatprep.subr.bf16.mxu0 0
        %7581 = vmatpush1.bf16.msra.mxu0 %v2532
        %7582 = vmatprep.subr.bf16.mxu0 0
        %7583 = vmatpush1.bf16.msra.mxu0 %v2533
        %7584 = vmatprep.subr.bf16.mxu0 0
        %7585 = vmatpush1.bf16.msra.mxu0 %v2534
        %7586 = vmatprep.subr.bf16.mxu0 0
        %7587 = vmatpush1.bf16.msra.mxu0 %v2535
        %7588 = vmatprep.subr.bf16.mxu0 0
        %7589 = vmatpush1.bf16.msra.mxu0 %v2536
        %7590 = vmatprep.subr.bf16.mxu0 0
        %7591 = vmatpush1.bf16.msra.mxu0 %v2537
        %7592 = vmatprep.subr.bf16.mxu0 0
        %7593 = vmatpush1.bf16.msra.mxu0 %v2538
        %7594 = vmatprep.subr.bf16.mxu0 0
        %7595 = vmatpush1.bf16.msra.mxu0 %v2539
        %7596 = vmatprep.mubr.bf16.mxu0 %v3791
        %7597 = vmatmul.mubr.bf16.gmra.mrb[0].mxu0 %v3777
        %v7598 = vpop.f32.mrb[0].mxu0
        %v7599 = vadd.f32 %v7559, %v7598
        %v7600 = vpop.f32.mrb[0].mxu0
        %v7601 = vpop.f32.mrb[0].mxu0
        %v7602 = vpop.f32.mrb[0].mxu0
        %7603 = vdwg.mxu0
        %7604 = vmatprep.subr.bf16.mxu0 0
        %7605 = vmatpush1.bf16.msra.mxu0 %v2540
        %7606 = vmatprep.subr.bf16.mxu0 0
        %7607 = vmatpush1.bf16.msra.mxu0 %v2541
        %7608 = vmatprep.subr.bf16.mxu0 0
        %7609 = vmatpush1.bf16.msra.mxu0 %v2542
        %7610 = vmatprep.subr.bf16.mxu0 0
        %7611 = vmatpush1.bf16.msra.mxu0 %v2543
        %7612 = vmatprep.subr.bf16.mxu0 0
        %7613 = vmatpush1.bf16.msra.mxu0 %v2544
        %7614 = vmatprep.subr.bf16.mxu0 0
        %7615 = vmatpush1.bf16.msra.mxu0 %v2545
        %7616 = vmatprep.subr.bf16.mxu0 0
        %7617 = vmatpush1.bf16.msra.mxu0 %v2546
        %7618 = vmatprep.subr.bf16.mxu0 0
        %7619 = vmatpush1.bf16.msra.mxu0 %v2547
        %7620 = vmatprep.subr.bf16.mxu0 0
        %7621 = vmatpush1.bf16.msra.mxu0 %v2548
        %7622 = vmatprep.subr.bf16.mxu0 0
        %7623 = vmatpush1.bf16.msra.mxu0 %v2549
        %7624 = vmatprep.subr.bf16.mxu0 0
        %7625 = vmatpush1.bf16.msra.mxu0 %v2550
        %7626 = vmatprep.subr.bf16.mxu0 0
        %7627 = vmatpush1.bf16.msra.mxu0 %v2551
        %7628 = vmatprep.subr.bf16.mxu0 0
        %7629 = vmatpush1.bf16.msra.mxu0 %v2552
        %7630 = vmatprep.subr.bf16.mxu0 0
        %7631 = vmatpush1.bf16.msra.mxu0 %v2553
        %7632 = vmatprep.subr.bf16.mxu0 0
        %7633 = vmatpush1.bf16.msra.mxu0 %v2554
        %7634 = vmatprep.subr.bf16.mxu0 0
        %7635 = vmatpush1.bf16.msra.mxu0 %v2555
        %7636 = vmatprep.mubr.bf16.mxu0 %v3801
        %7637 = vmatmul.mubr.bf16.gmra.mrb[0].mxu0 %v3799
        %v7638 = vpop.f32.mrb[0].mxu0
        %v7639 = vadd.f32 %v7599, %v7638
        %v7640 = vpop.f32.mrb[0].mxu0
        %v7641 = vpop.f32.mrb[0].mxu0
        %v7642 = vpop.f32.mrb[0].mxu0
        %7643 = vdwg.mxu0
        %7644 = vmatprep.subr.bf16.mxu0 0
        %7645 = vmatpush1.bf16.msra.mxu0 %v2556
        %7646 = vmatprep.subr.bf16.mxu0 0
        %7647 = vmatpush1.bf16.msra.mxu0 %v2557
        %7648 = vmatprep.subr.bf16.mxu0 0
        %7649 = vmatpush1.bf16.msra.mxu0 %v2558
        %7650 = vmatprep.subr.bf16.mxu0 0
        %7651 = vmatpush1.bf16.msra.mxu0 %v2559
        %7652 = vmatprep.subr.bf16.mxu0 0
        %7653 = vmatpush1.bf16.msra.mxu0 %v2560
        %7654 = vmatprep.subr.bf16.mxu0 0
        %7655 = vmatpush1.bf16.msra.mxu0 %v2561
        %7656 = vmatprep.subr.bf16.mxu0 0
        %7657 = vmatpush1.bf16.msra.mxu0 %v2562
        %7658 = vmatprep.subr.bf16.mxu0 0
        %7659 = vmatpush1.bf16.msra.mxu0 %v2563
        %7660 = vmatprep.subr.bf16.mxu0 0
        %7661 = vmatpush1.bf16.msra.mxu0 %v2564
        %7662 = vmatprep.subr.bf16.mxu0 0
        %7663 = vmatpush1.bf16.msra.mxu0 %v2565
        %7664 = vmatprep.subr.bf16.mxu0 0
        %7665 = vmatpush1.bf16.msra.mxu0 %v2566
        %7666 = vmatprep.subr.bf16.mxu0 0
        %7667 = vmatpush1.bf16.msra.mxu0 %v2567
        %7668 = vmatprep.subr.bf16.mxu0 0
        %7669 = vmatpush1.bf16.msra.mxu0 %v2568
        %7670 = vmatprep.subr.bf16.mxu0 0
        %7671 = vmatpush1.bf16.msra.mxu0 %v2569
        %7672 = vmatprep.subr.bf16.mxu0 0
        %7673 = vmatpush1.bf16.msra.mxu0 %v2570
        %7674 = vmatprep.subr.bf16.mxu0 0
        %7675 = vmatpush1.bf16.msra.mxu0 %v2571
        %7676 = vmatprep.mubr.bf16.mxu0 %v3798
        %7677 = vmatmul.mubr.bf16.gmra.mrb[0].mxu0 %v3784
        %v7678 = vpop.f32.mrb[0].mxu0
        %v7679 = vadd.f32 %v7639, %v7678
        %v7680 = vpop.f32.mrb[0].mxu0
        %v7681 = vpop.f32.mrb[0].mxu0
        %v7682 = vpop.f32.mrb[0].mxu0
        %7683 = vdwg.mxu0
        %7684 = vmatprep.subr.bf16.mxu0 0
        %7685 = vmatpush1.bf16.msra.mxu0 %v2572
        %7686 = vmatprep.subr.bf16.mxu0 0
        %7687 = vmatpush1.bf16.msra.mxu0 %v2573
        %7688 = vmatprep.subr.bf16.mxu0 0
        %7689 = vmatpush1.bf16.msra.mxu0 %v2574
        %7690 = vmatprep.subr.bf16.mxu0 0
        %7691 = vmatpush1.bf16.msra.mxu0 %v2575
        %7692 = vmatprep.subr.bf16.mxu0 0
        %7693 = vmatpush1.bf16.msra.mxu0 %v2576
        %7694 = vmatprep.subr.bf16.mxu0 0
        %7695 = vmatpush1.bf16.msra.mxu0 %v2577
        %7696 = vmatprep.subr.bf16.mxu0 0
        %7697 = vmatpush1.bf16.msra.mxu0 %v2578
        %7698 = vmatprep.subr.bf16.mxu0 0
        %7699 = vmatpush1.bf16.msra.mxu0 %v2579
        %7700 = vmatprep.subr.bf16.mxu0 0
        %7701 = vmatpush1.bf16.msra.mxu0 %v2580
        %7702 = vmatprep.subr.bf16.mxu0 0
        %7703 = vmatpush1.bf16.msra.mxu0 %v2581
        %7704 = vmatprep.subr.bf16.mxu0 0
        %7705 = vmatpush1.bf16.msra.mxu0 %v2582
        %7706 = vmatprep.subr.bf16.mxu0 0
        %7707 = vmatpush1.bf16.msra.mxu0 %v2583
        %7708 = vmatprep.subr.bf16.mxu0 0
        %7709 = vmatpush1.bf16.msra.mxu0 %v2584
        %7710 = vmatprep.subr.bf16.mxu0 0
        %7711 = vmatpush1.bf16.msra.mxu0 %v2585
        %7712 = vmatprep.subr.bf16.mxu0 0
        %7713 = vmatpush1.bf16.msra.mxu0 %v2586
        %7714 = vmatprep.subr.bf16.mxu0 0
        %7715 = vmatpush1.bf16.msra.mxu0 %v2587
        %7716 = vmatprep.mubr.bf16.mxu0 %v3802
        %7717 = vmatmul.mubr.bf16.gmra.mrb[0].mxu0 %v3800
        %v7718 = vpop.f32.mrb[0].mxu0
        %v7719 = vadd.f32 %v7679, %v7718
        %v7720 = vpop.f32.mrb[0].mxu0
        %v7721 = vpop.f32.mrb[0].mxu0
        %v7722 = vpop.f32.mrb[0].mxu0
        %7723 = vdwg.mxu0
        %7724 = vmatprep.subr.bf16.mxu0 0
        %7725 = vmatpush1.bf16.msra.mxu0 %v2588
        %7726 = vmatprep.subr.bf16.mxu0 0
        %7727 = vmatpush1.bf16.msra.mxu0 %v2589
        %7728 = vmatprep.subr.bf16.mxu0 0
        %7729 = vmatpush1.bf16.msra.mxu0 %v2590
        %7730 = vmatprep.subr.bf16.mxu0 0
        %7731 = vmatpush1.bf16.msra.mxu0 %v2591
        %7732 = vmatprep.subr.bf16.mxu0 0
        %7733 = vmatpush1.bf16.msra.mxu0 %v2592
        %7734 = vmatprep.subr.bf16.mxu0 0
        %7735 = vmatpush1.bf16.msra.mxu0 %v2593
        %7736 = vmatprep.subr.bf16.mxu0 0
        %7737 = vmatpush1.bf16.msra.mxu0 %v2594
        %7738 = vmatprep.subr.bf16.mxu0 0
        %7739 = vmatpush1.bf16.msra.mxu0 %v2595
        %7740 = vmatprep.subr.bf16.mxu0 0
        %7741 = vmatpush1.bf16.msra.mxu0 %v2596
        %7742 = vmatprep.subr.bf16.mxu0 0
        %7743 = vmatpush1.bf16.msra.mxu0 %v2597
        %7744 = vmatprep.subr.bf16.mxu0 0
        %7745 = vmatpush1.bf16.msra.mxu0 %v2598
        %7746 = vmatprep.subr.bf16.mxu0 0
        %7747 = vmatpush1.bf16.msra.mxu0 %v2599
        %7748 = vmatprep.subr.bf16.mxu0 0
        %7749 = vmatpush1.bf16.msra.mxu0 %v2600
        %7750 = vmatprep.subr.bf16.mxu0 0
        %7751 = vmatpush1.bf16.msra.mxu0 %v2601
        %7752 = vmatprep.subr.bf16.mxu0 0
        %7753 = vmatpush1.bf16.msra.mxu0 %v2602
        %7754 = vmatprep.subr.bf16.mxu0 0
        %7755 = vmatpush1.bf16.msra.mxu0 %v2603
        %7756 = vmatprep.mubr.bf16.mxu0 %v3840
        %7757 = vmatmul.mubr.bf16.gmra.mrb[0].mxu0 %v3826
        %v7758 = vpop.f32.mrb[0].mxu0
        %v7759 = vadd.f32 %v7719, %v7758
        %v7760 = vpop.f32.mrb[0].mxu0
        %v7761 = vpop.f32.mrb[0].mxu0
        %v7762 = vpop.f32.mrb[0].mxu0
        %7763 = vdwg.mxu0
        %7764 = vmatprep.subr.bf16.mxu0 0
        %7765 = vmatpush1.bf16.msra.mxu0 %v2604
        %7766 = vmatprep.subr.bf16.mxu0 0
        %7767 = vmatpush1.bf16.msra.mxu0 %v2605
        %7768 = vmatprep.subr.bf16.mxu0 0
        %7769 = vmatpush1.bf16.msra.mxu0 %v2606
        %7770 = vmatprep.subr.bf16.mxu0 0
        %7771 = vmatpush1.bf16.msra.mxu0 %v2607
        %7772 = vmatprep.subr.bf16.mxu0 0
        %7773 = vmatpush1.bf16.msra.mxu0 %v2608
        %7774 = vmatprep.subr.bf16.mxu0 0
        %7775 = vmatpush1.bf16.msra.mxu0 %v2609
        %7776 = vmatprep.subr.bf16.mxu0 0
        %7777 = vmatpush1.bf16.msra.mxu0 %v2610
        %7778 = vmatprep.subr.bf16.mxu0 0
        %7779 = vmatpush1.bf16.msra.mxu0 %v2611
        %7780 = vmatprep.subr.bf16.mxu0 0
        %7781 = vmatpush1.bf16.msra.mxu0 %v2612
        %7782 = vmatprep.subr.bf16.mxu0 0
        %7783 = vmatpush1.bf16.msra.mxu0 %v2613
        %7784 = vmatprep.subr.bf16.mxu0 0
        %7785 = vmatpush1.bf16.msra.mxu0 %v2614
        %7786 = vmatprep.subr.bf16.mxu0 0
        %7787 = vmatpush1.bf16.msra.mxu0 %v2615
        %7788 = vmatprep.subr.bf16.mxu0 0
        %7789 = vmatpush1.bf16.msra.mxu0 %v2616
        %7790 = vmatprep.subr.bf16.mxu0 0
        %7791 = vmatpush1.bf16.msra.mxu0 %v2617
        %7792 = vmatprep.subr.bf16.mxu0 0
        %7793 = vmatpush1.bf16.msra.mxu0 %v2618
        %7794 = vmatprep.subr.bf16.mxu0 0
        %7795 = vmatpush1.bf16.msra.mxu0 %v2619
        %7796 = vmatprep.mubr.bf16.mxu0 %v3850
        %7797 = vmatmul.mubr.bf16.gmra.mrb[0].mxu0 %v3848
        %v7798 = vpop.f32.mrb[0].mxu0
        %v7799 = vadd.f32 %v7759, %v7798
        %v7800 = vpop.f32.mrb[0].mxu0
        %v7801 = vpop.f32.mrb[0].mxu0
        %v7802 = vpop.f32.mrb[0].mxu0
        %7803 = vdwg.mxu0
        %7804 = vmatprep.subr.bf16.mxu0 0
        %7805 = vmatpush1.bf16.msra.mxu0 %v2620
        %7806 = vmatprep.subr.bf16.mxu0 0
        %7807 = vmatpush1.bf16.msra.mxu0 %v2621
        %7808 = vmatprep.subr.bf16.mxu0 0
        %7809 = vmatpush1.bf16.msra.mxu0 %v2622
        %7810 = vmatprep.subr.bf16.mxu0 0
        %7811 = vmatpush1.bf16.msra.mxu0 %v2623
        %7812 = vmatprep.subr.bf16.mxu0 0
        %7813 = vmatpush1.bf16.msra.mxu0 %v2624
        %7814 = vmatprep.subr.bf16.mxu0 0
        %7815 = vmatpush1.bf16.msra.mxu0 %v2625
        %7816 = vmatprep.subr.bf16.mxu0 0
        %7817 = vmatpush1.bf16.msra.mxu0 %v2626
        %7818 = vmatprep.subr.bf16.mxu0 0
        %7819 = vmatpush1.bf16.msra.mxu0 %v2627
        %7820 = vmatprep.subr.bf16.mxu0 0
        %7821 = vmatpush1.bf16.msra.mxu0 %v2628
        %7822 = vmatprep.subr.bf16.mxu0 0
        %7823 = vmatpush1.bf16.msra.mxu0 %v2629
        %7824 = vmatprep.subr.bf16.mxu0 0
        %7825 = vmatpush1.bf16.msra.mxu0 %v2630
        %7826 = vmatprep.subr.bf16.mxu0 0
        %7827 = vmatpush1.bf16.msra.mxu0 %v2631
        %7828 = vmatprep.subr.bf16.mxu0 0
        %7829 = vmatpush1.bf16.msra.mxu0 %v2632
        %7830 = vmatprep.subr.bf16.mxu0 0
        %7831 = vmatpush1.bf16.msra.mxu0 %v2633
        %7832 = vmatprep.subr.bf16.mxu0 0
        %7833 = vmatpush1.bf16.msra.mxu0 %v2634
        %7834 = vmatprep.subr.bf16.mxu0 0
        %7835 = vmatpush1.bf16.msra.mxu0 %v2635
        %7836 = vmatprep.mubr.bf16.mxu0 %v3847
        %7837 = vmatmul.mubr.bf16.gmra.mrb[0].mxu0 %v3833
        %v7838 = vpop.f32.mrb[0].mxu0
        %v7839 = vadd.f32 %v7799, %v7838
        %v7840 = vpop.f32.mrb[0].mxu0
        %v7841 = vpop.f32.mrb[0].mxu0
        %v7842 = vpop.f32.mrb[0].mxu0
        %7843 = vdwg.mxu0
        %7844 = vmatprep.subr.bf16.mxu0 0
        %7845 = vmatpush1.bf16.msra.mxu0 %v2636
        %7846 = vmatprep.subr.bf16.mxu0 0
        %7847 = vmatpush1.bf16.msra.mxu0 %v2637
        %7848 = vmatprep.subr.bf16.mxu0 0
        %7849 = vmatpush1.bf16.msra.mxu0 %v2638
        %7850 = vmatprep.subr.bf16.mxu0 0
        %7851 = vmatpush1.bf16.msra.mxu0 %v2639
        %7852 = vmatprep.subr.bf16.mxu0 0
        %7853 = vmatpush1.bf16.msra.mxu0 %v2640
        %7854 = vmatprep.subr.bf16.mxu0 0
        %7855 = vmatpush1.bf16.msra.mxu0 %v2641
        %7856 = vmatprep.subr.bf16.mxu0 0
        %7857 = vmatpush1.bf16.msra.mxu0 %v2642
        %7858 = vmatprep.subr.bf16.mxu0 0
        %7859 = vmatpush1.bf16.msra.mxu0 %v2643
        %7860 = vmatprep.subr.bf16.mxu0 0
        %7861 = vmatpush1.bf16.msra.mxu0 %v2644
        %7862 = vmatprep.subr.bf16.mxu0 0
        %7863 = vmatpush1.bf16.msra.mxu0 %v2645
        %7864 = vmatprep.subr.bf16.mxu0 0
        %7865 = vmatpush1.bf16.msra.mxu0 %v2646
        %7866 = vmatprep.subr.bf16.mxu0 0
        %7867 = vmatpush1.bf16.msra.mxu0 %v2647
        %7868 = vmatprep.subr.bf16.mxu0 0
        %7869 = vmatpush1.bf16.msra.mxu0 %v2648
        %7870 = vmatprep.subr.bf16.mxu0 0
        %7871 = vmatpush1.bf16.msra.mxu0 %v2649
        %7872 = vmatprep.subr.bf16.mxu0 0
        %7873 = vmatpush1.bf16.msra.mxu0 %v2650
        %7874 = vmatprep.subr.bf16.mxu0 0
        %7875 = vmatpush1.bf16.msra.mxu0 %v2651
        %7876 = vmatprep.mubr.bf16.mxu0 %v3851
        %7877 = vmatmul.mubr.bf16.gmra.mrb[0].mxu0 %v3849
        %v7878 = vpop.f32.mrb[0].mxu0
        %v7879 = vadd.f32 %v7839, %v7878
        %v7880 = vpop.f32.mrb[0].mxu0
        %v7881 = vpop.f32.mrb[0].mxu0
        %v7882 = vpop.f32.mrb[0].mxu0
        %7883 = vdwg.mxu0
        %v7884 = vadd.f32 %v323, %v7879
        %7885 = vst [vmem:[#allocation2] sm:$0x3] %v7884
        %p7886 = scmp.eq.s32.totalorder %s26, 1
        // Predicated region
        $region53: #{mlp_forward.2} parent=35 // pred_check
          %p7887 = pneg %p7886
        $region54: #{mlp_forward.2} parent=35 // pred_check_branch
          %7889 = sbr.rel (%p7887) target = $region56
        $region55: #{mlp_forward.2} parent=35 // pred_region
          %v7890 = vld [vmem:[#allocation2] sm:$0x3]
          %v7891 = vld [vmem:[%s263] sm:$0x1]
          %v7893 = vlaneseq
          %v7894 = vshrl.u32 %v7893, 7
          %v7895 = vsub.s32 0, %v7894
          %v7896 = vrot.slane %v7891, %v7895
          %v7898 = vmul.f32 %v7890, %v7896
          %v7899 = vld [vmem:[%s271] sm:$0x1]
          %v7901 = vlaneseq
          %v7902 = vshrl.u32 %v7901, 7
          %v7903 = vsub.s32 0, %v7902
          %v7904 = vrot.slane %v7899, %v7903
          %v7906 = vadd.f32 %v7898, %v7904
          %v7907 = vmax.f32 %v7906, 0.0
          %7908 = vst [vmem:[%s316] sm:$0x3] %v7907
        $region56: #{mlp_forward.2} parent=35 // pred_fallthru
          _
        %p7909 = scmp.lt.s32.totalorder %s25, 1
        %s7910 = scalar_select %p7909, %s25, 1
        %s7911 = smul.addr %s7910, 2
        %s7912 = scalar_lea.vmem %s4, %s7911
        // Predicated region
        $region57: #{mlp_forward.2} parent=35 // pred_check
          %p7913 = pneg %p157
        $region58: #{mlp_forward.2} parent=35 // pred_check_branch
          %7915 = sbr.rel (%p7913) target = $region60
        $region59: #{mlp_forward.2} parent=35 // pred_region
          _
        $region60: #{mlp_forward.2} parent=35 // pred_fallthru
          _
      $region36: #{mlp_forward.2} parent=5 // pred_fallthru
        _
      %p7916 = scmp.le.s32.totalorder 2, %s16
      // Predicated region
      $region61: #{mlp_forward.2} parent=5 // pred_check
        %p7917 = pneg %p7916
      $region62: #{mlp_forward.2} parent=5 // pred_check_branch
        %7919 = sbr.rel (%p7917) target = $region64
      $region63: #{mlp_forward.2} parent=5 // pred_region
        %s7920 = ssub.s32 %s16, 2
        // Predicated region
        $region65: #{mlp_forward.2} parent=63 // pred_check
          %p7921 = pneg %p163
        $region66: #{mlp_forward.2} parent=63 // pred_check_branch
          %7923 = sbr.rel (%p7921) target = $region68
        $region67: #{mlp_forward.2} parent=63 // pred_region
          %p7924 = scmp.lt.s32.totalorder %s27, 1
          %s7925 = scalar_select %p7924, %s27, 1
          %s7926 = smul.addr %s7925, 2
          %s7927 = scalar_lea.vmem %s4, %s7926
        $region68: #{mlp_forward.2} parent=63 // pred_fallthru
          _
      $region64: #{mlp_forward.2} parent=5 // pred_fallthru
        _
    $region6: #{mlp_forward.2} parent=1 // loop_footer
      %s20 = sadd.s32 1, %s16
    $region7: #{mlp_forward.2} parent=1 // loop_footer_branch
      %15 = sbr.rel target = $region3
    $region8: #{mlp_forward.2} parent=1 // loop_exit
      _
    %7928 = vsyncpa [#allocation4], 1
    %s7929 = scalar_lea.sflag [#allocation4], 1
    %7930 = vsyncpa %s7929, 1
    %7931 = vsyncpa [#allocation6], 1
    %s7932 = scalar_lea.sflag [#allocation6], 1
    %7933 = vsyncpa %s7932, 1

</llo_original>
